<compile_context>
chip_gen: v7x
topology: tpu7x:2x2x1
jax: 0.10.0
libtpu: 0.0.40
codegen_flags: <defaults>
</compile_context>

<pallas_src>
import functools

import jax
import jax.numpy as jnp
from jax.experimental import pallas as pl
from jax.experimental.pallas import tpu as pltpu


MATMUL_DTYPE = jnp.bfloat16   # MXU operand dtype (accumulation is f32)
LANE = 128


def _round_up(x, m):
    return (x + m - 1) // m * m


def _mm(a, w):
    """MXU matmul with bf16 operands and f32 accumulation."""
    return jnp.dot(a.astype(w.dtype), w, preferred_element_type=jnp.float32)


# ------------------------------ fused kernel ------------------------------- #

def _decoder_kernel(x_ref, cin_w_ref, cin_b_ref, w1_ref, b1_ref, w2_ref, b2_ref,
                    dw_ref, db_ref, cmw_ref, cmb_ref, cow_ref, cob_ref,
                    o_ref, apad_ref, cat_ref, *,
                    bb, t, down_t, depth, dilations, pad, wp):
    # Zero only the halo rows; rows [pad, pad+t) are fully overwritten every
    # layer.  Re-done every grid step (cheap: 2*pad rows per batch element) so
    # it is safe under megacore "parallel" splitting of the grid.
    zero_halo = jnp.zeros((pad, wp), dtype=apad_ref.dtype)
    for b in range(bb):
        apad_ref[b, :pad, :] = zero_halo
        apad_ref[b, pad + t:, :] = zero_halo

    # conv_in (k=1) + ReLU.  M = bb*t rows per grid step.
    h = jnp.maximum(_mm(x_ref[...], cin_w_ref[...]) + cin_b_ref[...], 0.0)  # (bb*t, wp) f32

    # TODO(synk): for large down_t*depth switch this unrolled chain to
    # lax.fori_loop with an SMEM dilation table to bound vreg live ranges.
    li = 0
    for dt in range(down_t):
        # Resnet1D: `depth` ResConv1DBlocks with reversed dilations.
        for _ in range(depth):
            d = dilations[li]
            a = jnp.maximum(h, 0.0).astype(MATMUL_DTYPE)     # activation1 (ReLU), bf16
            cat_ref[:, wp:2 * wp] = a                        # centre tap x[t]
            for b in range(bb):
                r0, r1 = b * t, (b + 1) * t
                apad_ref[b, pad:pad + t, :] = a[r0:r1, :]    # halo-padded copy
                # NOTE: the +/-d slices are sublane-misaligned (d not multiple
                # of 8) -> XLU relayout; fine unless the XLU slot saturates.
                cat_ref[r0:r1, 0:wp] = apad_ref[b, pad - d:pad - d + t, :]            # x[t-d]
                cat_ref[r0:r1, 2 * wp:3 * wp] = apad_ref[b, pad + d:pad + d + t, :]   # x[t+d]
            # Dilated k=3 conv as ONE matmul with K = 3*wp (taps accumulate in MXU).
            y = jnp.dot(cat_ref[...], w1_ref[li], preferred_element_type=jnp.float32)
            y = jnp.maximum(y + b1_ref[li], 0.0).astype(MATMUL_DTYPE)   # activation2 (ReLU)
            h = h + jnp.dot(y, w2_ref[li], preferred_element_type=jnp.float32) + b2_ref[li]
            li += 1
        # Trailing Conv1d(width, width, k=1) of the down block (Upsample == Identity here).
        h = _mm(h, dw_ref[dt]) + db_ref[dt]

    # conv_mid (k=1) + ReLU, then conv_out (k=1, output lanes padded to 128 so
    # the kernel's only HBM store is lane-dense).
    h = jnp.maximum(_mm(h, cmw_ref[...]) + cmb_ref[...], 0.0)
    o_ref[...] = (_mm(h, cow_ref[...]) + cob_ref[...]).astype(o_ref.dtype)


# --------------------------- parameter construction ------------------------ #

def init_decoder_params(key, *, input_emb_width, output_emb_width, width,
                        down_t, depth, dilation_growth_rate):
    keys = iter(jax.random.split(key, 512))
    wp = _round_up(width, LANE)
    cin_p = _round_up(output_emb_width, LANE)
    cout_p = _round_up(input_emb_width, LANE)

    def wfull(shape, fan_in, pad_widths):
        v = jax.random.normal(next(keys), shape, jnp.float32) / jnp.sqrt(fan_in)
        return jnp.pad(v, pad_widths).astype(MATMUL_DTYPE)

    def bfull(shape, pad_widths):
        v = jax.random.normal(next(keys), shape, jnp.float32) * 0.01
        return jnp.pad(v, pad_widths)

    # Resnet1D builds dilations growth**0 .. growth**(depth-1) then reverses;
    # the same Resnet1D is instantiated in each of the down_t blocks.
    dil_block = tuple(dilation_growth_rate ** i for i in range(depth))[::-1]
    dilations = dil_block * down_t
    L = down_t * depth
    pad = _round_up(max(dilations), 8)          # halo rows for the dilated taps
    pw = wp - width

    # Fused dilated-conv weight: K rows stacked as [x[t-d] | x[t] | x[t+d]].
    # Matmul layout: W[cin, cout] == torch_conv.weight[cout, cin, tap].T
    res_w1 = wfull((L, 3, width, width), 3 * width,
                   ((0, 0), (0, 0), (0, pw), (0, pw))).reshape(L, 3 * wp, wp)

    params = {
        "conv_in_w": wfull((output_emb_width, width), output_emb_width,
                           ((0, cin_p - output_emb_width), (0, pw))),
        "conv_in_b": bfull((1, width), ((0, 0), (0, pw))),
        "res_w1": res_w1,                                   # (L, 3*wp, wp)
        "res_b1": bfull((L, 1, width), ((0, 0), (0, 0), (0, pw))),
        "res_w2": wfull((L, width, width), width, ((0, 0), (0, pw), (0, pw))),
        "res_b2": bfull((L, 1, width), ((0, 0), (0, 0), (0, pw))),
        "down_w": wfull((down_t, width, width), width, ((0, 0), (0, pw), (0, pw))),
        "down_b": bfull((down_t, 1, width), ((0, 0), (0, 0), (0, pw))),
        "conv_mid_w": wfull((width, width), width, ((0, pw), (0, pw))),
        "conv_mid_b": bfull((1, width), ((0, 0), (0, pw))),
        "conv_out_w": wfull((width, input_emb_width), width,
                            ((0, pw), (0, cout_p - input_emb_width))),
        "conv_out_b": bfull((1, input_emb_width),
                            ((0, 0), (0, cout_p - input_emb_width))),
    }
    cfg = dict(input_emb_width=input_emb_width, output_emb_width=output_emb_width,
               width=width, wp=wp, cin_p=cin_p, cout_p=cout_p,
               down_t=down_t, depth=depth, dilations=dilations, pad=pad)
    return params, cfg


# ------------------------------- forward pass ------------------------------ #

_WEIGHT_NAMES = ("conv_in_w", "conv_in_b", "res_w1", "res_b1", "res_w2", "res_b2",
                 "down_w", "down_b", "conv_mid_w", "conv_mid_b",
                 "conv_out_w", "conv_out_b")


def _pick_vmem_limit_bytes():
    # v5e/v6e: 128 MiB physical VMEM -> allow up to 96 MiB.  v7x: 64 MiB ->
    # 3/4 of capacity = 48 MiB.  Fallback is conservative and safe everywhere.
    try:
        cap = pltpu.get_tpu_info().vmem_capacity_bytes
        return int(min(96 * 1024 * 1024, (cap * 3) // 4))
    except Exception:
        return 48 * 1024 * 1024


def decoder_forward(params, x_ncw, cfg, *, batch_block=None, single_buffer_weights=True):
    """x_ncw: (B, output_emb_width, T) float32 in PyTorch NCW layout."""
    B, c_in, T = x_ncw.shape
    assert c_in == cfg["output_emb_width"]
    # TODO(synk): support T % 8 != 0 (needs masked halo rows / T padding logic).
    assert T % 8 == 0, "this kernel requires T to be a multiple of 8"

    wp, cin_p, cout_p, pad = cfg["wp"], cfg["cin_p"], cfg["cout_p"], cfg["pad"]
    down_t, depth = cfg["down_t"], cfg["depth"]
    L = down_t * depth

    # Batch grouping: fold Bb batch elements into the matmul M dimension while
    # keeping >= 2 grid steps when possible (both v7x TensorCores busy).
    if batch_block is None:
        batch_block = 1 if B < 4 else min(8, B // 2)
    bb = max(1, min(batch_block, B))
    g = pl.cdiv(B, bb)
    b_pad = g * bb

    # NCW -> channels-last, zero-pad channels/batch, flatten to (B*T, C).
    # TODO(synk): fold this transpose (and the output one) into the kernel with
    # a dot_general contracting on Cin to save an HBM round trip at large T.
    x = jnp.transpose(x_ncw, (0, 2, 1))
    x = jnp.pad(x, ((0, b_pad - B), (0, 0), (0, cin_p - c_in))).astype(MATMUL_DTYPE)
    x = x.reshape(b_pad * T, cin_p)

    kern = functools.partial(
        _decoder_kernel, bb=bb, t=T, down_t=down_t, depth=depth,
        dilations=cfg["dilations"], pad=pad, wp=wp)

    def weight_spec(name):
        arr = params[name]
        nd = arr.ndim
        kw = {"pipeline_mode": pl.Buffered(1)} if single_buffer_weights else {}
        return pl.BlockSpec(arr.shape, lambda i, _nd=nd: (0,) * _nd, **kw)

    # Advisory cost estimate so XLA schedules the surrounding ops sensibly.
    m = b_pad * T
    flops_per_row = (2 * cin_p * wp + L * (2 * 3 * wp * wp + 2 * wp * wp)
                     + down_t * 2 * wp * wp + 2 * wp * wp + 2 * wp * cout_p)
    weight_bytes = sum(int(params[n].size) * params[n].dtype.itemsize
                       for n in _WEIGHT_NAMES)
    cost = pl.CostEstimate(flops=int(m * flops_per_row), transcendentals=0,
                           bytes_accessed=int(x.size) * 2 + m * cout_p * 4 + weight_bytes)

    y = pl.pallas_call(
        kern,
        out_shape=jax.ShapeDtypeStruct((b_pad * T, cout_p), jnp.float32),
        grid_spec=pltpu.PrefetchScalarGridSpec(
            num_scalar_prefetch=0,
            grid=(g,),
            in_specs=[pl.BlockSpec((bb * T, cin_p), lambda i: (i, 0))]
                    + [weight_spec(n) for n in _WEIGHT_NAMES],
            out_specs=pl.BlockSpec((bb * T, cout_p), lambda i: (i, 0)),
            scratch_shapes=[
                pltpu.VMEM((bb, T + 2 * pad, wp), MATMUL_DTYPE),  # halo-padded ReLU(h)
                pltpu.VMEM((bb * T, 3 * wp), MATMUL_DTYPE),       # fused-tap staging
            ],
        ),
        compiler_params=pltpu.CompilerParams(
            dimension_semantics=("parallel",),
            vmem_limit_bytes=_pick_vmem_limit_bytes(),
        ),
        cost_estimate=cost,
    )(x, *[params[n] for n in _WEIGHT_NAMES])

    y = y.reshape(b_pad, T, cout_p)[:B, :, :cfg["input_emb_width"]]
    return jnp.transpose(y, (0, 2, 1))                     # (B, input_emb_width, T)


# ------------------------------ pure-JAX reference ------------------------- #

def decoder_reference(params, x_ncw, cfg):
    B, c_in, T = x_ncw.shape
    wp, cin_p = cfg["wp"], cfg["cin_p"]

    def mm(a, w):
        return jnp.einsum("btc,cd->btd", a.astype(w.dtype), w,
                          preferred_element_type=jnp.float32)

    x = jnp.transpose(x_ncw, (0, 2, 1))
    x = jnp.pad(x, ((0, 0), (0, 0), (0, cin_p - c_in))).astype(MATMUL_DTYPE)
    h = jnp.maximum(mm(x, params["conv_in_w"]) + params["conv_in_b"], 0.0)
    li = 0
    for dt in range(cfg["down_t"]):
        for _ in range(cfg["depth"]):
            d = cfg["dilations"][li]
            a = jnp.maximum(h, 0.0)
            a_m = jnp.pad(a, ((0, 0), (d, 0), (0, 0)))[:, :T]   # a[t-d]
            a_p = jnp.pad(a, ((0, 0), (0, d), (0, 0)))[:, d:]   # a[t+d]
            a_cat = jnp.concatenate([a_m, a, a_p], axis=-1)     # K = 3*wp
            y = jnp.maximum(mm(a_cat, params["res_w1"][li]) + params["res_b1"][li], 0.0)
            h = h + mm(y, params["res_w2"][li]) + params["res_b2"][li]
            li += 1
        h = mm(h, params["down_w"][dt]) + params["down_b"][dt]
    h = jnp.maximum(mm(h, params["conv_mid_w"]) + params["conv_mid_b"], 0.0)
    out = mm(h, params["conv_out_w"]) + params["conv_out_b"]
    out = out[:, :, :cfg["input_emb_width"]]
    return jnp.transpose(out, (0, 2, 1))


# ----------------------------------- main ----------------------------------- #

if __name__ == "__main__":
    B, T = 4, 16
    input_emb_width = 3        # Decoder default (!= 263 -> k=1 convs, no Upsample)
    output_emb_width = 32      # small test stand-in for 512
    width = 32                 # small test stand-in for 512 (padded to 128 lanes)
    down_t = 2
    depth = 2
    dilation_growth_rate = 3

    key = jax.random.PRNGKey(0)
    pkey, xkey = jax.random.split(key)
    params, cfg = init_decoder_params(
        pkey,
        input_emb_width=input_emb_width,
        output_emb_width=output_emb_width,
        width=width,
        down_t=down_t,
        depth=depth,
        dilation_growth_rate=dilation_growth_rate,
    )

    x = jax.random.normal(xkey, (B, output_emb_width, T), jnp.float32)  # NCW, like PyTorch

    try:
        out = jax.block_until_ready(decoder_forward(params, x, cfg))
    except Exception:
        # Fallback: default double-buffered weight pipelining.
        out = jax.block_until_ready(
            decoder_forward(params, x, cfg, single_buffer_weights=False))
    assert out.shape == (B, input_emb_width, T), out.shape

    ref = jax.block_until_ready(decoder_reference(params, x, cfg))
    err = float(jnp.max(jnp.abs(out - ref)))
    assert jnp.allclose(out, ref, atol=2e-3, rtol=2e-3), err

    print("KERNEL_OK")
</pallas_src>

<mosaic_0001>
module attributes {stable_mosaic.version = 11 : i64} {
  func.func @_decoder_kernel(%arg0: i32, %arg1: memref<32x128xbf16, #tpu.memory_space<vmem>>, %arg2: memref<128x128xbf16, #tpu.memory_space<vmem>>, %arg3: memref<1x128xf32, #tpu.memory_space<vmem>>, %arg4: memref<4x384x128xbf16, #tpu.memory_space<vmem>>, %arg5: memref<4x1x128xf32, #tpu.memory_space<vmem>>, %arg6: memref<4x128x128xbf16, #tpu.memory_space<vmem>>, %arg7: memref<4x1x128xf32, #tpu.memory_space<vmem>>, %arg8: memref<2x128x128xbf16, #tpu.memory_space<vmem>>, %arg9: memref<2x1x128xf32, #tpu.memory_space<vmem>>, %arg10: memref<128x128xbf16, #tpu.memory_space<vmem>>, %arg11: memref<1x128xf32, #tpu.memory_space<vmem>>, %arg12: memref<128x128xbf16, #tpu.memory_space<vmem>>, %arg13: memref<1x128xf32, #tpu.memory_space<vmem>>, %arg14: memref<32x128xf32, #tpu.memory_space<vmem>>, %arg15: memref<2x32x128xbf16, #tpu.memory_space<vmem>>, %arg16: memref<32x384xbf16, #tpu.memory_space<vmem>>) attributes {dimension_semantics = [#tpu.dimension_semantics<parallel>], iteration_bounds = array<i64: 2>, scalar_prefetch = 0 : i64, scratch_operands = 2 : i64, tpu.core_type = #tpu.core_type<tc>, window_params = [{transform_indices = @transform_0, window_bounds = array<i64: 32, 128>}, {pipeline_mode = #tpu.pipeline_mode<synchronous>, transform_indices = @transform_1, window_bounds = array<i64: 128, 128>}, {pipeline_mode = #tpu.pipeline_mode<synchronous>, transform_indices = @transform_2, window_bounds = array<i64: 1, 128>}, {pipeline_mode = #tpu.pipeline_mode<synchronous>, transform_indices = @transform_3, window_bounds = array<i64: 4, 384, 128>}, {pipeline_mode = #tpu.pipeline_mode<synchronous>, transform_indices = @transform_4, window_bounds = array<i64: 4, 1, 128>}, {pipeline_mode = #tpu.pipeline_mode<synchronous>, transform_indices = @transform_5, window_bounds = array<i64: 4, 128, 128>}, {pipeline_mode = #tpu.pipeline_mode<synchronous>, transform_indices = @transform_6, window_bounds = array<i64: 4, 1, 128>}, {pipeline_mode = #tpu.pipeline_mode<synchronous>, transform_indices = @transform_7, window_bounds = array<i64: 2, 128, 128>}, {pipeline_mode = #tpu.pipeline_mode<synchronous>, transform_indices = @transform_8, window_bounds = array<i64: 2, 1, 128>}, {pipeline_mode = #tpu.pipeline_mode<synchronous>, transform_indices = @transform_9, window_bounds = array<i64: 128, 128>}, {pipeline_mode = #tpu.pipeline_mode<synchronous>, transform_indices = @transform_10, window_bounds = array<i64: 1, 128>}, {pipeline_mode = #tpu.pipeline_mode<synchronous>, transform_indices = @transform_11, window_bounds = array<i64: 128, 128>}, {pipeline_mode = #tpu.pipeline_mode<synchronous>, transform_indices = @transform_12, window_bounds = array<i64: 1, 128>}, {transform_indices = @transform_13, window_bounds = array<i64: 32, 128>}]} {
    %cst = arith.constant 0.000000e+00 : bf16
    %0 = vector.broadcast %cst : bf16 to vector<8x128xbf16>
    %c0 = arith.constant 0 : index
    %c0_0 = arith.constant 0 : index
    %c0_1 = arith.constant 0 : index
    %1 = vector.load %arg15[%c0, %c0_0, %c0_1] : memref<2x32x128xbf16, #tpu.memory_space<vmem>>, vector<1x8x128xbf16>
    %2 = vector.shape_cast %1 : vector<1x8x128xbf16> to vector<8x128xbf16>
    %3 = vector.shape_cast %0 : vector<8x128xbf16> to vector<1x8x128xbf16>
    tpu.vector_store %arg15[%c0, %c0_0, %c0_1], %3 {strides = array<i32>} : memref<2x32x128xbf16, #tpu.memory_space<vmem>>, vector<1x8x128xbf16>,
    %c0_2 = arith.constant 0 : index
    %c24 = arith.constant 24 : index
    %c0_3 = arith.constant 0 : index
    %4 = vector.load %arg15[%c0_2, %c24, %c0_3] : memref<2x32x128xbf16, #tpu.memory_space<vmem>>, vector<1x8x128xbf16>
    %5 = vector.shape_cast %4 : vector<1x8x128xbf16> to vector<8x128xbf16>
    %6 = vector.shape_cast %0 : vector<8x128xbf16> to vector<1x8x128xbf16>
    tpu.vector_store %arg15[%c0_2, %c24, %c0_3], %6 {strides = array<i32>} : memref<2x32x128xbf16, #tpu.memory_space<vmem>>, vector<1x8x128xbf16>,
    %c1 = arith.constant 1 : index
    %c0_4 = arith.constant 0 : index
    %c0_5 = arith.constant 0 : index
    %7 = vector.load %arg15[%c1, %c0_4, %c0_5] : memref<2x32x128xbf16, #tpu.memory_space<vmem>>, vector<1x8x128xbf16>
    %8 = vector.shape_cast %7 : vector<1x8x128xbf16> to vector<8x128xbf16>
    %9 = vector.shape_cast %0 : vector<8x128xbf16> to vector<1x8x128xbf16>
    tpu.vector_store %arg15[%c1, %c0_4, %c0_5], %9 {strides = array<i32>} : memref<2x32x128xbf16, #tpu.memory_space<vmem>>, vector<1x8x128xbf16>,
    %c1_6 = arith.constant 1 : index
    %c24_7 = arith.constant 24 : index
    %c0_8 = arith.constant 0 : index
    %10 = vector.load %arg15[%c1_6, %c24_7, %c0_8] : memref<2x32x128xbf16, #tpu.memory_space<vmem>>, vector<1x8x128xbf16>
    %11 = vector.shape_cast %10 : vector<1x8x128xbf16> to vector<8x128xbf16>
    %12 = vector.shape_cast %0 : vector<8x128xbf16> to vector<1x8x128xbf16>
    tpu.vector_store %arg15[%c1_6, %c24_7, %c0_8], %12 {strides = array<i32>} : memref<2x32x128xbf16, #tpu.memory_space<vmem>>, vector<1x8x128xbf16>,
    %c0_9 = arith.constant 0 : index
    %c0_10 = arith.constant 0 : index
    %13 = vector.load %arg1[%c0_9, %c0_10] : memref<32x128xbf16, #tpu.memory_space<vmem>>, vector<32x128xbf16>
    %c0_11 = arith.constant 0 : index
    %c0_12 = arith.constant 0 : index
    %14 = vector.load %arg2[%c0_11, %c0_12] : memref<128x128xbf16, #tpu.memory_space<vmem>>, vector<128x128xbf16>
    %cst_13 = arith.constant dense<0.000000e+00> : vector<32x128xf32>
    %15 = tpu.matmul %13, %14, %cst_13 {dimension_numbers = #tpu.dot_dimension_numbers<[1], [0], [0], [1], [0, 0, 1, 1], [], []>} : vector<32x128xbf16>, vector<128x128xbf16>, vector<32x128xf32> -> vector<32x128xf32>
    %c0_14 = arith.constant 0 : index
    %c0_15 = arith.constant 0 : index
    %16 = vector.load %arg3[%c0_14, %c0_15] : memref<1x128xf32, #tpu.memory_space<vmem>>, vector<1x128xf32>
    %17 = vector.broadcast %16 : vector<1x128xf32> to vector<32x128xf32>
    %18 = arith.addf %15, %17 : vector<32x128xf32>
    %cst_16 = arith.constant 0.000000e+00 : f32
    %19 = vector.broadcast %cst_16 : f32 to vector<32x128xf32>
    %20 = arith.maximumf %18, %19 : vector<32x128xf32>
    %cst_17 = arith.constant 0.000000e+00 : f32
    %21 = vector.broadcast %cst_17 : f32 to vector<32x128xf32>
    %22 = arith.maximumf %20, %21 : vector<32x128xf32>
    %23 = arith.truncf %22 : vector<32x128xf32> to vector<32x128xbf16>
    %c0_18 = arith.constant 0 : index
    %c128 = arith.constant 128 : index
    %24 = vector.load %arg16[%c0_18, %c128] : memref<32x384xbf16, #tpu.memory_space<vmem>>, vector<32x128xbf16>
    tpu.vector_store %arg16[%c0_18, %c128], %23 {strides = array<i32>} : memref<32x384xbf16, #tpu.memory_space<vmem>>, vector<32x128xbf16>,
    %25 = vector.extract_strided_slice %23 {offsets = [0, 0], sizes = [16, 128], strides = [1, 1]} : vector<32x128xbf16> to vector<16x128xbf16>
    %c0_19 = arith.constant 0 : index
    %c8 = arith.constant 8 : index
    %c0_20 = arith.constant 0 : index
    %26 = vector.load %arg15[%c0_19, %c8, %c0_20] : memref<2x32x128xbf16, #tpu.memory_space<vmem>>, vector<1x16x128xbf16>
    %27 = vector.shape_cast %26 : vector<1x16x128xbf16> to vector<16x128xbf16>
    %28 = vector.shape_cast %25 : vector<16x128xbf16> to vector<1x16x128xbf16>
    tpu.vector_store %arg15[%c0_19, %c8, %c0_20], %28 {strides = array<i32>} : memref<2x32x128xbf16, #tpu.memory_space<vmem>>, vector<1x16x128xbf16>,
    %c0_21 = arith.constant 0 : index
    %c5 = arith.constant 5 : index
    %c0_22 = arith.constant 0 : index
    %29 = vector.load %arg15[%c0_21, %c5, %c0_22] : memref<2x32x128xbf16, #tpu.memory_space<vmem>>, vector<1x16x128xbf16>
    %30 = vector.shape_cast %29 : vector<1x16x128xbf16> to vector<16x128xbf16>
    %c0_23 = arith.constant 0 : index
    %c0_24 = arith.constant 0 : index
    %31 = vector.load %arg16[%c0_23, %c0_24] : memref<32x384xbf16, #tpu.memory_space<vmem>>, vector<16x128xbf16>
    tpu.vector_store %arg16[%c0_23, %c0_24], %30 {strides = array<i32>} : memref<32x384xbf16, #tpu.memory_space<vmem>>, vector<16x128xbf16>,
    %c0_25 = arith.constant 0 : index
    %c11 = arith.constant 11 : index
    %c0_26 = arith.constant 0 : index
    %32 = vector.load %arg15[%c0_25, %c11, %c0_26] : memref<2x32x128xbf16, #tpu.memory_space<vmem>>, vector<1x16x128xbf16>
    %33 = vector.shape_cast %32 : vector<1x16x128xbf16> to vector<16x128xbf16>
    %c0_27 = arith.constant 0 : index
    %c256 = arith.constant 256 : index
    %34 = vector.load %arg16[%c0_27, %c256] : memref<32x384xbf16, #tpu.memory_space<vmem>>, vector<16x128xbf16>
    tpu.vector_store %arg16[%c0_27, %c256], %33 {strides = array<i32>} : memref<32x384xbf16, #tpu.memory_space<vmem>>, vector<16x128xbf16>,
    %35 = vector.extract_strided_slice %23 {offsets = [16, 0], sizes = [16, 128], strides = [1, 1]} : vector<32x128xbf16> to vector<16x128xbf16>
    %c1_28 = arith.constant 1 : index
    %c8_29 = arith.constant 8 : index
    %c0_30 = arith.constant 0 : index
    %36 = vector.load %arg15[%c1_28, %c8_29, %c0_30] : memref<2x32x128xbf16, #tpu.memory_space<vmem>>, vector<1x16x128xbf16>
    %37 = vector.shape_cast %36 : vector<1x16x128xbf16> to vector<16x128xbf16>
    %38 = vector.shape_cast %35 : vector<16x128xbf16> to vector<1x16x128xbf16>
    tpu.vector_store %arg15[%c1_28, %c8_29, %c0_30], %38 {strides = array<i32>} : memref<2x32x128xbf16, #tpu.memory_space<vmem>>, vector<1x16x128xbf16>,
    %c1_31 = arith.constant 1 : index
    %c5_32 = arith.constant 5 : index
    %c0_33 = arith.constant 0 : index
    %39 = vector.load %arg15[%c1_31, %c5_32, %c0_33] : memref<2x32x128xbf16, #tpu.memory_space<vmem>>, vector<1x16x128xbf16>
    %40 = vector.shape_cast %39 : vector<1x16x128xbf16> to vector<16x128xbf16>
    %c16 = arith.constant 16 : index
    %c0_34 = arith.constant 0 : index
    %41 = vector.load %arg16[%c16, %c0_34] : memref<32x384xbf16, #tpu.memory_space<vmem>>, vector<16x128xbf16>
    tpu.vector_store %arg16[%c16, %c0_34], %40 {strides = array<i32>} : memref<32x384xbf16, #tpu.memory_space<vmem>>, vector<16x128xbf16>,
    %c1_35 = arith.constant 1 : index
    %c11_36 = arith.constant 11 : index
    %c0_37 = arith.constant 0 : index
    %42 = vector.load %arg15[%c1_35, %c11_36, %c0_37] : memref<2x32x128xbf16, #tpu.memory_space<vmem>>, vector<1x16x128xbf16>
    %43 = vector.shape_cast %42 : vector<1x16x128xbf16> to vector<16x128xbf16>
    %c16_38 = arith.constant 16 : index
    %c256_39 = arith.constant 256 : index
    %44 = vector.load %arg16[%c16_38, %c256_39] : memref<32x384xbf16, #tpu.memory_space<vmem>>, vector<16x128xbf16>
    tpu.vector_store %arg16[%c16_38, %c256_39], %43 {strides = array<i32>} : memref<32x384xbf16, #tpu.memory_space<vmem>>, vector<16x128xbf16>,
    %c0_40 = arith.constant 0 : index
    %c0_41 = arith.constant 0 : index
    %45 = vector.load %arg16[%c0_40, %c0_41] : memref<32x384xbf16, #tpu.memory_space<vmem>>, vector<32x384xbf16>
    %c0_42 = arith.constant 0 : index
    %c0_43 = arith.constant 0 : index
    %c0_44 = arith.constant 0 : index
    %46 = vector.load %arg4[%c0_42, %c0_43, %c0_44] : memref<4x384x128xbf16, #tpu.memory_space<vmem>>, vector<1x384x128xbf16>
    %47 = vector.shape_cast %46 : vector<1x384x128xbf16> to vector<384x128xbf16>
    %cst_45 = arith.constant dense<0.000000e+00> : vector<32x128xf32>
    %48 = tpu.matmul %45, %47, %cst_45 {dimension_numbers = #tpu.dot_dimension_numbers<[1], [0], [0], [1], [0, 0, 1, 1], [], []>} : vector<32x384xbf16>, vector<384x128xbf16>, vector<32x128xf32> -> vector<32x128xf32>
    %c0_46 = arith.constant 0 : index
    %c0_47 = arith.constant 0 : index
    %c0_48 = arith.constant 0 : index
    %49 = vector.load %arg5[%c0_46, %c0_47, %c0_48] : memref<4x1x128xf32, #tpu.memory_space<vmem>>, vector<1x1x128xf32>
    %50 = vector.shape_cast %49 : vector<1x1x128xf32> to vector<1x128xf32>
    %51 = vector.broadcast %50 : vector<1x128xf32> to vector<32x128xf32>
    %52 = arith.addf %48, %51 : vector<32x128xf32>
    %cst_49 = arith.constant 0.000000e+00 : f32
    %53 = vector.broadcast %cst_49 : f32 to vector<32x128xf32>
    %54 = arith.maximumf %52, %53 : vector<32x128xf32>
    %55 = arith.truncf %54 : vector<32x128xf32> to vector<32x128xbf16>
    %c0_50 = arith.constant 0 : index
    %c0_51 = arith.constant 0 : index
    %c0_52 = arith.constant 0 : index
    %56 = vector.load %arg6[%c0_50, %c0_51, %c0_52] : memref<4x128x128xbf16, #tpu.memory_space<vmem>>, vector<1x128x128xbf16>
    %57 = vector.shape_cast %56 : vector<1x128x128xbf16> to vector<128x128xbf16>
    %cst_53 = arith.constant dense<0.000000e+00> : vector<32x128xf32>
    %58 = tpu.matmul %55, %57, %cst_53 {dimension_numbers = #tpu.dot_dimension_numbers<[1], [0], [0], [1], [0, 0, 1, 1], [], []>} : vector<32x128xbf16>, vector<128x128xbf16>, vector<32x128xf32> -> vector<32x128xf32>
    %59 = arith.addf %20, %58 : vector<32x128xf32>
    %c0_54 = arith.constant 0 : index
    %c0_55 = arith.constant 0 : index
    %c0_56 = arith.constant 0 : index
    %60 = vector.load %arg7[%c0_54, %c0_55, %c0_56] : memref<4x1x128xf32, #tpu.memory_space<vmem>>, vector<1x1x128xf32>
    %61 = vector.shape_cast %60 : vector<1x1x128xf32> to vector<1x128xf32>
    %62 = vector.broadcast %61 : vector<1x128xf32> to vector<32x128xf32>
    %63 = arith.addf %59, %62 : vector<32x128xf32>
    %cst_57 = arith.constant 0.000000e+00 : f32
    %64 = vector.broadcast %cst_57 : f32 to vector<32x128xf32>
    %65 = arith.maximumf %63, %64 : vector<32x128xf32>
    %66 = arith.truncf %65 : vector<32x128xf32> to vector<32x128xbf16>
    %c0_58 = arith.constant 0 : index
    %c128_59 = arith.constant 128 : index
    %67 = vector.load %arg16[%c0_58, %c128_59] : memref<32x384xbf16, #tpu.memory_space<vmem>>, vector<32x128xbf16>
    tpu.vector_store %arg16[%c0_58, %c128_59], %66 {strides = array<i32>} : memref<32x384xbf16, #tpu.memory_space<vmem>>, vector<32x128xbf16>,
    %68 = vector.extract_strided_slice %66 {offsets = [0, 0], sizes = [16, 128], strides = [1, 1]} : vector<32x128xbf16> to vector<16x128xbf16>
    %c0_60 = arith.constant 0 : index
    %c8_61 = arith.constant 8 : index
    %c0_62 = arith.constant 0 : index
    %69 = vector.load %arg15[%c0_60, %c8_61, %c0_62] : memref<2x32x128xbf16, #tpu.memory_space<vmem>>, vector<1x16x128xbf16>
    %70 = vector.shape_cast %69 : vector<1x16x128xbf16> to vector<16x128xbf16>
    %71 = vector.shape_cast %68 : vector<16x128xbf16> to vector<1x16x128xbf16>
    tpu.vector_store %arg15[%c0_60, %c8_61, %c0_62], %71 {strides = array<i32>} : memref<2x32x128xbf16, #tpu.memory_space<vmem>>, vector<1x16x128xbf16>,
    %c0_63 = arith.constant 0 : index
    %c7 = arith.constant 7 : index
    %c0_64 = arith.constant 0 : index
    %72 = vector.load %arg15[%c0_63, %c7, %c0_64] : memref<2x32x128xbf16, #tpu.memory_space<vmem>>, vector<1x16x128xbf16>
    %73 = vector.shape_cast %72 : vector<1x16x128xbf16> to vector<16x128xbf16>
    %c0_65 = arith.constant 0 : index
    %c0_66 = arith.constant 0 : index
    %74 = vector.load %arg16[%c0_65, %c0_66] : memref<32x384xbf16, #tpu.memory_space<vmem>>, vector<16x128xbf16>
    tpu.vector_store %arg16[%c0_65, %c0_66], %73 {strides = array<i32>} : memref<32x384xbf16, #tpu.memory_space<vmem>>, vector<16x128xbf16>,
    %c0_67 = arith.constant 0 : index
    %c9 = arith.constant 9 : index
    %c0_68 = arith.constant 0 : index
    %75 = vector.load %arg15[%c0_67, %c9, %c0_68] : memref<2x32x128xbf16, #tpu.memory_space<vmem>>, vector<1x16x128xbf16>
    %76 = vector.shape_cast %75 : vector<1x16x128xbf16> to vector<16x128xbf16>
    %c0_69 = arith.constant 0 : index
    %c256_70 = arith.constant 256 : index
    %77 = vector.load %arg16[%c0_69, %c256_70] : memref<32x384xbf16, #tpu.memory_space<vmem>>, vector<16x128xbf16>
    tpu.vector_store %arg16[%c0_69, %c256_70], %76 {strides = array<i32>} : memref<32x384xbf16, #tpu.memory_space<vmem>>, vector<16x128xbf16>,
    %78 = vector.extract_strided_slice %66 {offsets = [16, 0], sizes = [16, 128], strides = [1, 1]} : vector<32x128xbf16> to vector<16x128xbf16>
    %c1_71 = arith.constant 1 : index
    %c8_72 = arith.constant 8 : index
    %c0_73 = arith.constant 0 : index
    %79 = vector.load %arg15[%c1_71, %c8_72, %c0_73] : memref<2x32x128xbf16, #tpu.memory_space<vmem>>, vector<1x16x128xbf16>
    %80 = vector.shape_cast %79 : vector<1x16x128xbf16> to vector<16x128xbf16>
    %81 = vector.shape_cast %78 : vector<16x128xbf16> to vector<1x16x128xbf16>
    tpu.vector_store %arg15[%c1_71, %c8_72, %c0_73], %81 {strides = array<i32>} : memref<2x32x128xbf16, #tpu.memory_space<vmem>>, vector<1x16x128xbf16>,
    %c1_74 = arith.constant 1 : index
    %c7_75 = arith.constant 7 : index
    %c0_76 = arith.constant 0 : index
    %82 = vector.load %arg15[%c1_74, %c7_75, %c0_76] : memref<2x32x128xbf16, #tpu.memory_space<vmem>>, vector<1x16x128xbf16>
    %83 = vector.shape_cast %82 : vector<1x16x128xbf16> to vector<16x128xbf16>
    %c16_77 = arith.constant 16 : index
    %c0_78 = arith.constant 0 : index
    %84 = vector.load %arg16[%c16_77, %c0_78] : memref<32x384xbf16, #tpu.memory_space<vmem>>, vector<16x128xbf16>
    tpu.vector_store %arg16[%c16_77, %c0_78], %83 {strides = array<i32>} : memref<32x384xbf16, #tpu.memory_space<vmem>>, vector<16x128xbf16>,
    %c1_79 = arith.constant 1 : index
    %c9_80 = arith.constant 9 : index
    %c0_81 = arith.constant 0 : index
    %85 = vector.load %arg15[%c1_79, %c9_80, %c0_81] : memref<2x32x128xbf16, #tpu.memory_space<vmem>>, vector<1x16x128xbf16>
    %86 = vector.shape_cast %85 : vector<1x16x128xbf16> to vector<16x128xbf16>
    %c16_82 = arith.constant 16 : index
    %c256_83 = arith.constant 256 : index
    %87 = vector.load %arg16[%c16_82, %c256_83] : memref<32x384xbf16, #tpu.memory_space<vmem>>, vector<16x128xbf16>
    tpu.vector_store %arg16[%c16_82, %c256_83], %86 {strides = array<i32>} : memref<32x384xbf16, #tpu.memory_space<vmem>>, vector<16x128xbf16>,
    %c0_84 = arith.constant 0 : index
    %c0_85 = arith.constant 0 : index
    %88 = vector.load %arg16[%c0_84, %c0_85] : memref<32x384xbf16, #tpu.memory_space<vmem>>, vector<32x384xbf16>
    %c1_86 = arith.constant 1 : index
    %c0_87 = arith.constant 0 : index
    %c0_88 = arith.constant 0 : index
    %89 = vector.load %arg4[%c1_86, %c0_87, %c0_88] : memref<4x384x128xbf16, #tpu.memory_space<vmem>>, vector<1x384x128xbf16>
    %90 = vector.shape_cast %89 : vector<1x384x128xbf16> to vector<384x128xbf16>
    %cst_89 = arith.constant dense<0.000000e+00> : vector<32x128xf32>
    %91 = tpu.matmul %88, %90, %cst_89 {dimension_numbers = #tpu.dot_dimension_numbers<[1], [0], [0], [1], [0, 0, 1, 1], [], []>} : vector<32x384xbf16>, vector<384x128xbf16>, vector<32x128xf32> -> vector<32x128xf32>
    %c1_90 = arith.constant 1 : index
    %c0_91 = arith.constant 0 : index
    %c0_92 = arith.constant 0 : index
    %92 = vector.load %arg5[%c1_90, %c0_91, %c0_92] : memref<4x1x128xf32, #tpu.memory_space<vmem>>, vector<1x1x128xf32>
    %93 = vector.shape_cast %92 : vector<1x1x128xf32> to vector<1x128xf32>
    %94 = vector.broadcast %93 : vector<1x128xf32> to vector<32x128xf32>
    %95 = arith.addf %91, %94 : vector<32x128xf32>
    %cst_93 = arith.constant 0.000000e+00 : f32
    %96 = vector.broadcast %cst_93 : f32 to vector<32x128xf32>
    %97 = arith.maximumf %95, %96 : vector<32x128xf32>
    %98 = arith.truncf %97 : vector<32x128xf32> to vector<32x128xbf16>
    %c1_94 = arith.constant 1 : index
    %c0_95 = arith.constant 0 : index
    %c0_96 = arith.constant 0 : index
    %99 = vector.load %arg6[%c1_94, %c0_95, %c0_96] : memref<4x128x128xbf16, #tpu.memory_space<vmem>>, vector<1x128x128xbf16>
    %100 = vector.shape_cast %99 : vector<1x128x128xbf16> to vector<128x128xbf16>
    %cst_97 = arith.constant dense<0.000000e+00> : vector<32x128xf32>
    %101 = tpu.matmul %98, %100, %cst_97 {dimension_numbers = #tpu.dot_dimension_numbers<[1], [0], [0], [1], [0, 0, 1, 1], [], []>} : vector<32x128xbf16>, vector<128x128xbf16>, vector<32x128xf32> -> vector<32x128xf32>
    %102 = arith.addf %63, %101 : vector<32x128xf32>
    %c1_98 = arith.constant 1 : index
    %c0_99 = arith.constant 0 : index
    %c0_100 = arith.constant 0 : index
    %103 = vector.load %arg7[%c1_98, %c0_99, %c0_100] : memref<4x1x128xf32, #tpu.memory_space<vmem>>, vector<1x1x128xf32>
    %104 = vector.shape_cast %103 : vector<1x1x128xf32> to vector<1x128xf32>
    %105 = vector.broadcast %104 : vector<1x128xf32> to vector<32x128xf32>
    %106 = arith.addf %102, %105 : vector<32x128xf32>
    %c0_101 = arith.constant 0 : index
    %c0_102 = arith.constant 0 : index
    %c0_103 = arith.constant 0 : index
    %107 = vector.load %arg8[%c0_101, %c0_102, %c0_103] : memref<2x128x128xbf16, #tpu.memory_space<vmem>>, vector<1x128x128xbf16>
    %108 = vector.shape_cast %107 : vector<1x128x128xbf16> to vector<128x128xbf16>
    %109 = arith.truncf %106 : vector<32x128xf32> to vector<32x128xbf16>
    %cst_104 = arith.constant dense<0.000000e+00> : vector<32x128xf32>
    %110 = tpu.matmul %109, %108, %cst_104 {dimension_numbers = #tpu.dot_dimension_numbers<[1], [0], [0], [1], [0, 0, 1, 1], [], []>} : vector<32x128xbf16>, vector<128x128xbf16>, vector<32x128xf32> -> vector<32x128xf32>
    %c0_105 = arith.constant 0 : index
    %c0_106 = arith.constant 0 : index
    %c0_107 = arith.constant 0 : index
    %111 = vector.load %arg9[%c0_105, %c0_106, %c0_107] : memref<2x1x128xf32, #tpu.memory_space<vmem>>, vector<1x1x128xf32>
    %112 = vector.shape_cast %111 : vector<1x1x128xf32> to vector<1x128xf32>
    %113 = vector.broadcast %112 : vector<1x128xf32> to vector<32x128xf32>
    %114 = arith.addf %110, %113 : vector<32x128xf32>
    %cst_108 = arith.constant 0.000000e+00 : f32
    %115 = vector.broadcast %cst_108 : f32 to vector<32x128xf32>
    %116 = arith.maximumf %114, %115 : vector<32x128xf32>
    %117 = arith.truncf %116 : vector<32x128xf32> to vector<32x128xbf16>
    %c0_109 = arith.constant 0 : index
    %c128_110 = arith.constant 128 : index
    %118 = vector.load %arg16[%c0_109, %c128_110] : memref<32x384xbf16, #tpu.memory_space<vmem>>, vector<32x128xbf16>
    tpu.vector_store %arg16[%c0_109, %c128_110], %117 {strides = array<i32>} : memref<32x384xbf16, #tpu.memory_space<vmem>>, vector<32x128xbf16>,
    %119 = vector.extract_strided_slice %117 {offsets = [0, 0], sizes = [16, 128], strides = [1, 1]} : vector<32x128xbf16> to vector<16x128xbf16>
    %c0_111 = arith.constant 0 : index
    %c8_112 = arith.constant 8 : index
    %c0_113 = arith.constant 0 : index
    %120 = vector.load %arg15[%c0_111, %c8_112, %c0_113] : memref<2x32x128xbf16, #tpu.memory_space<vmem>>, vector<1x16x128xbf16>
    %121 = vector.shape_cast %120 : vector<1x16x128xbf16> to vector<16x128xbf16>
    %122 = vector.shape_cast %119 : vector<16x128xbf16> to vector<1x16x128xbf16>
    tpu.vector_store %arg15[%c0_111, %c8_112, %c0_113], %122 {strides = array<i32>} : memref<2x32x128xbf16, #tpu.memory_space<vmem>>, vector<1x16x128xbf16>,
    %c0_114 = arith.constant 0 : index
    %c5_115 = arith.constant 5 : index
    %c0_116 = arith.constant 0 : index
    %123 = vector.load %arg15[%c0_114, %c5_115, %c0_116] : memref<2x32x128xbf16, #tpu.memory_space<vmem>>, vector<1x16x128xbf16>
    %124 = vector.shape_cast %123 : vector<1x16x128xbf16> to vector<16x128xbf16>
    %c0_117 = arith.constant 0 : index
    %c0_118 = arith.constant 0 : index
    %125 = vector.load %arg16[%c0_117, %c0_118] : memref<32x384xbf16, #tpu.memory_space<vmem>>, vector<16x128xbf16>
    tpu.vector_store %arg16[%c0_117, %c0_118], %124 {strides = array<i32>} : memref<32x384xbf16, #tpu.memory_space<vmem>>, vector<16x128xbf16>,
    %c0_119 = arith.constant 0 : index
    %c11_120 = arith.constant 11 : index
    %c0_121 = arith.constant 0 : index
    %126 = vector.load %arg15[%c0_119, %c11_120, %c0_121] : memref<2x32x128xbf16, #tpu.memory_space<vmem>>, vector<1x16x128xbf16>
    %127 = vector.shape_cast %126 : vector<1x16x128xbf16> to vector<16x128xbf16>
    %c0_122 = arith.constant 0 : index
    %c256_123 = arith.constant 256 : index
    %128 = vector.load %arg16[%c0_122, %c256_123] : memref<32x384xbf16, #tpu.memory_space<vmem>>, vector<16x128xbf16>
    tpu.vector_store %arg16[%c0_122, %c256_123], %127 {strides = array<i32>} : memref<32x384xbf16, #tpu.memory_space<vmem>>, vector<16x128xbf16>,
    %129 = vector.extract_strided_slice %117 {offsets = [16, 0], sizes = [16, 128], strides = [1, 1]} : vector<32x128xbf16> to vector<16x128xbf16>
    %c1_124 = arith.constant 1 : index
    %c8_125 = arith.constant 8 : index
    %c0_126 = arith.constant 0 : index
    %130 = vector.load %arg15[%c1_124, %c8_125, %c0_126] : memref<2x32x128xbf16, #tpu.memory_space<vmem>>, vector<1x16x128xbf16>
    %131 = vector.shape_cast %130 : vector<1x16x128xbf16> to vector<16x128xbf16>
    %132 = vector.shape_cast %129 : vector<16x128xbf16> to vector<1x16x128xbf16>
    tpu.vector_store %arg15[%c1_124, %c8_125, %c0_126], %132 {strides = array<i32>} : memref<2x32x128xbf16, #tpu.memory_space<vmem>>, vector<1x16x128xbf16>,
    %c1_127 = arith.constant 1 : index
    %c5_128 = arith.constant 5 : index
    %c0_129 = arith.constant 0 : index
    %133 = vector.load %arg15[%c1_127, %c5_128, %c0_129] : memref<2x32x128xbf16, #tpu.memory_space<vmem>>, vector<1x16x128xbf16>
    %134 = vector.shape_cast %133 : vector<1x16x128xbf16> to vector<16x128xbf16>
    %c16_130 = arith.constant 16 : index
    %c0_131 = arith.constant 0 : index
    %135 = vector.load %arg16[%c16_130, %c0_131] : memref<32x384xbf16, #tpu.memory_space<vmem>>, vector<16x128xbf16>
    tpu.vector_store %arg16[%c16_130, %c0_131], %134 {strides = array<i32>} : memref<32x384xbf16, #tpu.memory_space<vmem>>, vector<16x128xbf16>,
    %c1_132 = arith.constant 1 : index
    %c11_133 = arith.constant 11 : index
    %c0_134 = arith.constant 0 : index
    %136 = vector.load %arg15[%c1_132, %c11_133, %c0_134] : memref<2x32x128xbf16, #tpu.memory_space<vmem>>, vector<1x16x128xbf16>
    %137 = vector.shape_cast %136 : vector<1x16x128xbf16> to vector<16x128xbf16>
    %c16_135 = arith.constant 16 : index
    %c256_136 = arith.constant 256 : index
    %138 = vector.load %arg16[%c16_135, %c256_136] : memref<32x384xbf16, #tpu.memory_space<vmem>>, vector<16x128xbf16>
    tpu.vector_store %arg16[%c16_135, %c256_136], %137 {strides = array<i32>} : memref<32x384xbf16, #tpu.memory_space<vmem>>, vector<16x128xbf16>,
    %c0_137 = arith.constant 0 : index
    %c0_138 = arith.constant 0 : index
    %139 = vector.load %arg16[%c0_137, %c0_138] : memref<32x384xbf16, #tpu.memory_space<vmem>>, vector<32x384xbf16>
    %c2 = arith.constant 2 : index
    %c0_139 = arith.constant 0 : index
    %c0_140 = arith.constant 0 : index
    %140 = vector.load %arg4[%c2, %c0_139, %c0_140] : memref<4x384x128xbf16, #tpu.memory_space<vmem>>, vector<1x384x128xbf16>
    %141 = vector.shape_cast %140 : vector<1x384x128xbf16> to vector<384x128xbf16>
    %cst_141 = arith.constant dense<0.000000e+00> : vector<32x128xf32>
    %142 = tpu.matmul %139, %141, %cst_141 {dimension_numbers = #tpu.dot_dimension_numbers<[1], [0], [0], [1], [0, 0, 1, 1], [], []>} : vector<32x384xbf16>, vector<384x128xbf16>, vector<32x128xf32> -> vector<32x128xf32>
    %c2_142 = arith.constant 2 : index
    %c0_143 = arith.constant 0 : index
    %c0_144 = arith.constant 0 : index
    %143 = vector.load %arg5[%c2_142, %c0_143, %c0_144] : memref<4x1x128xf32, #tpu.memory_space<vmem>>, vector<1x1x128xf32>
    %144 = vector.shape_cast %143 : vector<1x1x128xf32> to vector<1x128xf32>
    %145 = vector.broadcast %144 : vector<1x128xf32> to vector<32x128xf32>
    %146 = arith.addf %142, %145 : vector<32x128xf32>
    %cst_145 = arith.constant 0.000000e+00 : f32
    %147 = vector.broadcast %cst_145 : f32 to vector<32x128xf32>
    %148 = arith.maximumf %146, %147 : vector<32x128xf32>
    %149 = arith.truncf %148 : vector<32x128xf32> to vector<32x128xbf16>
    %c2_146 = arith.constant 2 : index
    %c0_147 = arith.constant 0 : index
    %c0_148 = arith.constant 0 : index
    %150 = vector.load %arg6[%c2_146, %c0_147, %c0_148] : memref<4x128x128xbf16, #tpu.memory_space<vmem>>, vector<1x128x128xbf16>
    %151 = vector.shape_cast %150 : vector<1x128x128xbf16> to vector<128x128xbf16>
    %cst_149 = arith.constant dense<0.000000e+00> : vector<32x128xf32>
    %152 = tpu.matmul %149, %151, %cst_149 {dimension_numbers = #tpu.dot_dimension_numbers<[1], [0], [0], [1], [0, 0, 1, 1], [], []>} : vector<32x128xbf16>, vector<128x128xbf16>, vector<32x128xf32> -> vector<32x128xf32>
    %153 = arith.addf %114, %152 : vector<32x128xf32>
    %c2_150 = arith.constant 2 : index
    %c0_151 = arith.constant 0 : index
    %c0_152 = arith.constant 0 : index
    %154 = vector.load %arg7[%c2_150, %c0_151, %c0_152] : memref<4x1x128xf32, #tpu.memory_space<vmem>>, vector<1x1x128xf32>
    %155 = vector.shape_cast %154 : vector<1x1x128xf32> to vector<1x128xf32>
    %156 = vector.broadcast %155 : vector<1x128xf32> to vector<32x128xf32>
    %157 = arith.addf %153, %156 : vector<32x128xf32>
    %cst_153 = arith.constant 0.000000e+00 : f32
    %158 = vector.broadcast %cst_153 : f32 to vector<32x128xf32>
    %159 = arith.maximumf %157, %158 : vector<32x128xf32>
    %160 = arith.truncf %159 : vector<32x128xf32> to vector<32x128xbf16>
    %c0_154 = arith.constant 0 : index
    %c128_155 = arith.constant 128 : index
    %161 = vector.load %arg16[%c0_154, %c128_155] : memref<32x384xbf16, #tpu.memory_space<vmem>>, vector<32x128xbf16>
    tpu.vector_store %arg16[%c0_154, %c128_155], %160 {strides = array<i32>} : memref<32x384xbf16, #tpu.memory_space<vmem>>, vector<32x128xbf16>,
    %162 = vector.extract_strided_slice %160 {offsets = [0, 0], sizes = [16, 128], strides = [1, 1]} : vector<32x128xbf16> to vector<16x128xbf16>
    %c0_156 = arith.constant 0 : index
    %c8_157 = arith.constant 8 : index
    %c0_158 = arith.constant 0 : index
    %163 = vector.load %arg15[%c0_156, %c8_157, %c0_158] : memref<2x32x128xbf16, #tpu.memory_space<vmem>>, vector<1x16x128xbf16>
    %164 = vector.shape_cast %163 : vector<1x16x128xbf16> to vector<16x128xbf16>
    %165 = vector.shape_cast %162 : vector<16x128xbf16> to vector<1x16x128xbf16>
    tpu.vector_store %arg15[%c0_156, %c8_157, %c0_158], %165 {strides = array<i32>} : memref<2x32x128xbf16, #tpu.memory_space<vmem>>, vector<1x16x128xbf16>,
    %c0_159 = arith.constant 0 : index
    %c7_160 = arith.constant 7 : index
    %c0_161 = arith.constant 0 : index
    %166 = vector.load %arg15[%c0_159, %c7_160, %c0_161] : memref<2x32x128xbf16, #tpu.memory_space<vmem>>, vector<1x16x128xbf16>
    %167 = vector.shape_cast %166 : vector<1x16x128xbf16> to vector<16x128xbf16>
    %c0_162 = arith.constant 0 : index
    %c0_163 = arith.constant 0 : index
    %168 = vector.load %arg16[%c0_162, %c0_163] : memref<32x384xbf16, #tpu.memory_space<vmem>>, vector<16x128xbf16>
    tpu.vector_store %arg16[%c0_162, %c0_163], %167 {strides = array<i32>} : memref<32x384xbf16, #tpu.memory_space<vmem>>, vector<16x128xbf16>,
    %c0_164 = arith.constant 0 : index
    %c9_165 = arith.constant 9 : index
    %c0_166 = arith.constant 0 : index
    %169 = vector.load %arg15[%c0_164, %c9_165, %c0_166] : memref<2x32x128xbf16, #tpu.memory_space<vmem>>, vector<1x16x128xbf16>
    %170 = vector.shape_cast %169 : vector<1x16x128xbf16> to vector<16x128xbf16>
    %c0_167 = arith.constant 0 : index
    %c256_168 = arith.constant 256 : index
    %171 = vector.load %arg16[%c0_167, %c256_168] : memref<32x384xbf16, #tpu.memory_space<vmem>>, vector<16x128xbf16>
    tpu.vector_store %arg16[%c0_167, %c256_168], %170 {strides = array<i32>} : memref<32x384xbf16, #tpu.memory_space<vmem>>, vector<16x128xbf16>,
    %172 = vector.extract_strided_slice %160 {offsets = [16, 0], sizes = [16, 128], strides = [1, 1]} : vector<32x128xbf16> to vector<16x128xbf16>
    %c1_169 = arith.constant 1 : index
    %c8_170 = arith.constant 8 : index
    %c0_171 = arith.constant 0 : index
    %173 = vector.load %arg15[%c1_169, %c8_170, %c0_171] : memref<2x32x128xbf16, #tpu.memory_space<vmem>>, vector<1x16x128xbf16>
    %174 = vector.shape_cast %173 : vector<1x16x128xbf16> to vector<16x128xbf16>
    %175 = vector.shape_cast %172 : vector<16x128xbf16> to vector<1x16x128xbf16>
    tpu.vector_store %arg15[%c1_169, %c8_170, %c0_171], %175 {strides = array<i32>} : memref<2x32x128xbf16, #tpu.memory_space<vmem>>, vector<1x16x128xbf16>,
    %c1_172 = arith.constant 1 : index
    %c7_173 = arith.constant 7 : index
    %c0_174 = arith.constant 0 : index
    %176 = vector.load %arg15[%c1_172, %c7_173, %c0_174] : memref<2x32x128xbf16, #tpu.memory_space<vmem>>, vector<1x16x128xbf16>
    %177 = vector.shape_cast %176 : vector<1x16x128xbf16> to vector<16x128xbf16>
    %c16_175 = arith.constant 16 : index
    %c0_176 = arith.constant 0 : index
    %178 = vector.load %arg16[%c16_175, %c0_176] : memref<32x384xbf16, #tpu.memory_space<vmem>>, vector<16x128xbf16>
    tpu.vector_store %arg16[%c16_175, %c0_176], %177 {strides = array<i32>} : memref<32x384xbf16, #tpu.memory_space<vmem>>, vector<16x128xbf16>,
    %c1_177 = arith.constant 1 : index
    %c9_178 = arith.constant 9 : index
    %c0_179 = arith.constant 0 : index
    %179 = vector.load %arg15[%c1_177, %c9_178, %c0_179] : memref<2x32x128xbf16, #tpu.memory_space<vmem>>, vector<1x16x128xbf16>
    %180 = vector.shape_cast %179 : vector<1x16x128xbf16> to vector<16x128xbf16>
    %c16_180 = arith.constant 16 : index
    %c256_181 = arith.constant 256 : index
    %181 = vector.load %arg16[%c16_180, %c256_181] : memref<32x384xbf16, #tpu.memory_space<vmem>>, vector<16x128xbf16>
    tpu.vector_store %arg16[%c16_180, %c256_181], %180 {strides = array<i32>} : memref<32x384xbf16, #tpu.memory_space<vmem>>, vector<16x128xbf16>,
    %c0_182 = arith.constant 0 : index
    %c0_183 = arith.constant 0 : index
    %182 = vector.load %arg16[%c0_182, %c0_183] : memref<32x384xbf16, #tpu.memory_space<vmem>>, vector<32x384xbf16>
    %c3 = arith.constant 3 : index
    %c0_184 = arith.constant 0 : index
    %c0_185 = arith.constant 0 : index
    %183 = vector.load %arg4[%c3, %c0_184, %c0_185] : memref<4x384x128xbf16, #tpu.memory_space<vmem>>, vector<1x384x128xbf16>
    %184 = vector.shape_cast %183 : vector<1x384x128xbf16> to vector<384x128xbf16>
    %cst_186 = arith.constant dense<0.000000e+00> : vector<32x128xf32>
    %185 = tpu.matmul %182, %184, %cst_186 {dimension_numbers = #tpu.dot_dimension_numbers<[1], [0], [0], [1], [0, 0, 1, 1], [], []>} : vector<32x384xbf16>, vector<384x128xbf16>, vector<32x128xf32> -> vector<32x128xf32>
    %c3_187 = arith.constant 3 : index
    %c0_188 = arith.constant 0 : index
    %c0_189 = arith.constant 0 : index
    %186 = vector.load %arg5[%c3_187, %c0_188, %c0_189] : memref<4x1x128xf32, #tpu.memory_space<vmem>>, vector<1x1x128xf32>
    %187 = vector.shape_cast %186 : vector<1x1x128xf32> to vector<1x128xf32>
    %188 = vector.broadcast %187 : vector<1x128xf32> to vector<32x128xf32>
    %189 = arith.addf %185, %188 : vector<32x128xf32>
    %cst_190 = arith.constant 0.000000e+00 : f32
    %190 = vector.broadcast %cst_190 : f32 to vector<32x128xf32>
    %191 = arith.maximumf %189, %190 : vector<32x128xf32>
    %192 = arith.truncf %191 : vector<32x128xf32> to vector<32x128xbf16>
    %c3_191 = arith.constant 3 : index
    %c0_192 = arith.constant 0 : index
    %c0_193 = arith.constant 0 : index
    %193 = vector.load %arg6[%c3_191, %c0_192, %c0_193] : memref<4x128x128xbf16, #tpu.memory_space<vmem>>, vector<1x128x128xbf16>
    %194 = vector.shape_cast %193 : vector<1x128x128xbf16> to vector<128x128xbf16>
    %cst_194 = arith.constant dense<0.000000e+00> : vector<32x128xf32>
    %195 = tpu.matmul %192, %194, %cst_194 {dimension_numbers = #tpu.dot_dimension_numbers<[1], [0], [0], [1], [0, 0, 1, 1], [], []>} : vector<32x128xbf16>, vector<128x128xbf16>, vector<32x128xf32> -> vector<32x128xf32>
    %196 = arith.addf %157, %195 : vector<32x128xf32>
    %c3_195 = arith.constant 3 : index
    %c0_196 = arith.constant 0 : index
    %c0_197 = arith.constant 0 : index
    %197 = vector.load %arg7[%c3_195, %c0_196, %c0_197] : memref<4x1x128xf32, #tpu.memory_space<vmem>>, vector<1x1x128xf32>
    %198 = vector.shape_cast %197 : vector<1x1x128xf32> to vector<1x128xf32>
    %199 = vector.broadcast %198 : vector<1x128xf32> to vector<32x128xf32>
    %200 = arith.addf %196, %199 : vector<32x128xf32>
    %c1_198 = arith.constant 1 : index
    %c0_199 = arith.constant 0 : index
    %c0_200 = arith.constant 0 : index
    %201 = vector.load %arg8[%c1_198, %c0_199, %c0_200] : memref<2x128x128xbf16, #tpu.memory_space<vmem>>, vector<1x128x128xbf16>
    %202 = vector.shape_cast %201 : vector<1x128x128xbf16> to vector<128x128xbf16>
    %203 = arith.truncf %200 : vector<32x128xf32> to vector<32x128xbf16>
    %cst_201 = arith.constant dense<0.000000e+00> : vector<32x128xf32>
    %204 = tpu.matmul %203, %202, %cst_201 {dimension_numbers = #tpu.dot_dimension_numbers<[1], [0], [0], [1], [0, 0, 1, 1], [], []>} : vector<32x128xbf16>, vector<128x128xbf16>, vector<32x128xf32> -> vector<32x128xf32>
    %c1_202 = arith.constant 1 : index
    %c0_203 = arith.constant 0 : index
    %c0_204 = arith.constant 0 : index
    %205 = vector.load %arg9[%c1_202, %c0_203, %c0_204] : memref<2x1x128xf32, #tpu.memory_space<vmem>>, vector<1x1x128xf32>
    %206 = vector.shape_cast %205 : vector<1x1x128xf32> to vector<1x128xf32>
    %207 = vector.broadcast %206 : vector<1x128xf32> to vector<32x128xf32>
    %208 = arith.addf %204, %207 : vector<32x128xf32>
    %c0_205 = arith.constant 0 : index
    %c0_206 = arith.constant 0 : index
    %209 = vector.load %arg10[%c0_205, %c0_206] : memref<128x128xbf16, #tpu.memory_space<vmem>>, vector<128x128xbf16>
    %210 = arith.truncf %208 : vector<32x128xf32> to vector<32x128xbf16>
    %cst_207 = arith.constant dense<0.000000e+00> : vector<32x128xf32>
    %211 = tpu.matmul %210, %209, %cst_207 {dimension_numbers = #tpu.dot_dimension_numbers<[1], [0], [0], [1], [0, 0, 1, 1], [], []>} : vector<32x128xbf16>, vector<128x128xbf16>, vector<32x128xf32> -> vector<32x128xf32>
    %c0_208 = arith.constant 0 : index
    %c0_209 = arith.constant 0 : index
    %212 = vector.load %arg11[%c0_208, %c0_209] : memref<1x128xf32, #tpu.memory_space<vmem>>, vector<1x128xf32>
    %213 = vector.broadcast %212 : vector<1x128xf32> to vector<32x128xf32>
    %214 = arith.addf %211, %213 : vector<32x128xf32>
    %cst_210 = arith.constant 0.000000e+00 : f32
    %215 = vector.broadcast %cst_210 : f32 to vector<32x128xf32>
    %216 = arith.maximumf %214, %215 : vector<32x128xf32>
    %c0_211 = arith.constant 0 : index
    %c0_212 = arith.constant 0 : index
    %217 = vector.load %arg12[%c0_211, %c0_212] : memref<128x128xbf16, #tpu.memory_space<vmem>>, vector<128x128xbf16>
    %218 = arith.truncf %216 : vector<32x128xf32> to vector<32x128xbf16>
    %cst_213 = arith.constant dense<0.000000e+00> : vector<32x128xf32>
    %219 = tpu.matmul %218, %217, %cst_213 {dimension_numbers = #tpu.dot_dimension_numbers<[1], [0], [0], [1], [0, 0, 1, 1], [], []>} : vector<32x128xbf16>, vector<128x128xbf16>, vector<32x128xf32> -> vector<32x128xf32>
    %c0_214 = arith.constant 0 : index
    %c0_215 = arith.constant 0 : index
    %220 = vector.load %arg13[%c0_214, %c0_215] : memref<1x128xf32, #tpu.memory_space<vmem>>, vector<1x128xf32>
    %221 = vector.broadcast %220 : vector<1x128xf32> to vector<32x128xf32>
    %222 = arith.addf %219, %221 : vector<32x128xf32>
    %c0_216 = arith.constant 0 : index
    %c0_217 = arith.constant 0 : index
    %223 = vector.load %arg14[%c0_216, %c0_217] : memref<32x128xf32, #tpu.memory_space<vmem>>, vector<32x128xf32>
    tpu.vector_store %arg14[%c0_216, %c0_217], %222 {strides = array<i32>} : memref<32x128xf32, #tpu.memory_space<vmem>>, vector<32x128xf32>,
    return
  }
  func.func @transform_0(%arg0: i32) -> (i32, i32) {
    %c0_i32 = arith.constant 0 : i32
    %c0_i32_0 = arith.constant 0 : i32
    return %arg0, %c0_i32 : i32, i32
  }
  func.func @transform_1(%arg0: i32) -> (i32, i32) {
    %c0_i32 = arith.constant 0 : i32
    %c0_i32_0 = arith.constant 0 : i32
    %c0_i32_1 = arith.constant 0 : i32
    return %c0_i32, %c0_i32_0 : i32, i32
  }
  func.func @transform_2(%arg0: i32) -> (i32, i32) {
    %c0_i32 = arith.constant 0 : i32
    %c0_i32_0 = arith.constant 0 : i32
    %c0_i32_1 = arith.constant 0 : i32
    return %c0_i32, %c0_i32_0 : i32, i32
  }
  func.func @transform_3(%arg0: i32) -> (i32, i32, i32) {
    %c0_i32 = arith.constant 0 : i32
    %c0_i32_0 = arith.constant 0 : i32
    %c0_i32_1 = arith.constant 0 : i32
    %c0_i32_2 = arith.constant 0 : i32
    return %c0_i32, %c0_i32_0, %c0_i32_1 : i32, i32, i32
  }
  func.func @transform_4(%arg0: i32) -> (i32, i32, i32) {
    %c0_i32 = arith.constant 0 : i32
    %c0_i32_0 = arith.constant 0 : i32
    %c0_i32_1 = arith.constant 0 : i32
    %c0_i32_2 = arith.constant 0 : i32
    return %c0_i32, %c0_i32_0, %c0_i32_1 : i32, i32, i32
  }
  func.func @transform_5(%arg0: i32) -> (i32, i32, i32) {
    %c0_i32 = arith.constant 0 : i32
    %c0_i32_0 = arith.constant 0 : i32
    %c0_i32_1 = arith.constant 0 : i32
    %c0_i32_2 = arith.constant 0 : i32
    return %c0_i32, %c0_i32_0, %c0_i32_1 : i32, i32, i32
  }
  func.func @transform_6(%arg0: i32) -> (i32, i32, i32) {
    %c0_i32 = arith.constant 0 : i32
    %c0_i32_0 = arith.constant 0 : i32
    %c0_i32_1 = arith.constant 0 : i32
    %c0_i32_2 = arith.constant 0 : i32
    return %c0_i32, %c0_i32_0, %c0_i32_1 : i32, i32, i32
  }
  func.func @transform_7(%arg0: i32) -> (i32, i32, i32) {
    %c0_i32 = arith.constant 0 : i32
    %c0_i32_0 = arith.constant 0 : i32
    %c0_i32_1 = arith.constant 0 : i32
    %c0_i32_2 = arith.constant 0 : i32
    return %c0_i32, %c0_i32_0, %c0_i32_1 : i32, i32, i32
  }
  func.func @transform_8(%arg0: i32) -> (i32, i32, i32) {
    %c0_i32 = arith.constant 0 : i32
    %c0_i32_0 = arith.constant 0 : i32
    %c0_i32_1 = arith.constant 0 : i32
    %c0_i32_2 = arith.constant 0 : i32
    return %c0_i32, %c0_i32_0, %c0_i32_1 : i32, i32, i32
  }
  func.func @transform_9(%arg0: i32) -> (i32, i32) {
    %c0_i32 = arith.constant 0 : i32
    %c0_i32_0 = arith.constant 0 : i32
    %c0_i32_1 = arith.constant 0 : i32
    return %c0_i32, %c0_i32_0 : i32, i32
  }
  func.func @transform_10(%arg0: i32) -> (i32, i32) {
    %c0_i32 = arith.constant 0 : i32
    %c0_i32_0 = arith.constant 0 : i32
    %c0_i32_1 = arith.constant 0 : i32
    return %c0_i32, %c0_i32_0 : i32, i32
  }
  func.func @transform_11(%arg0: i32) -> (i32, i32) {
    %c0_i32 = arith.constant 0 : i32
    %c0_i32_0 = arith.constant 0 : i32
    %c0_i32_1 = arith.constant 0 : i32
    return %c0_i32, %c0_i32_0 : i32, i32
  }
  func.func @transform_12(%arg0: i32) -> (i32, i32) {
    %c0_i32 = arith.constant 0 : i32
    %c0_i32_0 = arith.constant 0 : i32
    %c0_i32_1 = arith.constant 0 : i32
    return %c0_i32, %c0_i32_0 : i32, i32
  }
  func.func @transform_13(%arg0: i32) -> (i32, i32) {
    %c0_i32 = arith.constant 0 : i32
    %c0_i32_0 = arith.constant 0 : i32
    return %arg0, %c0_i32 : i32, i32
  }
}

module attributes {stable_mosaic.version = 11 : i64} {
  func.func @_decoder_kernel(%arg0: i32, %arg1: memref<32x128xbf16, #tpu.memory_space<vmem>>, %arg2: memref<128x128xbf16, #tpu.memory_space<vmem>>, %arg3: memref<1x128xf32, #tpu.memory_space<vmem>>, %arg4: memref<4x384x128xbf16, #tpu.memory_space<vmem>>, %arg5: memref<4x1x128xf32, #tpu.memory_space<vmem>>, %arg6: memref<4x128x128xbf16, #tpu.memory_space<vmem>>, %arg7: memref<4x1x128xf32, #tpu.memory_space<vmem>>, %arg8: memref<2x128x128xbf16, #tpu.memory_space<vmem>>, %arg9: memref<2x1x128xf32, #tpu.memory_space<vmem>>, %arg10: memref<128x128xbf16, #tpu.memory_space<vmem>>, %arg11: memref<1x128xf32, #tpu.memory_space<vmem>>, %arg12: memref<128x128xbf16, #tpu.memory_space<vmem>>, %arg13: memref<1x128xf32, #tpu.memory_space<vmem>>, %arg14: memref<32x128xf32, #tpu.memory_space<vmem>>, %arg15: memref<2x32x128xbf16, #tpu.memory_space<vmem>>, %arg16: memref<32x384xbf16, #tpu.memory_space<vmem>>) attributes {dimension_semantics = [#tpu.dimension_semantics<parallel>], iteration_bounds = array<i64: 2>, scalar_prefetch = 0 : i64, scratch_operands = 2 : i64, tpu.core_type = #tpu.core_type<tc>, window_params = [{transform_indices = @transform_0, window_bounds = array<i64: 32, 128>}, {pipeline_mode = #tpu.pipeline_mode<synchronous>, transform_indices = @transform_1, window_bounds = array<i64: 128, 128>}, {pipeline_mode = #tpu.pipeline_mode<synchronous>, transform_indices = @transform_2, window_bounds = array<i64: 1, 128>}, {pipeline_mode = #tpu.pipeline_mode<synchronous>, transform_indices = @transform_3, window_bounds = array<i64: 4, 384, 128>}, {pipeline_mode = #tpu.pipeline_mode<synchronous>, transform_indices = @transform_4, window_bounds = array<i64: 4, 1, 128>}, {pipeline_mode = #tpu.pipeline_mode<synchronous>, transform_indices = @transform_5, window_bounds = array<i64: 4, 128, 128>}, {pipeline_mode = #tpu.pipeline_mode<synchronous>, transform_indices = @transform_6, window_bounds = array<i64: 4, 1, 128>}, {pipeline_mode = #tpu.pipeline_mode<synchronous>, transform_indices = @transform_7, window_bounds = array<i64: 2, 128, 128>}, {pipeline_mode = #tpu.pipeline_mode<synchronous>, transform_indices = @transform_8, window_bounds = array<i64: 2, 1, 128>}, {pipeline_mode = #tpu.pipeline_mode<synchronous>, transform_indices = @transform_9, window_bounds = array<i64: 128, 128>}, {pipeline_mode = #tpu.pipeline_mode<synchronous>, transform_indices = @transform_10, window_bounds = array<i64: 1, 128>}, {pipeline_mode = #tpu.pipeline_mode<synchronous>, transform_indices = @transform_11, window_bounds = array<i64: 128, 128>}, {pipeline_mode = #tpu.pipeline_mode<synchronous>, transform_indices = @transform_12, window_bounds = array<i64: 1, 128>}, {transform_indices = @transform_13, window_bounds = array<i64: 32, 128>}]} {
    %cst = arith.constant 0.000000e+00 : bf16
    %0 = vector.broadcast %cst : bf16 to vector<8x128xbf16>
    %c0 = arith.constant 0 : index
    %c0_0 = arith.constant 0 : index
    %c0_1 = arith.constant 0 : index
    %1 = vector.load %arg15[%c0, %c0_0, %c0_1] : memref<2x32x128xbf16, #tpu.memory_space<vmem>>, vector<1x8x128xbf16>
    %2 = vector.shape_cast %1 : vector<1x8x128xbf16> to vector<8x128xbf16>
    %3 = vector.shape_cast %0 : vector<8x128xbf16> to vector<1x8x128xbf16>
    tpu.vector_store %arg15[%c0, %c0_0, %c0_1], %3 {strides = array<i32>} : memref<2x32x128xbf16, #tpu.memory_space<vmem>>, vector<1x8x128xbf16>,
    %c0_2 = arith.constant 0 : index
    %c24 = arith.constant 24 : index
    %c0_3 = arith.constant 0 : index
    %4 = vector.load %arg15[%c0_2, %c24, %c0_3] : memref<2x32x128xbf16, #tpu.memory_space<vmem>>, vector<1x8x128xbf16>
    %5 = vector.shape_cast %4 : vector<1x8x128xbf16> to vector<8x128xbf16>
    %6 = vector.shape_cast %0 : vector<8x128xbf16> to vector<1x8x128xbf16>
    tpu.vector_store %arg15[%c0_2, %c24, %c0_3], %6 {strides = array<i32>} : memref<2x32x128xbf16, #tpu.memory_space<vmem>>, vector<1x8x128xbf16>,
    %c1 = arith.constant 1 : index
    %c0_4 = arith.constant 0 : index
    %c0_5 = arith.constant 0 : index
    %7 = vector.load %arg15[%c1, %c0_4, %c0_5] : memref<2x32x128xbf16, #tpu.memory_space<vmem>>, vector<1x8x128xbf16>
    %8 = vector.shape_cast %7 : vector<1x8x128xbf16> to vector<8x128xbf16>
    %9 = vector.shape_cast %0 : vector<8x128xbf16> to vector<1x8x128xbf16>
    tpu.vector_store %arg15[%c1, %c0_4, %c0_5], %9 {strides = array<i32>} : memref<2x32x128xbf16, #tpu.memory_space<vmem>>, vector<1x8x128xbf16>,
    %c1_6 = arith.constant 1 : index
    %c24_7 = arith.constant 24 : index
    %c0_8 = arith.constant 0 : index
    %10 = vector.load %arg15[%c1_6, %c24_7, %c0_8] : memref<2x32x128xbf16, #tpu.memory_space<vmem>>, vector<1x8x128xbf16>
    %11 = vector.shape_cast %10 : vector<1x8x128xbf16> to vector<8x128xbf16>
    %12 = vector.shape_cast %0 : vector<8x128xbf16> to vector<1x8x128xbf16>
    tpu.vector_store %arg15[%c1_6, %c24_7, %c0_8], %12 {strides = array<i32>} : memref<2x32x128xbf16, #tpu.memory_space<vmem>>, vector<1x8x128xbf16>,
    %c0_9 = arith.constant 0 : index
    %c0_10 = arith.constant 0 : index
    %13 = vector.load %arg1[%c0_9, %c0_10] : memref<32x128xbf16, #tpu.memory_space<vmem>>, vector<32x128xbf16>
    %c0_11 = arith.constant 0 : index
    %c0_12 = arith.constant 0 : index
    %14 = vector.load %arg2[%c0_11, %c0_12] : memref<128x128xbf16, #tpu.memory_space<vmem>>, vector<128x128xbf16>
    %cst_13 = arith.constant dense<0.000000e+00> : vector<32x128xf32>
    %15 = tpu.matmul %13, %14, %cst_13 {dimension_numbers = #tpu.dot_dimension_numbers<[1], [0], [0], [1], [0, 0, 1, 1], [], []>} : vector<32x128xbf16>, vector<128x128xbf16>, vector<32x128xf32> -> vector<32x128xf32>
    %c0_14 = arith.constant 0 : index
    %c0_15 = arith.constant 0 : index
    %16 = vector.load %arg3[%c0_14, %c0_15] : memref<1x128xf32, #tpu.memory_space<vmem>>, vector<1x128xf32>
    %17 = vector.broadcast %16 : vector<1x128xf32> to vector<32x128xf32>
    %18 = arith.addf %15, %17 : vector<32x128xf32>
    %cst_16 = arith.constant 0.000000e+00 : f32
    %19 = vector.broadcast %cst_16 : f32 to vector<32x128xf32>
    %20 = arith.maximumf %18, %19 : vector<32x128xf32>
    %cst_17 = arith.constant 0.000000e+00 : f32
    %21 = vector.broadcast %cst_17 : f32 to vector<32x128xf32>
    %22 = arith.maximumf %20, %21 : vector<32x128xf32>
    %23 = arith.truncf %22 : vector<32x128xf32> to vector<32x128xbf16>
    %c0_18 = arith.constant 0 : index
    %c128 = arith.constant 128 : index
    %24 = vector.load %arg16[%c0_18, %c128] : memref<32x384xbf16, #tpu.memory_space<vmem>>, vector<32x128xbf16>
    tpu.vector_store %arg16[%c0_18, %c128], %23 {strides = array<i32>} : memref<32x384xbf16, #tpu.memory_space<vmem>>, vector<32x128xbf16>,
    %25 = vector.extract_strided_slice %23 {offsets = [0, 0], sizes = [16, 128], strides = [1, 1]} : vector<32x128xbf16> to vector<16x128xbf16>
    %c0_19 = arith.constant 0 : index
    %c8 = arith.constant 8 : index
    %c0_20 = arith.constant 0 : index
    %26 = vector.load %arg15[%c0_19, %c8, %c0_20] : memref<2x32x128xbf16, #tpu.memory_space<vmem>>, vector<1x16x128xbf16>
    %27 = vector.shape_cast %26 : vector<1x16x128xbf16> to vector<16x128xbf16>
    %28 = vector.shape_cast %25 : vector<16x128xbf16> to vector<1x16x128xbf16>
    tpu.vector_store %arg15[%c0_19, %c8, %c0_20], %28 {strides = array<i32>} : memref<2x32x128xbf16, #tpu.memory_space<vmem>>, vector<1x16x128xbf16>,
    %c0_21 = arith.constant 0 : index
    %c5 = arith.constant 5 : index
    %c0_22 = arith.constant 0 : index
    %29 = vector.load %arg15[%c0_21, %c5, %c0_22] : memref<2x32x128xbf16, #tpu.memory_space<vmem>>, vector<1x16x128xbf16>
    %30 = vector.shape_cast %29 : vector<1x16x128xbf16> to vector<16x128xbf16>
    %c0_23 = arith.constant 0 : index
    %c0_24 = arith.constant 0 : index
    %31 = vector.load %arg16[%c0_23, %c0_24] : memref<32x384xbf16, #tpu.memory_space<vmem>>, vector<16x128xbf16>
    tpu.vector_store %arg16[%c0_23, %c0_24], %30 {strides = array<i32>} : memref<32x384xbf16, #tpu.memory_space<vmem>>, vector<16x128xbf16>,
    %c0_25 = arith.constant 0 : index
    %c11 = arith.constant 11 : index
    %c0_26 = arith.constant 0 : index
    %32 = vector.load %arg15[%c0_25, %c11, %c0_26] : memref<2x32x128xbf16, #tpu.memory_space<vmem>>, vector<1x16x128xbf16>
    %33 = vector.shape_cast %32 : vector<1x16x128xbf16> to vector<16x128xbf16>
    %c0_27 = arith.constant 0 : index
    %c256 = arith.constant 256 : index
    %34 = vector.load %arg16[%c0_27, %c256] : memref<32x384xbf16, #tpu.memory_space<vmem>>, vector<16x128xbf16>
    tpu.vector_store %arg16[%c0_27, %c256], %33 {strides = array<i32>} : memref<32x384xbf16, #tpu.memory_space<vmem>>, vector<16x128xbf16>,
    %35 = vector.extract_strided_slice %23 {offsets = [16, 0], sizes = [16, 128], strides = [1, 1]} : vector<32x128xbf16> to vector<16x128xbf16>
    %c1_28 = arith.constant 1 : index
    %c8_29 = arith.constant 8 : index
    %c0_30 = arith.constant 0 : index
    %36 = vector.load %arg15[%c1_28, %c8_29, %c0_30] : memref<2x32x128xbf16, #tpu.memory_space<vmem>>, vector<1x16x128xbf16>
    %37 = vector.shape_cast %36 : vector<1x16x128xbf16> to vector<16x128xbf16>
    %38 = vector.shape_cast %35 : vector<16x128xbf16> to vector<1x16x128xbf16>
    tpu.vector_store %arg15[%c1_28, %c8_29, %c0_30], %38 {strides = array<i32>} : memref<2x32x128xbf16, #tpu.memory_space<vmem>>, vector<1x16x128xbf16>,
    %c1_31 = arith.constant 1 : index
    %c5_32 = arith.constant 5 : index
    %c0_33 = arith.constant 0 : index
    %39 = vector.load %arg15[%c1_31, %c5_32, %c0_33] : memref<2x32x128xbf16, #tpu.memory_space<vmem>>, vector<1x16x128xbf16>
    %40 = vector.shape_cast %39 : vector<1x16x128xbf16> to vector<16x128xbf16>
    %c16 = arith.constant 16 : index
    %c0_34 = arith.constant 0 : index
    %41 = vector.load %arg16[%c16, %c0_34] : memref<32x384xbf16, #tpu.memory_space<vmem>>, vector<16x128xbf16>
    tpu.vector_store %arg16[%c16, %c0_34], %40 {strides = array<i32>} : memref<32x384xbf16, #tpu.memory_space<vmem>>, vector<16x128xbf16>,
    %c1_35 = arith.constant 1 : index
    %c11_36 = arith.constant 11 : index
    %c0_37 = arith.constant 0 : index
    %42 = vector.load %arg15[%c1_35, %c11_36, %c0_37] : memref<2x32x128xbf16, #tpu.memory_space<vmem>>, vector<1x16x128xbf16>
    %43 = vector.shape_cast %42 : vector<1x16x128xbf16> to vector<16x128xbf16>
    %c16_38 = arith.constant 16 : index
    %c256_39 = arith.constant 256 : index
    %44 = vector.load %arg16[%c16_38, %c256_39] : memref<32x384xbf16, #tpu.memory_space<vmem>>, vector<16x128xbf16>
    tpu.vector_store %arg16[%c16_38, %c256_39], %43 {strides = array<i32>} : memref<32x384xbf16, #tpu.memory_space<vmem>>, vector<16x128xbf16>,
    %c0_40 = arith.constant 0 : index
    %c0_41 = arith.constant 0 : index
    %45 = vector.load %arg16[%c0_40, %c0_41] : memref<32x384xbf16, #tpu.memory_space<vmem>>, vector<32x384xbf16>
    %c0_42 = arith.constant 0 : index
    %c0_43 = arith.constant 0 : index
    %c0_44 = arith.constant 0 : index
    %46 = vector.load %arg4[%c0_42, %c0_43, %c0_44] : memref<4x384x128xbf16, #tpu.memory_space<vmem>>, vector<1x384x128xbf16>
    %47 = vector.shape_cast %46 : vector<1x384x128xbf16> to vector<384x128xbf16>
    %cst_45 = arith.constant dense<0.000000e+00> : vector<32x128xf32>
    %48 = tpu.matmul %45, %47, %cst_45 {dimension_numbers = #tpu.dot_dimension_numbers<[1], [0], [0], [1], [0, 0, 1, 1], [], []>} : vector<32x384xbf16>, vector<384x128xbf16>, vector<32x128xf32> -> vector<32x128xf32>
    %c0_46 = arith.constant 0 : index
    %c0_47 = arith.constant 0 : index
    %c0_48 = arith.constant 0 : index
    %49 = vector.load %arg5[%c0_46, %c0_47, %c0_48] : memref<4x1x128xf32, #tpu.memory_space<vmem>>, vector<1x1x128xf32>
    %50 = vector.shape_cast %49 : vector<1x1x128xf32> to vector<1x128xf32>
    %51 = vector.broadcast %50 : vector<1x128xf32> to vector<32x128xf32>
    %52 = arith.addf %48, %51 : vector<32x128xf32>
    %cst_49 = arith.constant 0.000000e+00 : f32
    %53 = vector.broadcast %cst_49 : f32 to vector<32x128xf32>
    %54 = arith.maximumf %52, %53 : vector<32x128xf32>
    %55 = arith.truncf %54 : vector<32x128xf32> to vector<32x128xbf16>
    %c0_50 = arith.constant 0 : index
    %c0_51 = arith.constant 0 : index
    %c0_52 = arith.constant 0 : index
    %56 = vector.load %arg6[%c0_50, %c0_51, %c0_52] : memref<4x128x128xbf16, #tpu.memory_space<vmem>>, vector<1x128x128xbf16>
    %57 = vector.shape_cast %56 : vector<1x128x128xbf16> to vector<128x128xbf16>
    %cst_53 = arith.constant dense<0.000000e+00> : vector<32x128xf32>
    %58 = tpu.matmul %55, %57, %cst_53 {dimension_numbers = #tpu.dot_dimension_numbers<[1], [0], [0], [1], [0, 0, 1, 1], [], []>} : vector<32x128xbf16>, vector<128x128xbf16>, vector<32x128xf32> -> vector<32x128xf32>
    %59 = arith.addf %20, %58 : vector<32x128xf32>
    %c0_54 = arith.constant 0 : index
    %c0_55 = arith.constant 0 : index
    %c0_56 = arith.constant 0 : index
    %60 = vector.load %arg7[%c0_54, %c0_55, %c0_56] : memref<4x1x128xf32, #tpu.memory_space<vmem>>, vector<1x1x128xf32>
    %61 = vector.shape_cast %60 : vector<1x1x128xf32> to vector<1x128xf32>
    %62 = vector.broadcast %61 : vector<1x128xf32> to vector<32x128xf32>
    %63 = arith.addf %59, %62 : vector<32x128xf32>
    %cst_57 = arith.constant 0.000000e+00 : f32
    %64 = vector.broadcast %cst_57 : f32 to vector<32x128xf32>
    %65 = arith.maximumf %63, %64 : vector<32x128xf32>
    %66 = arith.truncf %65 : vector<32x128xf32> to vector<32x128xbf16>
    %c0_58 = arith.constant 0 : index
    %c128_59 = arith.constant 128 : index
    %67 = vector.load %arg16[%c0_58, %c128_59] : memref<32x384xbf16, #tpu.memory_space<vmem>>, vector<32x128xbf16>
    tpu.vector_store %arg16[%c0_58, %c128_59], %66 {strides = array<i32>} : memref<32x384xbf16, #tpu.memory_space<vmem>>, vector<32x128xbf16>,
    %68 = vector.extract_strided_slice %66 {offsets = [0, 0], sizes = [16, 128], strides = [1, 1]} : vector<32x128xbf16> to vector<16x128xbf16>
    %c0_60 = arith.constant 0 : index
    %c8_61 = arith.constant 8 : index
    %c0_62 = arith.constant 0 : index
    %69 = vector.load %arg15[%c0_60, %c8_61, %c0_62] : memref<2x32x128xbf16, #tpu.memory_space<vmem>>, vector<1x16x128xbf16>
    %70 = vector.shape_cast %69 : vector<1x16x128xbf16> to vector<16x128xbf16>
    %71 = vector.shape_cast %68 : vector<16x128xbf16> to vector<1x16x128xbf16>
    tpu.vector_store %arg15[%c0_60, %c8_61, %c0_62], %71 {strides = array<i32>} : memref<2x32x128xbf16, #tpu.memory_space<vmem>>, vector<1x16x128xbf16>,
    %c0_63 = arith.constant 0 : index
    %c7 = arith.constant 7 : index
    %c0_64 = arith.constant 0 : index
    %72 = vector.load %arg15[%c0_63, %c7, %c0_64] : memref<2x32x128xbf16, #tpu.memory_space<vmem>>, vector<1x16x128xbf16>
    %73 = vector.shape_cast %72 : vector<1x16x128xbf16> to vector<16x128xbf16>
    %c0_65 = arith.constant 0 : index
    %c0_66 = arith.constant 0 : index
    %74 = vector.load %arg16[%c0_65, %c0_66] : memref<32x384xbf16, #tpu.memory_space<vmem>>, vector<16x128xbf16>
    tpu.vector_store %arg16[%c0_65, %c0_66], %73 {strides = array<i32>} : memref<32x384xbf16, #tpu.memory_space<vmem>>, vector<16x128xbf16>,
    %c0_67 = arith.constant 0 : index
    %c9 = arith.constant 9 : index
    %c0_68 = arith.constant 0 : index
    %75 = vector.load %arg15[%c0_67, %c9, %c0_68] : memref<2x32x128xbf16, #tpu.memory_space<vmem>>, vector<1x16x128xbf16>
    %76 = vector.shape_cast %75 : vector<1x16x128xbf16> to vector<16x128xbf16>
    %c0_69 = arith.constant 0 : index
    %c256_70 = arith.constant 256 : index
    %77 = vector.load %arg16[%c0_69, %c256_70] : memref<32x384xbf16, #tpu.memory_space<vmem>>, vector<16x128xbf16>
    tpu.vector_store %arg16[%c0_69, %c256_70], %76 {strides = array<i32>} : memref<32x384xbf16, #tpu.memory_space<vmem>>, vector<16x128xbf16>,
    %78 = vector.extract_strided_slice %66 {offsets = [16, 0], sizes = [16, 128], strides = [1, 1]} : vector<32x128xbf16> to vector<16x128xbf16>
    %c1_71 = arith.constant 1 : index
    %c8_72 = arith.constant 8 : index
    %c0_73 = arith.constant 0 : index
    %79 = vector.load %arg15[%c1_71, %c8_72, %c0_73] : memref<2x32x128xbf16, #tpu.memory_space<vmem>>, vector<1x16x128xbf16>
    %80 = vector.shape_cast %79 : vector<1x16x128xbf16> to vector<16x128xbf16>
    %81 = vector.shape_cast %78 : vector<16x128xbf16> to vector<1x16x128xbf16>
    tpu.vector_store %arg15[%c1_71, %c8_72, %c0_73], %81 {strides = array<i32>} : memref<2x32x128xbf16, #tpu.memory_space<vmem>>, vector<1x16x128xbf16>,
    %c1_74 = arith.constant 1 : index
    %c7_75 = arith.constant 7 : index
    %c0_76 = arith.constant 0 : index
    %82 = vector.load %arg15[%c1_74, %c7_75, %c0_76] : memref<2x32x128xbf16, #tpu.memory_space<vmem>>, vector<1x16x128xbf16>
    %83 = vector.shape_cast %82 : vector<1x16x128xbf16> to vector<16x128xbf16>
    %c16_77 = arith.constant 16 : index
    %c0_78 = arith.constant 0 : index
    %84 = vector.load %arg16[%c16_77, %c0_78] : memref<32x384xbf16, #tpu.memory_space<vmem>>, vector<16x128xbf16>
    tpu.vector_store %arg16[%c16_77, %c0_78], %83 {strides = array<i32>} : memref<32x384xbf16, #tpu.memory_space<vmem>>, vector<16x128xbf16>,
    %c1_79 = arith.constant 1 : index
    %c9_80 = arith.constant 9 : index
    %c0_81 = arith.constant 0 : index
    %85 = vector.load %arg15[%c1_79, %c9_80, %c0_81] : memref<2x32x128xbf16, #tpu.memory_space<vmem>>, vector<1x16x128xbf16>
    %86 = vector.shape_cast %85 : vector<1x16x128xbf16> to vector<16x128xbf16>
    %c16_82 = arith.constant 16 : index
    %c256_83 = arith.constant 256 : index
    %87 = vector.load %arg16[%c16_82, %c256_83] : memref<32x384xbf16, #tpu.memory_space<vmem>>, vector<16x128xbf16>
    tpu.vector_store %arg16[%c16_82, %c256_83], %86 {strides = array<i32>} : memref<32x384xbf16, #tpu.memory_space<vmem>>, vector<16x128xbf16>,
    %c0_84 = arith.constant 0 : index
    %c0_85 = arith.constant 0 : index
    %88 = vector.load %arg16[%c0_84, %c0_85] : memref<32x384xbf16, #tpu.memory_space<vmem>>, vector<32x384xbf16>
    %c1_86 = arith.constant 1 : index
    %c0_87 = arith.constant 0 : index
    %c0_88 = arith.constant 0 : index
    %89 = vector.load %arg4[%c1_86, %c0_87, %c0_88] : memref<4x384x128xbf16, #tpu.memory_space<vmem>>, vector<1x384x128xbf16>
    %90 = vector.shape_cast %89 : vector<1x384x128xbf16> to vector<384x128xbf16>
    %cst_89 = arith.constant dense<0.000000e+00> : vector<32x128xf32>
    %91 = tpu.matmul %88, %90, %cst_89 {dimension_numbers = #tpu.dot_dimension_numbers<[1], [0], [0], [1], [0, 0, 1, 1], [], []>} : vector<32x384xbf16>, vector<384x128xbf16>, vector<32x128xf32> -> vector<32x128xf32>
    %c1_90 = arith.constant 1 : index
    %c0_91 = arith.constant 0 : index
    %c0_92 = arith.constant 0 : index
    %92 = vector.load %arg5[%c1_90, %c0_91, %c0_92] : memref<4x1x128xf32, #tpu.memory_space<vmem>>, vector<1x1x128xf32>
    %93 = vector.shape_cast %92 : vector<1x1x128xf32> to vector<1x128xf32>
    %94 = vector.broadcast %93 : vector<1x128xf32> to vector<32x128xf32>
    %95 = arith.addf %91, %94 : vector<32x128xf32>
    %cst_93 = arith.constant 0.000000e+00 : f32
    %96 = vector.broadcast %cst_93 : f32 to vector<32x128xf32>
    %97 = arith.maximumf %95, %96 : vector<32x128xf32>
    %98 = arith.truncf %97 : vector<32x128xf32> to vector<32x128xbf16>
    %c1_94 = arith.constant 1 : index
    %c0_95 = arith.constant 0 : index
    %c0_96 = arith.constant 0 : index
    %99 = vector.load %arg6[%c1_94, %c0_95, %c0_96] : memref<4x128x128xbf16, #tpu.memory_space<vmem>>, vector<1x128x128xbf16>
    %100 = vector.shape_cast %99 : vector<1x128x128xbf16> to vector<128x128xbf16>
    %cst_97 = arith.constant dense<0.000000e+00> : vector<32x128xf32>
    %101 = tpu.matmul %98, %100, %cst_97 {dimension_numbers = #tpu.dot_dimension_numbers<[1], [0], [0], [1], [0, 0, 1, 1], [], []>} : vector<32x128xbf16>, vector<128x128xbf16>, vector<32x128xf32> -> vector<32x128xf32>
    %102 = arith.addf %63, %101 : vector<32x128xf32>
    %c1_98 = arith.constant 1 : index
    %c0_99 = arith.constant 0 : index
    %c0_100 = arith.constant 0 : index
    %103 = vector.load %arg7[%c1_98, %c0_99, %c0_100] : memref<4x1x128xf32, #tpu.memory_space<vmem>>, vector<1x1x128xf32>
    %104 = vector.shape_cast %103 : vector<1x1x128xf32> to vector<1x128xf32>
    %105 = vector.broadcast %104 : vector<1x128xf32> to vector<32x128xf32>
    %106 = arith.addf %102, %105 : vector<32x128xf32>
    %c0_101 = arith.constant 0 : index
    %c0_102 = arith.constant 0 : index
    %c0_103 = arith.constant 0 : index
    %107 = vector.load %arg8[%c0_101, %c0_102, %c0_103] : memref<2x128x128xbf16, #tpu.memory_space<vmem>>, vector<1x128x128xbf16>
    %108 = vector.shape_cast %107 : vector<1x128x128xbf16> to vector<128x128xbf16>
    %109 = arith.truncf %106 : vector<32x128xf32> to vector<32x128xbf16>
    %cst_104 = arith.constant dense<0.000000e+00> : vector<32x128xf32>
    %110 = tpu.matmul %109, %108, %cst_104 {dimension_numbers = #tpu.dot_dimension_numbers<[1], [0], [0], [1], [0, 0, 1, 1], [], []>} : vector<32x128xbf16>, vector<128x128xbf16>, vector<32x128xf32> -> vector<32x128xf32>
    %c0_105 = arith.constant 0 : index
    %c0_106 = arith.constant 0 : index
    %c0_107 = arith.constant 0 : index
    %111 = vector.load %arg9[%c0_105, %c0_106, %c0_107] : memref<2x1x128xf32, #tpu.memory_space<vmem>>, vector<1x1x128xf32>
    %112 = vector.shape_cast %111 : vector<1x1x128xf32> to vector<1x128xf32>
    %113 = vector.broadcast %112 : vector<1x128xf32> to vector<32x128xf32>
    %114 = arith.addf %110, %113 : vector<32x128xf32>
    %cst_108 = arith.constant 0.000000e+00 : f32
    %115 = vector.broadcast %cst_108 : f32 to vector<32x128xf32>
    %116 = arith.maximumf %114, %115 : vector<32x128xf32>
    %117 = arith.truncf %116 : vector<32x128xf32> to vector<32x128xbf16>
    %c0_109 = arith.constant 0 : index
    %c128_110 = arith.constant 128 : index
    %118 = vector.load %arg16[%c0_109, %c128_110] : memref<32x384xbf16, #tpu.memory_space<vmem>>, vector<32x128xbf16>
    tpu.vector_store %arg16[%c0_109, %c128_110], %117 {strides = array<i32>} : memref<32x384xbf16, #tpu.memory_space<vmem>>, vector<32x128xbf16>,
    %119 = vector.extract_strided_slice %117 {offsets = [0, 0], sizes = [16, 128], strides = [1, 1]} : vector<32x128xbf16> to vector<16x128xbf16>
    %c0_111 = arith.constant 0 : index
    %c8_112 = arith.constant 8 : index
    %c0_113 = arith.constant 0 : index
    %120 = vector.load %arg15[%c0_111, %c8_112, %c0_113] : memref<2x32x128xbf16, #tpu.memory_space<vmem>>, vector<1x16x128xbf16>
    %121 = vector.shape_cast %120 : vector<1x16x128xbf16> to vector<16x128xbf16>
    %122 = vector.shape_cast %119 : vector<16x128xbf16> to vector<1x16x128xbf16>
    tpu.vector_store %arg15[%c0_111, %c8_112, %c0_113], %122 {strides = array<i32>} : memref<2x32x128xbf16, #tpu.memory_space<vmem>>, vector<1x16x128xbf16>,
    %c0_114 = arith.constant 0 : index
    %c5_115 = arith.constant 5 : index
    %c0_116 = arith.constant 0 : index
    %123 = vector.load %arg15[%c0_114, %c5_115, %c0_116] : memref<2x32x128xbf16, #tpu.memory_space<vmem>>, vector<1x16x128xbf16>
    %124 = vector.shape_cast %123 : vector<1x16x128xbf16> to vector<16x128xbf16>
    %c0_117 = arith.constant 0 : index
    %c0_118 = arith.constant 0 : index
    %125 = vector.load %arg16[%c0_117, %c0_118] : memref<32x384xbf16, #tpu.memory_space<vmem>>, vector<16x128xbf16>
    tpu.vector_store %arg16[%c0_117, %c0_118], %124 {strides = array<i32>} : memref<32x384xbf16, #tpu.memory_space<vmem>>, vector<16x128xbf16>,
    %c0_119 = arith.constant 0 : index
    %c11_120 = arith.constant 11 : index
    %c0_121 = arith.constant 0 : index
    %126 = vector.load %arg15[%c0_119, %c11_120, %c0_121] : memref<2x32x128xbf16, #tpu.memory_space<vmem>>, vector<1x16x128xbf16>
    %127 = vector.shape_cast %126 : vector<1x16x128xbf16> to vector<16x128xbf16>
    %c0_122 = arith.constant 0 : index
    %c256_123 = arith.constant 256 : index
    %128 = vector.load %arg16[%c0_122, %c256_123] : memref<32x384xbf16, #tpu.memory_space<vmem>>, vector<16x128xbf16>
    tpu.vector_store %arg16[%c0_122, %c256_123], %127 {strides = array<i32>} : memref<32x384xbf16, #tpu.memory_space<vmem>>, vector<16x128xbf16>,
    %129 = vector.extract_strided_slice %117 {offsets = [16, 0], sizes = [16, 128], strides = [1, 1]} : vector<32x128xbf16> to vector<16x128xbf16>
    %c1_124 = arith.constant 1 : index
    %c8_125 = arith.constant 8 : index
    %c0_126 = arith.constant 0 : index
    %130 = vector.load %arg15[%c1_124, %c8_125, %c0_126] : memref<2x32x128xbf16, #tpu.memory_space<vmem>>, vector<1x16x128xbf16>
    %131 = vector.shape_cast %130 : vector<1x16x128xbf16> to vector<16x128xbf16>
    %132 = vector.shape_cast %129 : vector<16x128xbf16> to vector<1x16x128xbf16>
    tpu.vector_store %arg15[%c1_124, %c8_125, %c0_126], %132 {strides = array<i32>} : memref<2x32x128xbf16, #tpu.memory_space<vmem>>, vector<1x16x128xbf16>,
    %c1_127 = arith.constant 1 : index
    %c5_128 = arith.constant 5 : index
    %c0_129 = arith.constant 0 : index
    %133 = vector.load %arg15[%c1_127, %c5_128, %c0_129] : memref<2x32x128xbf16, #tpu.memory_space<vmem>>, vector<1x16x128xbf16>
    %134 = vector.shape_cast %133 : vector<1x16x128xbf16> to vector<16x128xbf16>
    %c16_130 = arith.constant 16 : index
    %c0_131 = arith.constant 0 : index
    %135 = vector.load %arg16[%c16_130, %c0_131] : memref<32x384xbf16, #tpu.memory_space<vmem>>, vector<16x128xbf16>
    tpu.vector_store %arg16[%c16_130, %c0_131], %134 {strides = array<i32>} : memref<32x384xbf16, #tpu.memory_space<vmem>>, vector<16x128xbf16>,
    %c1_132 = arith.constant 1 : index
    %c11_133 = arith.constant 11 : index
    %c0_134 = arith.constant 0 : index
    %136 = vector.load %arg15[%c1_132, %c11_133, %c0_134] : memref<2x32x128xbf16, #tpu.memory_space<vmem>>, vector<1x16x128xbf16>
    %137 = vector.shape_cast %136 : vector<1x16x128xbf16> to vector<16x128xbf16>
    %c16_135 = arith.constant 16 : index
    %c256_136 = arith.constant 256 : index
    %138 = vector.load %arg16[%c16_135, %c256_136] : memref<32x384xbf16, #tpu.memory_space<vmem>>, vector<16x128xbf16>
    tpu.vector_store %arg16[%c16_135, %c256_136], %137 {strides = array<i32>} : memref<32x384xbf16, #tpu.memory_space<vmem>>, vector<16x128xbf16>,
    %c0_137 = arith.constant 0 : index
    %c0_138 = arith.constant 0 : index
    %139 = vector.load %arg16[%c0_137, %c0_138] : memref<32x384xbf16, #tpu.memory_space<vmem>>, vector<32x384xbf16>
    %c2 = arith.constant 2 : index
    %c0_139 = arith.constant 0 : index
    %c0_140 = arith.constant 0 : index
    %140 = vector.load %arg4[%c2, %c0_139, %c0_140] : memref<4x384x128xbf16, #tpu.memory_space<vmem>>, vector<1x384x128xbf16>
    %141 = vector.shape_cast %140 : vector<1x384x128xbf16> to vector<384x128xbf16>
    %cst_141 = arith.constant dense<0.000000e+00> : vector<32x128xf32>
    %142 = tpu.matmul %139, %141, %cst_141 {dimension_numbers = #tpu.dot_dimension_numbers<[1], [0], [0], [1], [0, 0, 1, 1], [], []>} : vector<32x384xbf16>, vector<384x128xbf16>, vector<32x128xf32> -> vector<32x128xf32>
    %c2_142 = arith.constant 2 : index
    %c0_143 = arith.constant 0 : index
    %c0_144 = arith.constant 0 : index
    %143 = vector.load %arg5[%c2_142, %c0_143, %c0_144] : memref<4x1x128xf32, #tpu.memory_space<vmem>>, vector<1x1x128xf32>
    %144 = vector.shape_cast %143 : vector<1x1x128xf32> to vector<1x128xf32>
    %145 = vector.broadcast %144 : vector<1x128xf32> to vector<32x128xf32>
    %146 = arith.addf %142, %145 : vector<32x128xf32>
    %cst_145 = arith.constant 0.000000e+00 : f32
    %147 = vector.broadcast %cst_145 : f32 to vector<32x128xf32>
    %148 = arith.maximumf %146, %147 : vector<32x128xf32>
    %149 = arith.truncf %148 : vector<32x128xf32> to vector<32x128xbf16>
    %c2_146 = arith.constant 2 : index
    %c0_147 = arith.constant 0 : index
    %c0_148 = arith.constant 0 : index
    %150 = vector.load %arg6[%c2_146, %c0_147, %c0_148] : memref<4x128x128xbf16, #tpu.memory_space<vmem>>, vector<1x128x128xbf16>
    %151 = vector.shape_cast %150 : vector<1x128x128xbf16> to vector<128x128xbf16>
    %cst_149 = arith.constant dense<0.000000e+00> : vector<32x128xf32>
    %152 = tpu.matmul %149, %151, %cst_149 {dimension_numbers = #tpu.dot_dimension_numbers<[1], [0], [0], [1], [0, 0, 1, 1], [], []>} : vector<32x128xbf16>, vector<128x128xbf16>, vector<32x128xf32> -> vector<32x128xf32>
    %153 = arith.addf %114, %152 : vector<32x128xf32>
    %c2_150 = arith.constant 2 : index
    %c0_151 = arith.constant 0 : index
    %c0_152 = arith.constant 0 : index
    %154 = vector.load %arg7[%c2_150, %c0_151, %c0_152] : memref<4x1x128xf32, #tpu.memory_space<vmem>>, vector<1x1x128xf32>
    %155 = vector.shape_cast %154 : vector<1x1x128xf32> to vector<1x128xf32>
    %156 = vector.broadcast %155 : vector<1x128xf32> to vector<32x128xf32>
    %157 = arith.addf %153, %156 : vector<32x128xf32>
    %cst_153 = arith.constant 0.000000e+00 : f32
    %158 = vector.broadcast %cst_153 : f32 to vector<32x128xf32>
    %159 = arith.maximumf %157, %158 : vector<32x128xf32>
    %160 = arith.truncf %159 : vector<32x128xf32> to vector<32x128xbf16>
    %c0_154 = arith.constant 0 : index
    %c128_155 = arith.constant 128 : index
    %161 = vector.load %arg16[%c0_154, %c128_155] : memref<32x384xbf16, #tpu.memory_space<vmem>>, vector<32x128xbf16>
    tpu.vector_store %arg16[%c0_154, %c128_155], %160 {strides = array<i32>} : memref<32x384xbf16, #tpu.memory_space<vmem>>, vector<32x128xbf16>,
    %162 = vector.extract_strided_slice %160 {offsets = [0, 0], sizes = [16, 128], strides = [1, 1]} : vector<32x128xbf16> to vector<16x128xbf16>
    %c0_156 = arith.constant 0 : index
    %c8_157 = arith.constant 8 : index
    %c0_158 = arith.constant 0 : index
    %163 = vector.load %arg15[%c0_156, %c8_157, %c0_158] : memref<2x32x128xbf16, #tpu.memory_space<vmem>>, vector<1x16x128xbf16>
    %164 = vector.shape_cast %163 : vector<1x16x128xbf16> to vector<16x128xbf16>
    %165 = vector.shape_cast %162 : vector<16x128xbf16> to vector<1x16x128xbf16>
    tpu.vector_store %arg15[%c0_156, %c8_157, %c0_158], %165 {strides = array<i32>} : memref<2x32x128xbf16, #tpu.memory_space<vmem>>, vector<1x16x128xbf16>,
    %c0_159 = arith.constant 0 : index
    %c7_160 = arith.constant 7 : index
    %c0_161 = arith.constant 0 : index
    %166 = vector.load %arg15[%c0_159, %c7_160, %c0_161] : memref<2x32x128xbf16, #tpu.memory_space<vmem>>, vector<1x16x128xbf16>
    %167 = vector.shape_cast %166 : vector<1x16x128xbf16> to vector<16x128xbf16>
    %c0_162 = arith.constant 0 : index
    %c0_163 = arith.constant 0 : index
    %168 = vector.load %arg16[%c0_162, %c0_163] : memref<32x384xbf16, #tpu.memory_space<vmem>>, vector<16x128xbf16>
    tpu.vector_store %arg16[%c0_162, %c0_163], %167 {strides = array<i32>} : memref<32x384xbf16, #tpu.memory_space<vmem>>, vector<16x128xbf16>,
    %c0_164 = arith.constant 0 : index
    %c9_165 = arith.constant 9 : index
    %c0_166 = arith.constant 0 : index
    %169 = vector.load %arg15[%c0_164, %c9_165, %c0_166] : memref<2x32x128xbf16, #tpu.memory_space<vmem>>, vector<1x16x128xbf16>
    %170 = vector.shape_cast %169 : vector<1x16x128xbf16> to vector<16x128xbf16>
    %c0_167 = arith.constant 0 : index
    %c256_168 = arith.constant 256 : index
    %171 = vector.load %arg16[%c0_167, %c256_168] : memref<32x384xbf16, #tpu.memory_space<vmem>>, vector<16x128xbf16>
    tpu.vector_store %arg16[%c0_167, %c256_168], %170 {strides = array<i32>} : memref<32x384xbf16, #tpu.memory_space<vmem>>, vector<16x128xbf16>,
    %172 = vector.extract_strided_slice %160 {offsets = [16, 0], sizes = [16, 128], strides = [1, 1]} : vector<32x128xbf16> to vector<16x128xbf16>
    %c1_169 = arith.constant 1 : index
    %c8_170 = arith.constant 8 : index
    %c0_171 = arith.constant 0 : index
    %173 = vector.load %arg15[%c1_169, %c8_170, %c0_171] : memref<2x32x128xbf16, #tpu.memory_space<vmem>>, vector<1x16x128xbf16>
    %174 = vector.shape_cast %173 : vector<1x16x128xbf16> to vector<16x128xbf16>
    %175 = vector.shape_cast %172 : vector<16x128xbf16> to vector<1x16x128xbf16>
    tpu.vector_store %arg15[%c1_169, %c8_170, %c0_171], %175 {strides = array<i32>} : memref<2x32x128xbf16, #tpu.memory_space<vmem>>, vector<1x16x128xbf16>,
    %c1_172 = arith.constant 1 : index
    %c7_173 = arith.constant 7 : index
    %c0_174 = arith.constant 0 : index
    %176 = vector.load %arg15[%c1_172, %c7_173, %c0_174] : memref<2x32x128xbf16, #tpu.memory_space<vmem>>, vector<1x16x128xbf16>
    %177 = vector.shape_cast %176 : vector<1x16x128xbf16> to vector<16x128xbf16>
    %c16_175 = arith.constant 16 : index
    %c0_176 = arith.constant 0 : index
    %178 = vector.load %arg16[%c16_175, %c0_176] : memref<32x384xbf16, #tpu.memory_space<vmem>>, vector<16x128xbf16>
    tpu.vector_store %arg16[%c16_175, %c0_176], %177 {strides = array<i32>} : memref<32x384xbf16, #tpu.memory_space<vmem>>, vector<16x128xbf16>,
    %c1_177 = arith.constant 1 : index
    %c9_178 = arith.constant 9 : index
    %c0_179 = arith.constant 0 : index
    %179 = vector.load %arg15[%c1_177, %c9_178, %c0_179] : memref<2x32x128xbf16, #tpu.memory_space<vmem>>, vector<1x16x128xbf16>
    %180 = vector.shape_cast %179 : vector<1x16x128xbf16> to vector<16x128xbf16>
    %c16_180 = arith.constant 16 : index
    %c256_181 = arith.constant 256 : index
    %181 = vector.load %arg16[%c16_180, %c256_181] : memref<32x384xbf16, #tpu.memory_space<vmem>>, vector<16x128xbf16>
    tpu.vector_store %arg16[%c16_180, %c256_181], %180 {strides = array<i32>} : memref<32x384xbf16, #tpu.memory_space<vmem>>, vector<16x128xbf16>,
    %c0_182 = arith.constant 0 : index
    %c0_183 = arith.constant 0 : index
    %182 = vector.load %arg16[%c0_182, %c0_183] : memref<32x384xbf16, #tpu.memory_space<vmem>>, vector<32x384xbf16>
    %c3 = arith.constant 3 : index
    %c0_184 = arith.constant 0 : index
    %c0_185 = arith.constant 0 : index
    %183 = vector.load %arg4[%c3, %c0_184, %c0_185] : memref<4x384x128xbf16, #tpu.memory_space<vmem>>, vector<1x384x128xbf16>
    %184 = vector.shape_cast %183 : vector<1x384x128xbf16> to vector<384x128xbf16>
    %cst_186 = arith.constant dense<0.000000e+00> : vector<32x128xf32>
    %185 = tpu.matmul %182, %184, %cst_186 {dimension_numbers = #tpu.dot_dimension_numbers<[1], [0], [0], [1], [0, 0, 1, 1], [], []>} : vector<32x384xbf16>, vector<384x128xbf16>, vector<32x128xf32> -> vector<32x128xf32>
    %c3_187 = arith.constant 3 : index
    %c0_188 = arith.constant 0 : index
    %c0_189 = arith.constant 0 : index
    %186 = vector.load %arg5[%c3_187, %c0_188, %c0_189] : memref<4x1x128xf32, #tpu.memory_space<vmem>>, vector<1x1x128xf32>
    %187 = vector.shape_cast %186 : vector<1x1x128xf32> to vector<1x128xf32>
    %188 = vector.broadcast %187 : vector<1x128xf32> to vector<32x128xf32>
    %189 = arith.addf %185, %188 : vector<32x128xf32>
    %cst_190 = arith.constant 0.000000e+00 : f32
    %190 = vector.broadcast %cst_190 : f32 to vector<32x128xf32>
    %191 = arith.maximumf %189, %190 : vector<32x128xf32>
    %192 = arith.truncf %191 : vector<32x128xf32> to vector<32x128xbf16>
    %c3_191 = arith.constant 3 : index
    %c0_192 = arith.constant 0 : index
    %c0_193 = arith.constant 0 : index
    %193 = vector.load %arg6[%c3_191, %c0_192, %c0_193] : memref<4x128x128xbf16, #tpu.memory_space<vmem>>, vector<1x128x128xbf16>
    %194 = vector.shape_cast %193 : vector<1x128x128xbf16> to vector<128x128xbf16>
    %cst_194 = arith.constant dense<0.000000e+00> : vector<32x128xf32>
    %195 = tpu.matmul %192, %194, %cst_194 {dimension_numbers = #tpu.dot_dimension_numbers<[1], [0], [0], [1], [0, 0, 1, 1], [], []>} : vector<32x128xbf16>, vector<128x128xbf16>, vector<32x128xf32> -> vector<32x128xf32>
    %196 = arith.addf %157, %195 : vector<32x128xf32>
    %c3_195 = arith.constant 3 : index
    %c0_196 = arith.constant 0 : index
    %c0_197 = arith.constant 0 : index
    %197 = vector.load %arg7[%c3_195, %c0_196, %c0_197] : memref<4x1x128xf32, #tpu.memory_space<vmem>>, vector<1x1x128xf32>
    %198 = vector.shape_cast %197 : vector<1x1x128xf32> to vector<1x128xf32>
    %199 = vector.broadcast %198 : vector<1x128xf32> to vector<32x128xf32>
    %200 = arith.addf %196, %199 : vector<32x128xf32>
    %c1_198 = arith.constant 1 : index
    %c0_199 = arith.constant 0 : index
    %c0_200 = arith.constant 0 : index
    %201 = vector.load %arg8[%c1_198, %c0_199, %c0_200] : memref<2x128x128xbf16, #tpu.memory_space<vmem>>, vector<1x128x128xbf16>
    %202 = vector.shape_cast %201 : vector<1x128x128xbf16> to vector<128x128xbf16>
    %203 = arith.truncf %200 : vector<32x128xf32> to vector<32x128xbf16>
    %cst_201 = arith.constant dense<0.000000e+00> : vector<32x128xf32>
    %204 = tpu.matmul %203, %202, %cst_201 {dimension_numbers = #tpu.dot_dimension_numbers<[1], [0], [0], [1], [0, 0, 1, 1], [], []>} : vector<32x128xbf16>, vector<128x128xbf16>, vector<32x128xf32> -> vector<32x128xf32>
    %c1_202 = arith.constant 1 : index
    %c0_203 = arith.constant 0 : index
    %c0_204 = arith.constant 0 : index
    %205 = vector.load %arg9[%c1_202, %c0_203, %c0_204] : memref<2x1x128xf32, #tpu.memory_space<vmem>>, vector<1x1x128xf32>
    %206 = vector.shape_cast %205 : vector<1x1x128xf32> to vector<1x128xf32>
    %207 = vector.broadcast %206 : vector<1x128xf32> to vector<32x128xf32>
    %208 = arith.addf %204, %207 : vector<32x128xf32>
    %c0_205 = arith.constant 0 : index
    %c0_206 = arith.constant 0 : index
    %209 = vector.load %arg10[%c0_205, %c0_206] : memref<128x128xbf16, #tpu.memory_space<vmem>>, vector<128x128xbf16>
    %210 = arith.truncf %208 : vector<32x128xf32> to vector<32x128xbf16>
    %cst_207 = arith.constant dense<0.000000e+00> : vector<32x128xf32>
    %211 = tpu.matmul %210, %209, %cst_207 {dimension_numbers = #tpu.dot_dimension_numbers<[1], [0], [0], [1], [0, 0, 1, 1], [], []>} : vector<32x128xbf16>, vector<128x128xbf16>, vector<32x128xf32> -> vector<32x128xf32>
    %c0_208 = arith.constant 0 : index
    %c0_209 = arith.constant 0 : index
    %212 = vector.load %arg11[%c0_208, %c0_209] : memref<1x128xf32, #tpu.memory_space<vmem>>, vector<1x128xf32>
    %213 = vector.broadcast %212 : vector<1x128xf32> to vector<32x128xf32>
    %214 = arith.addf %211, %213 : vector<32x128xf32>
    %cst_210 = arith.constant 0.000000e+00 : f32
    %215 = vector.broadcast %cst_210 : f32 to vector<32x128xf32>
    %216 = arith.maximumf %214, %215 : vector<32x128xf32>
    %c0_211 = arith.constant 0 : index
    %c0_212 = arith.constant 0 : index
    %217 = vector.load %arg12[%c0_211, %c0_212] : memref<128x128xbf16, #tpu.memory_space<vmem>>, vector<128x128xbf16>
    %218 = arith.truncf %216 : vector<32x128xf32> to vector<32x128xbf16>
    %cst_213 = arith.constant dense<0.000000e+00> : vector<32x128xf32>
    %219 = tpu.matmul %218, %217, %cst_213 {dimension_numbers = #tpu.dot_dimension_numbers<[1], [0], [0], [1], [0, 0, 1, 1], [], []>} : vector<32x128xbf16>, vector<128x128xbf16>, vector<32x128xf32> -> vector<32x128xf32>
    %c0_214 = arith.constant 0 : index
    %c0_215 = arith.constant 0 : index
    %220 = vector.load %arg13[%c0_214, %c0_215] : memref<1x128xf32, #tpu.memory_space<vmem>>, vector<1x128xf32>
    %221 = vector.broadcast %220 : vector<1x128xf32> to vector<32x128xf32>
    %222 = arith.addf %219, %221 : vector<32x128xf32>
    %c0_216 = arith.constant 0 : index
    %c0_217 = arith.constant 0 : index
    %223 = vector.load %arg14[%c0_216, %c0_217] : memref<32x128xf32, #tpu.memory_space<vmem>>, vector<32x128xf32>
    tpu.vector_store %arg14[%c0_216, %c0_217], %222 {strides = array<i32>} : memref<32x128xf32, #tpu.memory_space<vmem>>, vector<32x128xf32>,
    return
  }
  func.func @transform_0(%arg0: i32) -> (i32, i32) {
    %c0_i32 = arith.constant 0 : i32
    %c0_i32_0 = arith.constant 0 : i32
    return %arg0, %c0_i32 : i32, i32
  }
  func.func @transform_1(%arg0: i32) -> (i32, i32) {
    %c0_i32 = arith.constant 0 : i32
    %c0_i32_0 = arith.constant 0 : i32
    %c0_i32_1 = arith.constant 0 : i32
    return %c0_i32, %c0_i32_0 : i32, i32
  }
  func.func @transform_2(%arg0: i32) -> (i32, i32) {
    %c0_i32 = arith.constant 0 : i32
    %c0_i32_0 = arith.constant 0 : i32
    %c0_i32_1 = arith.constant 0 : i32
    return %c0_i32, %c0_i32_0 : i32, i32
  }
  func.func @transform_3(%arg0: i32) -> (i32, i32, i32) {
    %c0_i32 = arith.constant 0 : i32
    %c0_i32_0 = arith.constant 0 : i32
    %c0_i32_1 = arith.constant 0 : i32
    %c0_i32_2 = arith.constant 0 : i32
    return %c0_i32, %c0_i32_0, %c0_i32_1 : i32, i32, i32
  }
  func.func @transform_4(%arg0: i32) -> (i32, i32, i32) {
    %c0_i32 = arith.constant 0 : i32
    %c0_i32_0 = arith.constant 0 : i32
    %c0_i32_1 = arith.constant 0 : i32
    %c0_i32_2 = arith.constant 0 : i32
    return %c0_i32, %c0_i32_0, %c0_i32_1 : i32, i32, i32
  }
  func.func @transform_5(%arg0: i32) -> (i32, i32, i32) {
    %c0_i32 = arith.constant 0 : i32
    %c0_i32_0 = arith.constant 0 : i32
    %c0_i32_1 = arith.constant 0 : i32
    %c0_i32_2 = arith.constant 0 : i32
    return %c0_i32, %c0_i32_0, %c0_i32_1 : i32, i32, i32
  }
  func.func @transform_6(%arg0: i32) -> (i32, i32, i32) {
    %c0_i32 = arith.constant 0 : i32
    %c0_i32_0 = arith.constant 0 : i32
    %c0_i32_1 = arith.constant 0 : i32
    %c0_i32_2 = arith.constant 0 : i32
    return %c0_i32, %c0_i32_0, %c0_i32_1 : i32, i32, i32
  }
  func.func @transform_7(%arg0: i32) -> (i32, i32, i32) {
    %c0_i32 = arith.constant 0 : i32
    %c0_i32_0 = arith.constant 0 : i32
    %c0_i32_1 = arith.constant 0 : i32
    %c0_i32_2 = arith.constant 0 : i32
    return %c0_i32, %c0_i32_0, %c0_i32_1 : i32, i32, i32
  }
  func.func @transform_8(%arg0: i32) -> (i32, i32, i32) {
    %c0_i32 = arith.constant 0 : i32
    %c0_i32_0 = arith.constant 0 : i32
    %c0_i32_1 = arith.constant 0 : i32
    %c0_i32_2 = arith.constant 0 : i32
    return %c0_i32, %c0_i32_0, %c0_i32_1 : i32, i32, i32
  }
  func.func @transform_9(%arg0: i32) -> (i32, i32) {
    %c0_i32 = arith.constant 0 : i32
    %c0_i32_0 = arith.constant 0 : i32
    %c0_i32_1 = arith.constant 0 : i32
    return %c0_i32, %c0_i32_0 : i32, i32
  }
  func.func @transform_10(%arg0: i32) -> (i32, i32) {
    %c0_i32 = arith.constant 0 : i32
    %c0_i32_0 = arith.constant 0 : i32
    %c0_i32_1 = arith.constant 0 : i32
    return %c0_i32, %c0_i32_0 : i32, i32
  }
  func.func @transform_11(%arg0: i32) -> (i32, i32) {
    %c0_i32 = arith.constant 0 : i32
    %c0_i32_0 = arith.constant 0 : i32
    %c0_i32_1 = arith.constant 0 : i32
    return %c0_i32, %c0_i32_0 : i32, i32
  }
  func.func @transform_12(%arg0: i32) -> (i32, i32) {
    %c0_i32 = arith.constant 0 : i32
    %c0_i32_0 = arith.constant 0 : i32
    %c0_i32_1 = arith.constant 0 : i32
    return %c0_i32, %c0_i32_0 : i32, i32
  }
  func.func @transform_13(%arg0: i32) -> (i32, i32) {
    %c0_i32 = arith.constant 0 : i32
    %c0_i32_0 = arith.constant 0 : i32
    return %arg0, %c0_i32 : i32, i32
  }
}

</mosaic_0001>

<llo_original>
// kernel: tpu_custom_call.1
$region0: #{tpu_custom_call.1}
  #allocation0 [shape = 'u32[]', space=smem, size = 0x4, offset = 0x4, fixed_abs, tag = 'smem constant byte address 0x4 - core index']
  #allocation1 [shape = 'u32[144,128]{1,0:T(1,128)}', space=vmem, size = 0x12000, scoped, tag = 'internal scratch']
  #allocation2 [shape = 'bf16[2,32,128]{2,1,0:T(16,128)(2,1)}', space=vmem, size = 0x4000, scoped, tag = 'scratch operand']
  #allocation3 [shape = 'bf16[32,384]{1,0:T(16,128)(2,1)}', space=vmem, size = 0x6000, scoped, tag = 'scratch operand']
  %s0 = inlined_call_operand.hbm [shape: bf16[64,128], index: 0, kind: input, shape index: {}]
  %s1 = inlined_call_operand.hbm [shape: bf16[128,128], index: 1, kind: input, shape index: {}]
  %s2 = inlined_call_operand.vmem [shape: f32[1,128], index: 2, kind: input, shape index: {}]
  %s3 = inlined_call_operand.hbm [shape: bf16[4,384,128], index: 3, kind: input, shape index: {}]
  %s4 = inlined_call_operand.vmem [shape: f32[4,1,128], index: 4, kind: input, shape index: {}]
  %s5 = inlined_call_operand.hbm [shape: bf16[4,128,128], index: 5, kind: input, shape index: {}]
  %s6 = inlined_call_operand.vmem [shape: f32[4,1,128], index: 6, kind: input, shape index: {}]
  %s7 = inlined_call_operand.hbm [shape: bf16[2,128,128], index: 7, kind: input, shape index: {}]
  %s8 = inlined_call_operand.vmem [shape: f32[2,1,128], index: 8, kind: input, shape index: {}]
  %s9 = inlined_call_operand.hbm [shape: bf16[128,128], index: 9, kind: input, shape index: {}]
  %s10 = inlined_call_operand.vmem [shape: f32[1,128], index: 10, kind: input, shape index: {}]
  %s11 = inlined_call_operand.hbm [shape: bf16[128,128], index: 11, kind: input, shape index: {}]
  %s12 = inlined_call_operand.vmem [shape: f32[1,128], index: 12, kind: input, shape index: {}]
  %s13 = inlined_call_operand.hbm [shape: f32[64,128], index: 13, kind: output, shape index: {}]
  %s14 = sld [smem:[#allocation0]]
  $region113: #{tpu_custom_call.1} parent=0
    _
  %s16 = ssub.s32 1, %s14
  %s17 = scalar_select 0, %s16, %s14
  $region1: #{tpu_custom_call.1} parent=0
    #allocation4 [shape = 'u8[16384]{0}', space=vmem, size = 0x4000, scoped, tag = 'input window, operand 0']
    #allocation5 [shape = 's32[2]{0}', space=sflag, size = 0x8, scoped, tag = 'scoped memory for tpu_custom_call.1']
    #allocation6 [shape = 's32[2]{0}', space=sflag, size = 0x8, scoped, tag = 'scoped memory for tpu_custom_call.1']
    #allocation7 [shape = 'u8[32768]{0}', space=vmem, size = 0x8000, scoped, tag = 'input window, operand 1, single buffered']
    #allocation8 [shape = 's32[1]{0}', space=sflag, size = 0x4, scoped, tag = 'scoped memory for tpu_custom_call.1']
    #allocation9 [shape = 'u8[393216]{0}', space=vmem, size = 0x60000, scoped, tag = 'input window, operand 3, single buffered']
    #allocation10 [shape = 'u8[131072]{0}', space=vmem, size = 0x20000, scoped, tag = 'input window, operand 5, single buffered']
    #allocation11 [shape = 's32[1]{0}', space=sflag, size = 0x4, scoped, tag = 'scoped memory for tpu_custom_call.1']
    #allocation12 [shape = 'u8[65536]{0}', space=vmem, size = 0x10000, scoped, tag = 'input window, operand 7, single buffered']
    #allocation13 [shape = 'u8[32768]{0}', space=vmem, size = 0x8000, scoped, tag = 'input window, operand 9, single buffered']
    #allocation14 [shape = 's32[1]{0}', space=sflag, size = 0x4, scoped, tag = 'scoped memory for tpu_custom_call.1']
    #allocation15 [shape = 'u8[32768]{0}', space=vmem, size = 0x8000, scoped, tag = 'input window, operand 11, single buffered']
    #allocation16 [shape = 'u8[32768]{0}', space=vmem, size = 0x8000, scoped, tag = 'output window, operand 0']
    %18 = vsyncpa [#allocation5], 0
    %s19 = scalar_lea.sflag [#allocation5], 1
    %20 = vsyncpa %s19, 0
    %21 = vsyncpa [#allocation8], 0
    %22 = vsyncpa [#allocation11], 0
    %23 = vsyncpa [#allocation14], 0
    %24 = vsyncpa [#allocation6], 0
    %s25 = scalar_lea.sflag [#allocation6], 1
    %26 = vsyncpa %s25, 0
    loop: start=0, step=1, limit=4
    $region2: #{tpu_custom_call.1} parent=1 // loop_pre_header
      _
    $region3: #{tpu_custom_call.1} parent=1 // loop_header
      %s28 = sphi 0, %s32
      %p29 = scmp.ge.s32.totalorder %s28, 4
      %s38 = sphi 0, %s40
      %s41 = sphi 0, %s38
      %s42 = sphi 0, %s41
      %s58 = sphi 0, %s42
      %s62 = sphi 0, %s62
      %s64 = sphi 0, %s62
      %s65 = sphi 0, %s64
      %s79 = sphi 0, %s65
      %s83 = sphi 0, %s83
      %s85 = sphi 0, %s83
      %s86 = sphi 0, %s85
      %s100 = sphi 0, %s86
      %s104 = sphi 0, %s104
      %s106 = sphi 0, %s104
      %s107 = sphi 0, %s106
      %s121 = sphi 0, %s107
      %s125 = sphi 0, %s125
      %s127 = sphi 0, %s125
      %s128 = sphi 0, %s127
      %s142 = sphi 0, %s128
      %s146 = sphi 0, %s146
      %s148 = sphi 0, %s146
      %s149 = sphi 0, %s148
      %s163 = sphi 0, %s149
      %s167 = sphi 0, %s167
      %s169 = sphi 0, %s167
      %s170 = sphi 0, %s169
      %s184 = sphi 0, %s170
      %s188 = sphi 0, %s188
      %s190 = sphi 0, %s188
      %s191 = sphi 0, %s190
      %s205 = sphi 0, %s191
      %s209 = sphi 0, %s209
      %s211 = sphi 0, %s209
      %s212 = sphi 0, %s211
      %s226 = sphi 0, %s212
      %s230 = sphi 0, %s230
      %s232 = sphi 0, %s230
      %s233 = sphi 0, %s232
      %s247 = sphi 0, %s233
      %s251 = sphi 0, %s251
      %s253 = sphi 0, %s251
      %s254 = sphi 0, %s253
      %s268 = sphi 0, %s254
      %s272 = sphi 0, %s272
      %s274 = sphi 0, %s272
      %s275 = sphi 0, %s274
      %s289 = sphi 0, %s275
      %s293 = sphi 0, %s293
      %s295 = sphi 0, %s293
      %s296 = sphi 0, %s295
      %s310 = sphi 0, %s296
      %s316 = sphi 0, %s318
      %s319 = sphi 0, %s316
      %s320 = sphi 0, %s319
      %s336 = sphi 0, %s320
    $region4: #{tpu_custom_call.1} parent=1 // loop_header_branch
      %31 = sbr.rel (%p29) target = $region8
    $region5: #{tpu_custom_call.1} parent=1 // loop_body
      %s33 = ssub.s32 %s28, 1
      %s34 = ssub.s32 %s28, 2
      %s35 = sadd.s32 %s28, 1
      %s36 = ssub.s32 %s28, %s35
      %p37 = scmp.eq.s32.totalorder %s36, 0
      %s39 = sadd.s32 %s38, 1
      %s40 = scalar_select %p37, %s38, %s39
      %p43 = pneg %p37
      %p44 = scmp.eq.s32.totalorder %s28, 1
      %p45 = por %p43, %p44
      %p46 = scmp.ne.s32.totalorder %s38, %s41
      %p47 = scmp.eq.s32.totalorder %s28, 0
      %p48 = por %p46, %p47
      %p49 = scmp.ne.s32.totalorder %s38, %s41
      %p50 = scmp.eq.s32.totalorder %s33, 1
      %p51 = por %p49, %p50
      %p52 = scmp.ne.s32.totalorder %s41, %s42
      %p53 = scmp.eq.s32.totalorder %s33, 0
      %p54 = por %p52, %p53
      %p55 = scmp.ne.s32.totalorder %s41, %s42
      %p56 = scmp.eq.s32.totalorder %s34, 1
      %p57 = por %p55, %p56
      %p59 = scmp.ne.s32.totalorder %s42, %s58
      %p60 = scmp.eq.s32.totalorder %s34, 0
      %p61 = por %p59, %p60
      %s63 = sadd.s32 %s62, 1
      %p66 = scmp.eq.s32.totalorder %s28, 1
      %p67 = scmp.ne.s32.totalorder %s62, %s64
      %p68 = scmp.eq.s32.totalorder %s28, 0
      %p69 = por %p67, %p68
      %p70 = scmp.ne.s32.totalorder %s62, %s64
      %p71 = scmp.eq.s32.totalorder %s33, 1
      %p72 = por %p70, %p71
      %p73 = scmp.ne.s32.totalorder %s64, %s65
      %p74 = scmp.eq.s32.totalorder %s33, 0
      %p75 = por %p73, %p74
      %p76 = scmp.ne.s32.totalorder %s64, %s65
      %p77 = scmp.eq.s32.totalorder %s34, 1
      %p78 = por %p76, %p77
      %p80 = scmp.ne.s32.totalorder %s65, %s79
      %p81 = scmp.eq.s32.totalorder %s34, 0
      %p82 = por %p80, %p81
      %s84 = sadd.s32 %s83, 1
      %p87 = scmp.eq.s32.totalorder %s28, 1
      %p88 = scmp.ne.s32.totalorder %s83, %s85
      %p89 = scmp.eq.s32.totalorder %s28, 0
      %p90 = por %p88, %p89
      %p91 = scmp.ne.s32.totalorder %s83, %s85
      %p92 = scmp.eq.s32.totalorder %s33, 1
      %p93 = por %p91, %p92
      %p94 = scmp.ne.s32.totalorder %s85, %s86
      %p95 = scmp.eq.s32.totalorder %s33, 0
      %p96 = por %p94, %p95
      %p97 = scmp.ne.s32.totalorder %s85, %s86
      %p98 = scmp.eq.s32.totalorder %s34, 1
      %p99 = por %p97, %p98
      %p101 = scmp.ne.s32.totalorder %s86, %s100
      %p102 = scmp.eq.s32.totalorder %s34, 0
      %p103 = por %p101, %p102
      %s105 = sadd.s32 %s104, 1
      %p108 = scmp.eq.s32.totalorder %s28, 1
      %p109 = scmp.ne.s32.totalorder %s104, %s106
      %p110 = scmp.eq.s32.totalorder %s28, 0
      %p111 = por %p109, %p110
      %p112 = scmp.ne.s32.totalorder %s104, %s106
      %p113 = scmp.eq.s32.totalorder %s33, 1
      %p114 = por %p112, %p113
      %p115 = scmp.ne.s32.totalorder %s106, %s107
      %p116 = scmp.eq.s32.totalorder %s33, 0
      %p117 = por %p115, %p116
      %p118 = scmp.ne.s32.totalorder %s106, %s107
      %p119 = scmp.eq.s32.totalorder %s34, 1
      %p120 = por %p118, %p119
      %p122 = scmp.ne.s32.totalorder %s107, %s121
      %p123 = scmp.eq.s32.totalorder %s34, 0
      %p124 = por %p122, %p123
      %s126 = sadd.s32 %s125, 1
      %p129 = scmp.eq.s32.totalorder %s28, 1
      %p130 = scmp.ne.s32.totalorder %s125, %s127
      %p131 = scmp.eq.s32.totalorder %s28, 0
      %p132 = por %p130, %p131
      %p133 = scmp.ne.s32.totalorder %s125, %s127
      %p134 = scmp.eq.s32.totalorder %s33, 1
      %p135 = por %p133, %p134
      %p136 = scmp.ne.s32.totalorder %s127, %s128
      %p137 = scmp.eq.s32.totalorder %s33, 0
      %p138 = por %p136, %p137
      %p139 = scmp.ne.s32.totalorder %s127, %s128
      %p140 = scmp.eq.s32.totalorder %s34, 1
      %p141 = por %p139, %p140
      %p143 = scmp.ne.s32.totalorder %s128, %s142
      %p144 = scmp.eq.s32.totalorder %s34, 0
      %p145 = por %p143, %p144
      %s147 = sadd.s32 %s146, 1
      %p150 = scmp.eq.s32.totalorder %s28, 1
      %p151 = scmp.ne.s32.totalorder %s146, %s148
      %p152 = scmp.eq.s32.totalorder %s28, 0
      %p153 = por %p151, %p152
      %p154 = scmp.ne.s32.totalorder %s146, %s148
      %p155 = scmp.eq.s32.totalorder %s33, 1
      %p156 = por %p154, %p155
      %p157 = scmp.ne.s32.totalorder %s148, %s149
      %p158 = scmp.eq.s32.totalorder %s33, 0
      %p159 = por %p157, %p158
      %p160 = scmp.ne.s32.totalorder %s148, %s149
      %p161 = scmp.eq.s32.totalorder %s34, 1
      %p162 = por %p160, %p161
      %p164 = scmp.ne.s32.totalorder %s149, %s163
      %p165 = scmp.eq.s32.totalorder %s34, 0
      %p166 = por %p164, %p165
      %s168 = sadd.s32 %s167, 1
      %p171 = scmp.eq.s32.totalorder %s28, 1
      %p172 = scmp.ne.s32.totalorder %s167, %s169
      %p173 = scmp.eq.s32.totalorder %s28, 0
      %p174 = por %p172, %p173
      %p175 = scmp.ne.s32.totalorder %s167, %s169
      %p176 = scmp.eq.s32.totalorder %s33, 1
      %p177 = por %p175, %p176
      %p178 = scmp.ne.s32.totalorder %s169, %s170
      %p179 = scmp.eq.s32.totalorder %s33, 0
      %p180 = por %p178, %p179
      %p181 = scmp.ne.s32.totalorder %s169, %s170
      %p182 = scmp.eq.s32.totalorder %s34, 1
      %p183 = por %p181, %p182
      %p185 = scmp.ne.s32.totalorder %s170, %s184
      %p186 = scmp.eq.s32.totalorder %s34, 0
      %p187 = por %p185, %p186
      %s189 = sadd.s32 %s188, 1
      %p192 = scmp.eq.s32.totalorder %s28, 1
      %p193 = scmp.ne.s32.totalorder %s188, %s190
      %p194 = scmp.eq.s32.totalorder %s28, 0
      %p195 = por %p193, %p194
      %p196 = scmp.ne.s32.totalorder %s188, %s190
      %p197 = scmp.eq.s32.totalorder %s33, 1
      %p198 = por %p196, %p197
      %p199 = scmp.ne.s32.totalorder %s190, %s191
      %p200 = scmp.eq.s32.totalorder %s33, 0
      %p201 = por %p199, %p200
      %p202 = scmp.ne.s32.totalorder %s190, %s191
      %p203 = scmp.eq.s32.totalorder %s34, 1
      %p204 = por %p202, %p203
      %p206 = scmp.ne.s32.totalorder %s191, %s205
      %p207 = scmp.eq.s32.totalorder %s34, 0
      %p208 = por %p206, %p207
      %s210 = sadd.s32 %s209, 1
      %p213 = scmp.eq.s32.totalorder %s28, 1
      %p214 = scmp.ne.s32.totalorder %s209, %s211
      %p215 = scmp.eq.s32.totalorder %s28, 0
      %p216 = por %p214, %p215
      %p217 = scmp.ne.s32.totalorder %s209, %s211
      %p218 = scmp.eq.s32.totalorder %s33, 1
      %p219 = por %p217, %p218
      %p220 = scmp.ne.s32.totalorder %s211, %s212
      %p221 = scmp.eq.s32.totalorder %s33, 0
      %p222 = por %p220, %p221
      %p223 = scmp.ne.s32.totalorder %s211, %s212
      %p224 = scmp.eq.s32.totalorder %s34, 1
      %p225 = por %p223, %p224
      %p227 = scmp.ne.s32.totalorder %s212, %s226
      %p228 = scmp.eq.s32.totalorder %s34, 0
      %p229 = por %p227, %p228
      %s231 = sadd.s32 %s230, 1
      %p234 = scmp.eq.s32.totalorder %s28, 1
      %p235 = scmp.ne.s32.totalorder %s230, %s232
      %p236 = scmp.eq.s32.totalorder %s28, 0
      %p237 = por %p235, %p236
      %p238 = scmp.ne.s32.totalorder %s230, %s232
      %p239 = scmp.eq.s32.totalorder %s33, 1
      %p240 = por %p238, %p239
      %p241 = scmp.ne.s32.totalorder %s232, %s233
      %p242 = scmp.eq.s32.totalorder %s33, 0
      %p243 = por %p241, %p242
      %p244 = scmp.ne.s32.totalorder %s232, %s233
      %p245 = scmp.eq.s32.totalorder %s34, 1
      %p246 = por %p244, %p245
      %p248 = scmp.ne.s32.totalorder %s233, %s247
      %p249 = scmp.eq.s32.totalorder %s34, 0
      %p250 = por %p248, %p249
      %s252 = sadd.s32 %s251, 1
      %p255 = scmp.eq.s32.totalorder %s28, 1
      %p256 = scmp.ne.s32.totalorder %s251, %s253
      %p257 = scmp.eq.s32.totalorder %s28, 0
      %p258 = por %p256, %p257
      %p259 = scmp.ne.s32.totalorder %s251, %s253
      %p260 = scmp.eq.s32.totalorder %s33, 1
      %p261 = por %p259, %p260
      %p262 = scmp.ne.s32.totalorder %s253, %s254
      %p263 = scmp.eq.s32.totalorder %s33, 0
      %p264 = por %p262, %p263
      %p265 = scmp.ne.s32.totalorder %s253, %s254
      %p266 = scmp.eq.s32.totalorder %s34, 1
      %p267 = por %p265, %p266
      %p269 = scmp.ne.s32.totalorder %s254, %s268
      %p270 = scmp.eq.s32.totalorder %s34, 0
      %p271 = por %p269, %p270
      %s273 = sadd.s32 %s272, 1
      %p276 = scmp.eq.s32.totalorder %s28, 1
      %p277 = scmp.ne.s32.totalorder %s272, %s274
      %p278 = scmp.eq.s32.totalorder %s28, 0
      %p279 = por %p277, %p278
      %p280 = scmp.ne.s32.totalorder %s272, %s274
      %p281 = scmp.eq.s32.totalorder %s33, 1
      %p282 = por %p280, %p281
      %p283 = scmp.ne.s32.totalorder %s274, %s275
      %p284 = scmp.eq.s32.totalorder %s33, 0
      %p285 = por %p283, %p284
      %p286 = scmp.ne.s32.totalorder %s274, %s275
      %p287 = scmp.eq.s32.totalorder %s34, 1
      %p288 = por %p286, %p287
      %p290 = scmp.ne.s32.totalorder %s275, %s289
      %p291 = scmp.eq.s32.totalorder %s34, 0
      %p292 = por %p290, %p291
      %s294 = sadd.s32 %s293, 1
      %p297 = scmp.eq.s32.totalorder %s28, 1
      %p298 = scmp.ne.s32.totalorder %s293, %s295
      %p299 = scmp.eq.s32.totalorder %s28, 0
      %p300 = por %p298, %p299
      %p301 = scmp.ne.s32.totalorder %s293, %s295
      %p302 = scmp.eq.s32.totalorder %s33, 1
      %p303 = por %p301, %p302
      %p304 = scmp.ne.s32.totalorder %s295, %s296
      %p305 = scmp.eq.s32.totalorder %s33, 0
      %p306 = por %p304, %p305
      %p307 = scmp.ne.s32.totalorder %s295, %s296
      %p308 = scmp.eq.s32.totalorder %s34, 1
      %p309 = por %p307, %p308
      %p311 = scmp.ne.s32.totalorder %s296, %s310
      %p312 = scmp.eq.s32.totalorder %s34, 0
      %p313 = por %p311, %p312
      %s314 = ssub.s32 %s28, %s35
      %p315 = scmp.eq.s32.totalorder %s314, 0
      %s317 = sadd.s32 %s316, 1
      %s318 = scalar_select %p315, %s316, %s317
      %p321 = pneg %p315
      %p322 = scmp.eq.s32.totalorder %s28, 1
      %p323 = por %p321, %p322
      %p324 = scmp.ne.s32.totalorder %s316, %s319
      %p325 = scmp.eq.s32.totalorder %s28, 0
      %p326 = por %p324, %p325
      %p327 = scmp.ne.s32.totalorder %s316, %s319
      %p328 = scmp.eq.s32.totalorder %s33, 1
      %p329 = por %p327, %p328
      %p330 = scmp.ne.s32.totalorder %s319, %s320
      %p331 = scmp.eq.s32.totalorder %s33, 0
      %p332 = por %p330, %p331
      %p333 = scmp.ne.s32.totalorder %s319, %s320
      %p334 = scmp.eq.s32.totalorder %s34, 1
      %p335 = por %p333, %p334
      %p337 = scmp.ne.s32.totalorder %s320, %s336
      %p338 = scmp.eq.s32.totalorder %s34, 0
      %p339 = por %p337, %p338
      %p340 = scmp.le.s32.totalorder 1, %s28
      %p341 = scmp.lt.s32.totalorder %s28, 3
      %p342 = pnand %p340, %p341
      %p343 = pneg %p342
      // Predicated region
      $region9: #{tpu_custom_call.1} parent=5 // pred_check
        _
      $region10: #{tpu_custom_call.1} parent=5 // pred_check_branch
        %345 = sbr.rel (%p342) target = $region12
      $region11: #{tpu_custom_call.1} parent=5 // pred_region
        %s346 = ssub.s32 %s28, 1
        // Predicated region
        $region13: #{tpu_custom_call.1} parent=11 // pred_check
          %p347 = pneg %p75
        $region14: #{tpu_custom_call.1} parent=11 // pred_check_branch
          %349 = sbr.rel (%p347) target = $region16
        $region15: #{tpu_custom_call.1} parent=11 // pred_region
          %s351 = ssub.s32 1024, 1024
          %352 = vsyncadd [#allocation8], %s351
          %s353 = sshll.u32 [#allocation7], 4
          %s354 = int_to_ptr.vmem [resolvable:$true] %s353
          %359 = dma.hbm_to_vmem [thread:$0]  %s1, 1024, %s354, [#allocation8], 64, 64, 4
        $region16: #{tpu_custom_call.1} parent=11 // pred_fallthru
          _
        // Predicated region
        $region17: #{tpu_custom_call.1} parent=11 // pred_check
          %p360 = pneg %p96
        $region18: #{tpu_custom_call.1} parent=11 // pred_check_branch
          %362 = sbr.rel (%p360) target = $region20
        $region19: #{tpu_custom_call.1} parent=11 // pred_region
          _
        $region20: #{tpu_custom_call.1} parent=11 // pred_fallthru
          _
        // Predicated region
        $region21: #{tpu_custom_call.1} parent=11 // pred_check
          %p363 = pneg %p117
        $region22: #{tpu_custom_call.1} parent=11 // pred_check_branch
          %365 = sbr.rel (%p363) target = $region24
        $region23: #{tpu_custom_call.1} parent=11 // pred_region
          %s367 = ssub.s32 12288, 12288
          %368 = vsyncadd [#allocation8], %s367
          %s369 = sshll.u32 [#allocation9], 4
          %s370 = int_to_ptr.vmem [resolvable:$true] %s369
          %375 = dma.hbm_to_vmem [thread:$0]  %s3, 12288, %s370, [#allocation8], 64, 64, 4
        $region24: #{tpu_custom_call.1} parent=11 // pred_fallthru
          _
        // Predicated region
        $region25: #{tpu_custom_call.1} parent=11 // pred_check
          %p376 = pneg %p138
        $region26: #{tpu_custom_call.1} parent=11 // pred_check_branch
          %378 = sbr.rel (%p376) target = $region28
        $region27: #{tpu_custom_call.1} parent=11 // pred_region
          _
        $region28: #{tpu_custom_call.1} parent=11 // pred_fallthru
          _
        // Predicated region
        $region29: #{tpu_custom_call.1} parent=11 // pred_check
          %p379 = pneg %p159
        $region30: #{tpu_custom_call.1} parent=11 // pred_check_branch
          %381 = sbr.rel (%p379) target = $region32
        $region31: #{tpu_custom_call.1} parent=11 // pred_region
          %s383 = ssub.s32 4096, 4096
          %384 = vsyncadd [#allocation11], %s383
          %s385 = sshll.u32 [#allocation10], 4
          %s386 = int_to_ptr.vmem [resolvable:$true] %s385
          %391 = dma.hbm_to_vmem [thread:$0]  %s5, 4096, %s386, [#allocation11], 64, 64, 4
        $region32: #{tpu_custom_call.1} parent=11 // pred_fallthru
          _
        // Predicated region
        $region33: #{tpu_custom_call.1} parent=11 // pred_check
          %p392 = pneg %p180
        $region34: #{tpu_custom_call.1} parent=11 // pred_check_branch
          %394 = sbr.rel (%p392) target = $region36
        $region35: #{tpu_custom_call.1} parent=11 // pred_region
          _
        $region36: #{tpu_custom_call.1} parent=11 // pred_fallthru
          _
        // Predicated region
        $region37: #{tpu_custom_call.1} parent=11 // pred_check
          %p395 = pneg %p201
        $region38: #{tpu_custom_call.1} parent=11 // pred_check_branch
          %397 = sbr.rel (%p395) target = $region40
        $region39: #{tpu_custom_call.1} parent=11 // pred_region
          %s399 = ssub.s32 2048, 2048
          %400 = vsyncadd [#allocation11], %s399
          %s401 = sshll.u32 [#allocation12], 4
          %s402 = int_to_ptr.vmem [resolvable:$true] %s401
          %407 = dma.hbm_to_vmem [thread:$0]  %s7, 2048, %s402, [#allocation11], 64, 64, 4
        $region40: #{tpu_custom_call.1} parent=11 // pred_fallthru
          _
        // Predicated region
        $region41: #{tpu_custom_call.1} parent=11 // pred_check
          %p408 = pneg %p222
        $region42: #{tpu_custom_call.1} parent=11 // pred_check_branch
          %410 = sbr.rel (%p408) target = $region44
        $region43: #{tpu_custom_call.1} parent=11 // pred_region
          _
        $region44: #{tpu_custom_call.1} parent=11 // pred_fallthru
          _
        // Predicated region
        $region45: #{tpu_custom_call.1} parent=11 // pred_check
          %p411 = pneg %p243
        $region46: #{tpu_custom_call.1} parent=11 // pred_check_branch
          %413 = sbr.rel (%p411) target = $region48
        $region47: #{tpu_custom_call.1} parent=11 // pred_region
          %s415 = ssub.s32 1024, 1024
          %416 = vsyncadd [#allocation14], %s415
          %s417 = sshll.u32 [#allocation13], 4
          %s418 = int_to_ptr.vmem [resolvable:$true] %s417
          %423 = dma.hbm_to_vmem [thread:$0]  %s9, 1024, %s418, [#allocation14], 64, 64, 4
        $region48: #{tpu_custom_call.1} parent=11 // pred_fallthru
          _
        // Predicated region
        $region49: #{tpu_custom_call.1} parent=11 // pred_check
          %p424 = pneg %p264
        $region50: #{tpu_custom_call.1} parent=11 // pred_check_branch
          %426 = sbr.rel (%p424) target = $region52
        $region51: #{tpu_custom_call.1} parent=11 // pred_region
          _
        $region52: #{tpu_custom_call.1} parent=11 // pred_fallthru
          _
        // Predicated region
        $region53: #{tpu_custom_call.1} parent=11 // pred_check
          %p427 = pneg %p285
        $region54: #{tpu_custom_call.1} parent=11 // pred_check_branch
          %429 = sbr.rel (%p427) target = $region56
        $region55: #{tpu_custom_call.1} parent=11 // pred_region
          %s431 = ssub.s32 1024, 1024
          %432 = vsyncadd [#allocation14], %s431
          %s433 = sshll.u32 [#allocation15], 4
          %s434 = int_to_ptr.vmem [resolvable:$true] %s433
          %439 = dma.hbm_to_vmem [thread:$0]  %s11, 1024, %s434, [#allocation14], 64, 64, 4
        $region56: #{tpu_custom_call.1} parent=11 // pred_fallthru
          _
        // Predicated region
        $region57: #{tpu_custom_call.1} parent=11 // pred_check
          %p440 = pneg %p306
        $region58: #{tpu_custom_call.1} parent=11 // pred_check_branch
          %442 = sbr.rel (%p440) target = $region60
        $region59: #{tpu_custom_call.1} parent=11 // pred_region
          _
        $region60: #{tpu_custom_call.1} parent=11 // pred_fallthru
          _
      $region12: #{tpu_custom_call.1} parent=5 // pred_fallthru
        _
      %p443 = scmp.lt.s32.totalorder %s28, 2
      // Predicated region
      $region61: #{tpu_custom_call.1} parent=5 // pred_check
        %p444 = pneg %p443
      $region62: #{tpu_custom_call.1} parent=5 // pred_check_branch
        %446 = sbr.rel (%p444) target = $region64
      $region63: #{tpu_custom_call.1} parent=5 // pred_region
        // Predicated region
        $region65: #{tpu_custom_call.1} parent=63 // pred_check
          %p447 = pneg %p48
        $region66: #{tpu_custom_call.1} parent=63 // pred_check_branch
          %449 = sbr.rel (%p447) target = $region68
        $region67: #{tpu_custom_call.1} parent=63 // pred_region
          %s450 = sand.u32 %s38, 1
          %s451 = scalar_lea.sflag [#allocation5], %s450
          %s452 = sand.u32 %s38, 1
          %s453 = smul.addr %s452, 16
          %s454 = scalar_lea.vmem [#allocation4], %s453
          %s455 = smul.u32 4, %s28
          %s457 = ssub.s32 256, 256
          %458 = vsyncadd %s451, %s457
          %s459 = smul.addr %s455, 64
          %s460 = scalar_lea.hbm %s0, %s459
          %s461 = sshll.u32 %s454, 4
          %s462 = int_to_ptr.vmem [resolvable:$true] %s461
          %467 = dma.hbm_to_vmem [thread:$0]  %s460, 256, %s462, %s451, 64, 64, 4
        $region68: #{tpu_custom_call.1} parent=63 // pred_fallthru
          _
      $region64: #{tpu_custom_call.1} parent=5 // pred_fallthru
        _
      %p468 = scmp.le.s32.totalorder 1, %s28
      %p469 = scmp.lt.s32.totalorder %s28, 3
      %p470 = pnand %p468, %p469
      %p471 = pneg %p470
      // Predicated region
      $region69: #{tpu_custom_call.1} parent=5 // pred_check
        _
      $region70: #{tpu_custom_call.1} parent=5 // pred_check_branch
        %473 = sbr.rel (%p470) target = $region72
      $region71: #{tpu_custom_call.1} parent=5 // pred_region
        %s474 = ssub.s32 %s28, 1
        %s475 = sand.u32 %s41, 1
        %s476 = scalar_lea.sflag [#allocation5], %s475
        %s477 = sand.u32 %s41, 1
        %s478 = smul.addr %s477, 16
        %s479 = scalar_lea.vmem [#allocation4], %s478
        // Predicated region
        $region73: #{tpu_custom_call.1} parent=71 // pred_check
          %p480 = pneg %p54
        $region74: #{tpu_custom_call.1} parent=71 // pred_check_branch
          %482 = sbr.rel (%p480) target = $region76
        $region75: #{tpu_custom_call.1} parent=71 // pred_region
          %483 = dma.done %s476, 256
        $region76: #{tpu_custom_call.1} parent=71 // pred_fallthru
          _
        // Predicated region
        $region77: #{tpu_custom_call.1} parent=71 // pred_check
          %p484 = pneg %p75
        $region78: #{tpu_custom_call.1} parent=71 // pred_check_branch
          %486 = sbr.rel (%p484) target = $region80
        $region79: #{tpu_custom_call.1} parent=71 // pred_region
          %487 = dma.done [#allocation8], 1024
        $region80: #{tpu_custom_call.1} parent=71 // pred_fallthru
          _
        // Predicated region
        $region81: #{tpu_custom_call.1} parent=71 // pred_check
          %p488 = pneg %p117
        $region82: #{tpu_custom_call.1} parent=71 // pred_check_branch
          %490 = sbr.rel (%p488) target = $region84
        $region83: #{tpu_custom_call.1} parent=71 // pred_region
          %491 = dma.done [#allocation8], 12288
        $region84: #{tpu_custom_call.1} parent=71 // pred_fallthru
          _
        // Predicated region
        $region85: #{tpu_custom_call.1} parent=71 // pred_check
          %p492 = pneg %p159
        $region86: #{tpu_custom_call.1} parent=71 // pred_check_branch
          %494 = sbr.rel (%p492) target = $region88
        $region87: #{tpu_custom_call.1} parent=71 // pred_region
          %495 = dma.done [#allocation11], 4096
        $region88: #{tpu_custom_call.1} parent=71 // pred_fallthru
          _
        // Predicated region
        $region89: #{tpu_custom_call.1} parent=71 // pred_check
          %p496 = pneg %p201
        $region90: #{tpu_custom_call.1} parent=71 // pred_check_branch
          %498 = sbr.rel (%p496) target = $region92
        $region91: #{tpu_custom_call.1} parent=71 // pred_region
          %499 = dma.done [#allocation11], 2048
        $region92: #{tpu_custom_call.1} parent=71 // pred_fallthru
          _
        // Predicated region
        $region93: #{tpu_custom_call.1} parent=71 // pred_check
          %p500 = pneg %p243
        $region94: #{tpu_custom_call.1} parent=71 // pred_check_branch
          %502 = sbr.rel (%p500) target = $region96
        $region95: #{tpu_custom_call.1} parent=71 // pred_region
          %503 = dma.done [#allocation14], 1024
        $region96: #{tpu_custom_call.1} parent=71 // pred_fallthru
          _
        // Predicated region
        $region97: #{tpu_custom_call.1} parent=71 // pred_check
          %p504 = pneg %p285
        $region98: #{tpu_custom_call.1} parent=71 // pred_check_branch
          %506 = sbr.rel (%p504) target = $region100
        $region99: #{tpu_custom_call.1} parent=71 // pred_region
          %507 = dma.done [#allocation14], 1024
        $region100: #{tpu_custom_call.1} parent=71 // pred_fallthru
          _
        %s508 = sand.u32 %s41, 1
        %s509 = scalar_lea.sflag [#allocation5], %s508
        %s510 = sand.u32 %s41, 1
        %s511 = smul.addr %s510, 16
        %s512 = scalar_lea.vmem [#allocation4], %s511
        %p513 = pneg %p54
        %p514 = pneg %p51
        %p515 = pneg %p75
        %p516 = pneg %p72
        %p517 = pneg %p96
        %p518 = pneg %p93
        %p519 = pneg %p117
        %p520 = pneg %p114
        %p521 = pneg %p138
        %p522 = pneg %p135
        %p523 = pneg %p159
        %p524 = pneg %p156
        %p525 = pneg %p180
        %p526 = pneg %p177
        %p527 = pneg %p201
        %p528 = pneg %p198
        %p529 = pneg %p222
        %p530 = pneg %p219
        %p531 = pneg %p243
        %p532 = pneg %p240
        %p533 = pneg %p264
        %p534 = pneg %p261
        %p535 = pneg %p285
        %p536 = pneg %p282
        %p537 = pneg %p306
        %p538 = pneg %p303
        %p539 = pneg %p332
        %p540 = pneg %p329
        %s541 = sand.u32 %s319, 1
        %s542 = scalar_lea.sflag [#allocation6], %s541
        %s543 = sand.u32 %s319, 1
        %s544 = smul.addr %s543, 32
        %s545 = scalar_lea.vmem [#allocation16], %s544
        %s546 = smul.u32 4, %s33
        %s547 = smul.u32 4, %s33
        %549 = vst [vmem:[#allocation2] sm:$0xf] 0
        %550 = vst [vmem:[#allocation2 + $0x8] sm:$0xf0] 0
        %s551 = scalar_lea.vmem [#allocation2], 16
        %552 = vst [vmem:[%s551] sm:$0xf] 0
        %553 = vst [vmem:[%s551 + $0x8] sm:$0xf0] 0
        %v554 = vld [vmem:[%s479] sm:$0xf]
        %v555 = vld [vmem:[%s479 + $0x4] sm:$0xf]
        %v556 = vld [vmem:[%s479 + $0x8] sm:$0xf]
        %v557 = vld [vmem:[%s479 + $0xc] sm:$0xf]
        %v558 = vld [vmem:[#allocation7] sm:$0xf]
        %v559 = vld [vmem:[#allocation7 + $0x4] sm:$0xf]
        %v560 = vld [vmem:[#allocation7 + $0x8] sm:$0xf]
        %v561 = vld [vmem:[#allocation7 + $0xc] sm:$0xf]
        %v562 = vld [vmem:[#allocation7 + $0x10] sm:$0xf]
        %v563 = vld [vmem:[#allocation7 + $0x14] sm:$0xf]
        %v564 = vld [vmem:[#allocation7 + $0x18] sm:$0xf]
        %v565 = vld [vmem:[#allocation7 + $0x1c] sm:$0xf]
        %v566 = vld [vmem:[#allocation7 + $0x20] sm:$0xf]
        %v567 = vld [vmem:[#allocation7 + $0x24] sm:$0xf]
        %v568 = vld [vmem:[#allocation7 + $0x28] sm:$0xf]
        %v569 = vld [vmem:[#allocation7 + $0x2c] sm:$0xf]
        %v570 = vld [vmem:[#allocation7 + $0x30] sm:$0xf]
        %v571 = vld [vmem:[#allocation7 + $0x34] sm:$0xf]
        %v572 = vld [vmem:[#allocation7 + $0x38] sm:$0xf]
        %v573 = vld [vmem:[#allocation7 + $0x3c] sm:$0xf]
        %v574 = vld [vmem:[%s2] sm:$0x1]
        %v576 = vlaneseq
        %v577 = vshrl.u32 %v576, 7
        %v578 = vsub.s32 0, %v577
        %v579 = vrot.slane %v574, %v578
        %v585 = vunpack.c.l.b16 %v554
        %v586 = vunpack.c.l.b16 %v555
        %v587 = vunpack.c.l.b16 %v556
        %v588 = vunpack.c.l.b16 %v557
        %v589 = vpack.c.b16 %v586, %v585
        %v590 = vpack.c.b16 %v588, %v587
        %v609 = vunpack.c.l.b16 %v558
        %v610 = vunpack.c.l.b16 %v559
        %v611 = vunpack.c.l.b16 %v560
        %v612 = vunpack.c.l.b16 %v561
        %v613 = vunpack.c.l.b16 %v562
        %v614 = vunpack.c.l.b16 %v563
        %v615 = vunpack.c.l.b16 %v564
        %v616 = vunpack.c.l.b16 %v565
        %v617 = vunpack.c.l.b16 %v566
        %v618 = vunpack.c.l.b16 %v567
        %v619 = vunpack.c.l.b16 %v568
        %v620 = vunpack.c.l.b16 %v569
        %v621 = vunpack.c.l.b16 %v570
        %v622 = vunpack.c.l.b16 %v571
        %v623 = vunpack.c.l.b16 %v572
        %v624 = vunpack.c.l.b16 %v573
        %v625 = vpack.c.b16 %v610, %v609
        %v626 = vpack.c.b16 %v612, %v611
        %v627 = vpack.c.b16 %v614, %v613
        %v628 = vpack.c.b16 %v616, %v615
        %v629 = vpack.c.b16 %v618, %v617
        %v630 = vpack.c.b16 %v620, %v619
        %v631 = vpack.c.b16 %v622, %v621
        %v632 = vpack.c.b16 %v624, %v623
        %641 = vmatprep.subr.bf16.mxu0 0
        %642 = vmatpush1.bf16.msra.mxu0 %v625
        %643 = vmatprep.subr.bf16.mxu0 0
        %644 = vmatpush1.bf16.msra.mxu0 %v626
        %645 = vmatprep.subr.bf16.mxu0 0
        %646 = vmatpush1.bf16.msra.mxu0 %v627
        %647 = vmatprep.subr.bf16.mxu0 0
        %648 = vmatpush1.bf16.msra.mxu0 %v628
        %649 = vmatprep.subr.bf16.mxu0 0
        %650 = vmatpush1.bf16.msra.mxu0 %v629
        %651 = vmatprep.subr.bf16.mxu0 0
        %652 = vmatpush1.bf16.msra.mxu0 %v630
        %653 = vmatprep.subr.bf16.mxu0 0
        %654 = vmatpush1.bf16.msra.mxu0 %v631
        %655 = vmatprep.subr.bf16.mxu0 0
        %656 = vmatpush1.bf16.msra.mxu0 %v632
        %657 = vmatprep.subr.bf16.mxu0 0
        %658 = vmatpush1.bf16.msra.mxu0 0
        %659 = vmatprep.subr.bf16.mxu0 0
        %660 = vmatpush1.bf16.msra.mxu0 0
        %661 = vmatprep.subr.bf16.mxu0 0
        %662 = vmatpush1.bf16.msra.mxu0 0
        %663 = vmatprep.subr.bf16.mxu0 0
        %664 = vmatpush1.bf16.msra.mxu0 0
        %665 = vmatprep.subr.bf16.mxu0 0
        %666 = vmatpush1.bf16.msra.mxu0 0
        %667 = vmatprep.subr.bf16.mxu0 0
        %668 = vmatpush1.bf16.msra.mxu0 0
        %669 = vmatprep.subr.bf16.mxu0 0
        %670 = vmatpush1.bf16.msra.mxu0 0
        %671 = vmatprep.subr.bf16.mxu0 0
        %672 = vmatpush1.bf16.msra.mxu0 0
        %673 = vmatprep.mubr.bf16.mxu0 0
        %674 = vmatmul.mubr.bf16.gmra.mrb[0].mxu0 %v589
        %v675 = vpop.f32.mrb[0].mxu0
        %v676 = vadd.f32 %v579, %v675
        %v677 = vpop.f32.mrb[0].mxu0
        %v678 = vpop.f32.mrb[0].mxu0
        %v679 = vadd.f32 %v579, %v678
        %v680 = vpop.f32.mrb[0].mxu0
        %681 = vmatprep.mubr.bf16.mxu0 0
        %682 = vmatmul.mubr.bf16.gmra.mrb[0].mxu0 %v590
        %v683 = vpop.f32.mrb[0].mxu0
        %v684 = vadd.f32 %v579, %v683
        %v685 = vpop.f32.mrb[0].mxu0
        %v686 = vpop.f32.mrb[0].mxu0
        %v687 = vadd.f32 %v579, %v686
        %v688 = vpop.f32.mrb[0].mxu0
        %689 = vdwg.mxu0
        %v690 = vmax.f32 %v676, 0.0
        %v691 = vmax.f32 %v679, 0.0
        %v692 = vmax.f32 %v684, 0.0
        %v693 = vmax.f32 %v687, 0.0
        %v694 = vmax.f32 %v690, 0.0
        %v695 = vmax.f32 %v691, 0.0
        %v696 = vmax.f32 %v692, 0.0
        %v697 = vmax.f32 %v693, 0.0
        %v698 = vpack.c.bf16 %v695, %v694
        %v699 = vpack.c.bf16 %v697, %v696
        %700 = vst [vmem:[#allocation3 + $0x8] sm:$0xff] %v698
        %701 = vst [vmem:[#allocation3 + $0x20] sm:$0xff] %v699
        %v703 = vrot.slane %v698, 4
        %705 = vst [vmem:[#allocation2] sm:$0xf0] %v703
        %706 = vst [vmem:[#allocation2 + $0x8] sm:$0xf] %v703
        %v707 = vld [vmem:[#allocation2] sm:$0xfc]
        %v708 = vld [vmem:[#allocation2 + $0x8] sm:$0x7]
        %vm709 = vsmask.f32 5376
        %v711 = vshrl.u32 %v707, 16
        %v713 = vrot.slane %v711, 2
        %v714 = vshll.u32 %v707, 16
        %v716 = vrot.slane %v714, 3
        %v717 = vor.u32 %v713, %v716
        %v719 = vshrl.u32 %v708, 16
        %v721 = vrot.slane %v719, 2
        %v722 = vshll.u32 %v708, 16
        %v724 = vrot.slane %v722, 3
        %v725 = vor.u32 %v721, %v724
        %v726 = vsel %vm709, %v717, %v725
        %728 = vst [vmem:[#allocation3] sm:$0xff] %v726
        %v729 = vld [vmem:[#allocation2] sm:$0xe0]
        %v730 = vld [vmem:[#allocation2 + $0x8] sm:$0x3f]
        %vm731 = vsmask.f32 2304
        %v733 = vshrl.u32 %v729, 16
        %v735 = vrot.slane %v733, 5
        %v736 = vshll.u32 %v729, 16
        %v738 = vrot.slane %v736, 6
        %v739 = vor.u32 %v735, %v738
        %v741 = vshrl.u32 %v730, 16
        %v743 = vrot.slane %v741, 5
        %v744 = vshll.u32 %v730, 16
        %v746 = vrot.slane %v744, 6
        %v747 = vor.u32 %v743, %v746
        %v748 = vsel %vm731, %v739, %v747
        %750 = vst [vmem:[#allocation3 + $0x10] sm:$0xff] %v748
        %v752 = vrot.slane %v699, 4
        %754 = vst [vmem:[%s551] sm:$0xf0] %v752
        %755 = vst [vmem:[%s551 + $0x8] sm:$0xf] %v752
        %v756 = vld [vmem:[%s551] sm:$0xfc]
        %v757 = vld [vmem:[%s551 + $0x8] sm:$0x7]
        %v759 = vshrl.u32 %v756, 16
        %v761 = vrot.slane %v759, 2
        %v762 = vshll.u32 %v756, 16
        %v764 = vrot.slane %v762, 3
        %v765 = vor.u32 %v761, %v764
        %v767 = vshrl.u32 %v757, 16
        %v769 = vrot.slane %v767, 2
        %v770 = vshll.u32 %v757, 16
        %v772 = vrot.slane %v770, 3
        %v773 = vor.u32 %v769, %v772
        %v774 = vsel %vm709, %v765, %v773
        %776 = vst [vmem:[#allocation3 + $0x18] sm:$0xff] %v774
        %v777 = vld [vmem:[%s551] sm:$0xe0]
        %v778 = vld [vmem:[%s551 + $0x8] sm:$0x3f]
        %v780 = vshrl.u32 %v777, 16
        %v782 = vrot.slane %v780, 5
        %v783 = vshll.u32 %v777, 16
        %v785 = vrot.slane %v783, 6
        %v786 = vor.u32 %v782, %v785
        %v788 = vshrl.u32 %v778, 16
        %v790 = vrot.slane %v788, 5
        %v791 = vshll.u32 %v778, 16
        %v793 = vrot.slane %v791, 6
        %v794 = vor.u32 %v790, %v793
        %v795 = vsel %vm731, %v786, %v794
        %797 = vst [vmem:[#allocation3 + $0x28] sm:$0xff] %v795
        %v798 = vld [vmem:[#allocation3] sm:$0xff]
        %v799 = vld [vmem:[#allocation3 + $0x8] sm:$0xff]
        %v800 = vld [vmem:[#allocation3 + $0x10] sm:$0xff]
        %v801 = vld [vmem:[#allocation3 + $0x18] sm:$0xff]
        %v802 = vld [vmem:[#allocation3 + $0x20] sm:$0xff]
        %v803 = vld [vmem:[#allocation3 + $0x28] sm:$0xff]
        %v804 = vld [vmem:[#allocation9] sm:$0xf]
        %v805 = vld [vmem:[#allocation9 + $0x4] sm:$0xf]
        %v806 = vld [vmem:[#allocation9 + $0x8] sm:$0xf]
        %v807 = vld [vmem:[#allocation9 + $0xc] sm:$0xf]
        %v808 = vld [vmem:[#allocation9 + $0x10] sm:$0xf]
        %v809 = vld [vmem:[#allocation9 + $0x14] sm:$0xf]
        %v810 = vld [vmem:[#allocation9 + $0x18] sm:$0xf]
        %v811 = vld [vmem:[#allocation9 + $0x1c] sm:$0xf]
        %v812 = vld [vmem:[#allocation9 + $0x20] sm:$0xf]
        %v813 = vld [vmem:[#allocation9 + $0x24] sm:$0xf]
        %v814 = vld [vmem:[#allocation9 + $0x28] sm:$0xf]
        %v815 = vld [vmem:[#allocation9 + $0x2c] sm:$0xf]
        %v816 = vld [vmem:[#allocation9 + $0x30] sm:$0xf]
        %v817 = vld [vmem:[#allocation9 + $0x34] sm:$0xf]
        %v818 = vld [vmem:[#allocation9 + $0x38] sm:$0xf]
        %v819 = vld [vmem:[#allocation9 + $0x3c] sm:$0xf]
        %v820 = vld [vmem:[#allocation9 + $0x40] sm:$0xf]
        %v821 = vld [vmem:[#allocation9 + $0x44] sm:$0xf]
        %v822 = vld [vmem:[#allocation9 + $0x48] sm:$0xf]
        %v823 = vld [vmem:[#allocation9 + $0x4c] sm:$0xf]
        %v824 = vld [vmem:[#allocation9 + $0x50] sm:$0xf]
        %v825 = vld [vmem:[#allocation9 + $0x54] sm:$0xf]
        %v826 = vld [vmem:[#allocation9 + $0x58] sm:$0xf]
        %v827 = vld [vmem:[#allocation9 + $0x5c] sm:$0xf]
        %v828 = vld [vmem:[#allocation9 + $0x60] sm:$0xf]
        %v829 = vld [vmem:[#allocation9 + $0x64] sm:$0xf]
        %v830 = vld [vmem:[#allocation9 + $0x68] sm:$0xf]
        %v831 = vld [vmem:[#allocation9 + $0x6c] sm:$0xf]
        %v832 = vld [vmem:[#allocation9 + $0x70] sm:$0xf]
        %v833 = vld [vmem:[#allocation9 + $0x74] sm:$0xf]
        %v834 = vld [vmem:[#allocation9 + $0x78] sm:$0xf]
        %v835 = vld [vmem:[#allocation9 + $0x7c] sm:$0xf]
        %v836 = vld [vmem:[#allocation9 + $0x80] sm:$0xf]
        %v837 = vld [vmem:[#allocation9 + $0x84] sm:$0xf]
        %v838 = vld [vmem:[#allocation9 + $0x88] sm:$0xf]
        %v839 = vld [vmem:[#allocation9 + $0x8c] sm:$0xf]
        %v840 = vld [vmem:[#allocation9 + $0x90] sm:$0xf]
        %v841 = vld [vmem:[#allocation9 + $0x94] sm:$0xf]
        %v842 = vld [vmem:[#allocation9 + $0x98] sm:$0xf]
        %v843 = vld [vmem:[#allocation9 + $0x9c] sm:$0xf]
        %v844 = vld [vmem:[#allocation9 + $0xa0] sm:$0xf]
        %v845 = vld [vmem:[#allocation9 + $0xa4] sm:$0xf]
        %v846 = vld [vmem:[#allocation9 + $0xa8] sm:$0xf]
        %v847 = vld [vmem:[#allocation9 + $0xac] sm:$0xf]
        %v848 = vld [vmem:[#allocation9 + $0xb0] sm:$0xf]
        %v849 = vld [vmem:[#allocation9 + $0xb4] sm:$0xf]
        %v850 = vld [vmem:[#allocation9 + $0xb8] sm:$0xf]
        %v851 = vld [vmem:[#allocation9 + $0xbc] sm:$0xf]
        %v852 = vld [vmem:[%s4] sm:$0x1]
        %v854 = vlaneseq
        %v855 = vshrl.u32 %v854, 7
        %v856 = vsub.s32 0, %v855
        %v857 = vrot.slane %v852, %v856
        %v907 = vunpack.c.l.b16 %v804
        %v908 = vunpack.c.l.b16 %v805
        %v909 = vunpack.c.l.b16 %v806
        %v910 = vunpack.c.l.b16 %v807
        %v911 = vunpack.c.l.b16 %v808
        %v912 = vunpack.c.l.b16 %v809
        %v913 = vunpack.c.l.b16 %v810
        %v914 = vunpack.c.l.b16 %v811
        %v915 = vunpack.c.l.b16 %v812
        %v916 = vunpack.c.l.b16 %v813
        %v917 = vunpack.c.l.b16 %v814
        %v918 = vunpack.c.l.b16 %v815
        %v919 = vunpack.c.l.b16 %v816
        %v920 = vunpack.c.l.b16 %v817
        %v921 = vunpack.c.l.b16 %v818
        %v922 = vunpack.c.l.b16 %v819
        %v923 = vunpack.c.l.b16 %v820
        %v924 = vunpack.c.l.b16 %v821
        %v925 = vunpack.c.l.b16 %v822
        %v926 = vunpack.c.l.b16 %v823
        %v927 = vunpack.c.l.b16 %v824
        %v928 = vunpack.c.l.b16 %v825
        %v929 = vunpack.c.l.b16 %v826
        %v930 = vunpack.c.l.b16 %v827
        %v931 = vunpack.c.l.b16 %v828
        %v932 = vunpack.c.l.b16 %v829
        %v933 = vunpack.c.l.b16 %v830
        %v934 = vunpack.c.l.b16 %v831
        %v935 = vunpack.c.l.b16 %v832
        %v936 = vunpack.c.l.b16 %v833
        %v937 = vunpack.c.l.b16 %v834
        %v938 = vunpack.c.l.b16 %v835
        %v939 = vunpack.c.l.b16 %v836
        %v940 = vunpack.c.l.b16 %v837
        %v941 = vunpack.c.l.b16 %v838
        %v942 = vunpack.c.l.b16 %v839
        %v943 = vunpack.c.l.b16 %v840
        %v944 = vunpack.c.l.b16 %v841
        %v945 = vunpack.c.l.b16 %v842
        %v946 = vunpack.c.l.b16 %v843
        %v947 = vunpack.c.l.b16 %v844
        %v948 = vunpack.c.l.b16 %v845
        %v949 = vunpack.c.l.b16 %v846
        %v950 = vunpack.c.l.b16 %v847
        %v951 = vunpack.c.l.b16 %v848
        %v952 = vunpack.c.l.b16 %v849
        %v953 = vunpack.c.l.b16 %v850
        %v954 = vunpack.c.l.b16 %v851
        %v955 = vpack.c.b16 %v908, %v907
        %v956 = vpack.c.b16 %v910, %v909
        %v957 = vpack.c.b16 %v912, %v911
        %v958 = vpack.c.b16 %v914, %v913
        %v959 = vpack.c.b16 %v916, %v915
        %v960 = vpack.c.b16 %v918, %v917
        %v961 = vpack.c.b16 %v920, %v919
        %v962 = vpack.c.b16 %v922, %v921
        %v963 = vpack.c.b16 %v924, %v923
        %v964 = vpack.c.b16 %v926, %v925
        %v965 = vpack.c.b16 %v928, %v927
        %v966 = vpack.c.b16 %v930, %v929
        %v967 = vpack.c.b16 %v932, %v931
        %v968 = vpack.c.b16 %v934, %v933
        %v969 = vpack.c.b16 %v936, %v935
        %v970 = vpack.c.b16 %v938, %v937
        %v971 = vpack.c.b16 %v940, %v939
        %v972 = vpack.c.b16 %v942, %v941
        %v973 = vpack.c.b16 %v944, %v943
        %v974 = vpack.c.b16 %v946, %v945
        %v975 = vpack.c.b16 %v948, %v947
        %v976 = vpack.c.b16 %v950, %v949
        %v977 = vpack.c.b16 %v952, %v951
        %v978 = vpack.c.b16 %v954, %v953
        %1003 = vmatprep.subr.bf16.mxu0 0
        %1004 = vmatpush1.bf16.msra.mxu0 %v955
        %1005 = vmatprep.subr.bf16.mxu0 0
        %1006 = vmatpush1.bf16.msra.mxu0 %v956
        %1007 = vmatprep.subr.bf16.mxu0 0
        %1008 = vmatpush1.bf16.msra.mxu0 %v957
        %1009 = vmatprep.subr.bf16.mxu0 0
        %1010 = vmatpush1.bf16.msra.mxu0 %v958
        %1011 = vmatprep.subr.bf16.mxu0 0
        %1012 = vmatpush1.bf16.msra.mxu0 %v959
        %1013 = vmatprep.subr.bf16.mxu0 0
        %1014 = vmatpush1.bf16.msra.mxu0 %v960
        %1015 = vmatprep.subr.bf16.mxu0 0
        %1016 = vmatpush1.bf16.msra.mxu0 %v961
        %1017 = vmatprep.subr.bf16.mxu0 0
        %1018 = vmatpush1.bf16.msra.mxu0 %v962
        %1019 = vmatprep.subr.bf16.mxu0 0
        %1020 = vmatpush1.bf16.msra.mxu0 %v963
        %1021 = vmatprep.subr.bf16.mxu0 0
        %1022 = vmatpush1.bf16.msra.mxu0 %v964
        %1023 = vmatprep.subr.bf16.mxu0 0
        %1024 = vmatpush1.bf16.msra.mxu0 %v965
        %1025 = vmatprep.subr.bf16.mxu0 0
        %1026 = vmatpush1.bf16.msra.mxu0 %v966
        %1027 = vmatprep.subr.bf16.mxu0 0
        %1028 = vmatpush1.bf16.msra.mxu0 %v967
        %1029 = vmatprep.subr.bf16.mxu0 0
        %1030 = vmatpush1.bf16.msra.mxu0 %v968
        %1031 = vmatprep.subr.bf16.mxu0 0
        %1032 = vmatpush1.bf16.msra.mxu0 %v969
        %1033 = vmatprep.subr.bf16.mxu0 0
        %1034 = vmatpush1.bf16.msra.mxu0 %v970
        %1035 = vmatprep.mubr.bf16.mxu0 %v799
        %1036 = vmatmul.mubr.bf16.gmra.mrb[0].mxu0 %v798
        %v1037 = vpop.f32.mrb[0].mxu0
        %v1038 = vadd.f32 %v857, %v1037
        %v1039 = vpop.f32.mrb[0].mxu0
        %v1040 = vpop.f32.mrb[0].mxu0
        %v1041 = vadd.f32 %v857, %v1040
        %v1042 = vpop.f32.mrb[0].mxu0
        %1043 = vmatprep.mubr.bf16.mxu0 %v802
        %1044 = vmatmul.mubr.bf16.gmra.mrb[0].mxu0 %v801
        %v1045 = vpop.f32.mrb[0].mxu0
        %v1046 = vadd.f32 %v857, %v1045
        %v1047 = vpop.f32.mrb[0].mxu0
        %v1048 = vpop.f32.mrb[0].mxu0
        %v1049 = vadd.f32 %v857, %v1048
        %v1050 = vpop.f32.mrb[0].mxu0
        %1051 = vdwg.mxu0
        %1052 = vmatprep.subr.bf16.mxu0 0
        %1053 = vmatpush1.bf16.msra.mxu0 %v971
        %1054 = vmatprep.subr.bf16.mxu0 0
        %1055 = vmatpush1.bf16.msra.mxu0 %v972
        %1056 = vmatprep.subr.bf16.mxu0 0
        %1057 = vmatpush1.bf16.msra.mxu0 %v973
        %1058 = vmatprep.subr.bf16.mxu0 0
        %1059 = vmatpush1.bf16.msra.mxu0 %v974
        %1060 = vmatprep.subr.bf16.mxu0 0
        %1061 = vmatpush1.bf16.msra.mxu0 %v975
        %1062 = vmatprep.subr.bf16.mxu0 0
        %1063 = vmatpush1.bf16.msra.mxu0 %v976
        %1064 = vmatprep.subr.bf16.mxu0 0
        %1065 = vmatpush1.bf16.msra.mxu0 %v977
        %1066 = vmatprep.subr.bf16.mxu0 0
        %1067 = vmatpush1.bf16.msra.mxu0 %v978
        %1068 = vmatprep.subr.bf16.mxu0 0
        %1069 = vmatpush1.bf16.msra.mxu0 0
        %1070 = vmatprep.subr.bf16.mxu0 0
        %1071 = vmatpush1.bf16.msra.mxu0 0
        %1072 = vmatprep.subr.bf16.mxu0 0
        %1073 = vmatpush1.bf16.msra.mxu0 0
        %1074 = vmatprep.subr.bf16.mxu0 0
        %1075 = vmatpush1.bf16.msra.mxu0 0
        %1076 = vmatprep.subr.bf16.mxu0 0
        %1077 = vmatpush1.bf16.msra.mxu0 0
        %1078 = vmatprep.subr.bf16.mxu0 0
        %1079 = vmatpush1.bf16.msra.mxu0 0
        %1080 = vmatprep.subr.bf16.mxu0 0
        %1081 = vmatpush1.bf16.msra.mxu0 0
        %1082 = vmatprep.subr.bf16.mxu0 0
        %1083 = vmatpush1.bf16.msra.mxu0 0
        %1084 = vmatprep.mubr.bf16.mxu0 0
        %1085 = vmatmul.mubr.bf16.gmra.mrb[0].mxu0 %v800
        %v1086 = vpop.f32.mrb[0].mxu0
        %v1087 = vadd.f32 %v1038, %v1086
        %v1088 = vpop.f32.mrb[0].mxu0
        %v1089 = vpop.f32.mrb[0].mxu0
        %v1090 = vadd.f32 %v1041, %v1089
        %v1091 = vpop.f32.mrb[0].mxu0
        %1092 = vmatprep.mubr.bf16.mxu0 0
        %1093 = vmatmul.mubr.bf16.gmra.mrb[0].mxu0 %v803
        %v1094 = vpop.f32.mrb[0].mxu0
        %v1095 = vadd.f32 %v1046, %v1094
        %v1096 = vpop.f32.mrb[0].mxu0
        %v1097 = vpop.f32.mrb[0].mxu0
        %v1098 = vadd.f32 %v1049, %v1097
        %v1099 = vpop.f32.mrb[0].mxu0
        %1100 = vdwg.mxu0
        %v1101 = vmax.f32 %v1087, 0.0
        %v1102 = vmax.f32 %v1090, 0.0
        %v1103 = vmax.f32 %v1095, 0.0
        %v1104 = vmax.f32 %v1098, 0.0
        %v1105 = vpack.c.bf16 %v1102, %v1101
        %v1106 = vpack.c.bf16 %v1104, %v1103
        %v1107 = vld [vmem:[#allocation10] sm:$0xf]
        %v1108 = vld [vmem:[#allocation10 + $0x4] sm:$0xf]
        %v1109 = vld [vmem:[#allocation10 + $0x8] sm:$0xf]
        %v1110 = vld [vmem:[#allocation10 + $0xc] sm:$0xf]
        %v1111 = vld [vmem:[#allocation10 + $0x10] sm:$0xf]
        %v1112 = vld [vmem:[#allocation10 + $0x14] sm:$0xf]
        %v1113 = vld [vmem:[#allocation10 + $0x18] sm:$0xf]
        %v1114 = vld [vmem:[#allocation10 + $0x1c] sm:$0xf]
        %v1115 = vld [vmem:[#allocation10 + $0x20] sm:$0xf]
        %v1116 = vld [vmem:[#allocation10 + $0x24] sm:$0xf]
        %v1117 = vld [vmem:[#allocation10 + $0x28] sm:$0xf]
        %v1118 = vld [vmem:[#allocation10 + $0x2c] sm:$0xf]
        %v1119 = vld [vmem:[#allocation10 + $0x30] sm:$0xf]
        %v1120 = vld [vmem:[#allocation10 + $0x34] sm:$0xf]
        %v1121 = vld [vmem:[#allocation10 + $0x38] sm:$0xf]
        %v1122 = vld [vmem:[#allocation10 + $0x3c] sm:$0xf]
        %v1139 = vunpack.c.l.b16 %v1107
        %v1140 = vunpack.c.l.b16 %v1108
        %v1141 = vunpack.c.l.b16 %v1109
        %v1142 = vunpack.c.l.b16 %v1110
        %v1143 = vunpack.c.l.b16 %v1111
        %v1144 = vunpack.c.l.b16 %v1112
        %v1145 = vunpack.c.l.b16 %v1113
        %v1146 = vunpack.c.l.b16 %v1114
        %v1147 = vunpack.c.l.b16 %v1115
        %v1148 = vunpack.c.l.b16 %v1116
        %v1149 = vunpack.c.l.b16 %v1117
        %v1150 = vunpack.c.l.b16 %v1118
        %v1151 = vunpack.c.l.b16 %v1119
        %v1152 = vunpack.c.l.b16 %v1120
        %v1153 = vunpack.c.l.b16 %v1121
        %v1154 = vunpack.c.l.b16 %v1122
        %v1155 = vpack.c.b16 %v1140, %v1139
        %v1156 = vpack.c.b16 %v1142, %v1141
        %v1157 = vpack.c.b16 %v1144, %v1143
        %v1158 = vpack.c.b16 %v1146, %v1145
        %v1159 = vpack.c.b16 %v1148, %v1147
        %v1160 = vpack.c.b16 %v1150, %v1149
        %v1161 = vpack.c.b16 %v1152, %v1151
        %v1162 = vpack.c.b16 %v1154, %v1153
        %1171 = vmatprep.subr.bf16.mxu0 0
        %1172 = vmatpush1.bf16.msra.mxu0 %v1155
        %1173 = vmatprep.subr.bf16.mxu0 0
        %1174 = vmatpush1.bf16.msra.mxu0 %v1156
        %1175 = vmatprep.subr.bf16.mxu0 0
        %1176 = vmatpush1.bf16.msra.mxu0 %v1157
        %1177 = vmatprep.subr.bf16.mxu0 0
        %1178 = vmatpush1.bf16.msra.mxu0 %v1158
        %1179 = vmatprep.subr.bf16.mxu0 0
        %1180 = vmatpush1.bf16.msra.mxu0 %v1159
        %1181 = vmatprep.subr.bf16.mxu0 0
        %1182 = vmatpush1.bf16.msra.mxu0 %v1160
        %1183 = vmatprep.subr.bf16.mxu0 0
        %1184 = vmatpush1.bf16.msra.mxu0 %v1161
        %1185 = vmatprep.subr.bf16.mxu0 0
        %1186 = vmatpush1.bf16.msra.mxu0 %v1162
        %1187 = vmatprep.subr.bf16.mxu0 0
        %1188 = vmatpush1.bf16.msra.mxu0 0
        %1189 = vmatprep.subr.bf16.mxu0 0
        %1190 = vmatpush1.bf16.msra.mxu0 0
        %1191 = vmatprep.subr.bf16.mxu0 0
        %1192 = vmatpush1.bf16.msra.mxu0 0
        %1193 = vmatprep.subr.bf16.mxu0 0
        %1194 = vmatpush1.bf16.msra.mxu0 0
        %1195 = vmatprep.subr.bf16.mxu0 0
        %1196 = vmatpush1.bf16.msra.mxu0 0
        %1197 = vmatprep.subr.bf16.mxu0 0
        %1198 = vmatpush1.bf16.msra.mxu0 0
        %1199 = vmatprep.subr.bf16.mxu0 0
        %1200 = vmatpush1.bf16.msra.mxu0 0
        %1201 = vmatprep.subr.bf16.mxu0 0
        %1202 = vmatpush1.bf16.msra.mxu0 0
        %1203 = vmatprep.mubr.bf16.mxu0 0
        %1204 = vmatmul.mubr.bf16.gmra.mrb[0].mxu0 %v1105
        %v1205 = vpop.f32.mrb[0].mxu0
        %v1206 = vadd.f32 0.0, %v1205
        %v1207 = vpop.f32.mrb[0].mxu0
        %v1208 = vpop.f32.mrb[0].mxu0
        %v1209 = vadd.f32 0.0, %v1208
        %v1210 = vpop.f32.mrb[0].mxu0
        %1211 = vmatprep.mubr.bf16.mxu0 0
        %1212 = vmatmul.mubr.bf16.gmra.mrb[0].mxu0 %v1106
        %v1213 = vpop.f32.mrb[0].mxu0
        %v1214 = vadd.f32 0.0, %v1213
        %v1215 = vpop.f32.mrb[0].mxu0
        %v1216 = vpop.f32.mrb[0].mxu0
        %v1217 = vadd.f32 0.0, %v1216
        %v1218 = vpop.f32.mrb[0].mxu0
        %1219 = vdwg.mxu0
        %v1220 = vadd.f32 %v690, %v1206
        %v1221 = vadd.f32 %v691, %v1209
        %v1222 = vadd.f32 %v692, %v1214
        %v1223 = vadd.f32 %v693, %v1217
        %v1224 = vld [vmem:[%s6] sm:$0x1]
        %v1226 = vlaneseq
        %v1227 = vshrl.u32 %v1226, 7
        %v1228 = vsub.s32 0, %v1227
        %v1229 = vrot.slane %v1224, %v1228
        %v1231 = vadd.f32 %v1220, %v1229
        %v1232 = vadd.f32 %v1221, %v1229
        %v1233 = vadd.f32 %v1222, %v1229
        %v1234 = vadd.f32 %v1223, %v1229
        %v1235 = vmax.f32 %v1231, 0.0
        %v1236 = vmax.f32 %v1232, 0.0
        %v1237 = vmax.f32 %v1233, 0.0
        %v1238 = vmax.f32 %v1234, 0.0
        %v1239 = vpack.c.bf16 %v1236, %v1235
        %v1240 = vpack.c.bf16 %v1238, %v1237
        %1241 = vst [vmem:[#allocation3 + $0x8] sm:$0xff] %v1239
        %1242 = vst [vmem:[#allocation3 + $0x20] sm:$0xff] %v1240
        %v1244 = vrot.slane %v1239, 4
        %1246 = vst [vmem:[#allocation2] sm:$0xf0] %v1244
        %1247 = vst [vmem:[#allocation2 + $0x8] sm:$0xf] %v1244
        %v1248 = vld [vmem:[#allocation2] sm:$0xf8]
        %v1249 = vld [vmem:[#allocation2 + $0x8] sm:$0xf]
        %vm1250 = vsmask.f32 4352
        %v1252 = vshrl.u32 %v1248, 16
        %v1254 = vrot.slane %v1252, 3
        %v1255 = vshll.u32 %v1248, 16
        %v1257 = vrot.slane %v1255, 4
        %v1258 = vor.u32 %v1254, %v1257
        %v1260 = vshrl.u32 %v1249, 16
        %v1262 = vrot.slane %v1260, 3
        %v1263 = vshll.u32 %v1249, 16
        %v1265 = vrot.slane %v1263, 4
        %v1266 = vor.u32 %v1262, %v1265
        %v1267 = vsel %vm1250, %v1258, %v1266
        %1269 = vst [vmem:[#allocation3] sm:$0xff] %v1267
        %v1270 = vld [vmem:[#allocation2] sm:$0xf0]
        %v1271 = vld [vmem:[#allocation2 + $0x8] sm:$0x1f]
        %vm1272 = vsmask.f32 3328
        %v1274 = vshrl.u32 %v1270, 16
        %v1276 = vrot.slane %v1274, 4
        %v1277 = vshll.u32 %v1270, 16
        %v1279 = vrot.slane %v1277, 5
        %v1280 = vor.u32 %v1276, %v1279
        %v1282 = vshrl.u32 %v1271, 16
        %v1284 = vrot.slane %v1282, 4
        %v1285 = vshll.u32 %v1271, 16
        %v1287 = vrot.slane %v1285, 5
        %v1288 = vor.u32 %v1284, %v1287
        %v1289 = vsel %vm1272, %v1280, %v1288
        %1291 = vst [vmem:[#allocation3 + $0x10] sm:$0xff] %v1289
        %v1293 = vrot.slane %v1240, 4
        %1295 = vst [vmem:[%s551] sm:$0xf0] %v1293
        %1296 = vst [vmem:[%s551 + $0x8] sm:$0xf] %v1293
        %v1297 = vld [vmem:[%s551] sm:$0xf8]
        %v1298 = vld [vmem:[%s551 + $0x8] sm:$0xf]
        %v1300 = vshrl.u32 %v1297, 16
        %v1302 = vrot.slane %v1300, 3
        %v1303 = vshll.u32 %v1297, 16
        %v1305 = vrot.slane %v1303, 4
        %v1306 = vor.u32 %v1302, %v1305
        %v1308 = vshrl.u32 %v1298, 16
        %v1310 = vrot.slane %v1308, 3
        %v1311 = vshll.u32 %v1298, 16
        %v1313 = vrot.slane %v1311, 4
        %v1314 = vor.u32 %v1310, %v1313
        %v1315 = vsel %vm1250, %v1306, %v1314
        %1317 = vst [vmem:[#allocation3 + $0x18] sm:$0xff] %v1315
        %v1318 = vld [vmem:[%s551] sm:$0xf0]
        %v1319 = vld [vmem:[%s551 + $0x8] sm:$0x1f]
        %v1321 = vshrl.u32 %v1318, 16
        %v1323 = vrot.slane %v1321, 4
        %v1324 = vshll.u32 %v1318, 16
        %v1326 = vrot.slane %v1324, 5
        %v1327 = vor.u32 %v1323, %v1326
        %v1329 = vshrl.u32 %v1319, 16
        %v1331 = vrot.slane %v1329, 4
        %v1332 = vshll.u32 %v1319, 16
        %v1334 = vrot.slane %v1332, 5
        %v1335 = vor.u32 %v1331, %v1334
        %v1336 = vsel %vm1272, %v1327, %v1335
        %1338 = vst [vmem:[#allocation3 + $0x28] sm:$0xff] %v1336
        %v1339 = vld [vmem:[#allocation3] sm:$0xff]
        %v1340 = vld [vmem:[#allocation3 + $0x8] sm:$0xff]
        %v1341 = vld [vmem:[#allocation3 + $0x10] sm:$0xff]
        %v1342 = vld [vmem:[#allocation3 + $0x18] sm:$0xff]
        %v1343 = vld [vmem:[#allocation3 + $0x20] sm:$0xff]
        %v1344 = vld [vmem:[#allocation3 + $0x28] sm:$0xff]
        %s1345 = scalar_lea.vmem [#allocation9], 192
        %v1346 = vld [vmem:[%s1345] sm:$0xf]
        %v1347 = vld [vmem:[%s1345 + $0x4] sm:$0xf]
        %v1348 = vld [vmem:[%s1345 + $0x8] sm:$0xf]
        %v1349 = vld [vmem:[%s1345 + $0xc] sm:$0xf]
        %v1350 = vld [vmem:[%s1345 + $0x10] sm:$0xf]
        %v1351 = vld [vmem:[%s1345 + $0x14] sm:$0xf]
        %v1352 = vld [vmem:[%s1345 + $0x18] sm:$0xf]
        %v1353 = vld [vmem:[%s1345 + $0x1c] sm:$0xf]
        %v1354 = vld [vmem:[%s1345 + $0x20] sm:$0xf]
        %v1355 = vld [vmem:[%s1345 + $0x24] sm:$0xf]
        %v1356 = vld [vmem:[%s1345 + $0x28] sm:$0xf]
        %v1357 = vld [vmem:[%s1345 + $0x2c] sm:$0xf]
        %v1358 = vld [vmem:[%s1345 + $0x30] sm:$0xf]
        %v1359 = vld [vmem:[%s1345 + $0x34] sm:$0xf]
        %v1360 = vld [vmem:[%s1345 + $0x38] sm:$0xf]
        %v1361 = vld [vmem:[%s1345 + $0x3c] sm:$0xf]
        %v1362 = vld [vmem:[%s1345 + $0x40] sm:$0xf]
        %v1363 = vld [vmem:[%s1345 + $0x44] sm:$0xf]
        %v1364 = vld [vmem:[%s1345 + $0x48] sm:$0xf]
        %v1365 = vld [vmem:[%s1345 + $0x4c] sm:$0xf]
        %v1366 = vld [vmem:[%s1345 + $0x50] sm:$0xf]
        %v1367 = vld [vmem:[%s1345 + $0x54] sm:$0xf]
        %v1368 = vld [vmem:[%s1345 + $0x58] sm:$0xf]
        %v1369 = vld [vmem:[%s1345 + $0x5c] sm:$0xf]
        %v1370 = vld [vmem:[%s1345 + $0x60] sm:$0xf]
        %v1371 = vld [vmem:[%s1345 + $0x64] sm:$0xf]
        %v1372 = vld [vmem:[%s1345 + $0x68] sm:$0xf]
        %v1373 = vld [vmem:[%s1345 + $0x6c] sm:$0xf]
        %v1374 = vld [vmem:[%s1345 + $0x70] sm:$0xf]
        %v1375 = vld [vmem:[%s1345 + $0x74] sm:$0xf]
        %v1376 = vld [vmem:[%s1345 + $0x78] sm:$0xf]
        %v1377 = vld [vmem:[%s1345 + $0x7c] sm:$0xf]
        %v1378 = vld [vmem:[%s1345 + $0x80] sm:$0xf]
        %v1379 = vld [vmem:[%s1345 + $0x84] sm:$0xf]
        %v1380 = vld [vmem:[%s1345 + $0x88] sm:$0xf]
        %v1381 = vld [vmem:[%s1345 + $0x8c] sm:$0xf]
        %v1382 = vld [vmem:[%s1345 + $0x90] sm:$0xf]
        %v1383 = vld [vmem:[%s1345 + $0x94] sm:$0xf]
        %v1384 = vld [vmem:[%s1345 + $0x98] sm:$0xf]
        %v1385 = vld [vmem:[%s1345 + $0x9c] sm:$0xf]
        %v1386 = vld [vmem:[%s1345 + $0xa0] sm:$0xf]
        %v1387 = vld [vmem:[%s1345 + $0xa4] sm:$0xf]
        %v1388 = vld [vmem:[%s1345 + $0xa8] sm:$0xf]
        %v1389 = vld [vmem:[%s1345 + $0xac] sm:$0xf]
        %v1390 = vld [vmem:[%s1345 + $0xb0] sm:$0xf]
        %v1391 = vld [vmem:[%s1345 + $0xb4] sm:$0xf]
        %v1392 = vld [vmem:[%s1345 + $0xb8] sm:$0xf]
        %v1393 = vld [vmem:[%s1345 + $0xbc] sm:$0xf]
        %s1394 = scalar_lea.vmem %s4, 1
        %v1395 = vld [vmem:[%s1394] sm:$0x1]
        %v1397 = vlaneseq
        %v1398 = vshrl.u32 %v1397, 7
        %v1399 = vsub.s32 0, %v1398
        %v1400 = vrot.slane %v1395, %v1399
        %v1450 = vunpack.c.l.b16 %v1346
        %v1451 = vunpack.c.l.b16 %v1347
        %v1452 = vunpack.c.l.b16 %v1348
        %v1453 = vunpack.c.l.b16 %v1349
        %v1454 = vunpack.c.l.b16 %v1350
        %v1455 = vunpack.c.l.b16 %v1351
        %v1456 = vunpack.c.l.b16 %v1352
        %v1457 = vunpack.c.l.b16 %v1353
        %v1458 = vunpack.c.l.b16 %v1354
        %v1459 = vunpack.c.l.b16 %v1355
        %v1460 = vunpack.c.l.b16 %v1356
        %v1461 = vunpack.c.l.b16 %v1357
        %v1462 = vunpack.c.l.b16 %v1358
        %v1463 = vunpack.c.l.b16 %v1359
        %v1464 = vunpack.c.l.b16 %v1360
        %v1465 = vunpack.c.l.b16 %v1361
        %v1466 = vunpack.c.l.b16 %v1362
        %v1467 = vunpack.c.l.b16 %v1363
        %v1468 = vunpack.c.l.b16 %v1364
        %v1469 = vunpack.c.l.b16 %v1365
        %v1470 = vunpack.c.l.b16 %v1366
        %v1471 = vunpack.c.l.b16 %v1367
        %v1472 = vunpack.c.l.b16 %v1368
        %v1473 = vunpack.c.l.b16 %v1369
        %v1474 = vunpack.c.l.b16 %v1370
        %v1475 = vunpack.c.l.b16 %v1371
        %v1476 = vunpack.c.l.b16 %v1372
        %v1477 = vunpack.c.l.b16 %v1373
        %v1478 = vunpack.c.l.b16 %v1374
        %v1479 = vunpack.c.l.b16 %v1375
        %v1480 = vunpack.c.l.b16 %v1376
        %v1481 = vunpack.c.l.b16 %v1377
        %v1482 = vunpack.c.l.b16 %v1378
        %v1483 = vunpack.c.l.b16 %v1379
        %v1484 = vunpack.c.l.b16 %v1380
        %v1485 = vunpack.c.l.b16 %v1381
        %v1486 = vunpack.c.l.b16 %v1382
        %v1487 = vunpack.c.l.b16 %v1383
        %v1488 = vunpack.c.l.b16 %v1384
        %v1489 = vunpack.c.l.b16 %v1385
        %v1490 = vunpack.c.l.b16 %v1386
        %v1491 = vunpack.c.l.b16 %v1387
        %v1492 = vunpack.c.l.b16 %v1388
        %v1493 = vunpack.c.l.b16 %v1389
        %v1494 = vunpack.c.l.b16 %v1390
        %v1495 = vunpack.c.l.b16 %v1391
        %v1496 = vunpack.c.l.b16 %v1392
        %v1497 = vunpack.c.l.b16 %v1393
        %v1498 = vpack.c.b16 %v1451, %v1450
        %v1499 = vpack.c.b16 %v1453, %v1452
        %v1500 = vpack.c.b16 %v1455, %v1454
        %v1501 = vpack.c.b16 %v1457, %v1456
        %v1502 = vpack.c.b16 %v1459, %v1458
        %v1503 = vpack.c.b16 %v1461, %v1460
        %v1504 = vpack.c.b16 %v1463, %v1462
        %v1505 = vpack.c.b16 %v1465, %v1464
        %v1506 = vpack.c.b16 %v1467, %v1466
        %v1507 = vpack.c.b16 %v1469, %v1468
        %v1508 = vpack.c.b16 %v1471, %v1470
        %v1509 = vpack.c.b16 %v1473, %v1472
        %v1510 = vpack.c.b16 %v1475, %v1474
        %v1511 = vpack.c.b16 %v1477, %v1476
        %v1512 = vpack.c.b16 %v1479, %v1478
        %v1513 = vpack.c.b16 %v1481, %v1480
        %v1514 = vpack.c.b16 %v1483, %v1482
        %v1515 = vpack.c.b16 %v1485, %v1484
        %v1516 = vpack.c.b16 %v1487, %v1486
        %v1517 = vpack.c.b16 %v1489, %v1488
        %v1518 = vpack.c.b16 %v1491, %v1490
        %v1519 = vpack.c.b16 %v1493, %v1492
        %v1520 = vpack.c.b16 %v1495, %v1494
        %v1521 = vpack.c.b16 %v1497, %v1496
        %1546 = vmatprep.subr.bf16.mxu0 0
        %1547 = vmatpush1.bf16.msra.mxu0 %v1498
        %1548 = vmatprep.subr.bf16.mxu0 0
        %1549 = vmatpush1.bf16.msra.mxu0 %v1499
        %1550 = vmatprep.subr.bf16.mxu0 0
        %1551 = vmatpush1.bf16.msra.mxu0 %v1500
        %1552 = vmatprep.subr.bf16.mxu0 0
        %1553 = vmatpush1.bf16.msra.mxu0 %v1501
        %1554 = vmatprep.subr.bf16.mxu0 0
        %1555 = vmatpush1.bf16.msra.mxu0 %v1502
        %1556 = vmatprep.subr.bf16.mxu0 0
        %1557 = vmatpush1.bf16.msra.mxu0 %v1503
        %1558 = vmatprep.subr.bf16.mxu0 0
        %1559 = vmatpush1.bf16.msra.mxu0 %v1504
        %1560 = vmatprep.subr.bf16.mxu0 0
        %1561 = vmatpush1.bf16.msra.mxu0 %v1505
        %1562 = vmatprep.subr.bf16.mxu0 0
        %1563 = vmatpush1.bf16.msra.mxu0 %v1506
        %1564 = vmatprep.subr.bf16.mxu0 0
        %1565 = vmatpush1.bf16.msra.mxu0 %v1507
        %1566 = vmatprep.subr.bf16.mxu0 0
        %1567 = vmatpush1.bf16.msra.mxu0 %v1508
        %1568 = vmatprep.subr.bf16.mxu0 0
        %1569 = vmatpush1.bf16.msra.mxu0 %v1509
        %1570 = vmatprep.subr.bf16.mxu0 0
        %1571 = vmatpush1.bf16.msra.mxu0 %v1510
        %1572 = vmatprep.subr.bf16.mxu0 0
        %1573 = vmatpush1.bf16.msra.mxu0 %v1511
        %1574 = vmatprep.subr.bf16.mxu0 0
        %1575 = vmatpush1.bf16.msra.mxu0 %v1512
        %1576 = vmatprep.subr.bf16.mxu0 0
        %1577 = vmatpush1.bf16.msra.mxu0 %v1513
        %1578 = vmatprep.mubr.bf16.mxu0 %v1340
        %1579 = vmatmul.mubr.bf16.gmra.mrb[0].mxu0 %v1339
        %v1580 = vpop.f32.mrb[0].mxu0
        %v1581 = vadd.f32 %v1400, %v1580
        %v1582 = vpop.f32.mrb[0].mxu0
        %v1583 = vpop.f32.mrb[0].mxu0
        %v1584 = vadd.f32 %v1400, %v1583
        %v1585 = vpop.f32.mrb[0].mxu0
        %1586 = vmatprep.mubr.bf16.mxu0 %v1343
        %1587 = vmatmul.mubr.bf16.gmra.mrb[0].mxu0 %v1342
        %v1588 = vpop.f32.mrb[0].mxu0
        %v1589 = vadd.f32 %v1400, %v1588
        %v1590 = vpop.f32.mrb[0].mxu0
        %v1591 = vpop.f32.mrb[0].mxu0
        %v1592 = vadd.f32 %v1400, %v1591
        %v1593 = vpop.f32.mrb[0].mxu0
        %1594 = vdwg.mxu0
        %1595 = vmatprep.subr.bf16.mxu0 0
        %1596 = vmatpush1.bf16.msra.mxu0 %v1514
        %1597 = vmatprep.subr.bf16.mxu0 0
        %1598 = vmatpush1.bf16.msra.mxu0 %v1515
        %1599 = vmatprep.subr.bf16.mxu0 0
        %1600 = vmatpush1.bf16.msra.mxu0 %v1516
        %1601 = vmatprep.subr.bf16.mxu0 0
        %1602 = vmatpush1.bf16.msra.mxu0 %v1517
        %1603 = vmatprep.subr.bf16.mxu0 0
        %1604 = vmatpush1.bf16.msra.mxu0 %v1518
        %1605 = vmatprep.subr.bf16.mxu0 0
        %1606 = vmatpush1.bf16.msra.mxu0 %v1519
        %1607 = vmatprep.subr.bf16.mxu0 0
        %1608 = vmatpush1.bf16.msra.mxu0 %v1520
        %1609 = vmatprep.subr.bf16.mxu0 0
        %1610 = vmatpush1.bf16.msra.mxu0 %v1521
        %1611 = vmatprep.subr.bf16.mxu0 0
        %1612 = vmatpush1.bf16.msra.mxu0 0
        %1613 = vmatprep.subr.bf16.mxu0 0
        %1614 = vmatpush1.bf16.msra.mxu0 0
        %1615 = vmatprep.subr.bf16.mxu0 0
        %1616 = vmatpush1.bf16.msra.mxu0 0
        %1617 = vmatprep.subr.bf16.mxu0 0
        %1618 = vmatpush1.bf16.msra.mxu0 0
        %1619 = vmatprep.subr.bf16.mxu0 0
        %1620 = vmatpush1.bf16.msra.mxu0 0
        %1621 = vmatprep.subr.bf16.mxu0 0
        %1622 = vmatpush1.bf16.msra.mxu0 0
        %1623 = vmatprep.subr.bf16.mxu0 0
        %1624 = vmatpush1.bf16.msra.mxu0 0
        %1625 = vmatprep.subr.bf16.mxu0 0
        %1626 = vmatpush1.bf16.msra.mxu0 0
        %1627 = vmatprep.mubr.bf16.mxu0 0
        %1628 = vmatmul.mubr.bf16.gmra.mrb[0].mxu0 %v1341
        %v1629 = vpop.f32.mrb[0].mxu0
        %v1630 = vadd.f32 %v1581, %v1629
        %v1631 = vpop.f32.mrb[0].mxu0
        %v1632 = vpop.f32.mrb[0].mxu0
        %v1633 = vadd.f32 %v1584, %v1632
        %v1634 = vpop.f32.mrb[0].mxu0
        %1635 = vmatprep.mubr.bf16.mxu0 0
        %1636 = vmatmul.mubr.bf16.gmra.mrb[0].mxu0 %v1344
        %v1637 = vpop.f32.mrb[0].mxu0
        %v1638 = vadd.f32 %v1589, %v1637
        %v1639 = vpop.f32.mrb[0].mxu0
        %v1640 = vpop.f32.mrb[0].mxu0
        %v1641 = vadd.f32 %v1592, %v1640
        %v1642 = vpop.f32.mrb[0].mxu0
        %1643 = vdwg.mxu0
        %v1644 = vmax.f32 %v1630, 0.0
        %v1645 = vmax.f32 %v1633, 0.0
        %v1646 = vmax.f32 %v1638, 0.0
        %v1647 = vmax.f32 %v1641, 0.0
        %v1648 = vpack.c.bf16 %v1645, %v1644
        %v1649 = vpack.c.bf16 %v1647, %v1646
        %s1650 = scalar_lea.vmem [#allocation10], 64
        %v1651 = vld [vmem:[%s1650] sm:$0xf]
        %v1652 = vld [vmem:[%s1650 + $0x4] sm:$0xf]
        %v1653 = vld [vmem:[%s1650 + $0x8] sm:$0xf]
        %v1654 = vld [vmem:[%s1650 + $0xc] sm:$0xf]
        %v1655 = vld [vmem:[%s1650 + $0x10] sm:$0xf]
        %v1656 = vld [vmem:[%s1650 + $0x14] sm:$0xf]
        %v1657 = vld [vmem:[%s1650 + $0x18] sm:$0xf]
        %v1658 = vld [vmem:[%s1650 + $0x1c] sm:$0xf]
        %v1659 = vld [vmem:[%s1650 + $0x20] sm:$0xf]
        %v1660 = vld [vmem:[%s1650 + $0x24] sm:$0xf]
        %v1661 = vld [vmem:[%s1650 + $0x28] sm:$0xf]
        %v1662 = vld [vmem:[%s1650 + $0x2c] sm:$0xf]
        %v1663 = vld [vmem:[%s1650 + $0x30] sm:$0xf]
        %v1664 = vld [vmem:[%s1650 + $0x34] sm:$0xf]
        %v1665 = vld [vmem:[%s1650 + $0x38] sm:$0xf]
        %v1666 = vld [vmem:[%s1650 + $0x3c] sm:$0xf]
        %v1683 = vunpack.c.l.b16 %v1651
        %v1684 = vunpack.c.l.b16 %v1652
        %v1685 = vunpack.c.l.b16 %v1653
        %v1686 = vunpack.c.l.b16 %v1654
        %v1687 = vunpack.c.l.b16 %v1655
        %v1688 = vunpack.c.l.b16 %v1656
        %v1689 = vunpack.c.l.b16 %v1657
        %v1690 = vunpack.c.l.b16 %v1658
        %v1691 = vunpack.c.l.b16 %v1659
        %v1692 = vunpack.c.l.b16 %v1660
        %v1693 = vunpack.c.l.b16 %v1661
        %v1694 = vunpack.c.l.b16 %v1662
        %v1695 = vunpack.c.l.b16 %v1663
        %v1696 = vunpack.c.l.b16 %v1664
        %v1697 = vunpack.c.l.b16 %v1665
        %v1698 = vunpack.c.l.b16 %v1666
        %v1699 = vpack.c.b16 %v1684, %v1683
        %v1700 = vpack.c.b16 %v1686, %v1685
        %v1701 = vpack.c.b16 %v1688, %v1687
        %v1702 = vpack.c.b16 %v1690, %v1689
        %v1703 = vpack.c.b16 %v1692, %v1691
        %v1704 = vpack.c.b16 %v1694, %v1693
        %v1705 = vpack.c.b16 %v1696, %v1695
        %v1706 = vpack.c.b16 %v1698, %v1697
        %1715 = vmatprep.subr.bf16.mxu0 0
        %1716 = vmatpush1.bf16.msra.mxu0 %v1699
        %1717 = vmatprep.subr.bf16.mxu0 0
        %1718 = vmatpush1.bf16.msra.mxu0 %v1700
        %1719 = vmatprep.subr.bf16.mxu0 0
        %1720 = vmatpush1.bf16.msra.mxu0 %v1701
        %1721 = vmatprep.subr.bf16.mxu0 0
        %1722 = vmatpush1.bf16.msra.mxu0 %v1702
        %1723 = vmatprep.subr.bf16.mxu0 0
        %1724 = vmatpush1.bf16.msra.mxu0 %v1703
        %1725 = vmatprep.subr.bf16.mxu0 0
        %1726 = vmatpush1.bf16.msra.mxu0 %v1704
        %1727 = vmatprep.subr.bf16.mxu0 0
        %1728 = vmatpush1.bf16.msra.mxu0 %v1705
        %1729 = vmatprep.subr.bf16.mxu0 0
        %1730 = vmatpush1.bf16.msra.mxu0 %v1706
        %1731 = vmatprep.subr.bf16.mxu0 0
        %1732 = vmatpush1.bf16.msra.mxu0 0
        %1733 = vmatprep.subr.bf16.mxu0 0
        %1734 = vmatpush1.bf16.msra.mxu0 0
        %1735 = vmatprep.subr.bf16.mxu0 0
        %1736 = vmatpush1.bf16.msra.mxu0 0
        %1737 = vmatprep.subr.bf16.mxu0 0
        %1738 = vmatpush1.bf16.msra.mxu0 0
        %1739 = vmatprep.subr.bf16.mxu0 0
        %1740 = vmatpush1.bf16.msra.mxu0 0
        %1741 = vmatprep.subr.bf16.mxu0 0
        %1742 = vmatpush1.bf16.msra.mxu0 0
        %1743 = vmatprep.subr.bf16.mxu0 0
        %1744 = vmatpush1.bf16.msra.mxu0 0
        %1745 = vmatprep.subr.bf16.mxu0 0
        %1746 = vmatpush1.bf16.msra.mxu0 0
        %1747 = vmatprep.mubr.bf16.mxu0 0
        %1748 = vmatmul.mubr.bf16.gmra.mrb[0].mxu0 %v1648
        %v1749 = vpop.f32.mrb[0].mxu0
        %v1750 = vadd.f32 0.0, %v1749
        %v1751 = vpop.f32.mrb[0].mxu0
        %v1752 = vpop.f32.mrb[0].mxu0
        %v1753 = vadd.f32 0.0, %v1752
        %v1754 = vpop.f32.mrb[0].mxu0
        %1755 = vmatprep.mubr.bf16.mxu0 0
        %1756 = vmatmul.mubr.bf16.gmra.mrb[0].mxu0 %v1649
        %v1757 = vpop.f32.mrb[0].mxu0
        %v1758 = vadd.f32 0.0, %v1757
        %v1759 = vpop.f32.mrb[0].mxu0
        %v1760 = vpop.f32.mrb[0].mxu0
        %v1761 = vadd.f32 0.0, %v1760
        %v1762 = vpop.f32.mrb[0].mxu0
        %1763 = vdwg.mxu0
        %v1764 = vadd.f32 %v1231, %v1750
        %v1765 = vadd.f32 %v1232, %v1753
        %v1766 = vadd.f32 %v1233, %v1758
        %v1767 = vadd.f32 %v1234, %v1761
        %s1768 = scalar_lea.vmem %s6, 1
        %v1769 = vld [vmem:[%s1768] sm:$0x1]
        %v1771 = vlaneseq
        %v1772 = vshrl.u32 %v1771, 7
        %v1773 = vsub.s32 0, %v1772
        %v1774 = vrot.slane %v1769, %v1773
        %v1776 = vadd.f32 %v1764, %v1774
        %v1777 = vadd.f32 %v1765, %v1774
        %v1778 = vadd.f32 %v1766, %v1774
        %v1779 = vadd.f32 %v1767, %v1774
        %v1780 = vld [vmem:[#allocation12] sm:$0xf]
        %v1781 = vld [vmem:[#allocation12 + $0x4] sm:$0xf]
        %v1782 = vld [vmem:[#allocation12 + $0x8] sm:$0xf]
        %v1783 = vld [vmem:[#allocation12 + $0xc] sm:$0xf]
        %v1784 = vld [vmem:[#allocation12 + $0x10] sm:$0xf]
        %v1785 = vld [vmem:[#allocation12 + $0x14] sm:$0xf]
        %v1786 = vld [vmem:[#allocation12 + $0x18] sm:$0xf]
        %v1787 = vld [vmem:[#allocation12 + $0x1c] sm:$0xf]
        %v1788 = vld [vmem:[#allocation12 + $0x20] sm:$0xf]
        %v1789 = vld [vmem:[#allocation12 + $0x24] sm:$0xf]
        %v1790 = vld [vmem:[#allocation12 + $0x28] sm:$0xf]
        %v1791 = vld [vmem:[#allocation12 + $0x2c] sm:$0xf]
        %v1792 = vld [vmem:[#allocation12 + $0x30] sm:$0xf]
        %v1793 = vld [vmem:[#allocation12 + $0x34] sm:$0xf]
        %v1794 = vld [vmem:[#allocation12 + $0x38] sm:$0xf]
        %v1795 = vld [vmem:[#allocation12 + $0x3c] sm:$0xf]
        %v1796 = vpack.c.bf16 %v1777, %v1776
        %v1797 = vpack.c.bf16 %v1779, %v1778
        %v1798 = vld [vmem:[%s8] sm:$0x1]
        %v1800 = vlaneseq
        %v1801 = vshrl.u32 %v1800, 7
        %v1802 = vsub.s32 0, %v1801
        %v1803 = vrot.slane %v1798, %v1802
        %v1821 = vunpack.c.l.b16 %v1780
        %v1822 = vunpack.c.l.b16 %v1781
        %v1823 = vunpack.c.l.b16 %v1782
        %v1824 = vunpack.c.l.b16 %v1783
        %v1825 = vunpack.c.l.b16 %v1784
        %v1826 = vunpack.c.l.b16 %v1785
        %v1827 = vunpack.c.l.b16 %v1786
        %v1828 = vunpack.c.l.b16 %v1787
        %v1829 = vunpack.c.l.b16 %v1788
        %v1830 = vunpack.c.l.b16 %v1789
        %v1831 = vunpack.c.l.b16 %v1790
        %v1832 = vunpack.c.l.b16 %v1791
        %v1833 = vunpack.c.l.b16 %v1792
        %v1834 = vunpack.c.l.b16 %v1793
        %v1835 = vunpack.c.l.b16 %v1794
        %v1836 = vunpack.c.l.b16 %v1795
        %v1837 = vpack.c.b16 %v1822, %v1821
        %v1838 = vpack.c.b16 %v1824, %v1823
        %v1839 = vpack.c.b16 %v1826, %v1825
        %v1840 = vpack.c.b16 %v1828, %v1827
        %v1841 = vpack.c.b16 %v1830, %v1829
        %v1842 = vpack.c.b16 %v1832, %v1831
        %v1843 = vpack.c.b16 %v1834, %v1833
        %v1844 = vpack.c.b16 %v1836, %v1835
        %1853 = vmatprep.subr.bf16.mxu0 0
        %1854 = vmatpush1.bf16.msra.mxu0 %v1837
        %1855 = vmatprep.subr.bf16.mxu0 0
        %1856 = vmatpush1.bf16.msra.mxu0 %v1838
        %1857 = vmatprep.subr.bf16.mxu0 0
        %1858 = vmatpush1.bf16.msra.mxu0 %v1839
        %1859 = vmatprep.subr.bf16.mxu0 0
        %1860 = vmatpush1.bf16.msra.mxu0 %v1840
        %1861 = vmatprep.subr.bf16.mxu0 0
        %1862 = vmatpush1.bf16.msra.mxu0 %v1841
        %1863 = vmatprep.subr.bf16.mxu0 0
        %1864 = vmatpush1.bf16.msra.mxu0 %v1842
        %1865 = vmatprep.subr.bf16.mxu0 0
        %1866 = vmatpush1.bf16.msra.mxu0 %v1843
        %1867 = vmatprep.subr.bf16.mxu0 0
        %1868 = vmatpush1.bf16.msra.mxu0 %v1844
        %1869 = vmatprep.subr.bf16.mxu0 0
        %1870 = vmatpush1.bf16.msra.mxu0 0
        %1871 = vmatprep.subr.bf16.mxu0 0
        %1872 = vmatpush1.bf16.msra.mxu0 0
        %1873 = vmatprep.subr.bf16.mxu0 0
        %1874 = vmatpush1.bf16.msra.mxu0 0
        %1875 = vmatprep.subr.bf16.mxu0 0
        %1876 = vmatpush1.bf16.msra.mxu0 0
        %1877 = vmatprep.subr.bf16.mxu0 0
        %1878 = vmatpush1.bf16.msra.mxu0 0
        %1879 = vmatprep.subr.bf16.mxu0 0
        %1880 = vmatpush1.bf16.msra.mxu0 0
        %1881 = vmatprep.subr.bf16.mxu0 0
        %1882 = vmatpush1.bf16.msra.mxu0 0
        %1883 = vmatprep.subr.bf16.mxu0 0
        %1884 = vmatpush1.bf16.msra.mxu0 0
        %1885 = vmatprep.mubr.bf16.mxu0 0
        %1886 = vmatmul.mubr.bf16.gmra.mrb[0].mxu0 %v1796
        %v1887 = vpop.f32.mrb[0].mxu0
        %v1888 = vadd.f32 %v1803, %v1887
        %v1889 = vpop.f32.mrb[0].mxu0
        %v1890 = vpop.f32.mrb[0].mxu0
        %v1891 = vadd.f32 %v1803, %v1890
        %v1892 = vpop.f32.mrb[0].mxu0
        %1893 = vmatprep.mubr.bf16.mxu0 0
        %1894 = vmatmul.mubr.bf16.gmra.mrb[0].mxu0 %v1797
        %v1895 = vpop.f32.mrb[0].mxu0
        %v1896 = vadd.f32 %v1803, %v1895
        %v1897 = vpop.f32.mrb[0].mxu0
        %v1898 = vpop.f32.mrb[0].mxu0
        %v1899 = vadd.f32 %v1803, %v1898
        %v1900 = vpop.f32.mrb[0].mxu0
        %1901 = vdwg.mxu0
        %v1902 = vmax.f32 %v1888, 0.0
        %v1903 = vmax.f32 %v1891, 0.0
        %v1904 = vmax.f32 %v1896, 0.0
        %v1905 = vmax.f32 %v1899, 0.0
        %v1906 = vpack.c.bf16 %v1903, %v1902
        %v1907 = vpack.c.bf16 %v1905, %v1904
        %1908 = vst [vmem:[#allocation3 + $0x8] sm:$0xff] %v1906
        %1909 = vst [vmem:[#allocation3 + $0x20] sm:$0xff] %v1907
        %v1911 = vrot.slane %v1906, 4
        %1913 = vst [vmem:[#allocation2] sm:$0xf0] %v1911
        %1914 = vst [vmem:[#allocation2 + $0x8] sm:$0xf] %v1911
        %v1915 = vld [vmem:[#allocation2] sm:$0xfc]
        %v1916 = vld [vmem:[#allocation2 + $0x8] sm:$0x7]
        %v1918 = vshrl.u32 %v1915, 16
        %v1920 = vrot.slane %v1918, 2
        %v1921 = vshll.u32 %v1915, 16
        %v1923 = vrot.slane %v1921, 3
        %v1924 = vor.u32 %v1920, %v1923
        %v1926 = vshrl.u32 %v1916, 16
        %v1928 = vrot.slane %v1926, 2
        %v1929 = vshll.u32 %v1916, 16
        %v1931 = vrot.slane %v1929, 3
        %v1932 = vor.u32 %v1928, %v1931
        %v1933 = vsel %vm709, %v1924, %v1932
        %1935 = vst [vmem:[#allocation3] sm:$0xff] %v1933
        %v1936 = vld [vmem:[#allocation2] sm:$0xe0]
        %v1937 = vld [vmem:[#allocation2 + $0x8] sm:$0x3f]
        %v1939 = vshrl.u32 %v1936, 16
        %v1941 = vrot.slane %v1939, 5
        %v1942 = vshll.u32 %v1936, 16
        %v1944 = vrot.slane %v1942, 6
        %v1945 = vor.u32 %v1941, %v1944
        %v1947 = vshrl.u32 %v1937, 16
        %v1949 = vrot.slane %v1947, 5
        %v1950 = vshll.u32 %v1937, 16
        %v1952 = vrot.slane %v1950, 6
        %v1953 = vor.u32 %v1949, %v1952
        %v1954 = vsel %vm731, %v1945, %v1953
        %1956 = vst [vmem:[#allocation3 + $0x10] sm:$0xff] %v1954
        %v1958 = vrot.slane %v1907, 4
        %1960 = vst [vmem:[%s551] sm:$0xf0] %v1958
        %1961 = vst [vmem:[%s551 + $0x8] sm:$0xf] %v1958
        %v1962 = vld [vmem:[%s551] sm:$0xfc]
        %v1963 = vld [vmem:[%s551 + $0x8] sm:$0x7]
        %v1965 = vshrl.u32 %v1962, 16
        %v1967 = vrot.slane %v1965, 2
        %v1968 = vshll.u32 %v1962, 16
        %v1970 = vrot.slane %v1968, 3
        %v1971 = vor.u32 %v1967, %v1970
        %v1973 = vshrl.u32 %v1963, 16
        %v1975 = vrot.slane %v1973, 2
        %v1976 = vshll.u32 %v1963, 16
        %v1978 = vrot.slane %v1976, 3
        %v1979 = vor.u32 %v1975, %v1978
        %v1980 = vsel %vm709, %v1971, %v1979
        %1982 = vst [vmem:[#allocation3 + $0x18] sm:$0xff] %v1980
        %v1983 = vld [vmem:[%s551] sm:$0xe0]
        %v1984 = vld [vmem:[%s551 + $0x8] sm:$0x3f]
        %v1986 = vshrl.u32 %v1983, 16
        %v1988 = vrot.slane %v1986, 5
        %v1989 = vshll.u32 %v1983, 16
        %v1991 = vrot.slane %v1989, 6
        %v1992 = vor.u32 %v1988, %v1991
        %v1994 = vshrl.u32 %v1984, 16
        %v1996 = vrot.slane %v1994, 5
        %v1997 = vshll.u32 %v1984, 16
        %v1999 = vrot.slane %v1997, 6
        %v2000 = vor.u32 %v1996, %v1999
        %v2001 = vsel %vm731, %v1992, %v2000
        %2003 = vst [vmem:[#allocation3 + $0x28] sm:$0xff] %v2001
        %v2004 = vld [vmem:[#allocation3] sm:$0xff]
        %v2005 = vld [vmem:[#allocation3 + $0x8] sm:$0xff]
        %v2006 = vld [vmem:[#allocation3 + $0x10] sm:$0xff]
        %v2007 = vld [vmem:[#allocation3 + $0x18] sm:$0xff]
        %v2008 = vld [vmem:[#allocation3 + $0x20] sm:$0xff]
        %v2009 = vld [vmem:[#allocation3 + $0x28] sm:$0xff]
        %s2010 = scalar_lea.vmem [#allocation9], 384
        %v2011 = vld [vmem:[%s2010] sm:$0xf]
        %v2012 = vld [vmem:[%s2010 + $0x4] sm:$0xf]
        %v2013 = vld [vmem:[%s2010 + $0x8] sm:$0xf]
        %v2014 = vld [vmem:[%s2010 + $0xc] sm:$0xf]
        %v2015 = vld [vmem:[%s2010 + $0x10] sm:$0xf]
        %v2016 = vld [vmem:[%s2010 + $0x14] sm:$0xf]
        %v2017 = vld [vmem:[%s2010 + $0x18] sm:$0xf]
        %v2018 = vld [vmem:[%s2010 + $0x1c] sm:$0xf]
        %v2019 = vld [vmem:[%s2010 + $0x20] sm:$0xf]
        %v2020 = vld [vmem:[%s2010 + $0x24] sm:$0xf]
        %v2021 = vld [vmem:[%s2010 + $0x28] sm:$0xf]
        %v2022 = vld [vmem:[%s2010 + $0x2c] sm:$0xf]
        %v2023 = vld [vmem:[%s2010 + $0x30] sm:$0xf]
        %v2024 = vld [vmem:[%s2010 + $0x34] sm:$0xf]
        %v2025 = vld [vmem:[%s2010 + $0x38] sm:$0xf]
        %v2026 = vld [vmem:[%s2010 + $0x3c] sm:$0xf]
        %v2027 = vld [vmem:[%s2010 + $0x40] sm:$0xf]
        %v2028 = vld [vmem:[%s2010 + $0x44] sm:$0xf]
        %v2029 = vld [vmem:[%s2010 + $0x48] sm:$0xf]
        %v2030 = vld [vmem:[%s2010 + $0x4c] sm:$0xf]
        %v2031 = vld [vmem:[%s2010 + $0x50] sm:$0xf]
        %v2032 = vld [vmem:[%s2010 + $0x54] sm:$0xf]
        %v2033 = vld [vmem:[%s2010 + $0x58] sm:$0xf]
        %v2034 = vld [vmem:[%s2010 + $0x5c] sm:$0xf]
        %v2035 = vld [vmem:[%s2010 + $0x60] sm:$0xf]
        %v2036 = vld [vmem:[%s2010 + $0x64] sm:$0xf]
        %v2037 = vld [vmem:[%s2010 + $0x68] sm:$0xf]
        %v2038 = vld [vmem:[%s2010 + $0x6c] sm:$0xf]
        %v2039 = vld [vmem:[%s2010 + $0x70] sm:$0xf]
        %v2040 = vld [vmem:[%s2010 + $0x74] sm:$0xf]
        %v2041 = vld [vmem:[%s2010 + $0x78] sm:$0xf]
        %v2042 = vld [vmem:[%s2010 + $0x7c] sm:$0xf]
        %v2043 = vld [vmem:[%s2010 + $0x80] sm:$0xf]
        %v2044 = vld [vmem:[%s2010 + $0x84] sm:$0xf]
        %v2045 = vld [vmem:[%s2010 + $0x88] sm:$0xf]
        %v2046 = vld [vmem:[%s2010 + $0x8c] sm:$0xf]
        %v2047 = vld [vmem:[%s2010 + $0x90] sm:$0xf]
        %v2048 = vld [vmem:[%s2010 + $0x94] sm:$0xf]
        %v2049 = vld [vmem:[%s2010 + $0x98] sm:$0xf]
        %v2050 = vld [vmem:[%s2010 + $0x9c] sm:$0xf]
        %v2051 = vld [vmem:[%s2010 + $0xa0] sm:$0xf]
        %v2052 = vld [vmem:[%s2010 + $0xa4] sm:$0xf]
        %v2053 = vld [vmem:[%s2010 + $0xa8] sm:$0xf]
        %v2054 = vld [vmem:[%s2010 + $0xac] sm:$0xf]
        %v2055 = vld [vmem:[%s2010 + $0xb0] sm:$0xf]
        %v2056 = vld [vmem:[%s2010 + $0xb4] sm:$0xf]
        %v2057 = vld [vmem:[%s2010 + $0xb8] sm:$0xf]
        %v2058 = vld [vmem:[%s2010 + $0xbc] sm:$0xf]
        %s2059 = scalar_lea.vmem %s4, 2
        %v2060 = vld [vmem:[%s2059] sm:$0x1]
        %v2062 = vlaneseq
        %v2063 = vshrl.u32 %v2062, 7
        %v2064 = vsub.s32 0, %v2063
        %v2065 = vrot.slane %v2060, %v2064
        %v2115 = vunpack.c.l.b16 %v2011
        %v2116 = vunpack.c.l.b16 %v2012
        %v2117 = vunpack.c.l.b16 %v2013
        %v2118 = vunpack.c.l.b16 %v2014
        %v2119 = vunpack.c.l.b16 %v2015
        %v2120 = vunpack.c.l.b16 %v2016
        %v2121 = vunpack.c.l.b16 %v2017
        %v2122 = vunpack.c.l.b16 %v2018
        %v2123 = vunpack.c.l.b16 %v2019
        %v2124 = vunpack.c.l.b16 %v2020
        %v2125 = vunpack.c.l.b16 %v2021
        %v2126 = vunpack.c.l.b16 %v2022
        %v2127 = vunpack.c.l.b16 %v2023
        %v2128 = vunpack.c.l.b16 %v2024
        %v2129 = vunpack.c.l.b16 %v2025
        %v2130 = vunpack.c.l.b16 %v2026
        %v2131 = vunpack.c.l.b16 %v2027
        %v2132 = vunpack.c.l.b16 %v2028
        %v2133 = vunpack.c.l.b16 %v2029
        %v2134 = vunpack.c.l.b16 %v2030
        %v2135 = vunpack.c.l.b16 %v2031
        %v2136 = vunpack.c.l.b16 %v2032
        %v2137 = vunpack.c.l.b16 %v2033
        %v2138 = vunpack.c.l.b16 %v2034
        %v2139 = vunpack.c.l.b16 %v2035
        %v2140 = vunpack.c.l.b16 %v2036
        %v2141 = vunpack.c.l.b16 %v2037
        %v2142 = vunpack.c.l.b16 %v2038
        %v2143 = vunpack.c.l.b16 %v2039
        %v2144 = vunpack.c.l.b16 %v2040
        %v2145 = vunpack.c.l.b16 %v2041
        %v2146 = vunpack.c.l.b16 %v2042
        %v2147 = vunpack.c.l.b16 %v2043
        %v2148 = vunpack.c.l.b16 %v2044
        %v2149 = vunpack.c.l.b16 %v2045
        %v2150 = vunpack.c.l.b16 %v2046
        %v2151 = vunpack.c.l.b16 %v2047
        %v2152 = vunpack.c.l.b16 %v2048
        %v2153 = vunpack.c.l.b16 %v2049
        %v2154 = vunpack.c.l.b16 %v2050
        %v2155 = vunpack.c.l.b16 %v2051
        %v2156 = vunpack.c.l.b16 %v2052
        %v2157 = vunpack.c.l.b16 %v2053
        %v2158 = vunpack.c.l.b16 %v2054
        %v2159 = vunpack.c.l.b16 %v2055
        %v2160 = vunpack.c.l.b16 %v2056
        %v2161 = vunpack.c.l.b16 %v2057
        %v2162 = vunpack.c.l.b16 %v2058
        %v2163 = vpack.c.b16 %v2116, %v2115
        %v2164 = vpack.c.b16 %v2118, %v2117
        %v2165 = vpack.c.b16 %v2120, %v2119
        %v2166 = vpack.c.b16 %v2122, %v2121
        %v2167 = vpack.c.b16 %v2124, %v2123
        %v2168 = vpack.c.b16 %v2126, %v2125
        %v2169 = vpack.c.b16 %v2128, %v2127
        %v2170 = vpack.c.b16 %v2130, %v2129
        %v2171 = vpack.c.b16 %v2132, %v2131
        %v2172 = vpack.c.b16 %v2134, %v2133
        %v2173 = vpack.c.b16 %v2136, %v2135
        %v2174 = vpack.c.b16 %v2138, %v2137
        %v2175 = vpack.c.b16 %v2140, %v2139
        %v2176 = vpack.c.b16 %v2142, %v2141
        %v2177 = vpack.c.b16 %v2144, %v2143
        %v2178 = vpack.c.b16 %v2146, %v2145
        %v2179 = vpack.c.b16 %v2148, %v2147
        %v2180 = vpack.c.b16 %v2150, %v2149
        %v2181 = vpack.c.b16 %v2152, %v2151
        %v2182 = vpack.c.b16 %v2154, %v2153
        %v2183 = vpack.c.b16 %v2156, %v2155
        %v2184 = vpack.c.b16 %v2158, %v2157
        %v2185 = vpack.c.b16 %v2160, %v2159
        %v2186 = vpack.c.b16 %v2162, %v2161
        %2211 = vmatprep.subr.bf16.mxu0 0
        %2212 = vmatpush1.bf16.msra.mxu0 %v2163
        %2213 = vmatprep.subr.bf16.mxu0 0
        %2214 = vmatpush1.bf16.msra.mxu0 %v2164
        %2215 = vmatprep.subr.bf16.mxu0 0
        %2216 = vmatpush1.bf16.msra.mxu0 %v2165
        %2217 = vmatprep.subr.bf16.mxu0 0
        %2218 = vmatpush1.bf16.msra.mxu0 %v2166
        %2219 = vmatprep.subr.bf16.mxu0 0
        %2220 = vmatpush1.bf16.msra.mxu0 %v2167
        %2221 = vmatprep.subr.bf16.mxu0 0
        %2222 = vmatpush1.bf16.msra.mxu0 %v2168
        %2223 = vmatprep.subr.bf16.mxu0 0
        %2224 = vmatpush1.bf16.msra.mxu0 %v2169
        %2225 = vmatprep.subr.bf16.mxu0 0
        %2226 = vmatpush1.bf16.msra.mxu0 %v2170
        %2227 = vmatprep.subr.bf16.mxu0 0
        %2228 = vmatpush1.bf16.msra.mxu0 %v2171
        %2229 = vmatprep.subr.bf16.mxu0 0
        %2230 = vmatpush1.bf16.msra.mxu0 %v2172
        %2231 = vmatprep.subr.bf16.mxu0 0
        %2232 = vmatpush1.bf16.msra.mxu0 %v2173
        %2233 = vmatprep.subr.bf16.mxu0 0
        %2234 = vmatpush1.bf16.msra.mxu0 %v2174
        %2235 = vmatprep.subr.bf16.mxu0 0
        %2236 = vmatpush1.bf16.msra.mxu0 %v2175
        %2237 = vmatprep.subr.bf16.mxu0 0
        %2238 = vmatpush1.bf16.msra.mxu0 %v2176
        %2239 = vmatprep.subr.bf16.mxu0 0
        %2240 = vmatpush1.bf16.msra.mxu0 %v2177
        %2241 = vmatprep.subr.bf16.mxu0 0
        %2242 = vmatpush1.bf16.msra.mxu0 %v2178
        %2243 = vmatprep.mubr.bf16.mxu0 %v2005
        %2244 = vmatmul.mubr.bf16.gmra.mrb[0].mxu0 %v2004
        %v2245 = vpop.f32.mrb[0].mxu0
        %v2246 = vadd.f32 %v2065, %v2245
        %v2247 = vpop.f32.mrb[0].mxu0
        %v2248 = vpop.f32.mrb[0].mxu0
        %v2249 = vadd.f32 %v2065, %v2248
        %v2250 = vpop.f32.mrb[0].mxu0
        %2251 = vmatprep.mubr.bf16.mxu0 %v2008
        %2252 = vmatmul.mubr.bf16.gmra.mrb[0].mxu0 %v2007
        %v2253 = vpop.f32.mrb[0].mxu0
        %v2254 = vadd.f32 %v2065, %v2253
        %v2255 = vpop.f32.mrb[0].mxu0
        %v2256 = vpop.f32.mrb[0].mxu0
        %v2257 = vadd.f32 %v2065, %v2256
        %v2258 = vpop.f32.mrb[0].mxu0
        %2259 = vdwg.mxu0
        %2260 = vmatprep.subr.bf16.mxu0 0
        %2261 = vmatpush1.bf16.msra.mxu0 %v2179
        %2262 = vmatprep.subr.bf16.mxu0 0
        %2263 = vmatpush1.bf16.msra.mxu0 %v2180
        %2264 = vmatprep.subr.bf16.mxu0 0
        %2265 = vmatpush1.bf16.msra.mxu0 %v2181
        %2266 = vmatprep.subr.bf16.mxu0 0
        %2267 = vmatpush1.bf16.msra.mxu0 %v2182
        %2268 = vmatprep.subr.bf16.mxu0 0
        %2269 = vmatpush1.bf16.msra.mxu0 %v2183
        %2270 = vmatprep.subr.bf16.mxu0 0
        %2271 = vmatpush1.bf16.msra.mxu0 %v2184
        %2272 = vmatprep.subr.bf16.mxu0 0
        %2273 = vmatpush1.bf16.msra.mxu0 %v2185
        %2274 = vmatprep.subr.bf16.mxu0 0
        %2275 = vmatpush1.bf16.msra.mxu0 %v2186
        %2276 = vmatprep.subr.bf16.mxu0 0
        %2277 = vmatpush1.bf16.msra.mxu0 0
        %2278 = vmatprep.subr.bf16.mxu0 0
        %2279 = vmatpush1.bf16.msra.mxu0 0
        %2280 = vmatprep.subr.bf16.mxu0 0
        %2281 = vmatpush1.bf16.msra.mxu0 0
        %2282 = vmatprep.subr.bf16.mxu0 0
        %2283 = vmatpush1.bf16.msra.mxu0 0
        %2284 = vmatprep.subr.bf16.mxu0 0
        %2285 = vmatpush1.bf16.msra.mxu0 0
        %2286 = vmatprep.subr.bf16.mxu0 0
        %2287 = vmatpush1.bf16.msra.mxu0 0
        %2288 = vmatprep.subr.bf16.mxu0 0
        %2289 = vmatpush1.bf16.msra.mxu0 0
        %2290 = vmatprep.subr.bf16.mxu0 0
        %2291 = vmatpush1.bf16.msra.mxu0 0
        %2292 = vmatprep.mubr.bf16.mxu0 0
        %2293 = vmatmul.mubr.bf16.gmra.mrb[0].mxu0 %v2006
        %v2294 = vpop.f32.mrb[0].mxu0
        %v2295 = vadd.f32 %v2246, %v2294
        %v2296 = vpop.f32.mrb[0].mxu0
        %v2297 = vpop.f32.mrb[0].mxu0
        %v2298 = vadd.f32 %v2249, %v2297
        %v2299 = vpop.f32.mrb[0].mxu0
        %2300 = vmatprep.mubr.bf16.mxu0 0
        %2301 = vmatmul.mubr.bf16.gmra.mrb[0].mxu0 %v2009
        %v2302 = vpop.f32.mrb[0].mxu0
        %v2303 = vadd.f32 %v2254, %v2302
        %v2304 = vpop.f32.mrb[0].mxu0
        %v2305 = vpop.f32.mrb[0].mxu0
        %v2306 = vadd.f32 %v2257, %v2305
        %v2307 = vpop.f32.mrb[0].mxu0
        %2308 = vdwg.mxu0
        %v2309 = vmax.f32 %v2295, 0.0
        %v2310 = vmax.f32 %v2298, 0.0
        %v2311 = vmax.f32 %v2303, 0.0
        %v2312 = vmax.f32 %v2306, 0.0
        %v2313 = vpack.c.bf16 %v2310, %v2309
        %v2314 = vpack.c.bf16 %v2312, %v2311
        %s2315 = scalar_lea.vmem [#allocation10], 128
        %v2316 = vld [vmem:[%s2315] sm:$0xf]
        %v2317 = vld [vmem:[%s2315 + $0x4] sm:$0xf]
        %v2318 = vld [vmem:[%s2315 + $0x8] sm:$0xf]
        %v2319 = vld [vmem:[%s2315 + $0xc] sm:$0xf]
        %v2320 = vld [vmem:[%s2315 + $0x10] sm:$0xf]
        %v2321 = vld [vmem:[%s2315 + $0x14] sm:$0xf]
        %v2322 = vld [vmem:[%s2315 + $0x18] sm:$0xf]
        %v2323 = vld [vmem:[%s2315 + $0x1c] sm:$0xf]
        %v2324 = vld [vmem:[%s2315 + $0x20] sm:$0xf]
        %v2325 = vld [vmem:[%s2315 + $0x24] sm:$0xf]
        %v2326 = vld [vmem:[%s2315 + $0x28] sm:$0xf]
        %v2327 = vld [vmem:[%s2315 + $0x2c] sm:$0xf]
        %v2328 = vld [vmem:[%s2315 + $0x30] sm:$0xf]
        %v2329 = vld [vmem:[%s2315 + $0x34] sm:$0xf]
        %v2330 = vld [vmem:[%s2315 + $0x38] sm:$0xf]
        %v2331 = vld [vmem:[%s2315 + $0x3c] sm:$0xf]
        %v2348 = vunpack.c.l.b16 %v2316
        %v2349 = vunpack.c.l.b16 %v2317
        %v2350 = vunpack.c.l.b16 %v2318
        %v2351 = vunpack.c.l.b16 %v2319
        %v2352 = vunpack.c.l.b16 %v2320
        %v2353 = vunpack.c.l.b16 %v2321
        %v2354 = vunpack.c.l.b16 %v2322
        %v2355 = vunpack.c.l.b16 %v2323
        %v2356 = vunpack.c.l.b16 %v2324
        %v2357 = vunpack.c.l.b16 %v2325
        %v2358 = vunpack.c.l.b16 %v2326
        %v2359 = vunpack.c.l.b16 %v2327
        %v2360 = vunpack.c.l.b16 %v2328
        %v2361 = vunpack.c.l.b16 %v2329
        %v2362 = vunpack.c.l.b16 %v2330
        %v2363 = vunpack.c.l.b16 %v2331
        %v2364 = vpack.c.b16 %v2349, %v2348
        %v2365 = vpack.c.b16 %v2351, %v2350
        %v2366 = vpack.c.b16 %v2353, %v2352
        %v2367 = vpack.c.b16 %v2355, %v2354
        %v2368 = vpack.c.b16 %v2357, %v2356
        %v2369 = vpack.c.b16 %v2359, %v2358
        %v2370 = vpack.c.b16 %v2361, %v2360
        %v2371 = vpack.c.b16 %v2363, %v2362
        %2380 = vmatprep.subr.bf16.mxu0 0
        %2381 = vmatpush1.bf16.msra.mxu0 %v2364
        %2382 = vmatprep.subr.bf16.mxu0 0
        %2383 = vmatpush1.bf16.msra.mxu0 %v2365
        %2384 = vmatprep.subr.bf16.mxu0 0
        %2385 = vmatpush1.bf16.msra.mxu0 %v2366
        %2386 = vmatprep.subr.bf16.mxu0 0
        %2387 = vmatpush1.bf16.msra.mxu0 %v2367
        %2388 = vmatprep.subr.bf16.mxu0 0
        %2389 = vmatpush1.bf16.msra.mxu0 %v2368
        %2390 = vmatprep.subr.bf16.mxu0 0
        %2391 = vmatpush1.bf16.msra.mxu0 %v2369
        %2392 = vmatprep.subr.bf16.mxu0 0
        %2393 = vmatpush1.bf16.msra.mxu0 %v2370
        %2394 = vmatprep.subr.bf16.mxu0 0
        %2395 = vmatpush1.bf16.msra.mxu0 %v2371
        %2396 = vmatprep.subr.bf16.mxu0 0
        %2397 = vmatpush1.bf16.msra.mxu0 0
        %2398 = vmatprep.subr.bf16.mxu0 0
        %2399 = vmatpush1.bf16.msra.mxu0 0
        %2400 = vmatprep.subr.bf16.mxu0 0
        %2401 = vmatpush1.bf16.msra.mxu0 0
        %2402 = vmatprep.subr.bf16.mxu0 0
        %2403 = vmatpush1.bf16.msra.mxu0 0
        %2404 = vmatprep.subr.bf16.mxu0 0
        %2405 = vmatpush1.bf16.msra.mxu0 0
        %2406 = vmatprep.subr.bf16.mxu0 0
        %2407 = vmatpush1.bf16.msra.mxu0 0
        %2408 = vmatprep.subr.bf16.mxu0 0
        %2409 = vmatpush1.bf16.msra.mxu0 0
        %2410 = vmatprep.subr.bf16.mxu0 0
        %2411 = vmatpush1.bf16.msra.mxu0 0
        %2412 = vmatprep.mubr.bf16.mxu0 0
        %2413 = vmatmul.mubr.bf16.gmra.mrb[0].mxu0 %v2313
        %v2414 = vpop.f32.mrb[0].mxu0
        %v2415 = vadd.f32 0.0, %v2414
        %v2416 = vpop.f32.mrb[0].mxu0
        %v2417 = vpop.f32.mrb[0].mxu0
        %v2418 = vadd.f32 0.0, %v2417
        %v2419 = vpop.f32.mrb[0].mxu0
        %2420 = vmatprep.mubr.bf16.mxu0 0
        %2421 = vmatmul.mubr.bf16.gmra.mrb[0].mxu0 %v2314
        %v2422 = vpop.f32.mrb[0].mxu0
        %v2423 = vadd.f32 0.0, %v2422
        %v2424 = vpop.f32.mrb[0].mxu0
        %v2425 = vpop.f32.mrb[0].mxu0
        %v2426 = vadd.f32 0.0, %v2425
        %v2427 = vpop.f32.mrb[0].mxu0
        %2428 = vdwg.mxu0
        %v2429 = vadd.f32 %v1888, %v2415
        %v2430 = vadd.f32 %v1891, %v2418
        %v2431 = vadd.f32 %v1896, %v2423
        %v2432 = vadd.f32 %v1899, %v2426
        %s2433 = scalar_lea.vmem %s6, 2
        %v2434 = vld [vmem:[%s2433] sm:$0x1]
        %v2436 = vlaneseq
        %v2437 = vshrl.u32 %v2436, 7
        %v2438 = vsub.s32 0, %v2437
        %v2439 = vrot.slane %v2434, %v2438
        %v2441 = vadd.f32 %v2429, %v2439
        %v2442 = vadd.f32 %v2430, %v2439
        %v2443 = vadd.f32 %v2431, %v2439
        %v2444 = vadd.f32 %v2432, %v2439
        %v2445 = vmax.f32 %v2441, 0.0
        %v2446 = vmax.f32 %v2442, 0.0
        %v2447 = vmax.f32 %v2443, 0.0
        %v2448 = vmax.f32 %v2444, 0.0
        %v2449 = vpack.c.bf16 %v2446, %v2445
        %v2450 = vpack.c.bf16 %v2448, %v2447
        %2451 = vst [vmem:[#allocation3 + $0x8] sm:$0xff] %v2449
        %2452 = vst [vmem:[#allocation3 + $0x20] sm:$0xff] %v2450
        %v2454 = vrot.slane %v2449, 4
        %2456 = vst [vmem:[#allocation2] sm:$0xf0] %v2454
        %2457 = vst [vmem:[#allocation2 + $0x8] sm:$0xf] %v2454
        %v2458 = vld [vmem:[#allocation2] sm:$0xf8]
        %v2459 = vld [vmem:[#allocation2 + $0x8] sm:$0xf]
        %v2461 = vshrl.u32 %v2458, 16
        %v2463 = vrot.slane %v2461, 3
        %v2464 = vshll.u32 %v2458, 16
        %v2466 = vrot.slane %v2464, 4
        %v2467 = vor.u32 %v2463, %v2466
        %v2469 = vshrl.u32 %v2459, 16
        %v2471 = vrot.slane %v2469, 3
        %v2472 = vshll.u32 %v2459, 16
        %v2474 = vrot.slane %v2472, 4
        %v2475 = vor.u32 %v2471, %v2474
        %v2476 = vsel %vm1250, %v2467, %v2475
        %2478 = vst [vmem:[#allocation3] sm:$0xff] %v2476
        %v2479 = vld [vmem:[#allocation2] sm:$0xf0]
        %v2480 = vld [vmem:[#allocation2 + $0x8] sm:$0x1f]
        %v2482 = vshrl.u32 %v2479, 16
        %v2484 = vrot.slane %v2482, 4
        %v2485 = vshll.u32 %v2479, 16
        %v2487 = vrot.slane %v2485, 5
        %v2488 = vor.u32 %v2484, %v2487
        %v2490 = vshrl.u32 %v2480, 16
        %v2492 = vrot.slane %v2490, 4
        %v2493 = vshll.u32 %v2480, 16
        %v2495 = vrot.slane %v2493, 5
        %v2496 = vor.u32 %v2492, %v2495
        %v2497 = vsel %vm1272, %v2488, %v2496
        %2499 = vst [vmem:[#allocation3 + $0x10] sm:$0xff] %v2497
        %v2501 = vrot.slane %v2450, 4
        %2503 = vst [vmem:[%s551] sm:$0xf0] %v2501
        %2504 = vst [vmem:[%s551 + $0x8] sm:$0xf] %v2501
        %v2505 = vld [vmem:[%s551] sm:$0xf8]
        %v2506 = vld [vmem:[%s551 + $0x8] sm:$0xf]
        %v2508 = vshrl.u32 %v2505, 16
        %v2510 = vrot.slane %v2508, 3
        %v2511 = vshll.u32 %v2505, 16
        %v2513 = vrot.slane %v2511, 4
        %v2514 = vor.u32 %v2510, %v2513
        %v2516 = vshrl.u32 %v2506, 16
        %v2518 = vrot.slane %v2516, 3
        %v2519 = vshll.u32 %v2506, 16
        %v2521 = vrot.slane %v2519, 4
        %v2522 = vor.u32 %v2518, %v2521
        %v2523 = vsel %vm1250, %v2514, %v2522
        %2525 = vst [vmem:[#allocation3 + $0x18] sm:$0xff] %v2523
        %v2526 = vld [vmem:[%s551] sm:$0xf0]
        %v2527 = vld [vmem:[%s551 + $0x8] sm:$0x1f]
        %v2529 = vshrl.u32 %v2526, 16
        %v2531 = vrot.slane %v2529, 4
        %v2532 = vshll.u32 %v2526, 16
        %v2534 = vrot.slane %v2532, 5
        %v2535 = vor.u32 %v2531, %v2534
        %v2537 = vshrl.u32 %v2527, 16
        %v2539 = vrot.slane %v2537, 4
        %v2540 = vshll.u32 %v2527, 16
        %v2542 = vrot.slane %v2540, 5
        %v2543 = vor.u32 %v2539, %v2542
        %v2544 = vsel %vm1272, %v2535, %v2543
        %2546 = vst [vmem:[#allocation3 + $0x28] sm:$0xff] %v2544
        %v2547 = vld [vmem:[#allocation3] sm:$0xff]
        %v2548 = vld [vmem:[#allocation3 + $0x8] sm:$0xff]
        %v2549 = vld [vmem:[#allocation3 + $0x10] sm:$0xff]
        %v2550 = vld [vmem:[#allocation3 + $0x18] sm:$0xff]
        %v2551 = vld [vmem:[#allocation3 + $0x20] sm:$0xff]
        %v2552 = vld [vmem:[#allocation3 + $0x28] sm:$0xff]
        %s2553 = scalar_lea.vmem [#allocation9], 576
        %v2554 = vld [vmem:[%s2553] sm:$0xf]
        %v2555 = vld [vmem:[%s2553 + $0x4] sm:$0xf]
        %v2556 = vld [vmem:[%s2553 + $0x8] sm:$0xf]
        %v2557 = vld [vmem:[%s2553 + $0xc] sm:$0xf]
        %v2558 = vld [vmem:[%s2553 + $0x10] sm:$0xf]
        %v2559 = vld [vmem:[%s2553 + $0x14] sm:$0xf]
        %v2560 = vld [vmem:[%s2553 + $0x18] sm:$0xf]
        %v2561 = vld [vmem:[%s2553 + $0x1c] sm:$0xf]
        %v2562 = vld [vmem:[%s2553 + $0x20] sm:$0xf]
        %v2563 = vld [vmem:[%s2553 + $0x24] sm:$0xf]
        %v2564 = vld [vmem:[%s2553 + $0x28] sm:$0xf]
        %v2565 = vld [vmem:[%s2553 + $0x2c] sm:$0xf]
        %v2566 = vld [vmem:[%s2553 + $0x30] sm:$0xf]
        %v2567 = vld [vmem:[%s2553 + $0x34] sm:$0xf]
        %v2568 = vld [vmem:[%s2553 + $0x38] sm:$0xf]
        %v2569 = vld [vmem:[%s2553 + $0x3c] sm:$0xf]
        %v2570 = vld [vmem:[%s2553 + $0x40] sm:$0xf]
        %v2571 = vld [vmem:[%s2553 + $0x44] sm:$0xf]
        %v2572 = vld [vmem:[%s2553 + $0x48] sm:$0xf]
        %v2573 = vld [vmem:[%s2553 + $0x4c] sm:$0xf]
        %v2574 = vld [vmem:[%s2553 + $0x50] sm:$0xf]
        %v2575 = vld [vmem:[%s2553 + $0x54] sm:$0xf]
        %v2576 = vld [vmem:[%s2553 + $0x58] sm:$0xf]
        %v2577 = vld [vmem:[%s2553 + $0x5c] sm:$0xf]
        %v2578 = vld [vmem:[%s2553 + $0x60] sm:$0xf]
        %v2579 = vld [vmem:[%s2553 + $0x64] sm:$0xf]
        %v2580 = vld [vmem:[%s2553 + $0x68] sm:$0xf]
        %v2581 = vld [vmem:[%s2553 + $0x6c] sm:$0xf]
        %v2582 = vld [vmem:[%s2553 + $0x70] sm:$0xf]
        %v2583 = vld [vmem:[%s2553 + $0x74] sm:$0xf]
        %v2584 = vld [vmem:[%s2553 + $0x78] sm:$0xf]
        %v2585 = vld [vmem:[%s2553 + $0x7c] sm:$0xf]
        %v2586 = vld [vmem:[%s2553 + $0x80] sm:$0xf]
        %v2587 = vld [vmem:[%s2553 + $0x84] sm:$0xf]
        %v2588 = vld [vmem:[%s2553 + $0x88] sm:$0xf]
        %v2589 = vld [vmem:[%s2553 + $0x8c] sm:$0xf]
        %v2590 = vld [vmem:[%s2553 + $0x90] sm:$0xf]
        %v2591 = vld [vmem:[%s2553 + $0x94] sm:$0xf]
        %v2592 = vld [vmem:[%s2553 + $0x98] sm:$0xf]
        %v2593 = vld [vmem:[%s2553 + $0x9c] sm:$0xf]
        %v2594 = vld [vmem:[%s2553 + $0xa0] sm:$0xf]
        %v2595 = vld [vmem:[%s2553 + $0xa4] sm:$0xf]
        %v2596 = vld [vmem:[%s2553 + $0xa8] sm:$0xf]
        %v2597 = vld [vmem:[%s2553 + $0xac] sm:$0xf]
        %v2598 = vld [vmem:[%s2553 + $0xb0] sm:$0xf]
        %v2599 = vld [vmem:[%s2553 + $0xb4] sm:$0xf]
        %v2600 = vld [vmem:[%s2553 + $0xb8] sm:$0xf]
        %v2601 = vld [vmem:[%s2553 + $0xbc] sm:$0xf]
        %s2602 = scalar_lea.vmem %s4, 3
        %v2603 = vld [vmem:[%s2602] sm:$0x1]
        %v2605 = vlaneseq
        %v2606 = vshrl.u32 %v2605, 7
        %v2607 = vsub.s32 0, %v2606
        %v2608 = vrot.slane %v2603, %v2607
        %v2658 = vunpack.c.l.b16 %v2554
        %v2659 = vunpack.c.l.b16 %v2555
        %v2660 = vunpack.c.l.b16 %v2556
        %v2661 = vunpack.c.l.b16 %v2557
        %v2662 = vunpack.c.l.b16 %v2558
        %v2663 = vunpack.c.l.b16 %v2559
        %v2664 = vunpack.c.l.b16 %v2560
        %v2665 = vunpack.c.l.b16 %v2561
        %v2666 = vunpack.c.l.b16 %v2562
        %v2667 = vunpack.c.l.b16 %v2563
        %v2668 = vunpack.c.l.b16 %v2564
        %v2669 = vunpack.c.l.b16 %v2565
        %v2670 = vunpack.c.l.b16 %v2566
        %v2671 = vunpack.c.l.b16 %v2567
        %v2672 = vunpack.c.l.b16 %v2568
        %v2673 = vunpack.c.l.b16 %v2569
        %v2674 = vunpack.c.l.b16 %v2570
        %v2675 = vunpack.c.l.b16 %v2571
        %v2676 = vunpack.c.l.b16 %v2572
        %v2677 = vunpack.c.l.b16 %v2573
        %v2678 = vunpack.c.l.b16 %v2574
        %v2679 = vunpack.c.l.b16 %v2575
        %v2680 = vunpack.c.l.b16 %v2576
        %v2681 = vunpack.c.l.b16 %v2577
        %v2682 = vunpack.c.l.b16 %v2578
        %v2683 = vunpack.c.l.b16 %v2579
        %v2684 = vunpack.c.l.b16 %v2580
        %v2685 = vunpack.c.l.b16 %v2581
        %v2686 = vunpack.c.l.b16 %v2582
        %v2687 = vunpack.c.l.b16 %v2583
        %v2688 = vunpack.c.l.b16 %v2584
        %v2689 = vunpack.c.l.b16 %v2585
        %v2690 = vunpack.c.l.b16 %v2586
        %v2691 = vunpack.c.l.b16 %v2587
        %v2692 = vunpack.c.l.b16 %v2588
        %v2693 = vunpack.c.l.b16 %v2589
        %v2694 = vunpack.c.l.b16 %v2590
        %v2695 = vunpack.c.l.b16 %v2591
        %v2696 = vunpack.c.l.b16 %v2592
        %v2697 = vunpack.c.l.b16 %v2593
        %v2698 = vunpack.c.l.b16 %v2594
        %v2699 = vunpack.c.l.b16 %v2595
        %v2700 = vunpack.c.l.b16 %v2596
        %v2701 = vunpack.c.l.b16 %v2597
        %v2702 = vunpack.c.l.b16 %v2598
        %v2703 = vunpack.c.l.b16 %v2599
        %v2704 = vunpack.c.l.b16 %v2600
        %v2705 = vunpack.c.l.b16 %v2601
        %v2706 = vpack.c.b16 %v2659, %v2658
        %v2707 = vpack.c.b16 %v2661, %v2660
        %v2708 = vpack.c.b16 %v2663, %v2662
        %v2709 = vpack.c.b16 %v2665, %v2664
        %v2710 = vpack.c.b16 %v2667, %v2666
        %v2711 = vpack.c.b16 %v2669, %v2668
        %v2712 = vpack.c.b16 %v2671, %v2670
        %v2713 = vpack.c.b16 %v2673, %v2672
        %v2714 = vpack.c.b16 %v2675, %v2674
        %v2715 = vpack.c.b16 %v2677, %v2676
        %v2716 = vpack.c.b16 %v2679, %v2678
        %v2717 = vpack.c.b16 %v2681, %v2680
        %v2718 = vpack.c.b16 %v2683, %v2682
        %v2719 = vpack.c.b16 %v2685, %v2684
        %v2720 = vpack.c.b16 %v2687, %v2686
        %v2721 = vpack.c.b16 %v2689, %v2688
        %v2722 = vpack.c.b16 %v2691, %v2690
        %v2723 = vpack.c.b16 %v2693, %v2692
        %v2724 = vpack.c.b16 %v2695, %v2694
        %v2725 = vpack.c.b16 %v2697, %v2696
        %v2726 = vpack.c.b16 %v2699, %v2698
        %v2727 = vpack.c.b16 %v2701, %v2700
        %v2728 = vpack.c.b16 %v2703, %v2702
        %v2729 = vpack.c.b16 %v2705, %v2704
        %2754 = vmatprep.subr.bf16.mxu0 0
        %2755 = vmatpush1.bf16.msra.mxu0 %v2706
        %2756 = vmatprep.subr.bf16.mxu0 0
        %2757 = vmatpush1.bf16.msra.mxu0 %v2707
        %2758 = vmatprep.subr.bf16.mxu0 0
        %2759 = vmatpush1.bf16.msra.mxu0 %v2708
        %2760 = vmatprep.subr.bf16.mxu0 0
        %2761 = vmatpush1.bf16.msra.mxu0 %v2709
        %2762 = vmatprep.subr.bf16.mxu0 0
        %2763 = vmatpush1.bf16.msra.mxu0 %v2710
        %2764 = vmatprep.subr.bf16.mxu0 0
        %2765 = vmatpush1.bf16.msra.mxu0 %v2711
        %2766 = vmatprep.subr.bf16.mxu0 0
        %2767 = vmatpush1.bf16.msra.mxu0 %v2712
        %2768 = vmatprep.subr.bf16.mxu0 0
        %2769 = vmatpush1.bf16.msra.mxu0 %v2713
        %2770 = vmatprep.subr.bf16.mxu0 0
        %2771 = vmatpush1.bf16.msra.mxu0 %v2714
        %2772 = vmatprep.subr.bf16.mxu0 0
        %2773 = vmatpush1.bf16.msra.mxu0 %v2715
        %2774 = vmatprep.subr.bf16.mxu0 0
        %2775 = vmatpush1.bf16.msra.mxu0 %v2716
        %2776 = vmatprep.subr.bf16.mxu0 0
        %2777 = vmatpush1.bf16.msra.mxu0 %v2717
        %2778 = vmatprep.subr.bf16.mxu0 0
        %2779 = vmatpush1.bf16.msra.mxu0 %v2718
        %2780 = vmatprep.subr.bf16.mxu0 0
        %2781 = vmatpush1.bf16.msra.mxu0 %v2719
        %2782 = vmatprep.subr.bf16.mxu0 0
        %2783 = vmatpush1.bf16.msra.mxu0 %v2720
        %2784 = vmatprep.subr.bf16.mxu0 0
        %2785 = vmatpush1.bf16.msra.mxu0 %v2721
        %2786 = vmatprep.mubr.bf16.mxu0 %v2548
        %2787 = vmatmul.mubr.bf16.gmra.mrb[0].mxu0 %v2547
        %v2788 = vpop.f32.mrb[0].mxu0
        %v2789 = vadd.f32 %v2608, %v2788
        %v2790 = vpop.f32.mrb[0].mxu0
        %v2791 = vpop.f32.mrb[0].mxu0
        %v2792 = vadd.f32 %v2608, %v2791
        %v2793 = vpop.f32.mrb[0].mxu0
        %2794 = vmatprep.mubr.bf16.mxu0 %v2551
        %2795 = vmatmul.mubr.bf16.gmra.mrb[0].mxu0 %v2550
        %v2796 = vpop.f32.mrb[0].mxu0
        %v2797 = vadd.f32 %v2608, %v2796
        %v2798 = vpop.f32.mrb[0].mxu0
        %v2799 = vpop.f32.mrb[0].mxu0
        %v2800 = vadd.f32 %v2608, %v2799
        %v2801 = vpop.f32.mrb[0].mxu0
        %2802 = vdwg.mxu0
        %2803 = vmatprep.subr.bf16.mxu0 0
        %2804 = vmatpush1.bf16.msra.mxu0 %v2722
        %2805 = vmatprep.subr.bf16.mxu0 0
        %2806 = vmatpush1.bf16.msra.mxu0 %v2723
        %2807 = vmatprep.subr.bf16.mxu0 0
        %2808 = vmatpush1.bf16.msra.mxu0 %v2724
        %2809 = vmatprep.subr.bf16.mxu0 0
        %2810 = vmatpush1.bf16.msra.mxu0 %v2725
        %2811 = vmatprep.subr.bf16.mxu0 0
        %2812 = vmatpush1.bf16.msra.mxu0 %v2726
        %2813 = vmatprep.subr.bf16.mxu0 0
        %2814 = vmatpush1.bf16.msra.mxu0 %v2727
        %2815 = vmatprep.subr.bf16.mxu0 0
        %2816 = vmatpush1.bf16.msra.mxu0 %v2728
        %2817 = vmatprep.subr.bf16.mxu0 0
        %2818 = vmatpush1.bf16.msra.mxu0 %v2729
        %2819 = vmatprep.subr.bf16.mxu0 0
        %2820 = vmatpush1.bf16.msra.mxu0 0
        %2821 = vmatprep.subr.bf16.mxu0 0
        %2822 = vmatpush1.bf16.msra.mxu0 0
        %2823 = vmatprep.subr.bf16.mxu0 0
        %2824 = vmatpush1.bf16.msra.mxu0 0
        %2825 = vmatprep.subr.bf16.mxu0 0
        %2826 = vmatpush1.bf16.msra.mxu0 0
        %2827 = vmatprep.subr.bf16.mxu0 0
        %2828 = vmatpush1.bf16.msra.mxu0 0
        %2829 = vmatprep.subr.bf16.mxu0 0
        %2830 = vmatpush1.bf16.msra.mxu0 0
        %2831 = vmatprep.subr.bf16.mxu0 0
        %2832 = vmatpush1.bf16.msra.mxu0 0
        %2833 = vmatprep.subr.bf16.mxu0 0
        %2834 = vmatpush1.bf16.msra.mxu0 0
        %2835 = vmatprep.mubr.bf16.mxu0 0
        %2836 = vmatmul.mubr.bf16.gmra.mrb[0].mxu0 %v2549
        %v2837 = vpop.f32.mrb[0].mxu0
        %v2838 = vadd.f32 %v2789, %v2837
        %v2839 = vpop.f32.mrb[0].mxu0
        %v2840 = vpop.f32.mrb[0].mxu0
        %v2841 = vadd.f32 %v2792, %v2840
        %v2842 = vpop.f32.mrb[0].mxu0
        %2843 = vmatprep.mubr.bf16.mxu0 0
        %2844 = vmatmul.mubr.bf16.gmra.mrb[0].mxu0 %v2552
        %v2845 = vpop.f32.mrb[0].mxu0
        %v2846 = vadd.f32 %v2797, %v2845
        %v2847 = vpop.f32.mrb[0].mxu0
        %v2848 = vpop.f32.mrb[0].mxu0
        %v2849 = vadd.f32 %v2800, %v2848
        %v2850 = vpop.f32.mrb[0].mxu0
        %2851 = vdwg.mxu0
        %v2852 = vmax.f32 %v2838, 0.0
        %v2853 = vmax.f32 %v2841, 0.0
        %v2854 = vmax.f32 %v2846, 0.0
        %v2855 = vmax.f32 %v2849, 0.0
        %v2856 = vpack.c.bf16 %v2853, %v2852
        %v2857 = vpack.c.bf16 %v2855, %v2854
        %s2858 = scalar_lea.vmem [#allocation10], 192
        %v2859 = vld [vmem:[%s2858] sm:$0xf]
        %v2860 = vld [vmem:[%s2858 + $0x4] sm:$0xf]
        %v2861 = vld [vmem:[%s2858 + $0x8] sm:$0xf]
        %v2862 = vld [vmem:[%s2858 + $0xc] sm:$0xf]
        %v2863 = vld [vmem:[%s2858 + $0x10] sm:$0xf]
        %v2864 = vld [vmem:[%s2858 + $0x14] sm:$0xf]
        %v2865 = vld [vmem:[%s2858 + $0x18] sm:$0xf]
        %v2866 = vld [vmem:[%s2858 + $0x1c] sm:$0xf]
        %v2867 = vld [vmem:[%s2858 + $0x20] sm:$0xf]
        %v2868 = vld [vmem:[%s2858 + $0x24] sm:$0xf]
        %v2869 = vld [vmem:[%s2858 + $0x28] sm:$0xf]
        %v2870 = vld [vmem:[%s2858 + $0x2c] sm:$0xf]
        %v2871 = vld [vmem:[%s2858 + $0x30] sm:$0xf]
        %v2872 = vld [vmem:[%s2858 + $0x34] sm:$0xf]
        %v2873 = vld [vmem:[%s2858 + $0x38] sm:$0xf]
        %v2874 = vld [vmem:[%s2858 + $0x3c] sm:$0xf]
        %v2891 = vunpack.c.l.b16 %v2859
        %v2892 = vunpack.c.l.b16 %v2860
        %v2893 = vunpack.c.l.b16 %v2861
        %v2894 = vunpack.c.l.b16 %v2862
        %v2895 = vunpack.c.l.b16 %v2863
        %v2896 = vunpack.c.l.b16 %v2864
        %v2897 = vunpack.c.l.b16 %v2865
        %v2898 = vunpack.c.l.b16 %v2866
        %v2899 = vunpack.c.l.b16 %v2867
        %v2900 = vunpack.c.l.b16 %v2868
        %v2901 = vunpack.c.l.b16 %v2869
        %v2902 = vunpack.c.l.b16 %v2870
        %v2903 = vunpack.c.l.b16 %v2871
        %v2904 = vunpack.c.l.b16 %v2872
        %v2905 = vunpack.c.l.b16 %v2873
        %v2906 = vunpack.c.l.b16 %v2874
        %v2907 = vpack.c.b16 %v2892, %v2891
        %v2908 = vpack.c.b16 %v2894, %v2893
        %v2909 = vpack.c.b16 %v2896, %v2895
        %v2910 = vpack.c.b16 %v2898, %v2897
        %v2911 = vpack.c.b16 %v2900, %v2899
        %v2912 = vpack.c.b16 %v2902, %v2901
        %v2913 = vpack.c.b16 %v2904, %v2903
        %v2914 = vpack.c.b16 %v2906, %v2905
        %2923 = vmatprep.subr.bf16.mxu0 0
        %2924 = vmatpush1.bf16.msra.mxu0 %v2907
        %2925 = vmatprep.subr.bf16.mxu0 0
        %2926 = vmatpush1.bf16.msra.mxu0 %v2908
        %2927 = vmatprep.subr.bf16.mxu0 0
        %2928 = vmatpush1.bf16.msra.mxu0 %v2909
        %2929 = vmatprep.subr.bf16.mxu0 0
        %2930 = vmatpush1.bf16.msra.mxu0 %v2910
        %2931 = vmatprep.subr.bf16.mxu0 0
        %2932 = vmatpush1.bf16.msra.mxu0 %v2911
        %2933 = vmatprep.subr.bf16.mxu0 0
        %2934 = vmatpush1.bf16.msra.mxu0 %v2912
        %2935 = vmatprep.subr.bf16.mxu0 0
        %2936 = vmatpush1.bf16.msra.mxu0 %v2913
        %2937 = vmatprep.subr.bf16.mxu0 0
        %2938 = vmatpush1.bf16.msra.mxu0 %v2914
        %2939 = vmatprep.subr.bf16.mxu0 0
        %2940 = vmatpush1.bf16.msra.mxu0 0
        %2941 = vmatprep.subr.bf16.mxu0 0
        %2942 = vmatpush1.bf16.msra.mxu0 0
        %2943 = vmatprep.subr.bf16.mxu0 0
        %2944 = vmatpush1.bf16.msra.mxu0 0
        %2945 = vmatprep.subr.bf16.mxu0 0
        %2946 = vmatpush1.bf16.msra.mxu0 0
        %2947 = vmatprep.subr.bf16.mxu0 0
        %2948 = vmatpush1.bf16.msra.mxu0 0
        %2949 = vmatprep.subr.bf16.mxu0 0
        %2950 = vmatpush1.bf16.msra.mxu0 0
        %2951 = vmatprep.subr.bf16.mxu0 0
        %2952 = vmatpush1.bf16.msra.mxu0 0
        %2953 = vmatprep.subr.bf16.mxu0 0
        %2954 = vmatpush1.bf16.msra.mxu0 0
        %2955 = vmatprep.mubr.bf16.mxu0 0
        %2956 = vmatmul.mubr.bf16.gmra.mrb[0].mxu0 %v2856
        %v2957 = vpop.f32.mrb[0].mxu0
        %v2958 = vadd.f32 0.0, %v2957
        %v2959 = vpop.f32.mrb[0].mxu0
        %v2960 = vpop.f32.mrb[0].mxu0
        %v2961 = vadd.f32 0.0, %v2960
        %v2962 = vpop.f32.mrb[0].mxu0
        %2963 = vmatprep.mubr.bf16.mxu0 0
        %2964 = vmatmul.mubr.bf16.gmra.mrb[0].mxu0 %v2857
        %v2965 = vpop.f32.mrb[0].mxu0
        %v2966 = vadd.f32 0.0, %v2965
        %v2967 = vpop.f32.mrb[0].mxu0
        %v2968 = vpop.f32.mrb[0].mxu0
        %v2969 = vadd.f32 0.0, %v2968
        %v2970 = vpop.f32.mrb[0].mxu0
        %2971 = vdwg.mxu0
        %v2972 = vadd.f32 %v2441, %v2958
        %v2973 = vadd.f32 %v2442, %v2961
        %v2974 = vadd.f32 %v2443, %v2966
        %v2975 = vadd.f32 %v2444, %v2969
        %s2976 = scalar_lea.vmem %s6, 3
        %v2977 = vld [vmem:[%s2976] sm:$0x1]
        %v2979 = vlaneseq
        %v2980 = vshrl.u32 %v2979, 7
        %v2981 = vsub.s32 0, %v2980
        %v2982 = vrot.slane %v2977, %v2981
        %v2984 = vadd.f32 %v2972, %v2982
        %v2985 = vadd.f32 %v2973, %v2982
        %v2986 = vadd.f32 %v2974, %v2982
        %v2987 = vadd.f32 %v2975, %v2982
        %s2988 = scalar_lea.vmem [#allocation12], 64
        %v2989 = vld [vmem:[%s2988] sm:$0xf]
        %v2990 = vld [vmem:[%s2988 + $0x4] sm:$0xf]
        %v2991 = vld [vmem:[%s2988 + $0x8] sm:$0xf]
        %v2992 = vld [vmem:[%s2988 + $0xc] sm:$0xf]
        %v2993 = vld [vmem:[%s2988 + $0x10] sm:$0xf]
        %v2994 = vld [vmem:[%s2988 + $0x14] sm:$0xf]
        %v2995 = vld [vmem:[%s2988 + $0x18] sm:$0xf]
        %v2996 = vld [vmem:[%s2988 + $0x1c] sm:$0xf]
        %v2997 = vld [vmem:[%s2988 + $0x20] sm:$0xf]
        %v2998 = vld [vmem:[%s2988 + $0x24] sm:$0xf]
        %v2999 = vld [vmem:[%s2988 + $0x28] sm:$0xf]
        %v3000 = vld [vmem:[%s2988 + $0x2c] sm:$0xf]
        %v3001 = vld [vmem:[%s2988 + $0x30] sm:$0xf]
        %v3002 = vld [vmem:[%s2988 + $0x34] sm:$0xf]
        %v3003 = vld [vmem:[%s2988 + $0x38] sm:$0xf]
        %v3004 = vld [vmem:[%s2988 + $0x3c] sm:$0xf]
        %v3005 = vpack.c.bf16 %v2985, %v2984
        %v3006 = vpack.c.bf16 %v2987, %v2986
        %s3007 = scalar_lea.vmem %s8, 1
        %v3008 = vld [vmem:[%s3007] sm:$0x1]
        %v3010 = vlaneseq
        %v3011 = vshrl.u32 %v3010, 7
        %v3012 = vsub.s32 0, %v3011
        %v3013 = vrot.slane %v3008, %v3012
        %v3031 = vunpack.c.l.b16 %v2989
        %v3032 = vunpack.c.l.b16 %v2990
        %v3033 = vunpack.c.l.b16 %v2991
        %v3034 = vunpack.c.l.b16 %v2992
        %v3035 = vunpack.c.l.b16 %v2993
        %v3036 = vunpack.c.l.b16 %v2994
        %v3037 = vunpack.c.l.b16 %v2995
        %v3038 = vunpack.c.l.b16 %v2996
        %v3039 = vunpack.c.l.b16 %v2997
        %v3040 = vunpack.c.l.b16 %v2998
        %v3041 = vunpack.c.l.b16 %v2999
        %v3042 = vunpack.c.l.b16 %v3000
        %v3043 = vunpack.c.l.b16 %v3001
        %v3044 = vunpack.c.l.b16 %v3002
        %v3045 = vunpack.c.l.b16 %v3003
        %v3046 = vunpack.c.l.b16 %v3004
        %v3047 = vpack.c.b16 %v3032, %v3031
        %v3048 = vpack.c.b16 %v3034, %v3033
        %v3049 = vpack.c.b16 %v3036, %v3035
        %v3050 = vpack.c.b16 %v3038, %v3037
        %v3051 = vpack.c.b16 %v3040, %v3039
        %v3052 = vpack.c.b16 %v3042, %v3041
        %v3053 = vpack.c.b16 %v3044, %v3043
        %v3054 = vpack.c.b16 %v3046, %v3045
        %3063 = vmatprep.subr.bf16.mxu0 0
        %3064 = vmatpush1.bf16.msra.mxu0 %v3047
        %3065 = vmatprep.subr.bf16.mxu0 0
        %3066 = vmatpush1.bf16.msra.mxu0 %v3048
        %3067 = vmatprep.subr.bf16.mxu0 0
        %3068 = vmatpush1.bf16.msra.mxu0 %v3049
        %3069 = vmatprep.subr.bf16.mxu0 0
        %3070 = vmatpush1.bf16.msra.mxu0 %v3050
        %3071 = vmatprep.subr.bf16.mxu0 0
        %3072 = vmatpush1.bf16.msra.mxu0 %v3051
        %3073 = vmatprep.subr.bf16.mxu0 0
        %3074 = vmatpush1.bf16.msra.mxu0 %v3052
        %3075 = vmatprep.subr.bf16.mxu0 0
        %3076 = vmatpush1.bf16.msra.mxu0 %v3053
        %3077 = vmatprep.subr.bf16.mxu0 0
        %3078 = vmatpush1.bf16.msra.mxu0 %v3054
        %3079 = vmatprep.subr.bf16.mxu0 0
        %3080 = vmatpush1.bf16.msra.mxu0 0
        %3081 = vmatprep.subr.bf16.mxu0 0
        %3082 = vmatpush1.bf16.msra.mxu0 0
        %3083 = vmatprep.subr.bf16.mxu0 0
        %3084 = vmatpush1.bf16.msra.mxu0 0
        %3085 = vmatprep.subr.bf16.mxu0 0
        %3086 = vmatpush1.bf16.msra.mxu0 0
        %3087 = vmatprep.subr.bf16.mxu0 0
        %3088 = vmatpush1.bf16.msra.mxu0 0
        %3089 = vmatprep.subr.bf16.mxu0 0
        %3090 = vmatpush1.bf16.msra.mxu0 0
        %3091 = vmatprep.subr.bf16.mxu0 0
        %3092 = vmatpush1.bf16.msra.mxu0 0
        %3093 = vmatprep.subr.bf16.mxu0 0
        %3094 = vmatpush1.bf16.msra.mxu0 0
        %3095 = vmatprep.mubr.bf16.mxu0 0
        %3096 = vmatmul.mubr.bf16.gmra.mrb[0].mxu0 %v3005
        %v3097 = vpop.f32.mrb[0].mxu0
        %v3098 = vadd.f32 %v3013, %v3097
        %v3099 = vpop.f32.mrb[0].mxu0
        %v3100 = vpop.f32.mrb[0].mxu0
        %v3101 = vadd.f32 %v3013, %v3100
        %v3102 = vpop.f32.mrb[0].mxu0
        %3103 = vmatprep.mubr.bf16.mxu0 0
        %3104 = vmatmul.mubr.bf16.gmra.mrb[0].mxu0 %v3006
        %v3105 = vpop.f32.mrb[0].mxu0
        %v3106 = vadd.f32 %v3013, %v3105
        %v3107 = vpop.f32.mrb[0].mxu0
        %v3108 = vpop.f32.mrb[0].mxu0
        %v3109 = vadd.f32 %v3013, %v3108
        %v3110 = vpop.f32.mrb[0].mxu0
        %3111 = vdwg.mxu0
        %v3112 = vld [vmem:[#allocation13] sm:$0xf]
        %v3113 = vld [vmem:[#allocation13 + $0x4] sm:$0xf]
        %v3114 = vld [vmem:[#allocation13 + $0x8] sm:$0xf]
        %v3115 = vld [vmem:[#allocation13 + $0xc] sm:$0xf]
        %v3116 = vld [vmem:[#allocation13 + $0x10] sm:$0xf]
        %v3117 = vld [vmem:[#allocation13 + $0x14] sm:$0xf]
        %v3118 = vld [vmem:[#allocation13 + $0x18] sm:$0xf]
        %v3119 = vld [vmem:[#allocation13 + $0x1c] sm:$0xf]
        %v3120 = vld [vmem:[#allocation13 + $0x20] sm:$0xf]
        %v3121 = vld [vmem:[#allocation13 + $0x24] sm:$0xf]
        %v3122 = vld [vmem:[#allocation13 + $0x28] sm:$0xf]
        %v3123 = vld [vmem:[#allocation13 + $0x2c] sm:$0xf]
        %v3124 = vld [vmem:[#allocation13 + $0x30] sm:$0xf]
        %v3125 = vld [vmem:[#allocation13 + $0x34] sm:$0xf]
        %v3126 = vld [vmem:[#allocation13 + $0x38] sm:$0xf]
        %v3127 = vld [vmem:[#allocation13 + $0x3c] sm:$0xf]
        %v3128 = vpack.c.bf16 %v3101, %v3098
        %v3129 = vpack.c.bf16 %v3109, %v3106
        %v3130 = vld [vmem:[%s10] sm:$0x1]
        %v3132 = vlaneseq
        %v3133 = vshrl.u32 %v3132, 7
        %v3134 = vsub.s32 0, %v3133
        %v3135 = vrot.slane %v3130, %v3134
        %v3153 = vunpack.c.l.b16 %v3112
        %v3154 = vunpack.c.l.b16 %v3113
        %v3155 = vunpack.c.l.b16 %v3114
        %v3156 = vunpack.c.l.b16 %v3115
        %v3157 = vunpack.c.l.b16 %v3116
        %v3158 = vunpack.c.l.b16 %v3117
        %v3159 = vunpack.c.l.b16 %v3118
        %v3160 = vunpack.c.l.b16 %v3119
        %v3161 = vunpack.c.l.b16 %v3120
        %v3162 = vunpack.c.l.b16 %v3121
        %v3163 = vunpack.c.l.b16 %v3122
        %v3164 = vunpack.c.l.b16 %v3123
        %v3165 = vunpack.c.l.b16 %v3124
        %v3166 = vunpack.c.l.b16 %v3125
        %v3167 = vunpack.c.l.b16 %v3126
        %v3168 = vunpack.c.l.b16 %v3127
        %v3169 = vpack.c.b16 %v3154, %v3153
        %v3170 = vpack.c.b16 %v3156, %v3155
        %v3171 = vpack.c.b16 %v3158, %v3157
        %v3172 = vpack.c.b16 %v3160, %v3159
        %v3173 = vpack.c.b16 %v3162, %v3161
        %v3174 = vpack.c.b16 %v3164, %v3163
        %v3175 = vpack.c.b16 %v3166, %v3165
        %v3176 = vpack.c.b16 %v3168, %v3167
        %3185 = vmatprep.subr.bf16.mxu0 0
        %3186 = vmatpush1.bf16.msra.mxu0 %v3169
        %3187 = vmatprep.subr.bf16.mxu0 0
        %3188 = vmatpush1.bf16.msra.mxu0 %v3170
        %3189 = vmatprep.subr.bf16.mxu0 0
        %3190 = vmatpush1.bf16.msra.mxu0 %v3171
        %3191 = vmatprep.subr.bf16.mxu0 0
        %3192 = vmatpush1.bf16.msra.mxu0 %v3172
        %3193 = vmatprep.subr.bf16.mxu0 0
        %3194 = vmatpush1.bf16.msra.mxu0 %v3173
        %3195 = vmatprep.subr.bf16.mxu0 0
        %3196 = vmatpush1.bf16.msra.mxu0 %v3174
        %3197 = vmatprep.subr.bf16.mxu0 0
        %3198 = vmatpush1.bf16.msra.mxu0 %v3175
        %3199 = vmatprep.subr.bf16.mxu0 0
        %3200 = vmatpush1.bf16.msra.mxu0 %v3176
        %3201 = vmatprep.subr.bf16.mxu0 0
        %3202 = vmatpush1.bf16.msra.mxu0 0
        %3203 = vmatprep.subr.bf16.mxu0 0
        %3204 = vmatpush1.bf16.msra.mxu0 0
        %3205 = vmatprep.subr.bf16.mxu0 0
        %3206 = vmatpush1.bf16.msra.mxu0 0
        %3207 = vmatprep.subr.bf16.mxu0 0
        %3208 = vmatpush1.bf16.msra.mxu0 0
        %3209 = vmatprep.subr.bf16.mxu0 0
        %3210 = vmatpush1.bf16.msra.mxu0 0
        %3211 = vmatprep.subr.bf16.mxu0 0
        %3212 = vmatpush1.bf16.msra.mxu0 0
        %3213 = vmatprep.subr.bf16.mxu0 0
        %3214 = vmatpush1.bf16.msra.mxu0 0
        %3215 = vmatprep.subr.bf16.mxu0 0
        %3216 = vmatpush1.bf16.msra.mxu0 0
        %3217 = vmatprep.mubr.bf16.mxu0 0
        %3218 = vmatmul.mubr.bf16.gmra.mrb[0].mxu0 %v3128
        %v3219 = vpop.f32.mrb[0].mxu0
        %v3220 = vadd.f32 %v3135, %v3219
        %v3221 = vpop.f32.mrb[0].mxu0
        %v3222 = vpop.f32.mrb[0].mxu0
        %v3223 = vadd.f32 %v3135, %v3222
        %v3224 = vpop.f32.mrb[0].mxu0
        %3225 = vmatprep.mubr.bf16.mxu0 0
        %3226 = vmatmul.mubr.bf16.gmra.mrb[0].mxu0 %v3129
        %v3227 = vpop.f32.mrb[0].mxu0
        %v3228 = vadd.f32 %v3135, %v3227
        %v3229 = vpop.f32.mrb[0].mxu0
        %v3230 = vpop.f32.mrb[0].mxu0
        %v3231 = vadd.f32 %v3135, %v3230
        %v3232 = vpop.f32.mrb[0].mxu0
        %3233 = vdwg.mxu0
        %v3234 = vmax.f32 %v3220, 0.0
        %v3235 = vmax.f32 %v3223, 0.0
        %v3236 = vmax.f32 %v3228, 0.0
        %v3237 = vmax.f32 %v3231, 0.0
        %v3238 = vld [vmem:[#allocation15] sm:$0xf]
        %v3239 = vld [vmem:[#allocation15 + $0x4] sm:$0xf]
        %v3240 = vld [vmem:[#allocation15 + $0x8] sm:$0xf]
        %v3241 = vld [vmem:[#allocation15 + $0xc] sm:$0xf]
        %v3242 = vld [vmem:[#allocation15 + $0x10] sm:$0xf]
        %v3243 = vld [vmem:[#allocation15 + $0x14] sm:$0xf]
        %v3244 = vld [vmem:[#allocation15 + $0x18] sm:$0xf]
        %v3245 = vld [vmem:[#allocation15 + $0x1c] sm:$0xf]
        %v3246 = vld [vmem:[#allocation15 + $0x20] sm:$0xf]
        %v3247 = vld [vmem:[#allocation15 + $0x24] sm:$0xf]
        %v3248 = vld [vmem:[#allocation15 + $0x28] sm:$0xf]
        %v3249 = vld [vmem:[#allocation15 + $0x2c] sm:$0xf]
        %v3250 = vld [vmem:[#allocation15 + $0x30] sm:$0xf]
        %v3251 = vld [vmem:[#allocation15 + $0x34] sm:$0xf]
        %v3252 = vld [vmem:[#allocation15 + $0x38] sm:$0xf]
        %v3253 = vld [vmem:[#allocation15 + $0x3c] sm:$0xf]
        %v3254 = vpack.c.bf16 %v3235, %v3234
        %v3255 = vpack.c.bf16 %v3237, %v3236
        %v3256 = vld [vmem:[%s12] sm:$0x1]
        %v3258 = vlaneseq
        %v3259 = vshrl.u32 %v3258, 7
        %v3260 = vsub.s32 0, %v3259
        %v3261 = vrot.slane %v3256, %v3260
        %v3279 = vunpack.c.l.b16 %v3238
        %v3280 = vunpack.c.l.b16 %v3239
        %v3281 = vunpack.c.l.b16 %v3240
        %v3282 = vunpack.c.l.b16 %v3241
        %v3283 = vunpack.c.l.b16 %v3242
        %v3284 = vunpack.c.l.b16 %v3243
        %v3285 = vunpack.c.l.b16 %v3244
        %v3286 = vunpack.c.l.b16 %v3245
        %v3287 = vunpack.c.l.b16 %v3246
        %v3288 = vunpack.c.l.b16 %v3247
        %v3289 = vunpack.c.l.b16 %v3248
        %v3290 = vunpack.c.l.b16 %v3249
        %v3291 = vunpack.c.l.b16 %v3250
        %v3292 = vunpack.c.l.b16 %v3251
        %v3293 = vunpack.c.l.b16 %v3252
        %v3294 = vunpack.c.l.b16 %v3253
        %v3295 = vpack.c.b16 %v3280, %v3279
        %v3296 = vpack.c.b16 %v3282, %v3281
        %v3297 = vpack.c.b16 %v3284, %v3283
        %v3298 = vpack.c.b16 %v3286, %v3285
        %v3299 = vpack.c.b16 %v3288, %v3287
        %v3300 = vpack.c.b16 %v3290, %v3289
        %v3301 = vpack.c.b16 %v3292, %v3291
        %v3302 = vpack.c.b16 %v3294, %v3293
        %3311 = vmatprep.subr.bf16.mxu0 0
        %3312 = vmatpush1.bf16.msra.mxu0 %v3295
        %3313 = vmatprep.subr.bf16.mxu0 0
        %3314 = vmatpush1.bf16.msra.mxu0 %v3296
        %3315 = vmatprep.subr.bf16.mxu0 0
        %3316 = vmatpush1.bf16.msra.mxu0 %v3297
        %3317 = vmatprep.subr.bf16.mxu0 0
        %3318 = vmatpush1.bf16.msra.mxu0 %v3298
        %3319 = vmatprep.subr.bf16.mxu0 0
        %3320 = vmatpush1.bf16.msra.mxu0 %v3299
        %3321 = vmatprep.subr.bf16.mxu0 0
        %3322 = vmatpush1.bf16.msra.mxu0 %v3300
        %3323 = vmatprep.subr.bf16.mxu0 0
        %3324 = vmatpush1.bf16.msra.mxu0 %v3301
        %3325 = vmatprep.subr.bf16.mxu0 0
        %3326 = vmatpush1.bf16.msra.mxu0 %v3302
        %3327 = vmatprep.subr.bf16.mxu0 0
        %3328 = vmatpush1.bf16.msra.mxu0 0
        %3329 = vmatprep.subr.bf16.mxu0 0
        %3330 = vmatpush1.bf16.msra.mxu0 0
        %3331 = vmatprep.subr.bf16.mxu0 0
        %3332 = vmatpush1.bf16.msra.mxu0 0
        %3333 = vmatprep.subr.bf16.mxu0 0
        %3334 = vmatpush1.bf16.msra.mxu0 0
        %3335 = vmatprep.subr.bf16.mxu0 0
        %3336 = vmatpush1.bf16.msra.mxu0 0
        %3337 = vmatprep.subr.bf16.mxu0 0
        %3338 = vmatpush1.bf16.msra.mxu0 0
        %3339 = vmatprep.subr.bf16.mxu0 0
        %3340 = vmatpush1.bf16.msra.mxu0 0
        %3341 = vmatprep.subr.bf16.mxu0 0
        %3342 = vmatpush1.bf16.msra.mxu0 0
        %3343 = vmatprep.mubr.bf16.mxu0 0
        %3344 = vmatmul.mubr.bf16.gmra.mrb[0].mxu0 %v3254
        %v3345 = vpop.f32.mrb[0].mxu0
        %v3346 = vadd.f32 %v3261, %v3345
        %v3347 = vpop.f32.mrb[0].mxu0
        %v3348 = vpop.f32.mrb[0].mxu0
        %v3349 = vadd.f32 %v3261, %v3348
        %v3350 = vpop.f32.mrb[0].mxu0
        %3351 = vmatprep.mubr.bf16.mxu0 0
        %3352 = vmatmul.mubr.bf16.gmra.mrb[0].mxu0 %v3255
        %v3353 = vpop.f32.mrb[0].mxu0
        %v3354 = vadd.f32 %v3261, %v3353
        %v3355 = vpop.f32.mrb[0].mxu0
        %v3356 = vpop.f32.mrb[0].mxu0
        %v3357 = vadd.f32 %v3261, %v3356
        %v3358 = vpop.f32.mrb[0].mxu0
        %3359 = vdwg.mxu0
        %3360 = vst [vmem:[%s545] sm:$0xff] %v3346
        %3361 = vst [vmem:[%s545 + $0x8] sm:$0xff] %v3349
        %3362 = vst [vmem:[%s545 + $0x10] sm:$0xff] %v3354
        %3363 = vst [vmem:[%s545 + $0x18] sm:$0xff] %v3357
        %s3364 = sand.u32 %s319, 1
        %s3365 = scalar_lea.sflag [#allocation6], %s3364
        %s3366 = sand.u32 %s319, 1
        %s3367 = smul.addr %s3366, 32
        %s3368 = scalar_lea.vmem [#allocation16], %s3367
        // Predicated region
        $region101: #{tpu_custom_call.1} parent=71 // pred_check
          %p3369 = pneg %p329
        $region102: #{tpu_custom_call.1} parent=71 // pred_check_branch
          %3371 = sbr.rel (%p3369) target = $region104
        $region103: #{tpu_custom_call.1} parent=71 // pred_region
          %s3372 = smul.u32 4, %s33
          %s3374 = ssub.s32 512, 512
          %3375 = vsyncadd %s3365, %s3374
          %s3376 = smul.addr %s3372, 128
          %s3377 = scalar_lea.hbm %s13, %s3376
          %s3378 = sshll.u32 %s3368, 4
          %s3379 = int_to_ptr.vmem [resolvable:$true] %s3378
          %3384 = dma.vmem_to_hbm [thread:$0]  %s3379, 512, %s3377, %s3365, 128, 128, 8
        $region104: #{tpu_custom_call.1} parent=71 // pred_fallthru
          _
      $region72: #{tpu_custom_call.1} parent=5 // pred_fallthru
        _
      %p3385 = scmp.le.s32.totalorder 2, %s28
      // Predicated region
      $region105: #{tpu_custom_call.1} parent=5 // pred_check
        %p3386 = pneg %p3385
      $region106: #{tpu_custom_call.1} parent=5 // pred_check_branch
        %3388 = sbr.rel (%p3386) target = $region108
      $region107: #{tpu_custom_call.1} parent=5 // pred_region
        %s3389 = ssub.s32 %s28, 2
        // Predicated region
        $region109: #{tpu_custom_call.1} parent=107 // pred_check
          %p3390 = pneg %p335
        $region110: #{tpu_custom_call.1} parent=107 // pred_check_branch
          %3392 = sbr.rel (%p3390) target = $region112
        $region111: #{tpu_custom_call.1} parent=107 // pred_region
          %s3393 = sand.u32 %s320, 1
          %s3394 = scalar_lea.sflag [#allocation6], %s3393
          %s3395 = sand.u32 %s320, 1
          %s3396 = smul.addr %s3395, 32
          %s3397 = scalar_lea.vmem [#allocation16], %s3396
          %3398 = dma.done %s3394, 512
        $region112: #{tpu_custom_call.1} parent=107 // pred_fallthru
          _
      $region108: #{tpu_custom_call.1} parent=5 // pred_fallthru
        _
    $region6: #{tpu_custom_call.1} parent=1 // loop_footer
      %s32 = sadd.s32 1, %s28
    $region7: #{tpu_custom_call.1} parent=1 // loop_footer_branch
      %27 = sbr.rel target = $region3
    $region8: #{tpu_custom_call.1} parent=1 // loop_exit
      _
    %3399 = vsyncpa [#allocation5], 1
    %s3400 = scalar_lea.sflag [#allocation5], 1
    %3401 = vsyncpa %s3400, 1
    %3402 = vsyncpa [#allocation8], 1
    %3403 = vsyncpa [#allocation11], 1
    %3404 = vsyncpa [#allocation14], 1
    %3405 = vsyncpa [#allocation6], 1
    %s3406 = scalar_lea.sflag [#allocation6], 1
    %3407 = vsyncpa %s3406, 1

// kernel: tpu_custom_call.1
$region0: #{tpu_custom_call.1}
  #allocation0 [shape = 'u32[]', space=smem, size = 0x4, offset = 0x4, fixed_abs, tag = 'smem constant byte address 0x4 - core index']
  #allocation1 [shape = 'u32[144,128]{1,0:T(1,128)}', space=vmem, size = 0x12000, scoped, tag = 'internal scratch']
  #allocation2 [shape = 'bf16[2,32,128]{2,1,0:T(16,128)(2,1)}', space=vmem, size = 0x4000, scoped, tag = 'scratch operand']
  #allocation3 [shape = 'bf16[32,384]{1,0:T(16,128)(2,1)}', space=vmem, size = 0x6000, scoped, tag = 'scratch operand']
  %s0 = inlined_call_operand.hbm [shape: bf16[64,128], index: 0, kind: input, shape index: {}]
  %s1 = inlined_call_operand.hbm [shape: bf16[128,128], index: 1, kind: input, shape index: {}]
  %s2 = inlined_call_operand.vmem [shape: f32[1,128], index: 2, kind: input, shape index: {}]
  %s3 = inlined_call_operand.hbm [shape: bf16[4,384,128], index: 3, kind: input, shape index: {}]
  %s4 = inlined_call_operand.vmem [shape: f32[4,1,128], index: 4, kind: input, shape index: {}]
  %s5 = inlined_call_operand.hbm [shape: bf16[4,128,128], index: 5, kind: input, shape index: {}]
  %s6 = inlined_call_operand.vmem [shape: f32[4,1,128], index: 6, kind: input, shape index: {}]
  %s7 = inlined_call_operand.hbm [shape: bf16[2,128,128], index: 7, kind: input, shape index: {}]
  %s8 = inlined_call_operand.vmem [shape: f32[2,1,128], index: 8, kind: input, shape index: {}]
  %s9 = inlined_call_operand.hbm [shape: bf16[128,128], index: 9, kind: input, shape index: {}]
  %s10 = inlined_call_operand.vmem [shape: f32[1,128], index: 10, kind: input, shape index: {}]
  %s11 = inlined_call_operand.hbm [shape: bf16[128,128], index: 11, kind: input, shape index: {}]
  %s12 = inlined_call_operand.vmem [shape: f32[1,128], index: 12, kind: input, shape index: {}]
  %s13 = inlined_call_operand.hbm [shape: f32[64,128], index: 13, kind: output, shape index: {}]
  %s14 = sld [smem:[#allocation0]]
  $region113: #{tpu_custom_call.1} parent=0
    _
  %s16 = ssub.s32 1, %s14
  %s17 = scalar_select 0, %s16, %s14
  $region1: #{tpu_custom_call.1} parent=0
    #allocation4 [shape = 'u8[16384]{0}', space=vmem, size = 0x4000, scoped, tag = 'input window, operand 0']
    #allocation5 [shape = 's32[2]{0}', space=sflag, size = 0x8, scoped, tag = 'scoped memory for tpu_custom_call.1']
    #allocation6 [shape = 's32[2]{0}', space=sflag, size = 0x8, scoped, tag = 'scoped memory for tpu_custom_call.1']
    #allocation7 [shape = 'u8[32768]{0}', space=vmem, size = 0x8000, scoped, tag = 'input window, operand 1, single buffered']
    #allocation8 [shape = 's32[1]{0}', space=sflag, size = 0x4, scoped, tag = 'scoped memory for tpu_custom_call.1']
    #allocation9 [shape = 'u8[393216]{0}', space=vmem, size = 0x60000, scoped, tag = 'input window, operand 3, single buffered']
    #allocation10 [shape = 'u8[131072]{0}', space=vmem, size = 0x20000, scoped, tag = 'input window, operand 5, single buffered']
    #allocation11 [shape = 's32[1]{0}', space=sflag, size = 0x4, scoped, tag = 'scoped memory for tpu_custom_call.1']
    #allocation12 [shape = 'u8[65536]{0}', space=vmem, size = 0x10000, scoped, tag = 'input window, operand 7, single buffered']
    #allocation13 [shape = 'u8[32768]{0}', space=vmem, size = 0x8000, scoped, tag = 'input window, operand 9, single buffered']
    #allocation14 [shape = 's32[1]{0}', space=sflag, size = 0x4, scoped, tag = 'scoped memory for tpu_custom_call.1']
    #allocation15 [shape = 'u8[32768]{0}', space=vmem, size = 0x8000, scoped, tag = 'input window, operand 11, single buffered']
    #allocation16 [shape = 'u8[32768]{0}', space=vmem, size = 0x8000, scoped, tag = 'output window, operand 0']
    %18 = vsyncpa [#allocation5], 0
    %s19 = scalar_lea.sflag [#allocation5], 1
    %20 = vsyncpa %s19, 0
    %21 = vsyncpa [#allocation8], 0
    %22 = vsyncpa [#allocation11], 0
    %23 = vsyncpa [#allocation14], 0
    %24 = vsyncpa [#allocation6], 0
    %s25 = scalar_lea.sflag [#allocation6], 1
    %26 = vsyncpa %s25, 0
    loop: start=0, step=1, limit=4
    $region2: #{tpu_custom_call.1} parent=1 // loop_pre_header
      _
    $region3: #{tpu_custom_call.1} parent=1 // loop_header
      %s28 = sphi 0, %s32
      %p29 = scmp.ge.s32.totalorder %s28, 4
      %s38 = sphi 0, %s40
      %s41 = sphi 0, %s38
      %s42 = sphi 0, %s41
      %s58 = sphi 0, %s42
      %s62 = sphi 0, %s62
      %s64 = sphi 0, %s62
      %s65 = sphi 0, %s64
      %s79 = sphi 0, %s65
      %s83 = sphi 0, %s83
      %s85 = sphi 0, %s83
      %s86 = sphi 0, %s85
      %s100 = sphi 0, %s86
      %s104 = sphi 0, %s104
      %s106 = sphi 0, %s104
      %s107 = sphi 0, %s106
      %s121 = sphi 0, %s107
      %s125 = sphi 0, %s125
      %s127 = sphi 0, %s125
      %s128 = sphi 0, %s127
      %s142 = sphi 0, %s128
      %s146 = sphi 0, %s146
      %s148 = sphi 0, %s146
      %s149 = sphi 0, %s148
      %s163 = sphi 0, %s149
      %s167 = sphi 0, %s167
      %s169 = sphi 0, %s167
      %s170 = sphi 0, %s169
      %s184 = sphi 0, %s170
      %s188 = sphi 0, %s188
      %s190 = sphi 0, %s188
      %s191 = sphi 0, %s190
      %s205 = sphi 0, %s191
      %s209 = sphi 0, %s209
      %s211 = sphi 0, %s209
      %s212 = sphi 0, %s211
      %s226 = sphi 0, %s212
      %s230 = sphi 0, %s230
      %s232 = sphi 0, %s230
      %s233 = sphi 0, %s232
      %s247 = sphi 0, %s233
      %s251 = sphi 0, %s251
      %s253 = sphi 0, %s251
      %s254 = sphi 0, %s253
      %s268 = sphi 0, %s254
      %s272 = sphi 0, %s272
      %s274 = sphi 0, %s272
      %s275 = sphi 0, %s274
      %s289 = sphi 0, %s275
      %s293 = sphi 0, %s293
      %s295 = sphi 0, %s293
      %s296 = sphi 0, %s295
      %s310 = sphi 0, %s296
      %s316 = sphi 0, %s318
      %s319 = sphi 0, %s316
      %s320 = sphi 0, %s319
      %s336 = sphi 0, %s320
    $region4: #{tpu_custom_call.1} parent=1 // loop_header_branch
      %31 = sbr.rel (%p29) target = $region8
    $region5: #{tpu_custom_call.1} parent=1 // loop_body
      %s33 = ssub.s32 %s28, 1
      %s34 = ssub.s32 %s28, 2
      %s35 = sadd.s32 %s28, 1
      %s36 = ssub.s32 %s28, %s35
      %p37 = scmp.eq.s32.totalorder %s36, 0
      %s39 = sadd.s32 %s38, 1
      %s40 = scalar_select %p37, %s38, %s39
      %p43 = pneg %p37
      %p44 = scmp.eq.s32.totalorder %s28, 1
      %p45 = por %p43, %p44
      %p46 = scmp.ne.s32.totalorder %s38, %s41
      %p47 = scmp.eq.s32.totalorder %s28, 0
      %p48 = por %p46, %p47
      %p49 = scmp.ne.s32.totalorder %s38, %s41
      %p50 = scmp.eq.s32.totalorder %s33, 1
      %p51 = por %p49, %p50
      %p52 = scmp.ne.s32.totalorder %s41, %s42
      %p53 = scmp.eq.s32.totalorder %s33, 0
      %p54 = por %p52, %p53
      %p55 = scmp.ne.s32.totalorder %s41, %s42
      %p56 = scmp.eq.s32.totalorder %s34, 1
      %p57 = por %p55, %p56
      %p59 = scmp.ne.s32.totalorder %s42, %s58
      %p60 = scmp.eq.s32.totalorder %s34, 0
      %p61 = por %p59, %p60
      %s63 = sadd.s32 %s62, 1
      %p66 = scmp.eq.s32.totalorder %s28, 1
      %p67 = scmp.ne.s32.totalorder %s62, %s64
      %p68 = scmp.eq.s32.totalorder %s28, 0
      %p69 = por %p67, %p68
      %p70 = scmp.ne.s32.totalorder %s62, %s64
      %p71 = scmp.eq.s32.totalorder %s33, 1
      %p72 = por %p70, %p71
      %p73 = scmp.ne.s32.totalorder %s64, %s65
      %p74 = scmp.eq.s32.totalorder %s33, 0
      %p75 = por %p73, %p74
      %p76 = scmp.ne.s32.totalorder %s64, %s65
      %p77 = scmp.eq.s32.totalorder %s34, 1
      %p78 = por %p76, %p77
      %p80 = scmp.ne.s32.totalorder %s65, %s79
      %p81 = scmp.eq.s32.totalorder %s34, 0
      %p82 = por %p80, %p81
      %s84 = sadd.s32 %s83, 1
      %p87 = scmp.eq.s32.totalorder %s28, 1
      %p88 = scmp.ne.s32.totalorder %s83, %s85
      %p89 = scmp.eq.s32.totalorder %s28, 0
      %p90 = por %p88, %p89
      %p91 = scmp.ne.s32.totalorder %s83, %s85
      %p92 = scmp.eq.s32.totalorder %s33, 1
      %p93 = por %p91, %p92
      %p94 = scmp.ne.s32.totalorder %s85, %s86
      %p95 = scmp.eq.s32.totalorder %s33, 0
      %p96 = por %p94, %p95
      %p97 = scmp.ne.s32.totalorder %s85, %s86
      %p98 = scmp.eq.s32.totalorder %s34, 1
      %p99 = por %p97, %p98
      %p101 = scmp.ne.s32.totalorder %s86, %s100
      %p102 = scmp.eq.s32.totalorder %s34, 0
      %p103 = por %p101, %p102
      %s105 = sadd.s32 %s104, 1
      %p108 = scmp.eq.s32.totalorder %s28, 1
      %p109 = scmp.ne.s32.totalorder %s104, %s106
      %p110 = scmp.eq.s32.totalorder %s28, 0
      %p111 = por %p109, %p110
      %p112 = scmp.ne.s32.totalorder %s104, %s106
      %p113 = scmp.eq.s32.totalorder %s33, 1
      %p114 = por %p112, %p113
      %p115 = scmp.ne.s32.totalorder %s106, %s107
      %p116 = scmp.eq.s32.totalorder %s33, 0
      %p117 = por %p115, %p116
      %p118 = scmp.ne.s32.totalorder %s106, %s107
      %p119 = scmp.eq.s32.totalorder %s34, 1
      %p120 = por %p118, %p119
      %p122 = scmp.ne.s32.totalorder %s107, %s121
      %p123 = scmp.eq.s32.totalorder %s34, 0
      %p124 = por %p122, %p123
      %s126 = sadd.s32 %s125, 1
      %p129 = scmp.eq.s32.totalorder %s28, 1
      %p130 = scmp.ne.s32.totalorder %s125, %s127
      %p131 = scmp.eq.s32.totalorder %s28, 0
      %p132 = por %p130, %p131
      %p133 = scmp.ne.s32.totalorder %s125, %s127
      %p134 = scmp.eq.s32.totalorder %s33, 1
      %p135 = por %p133, %p134
      %p136 = scmp.ne.s32.totalorder %s127, %s128
      %p137 = scmp.eq.s32.totalorder %s33, 0
      %p138 = por %p136, %p137
      %p139 = scmp.ne.s32.totalorder %s127, %s128
      %p140 = scmp.eq.s32.totalorder %s34, 1
      %p141 = por %p139, %p140
      %p143 = scmp.ne.s32.totalorder %s128, %s142
      %p144 = scmp.eq.s32.totalorder %s34, 0
      %p145 = por %p143, %p144
      %s147 = sadd.s32 %s146, 1
      %p150 = scmp.eq.s32.totalorder %s28, 1
      %p151 = scmp.ne.s32.totalorder %s146, %s148
      %p152 = scmp.eq.s32.totalorder %s28, 0
      %p153 = por %p151, %p152
      %p154 = scmp.ne.s32.totalorder %s146, %s148
      %p155 = scmp.eq.s32.totalorder %s33, 1
      %p156 = por %p154, %p155
      %p157 = scmp.ne.s32.totalorder %s148, %s149
      %p158 = scmp.eq.s32.totalorder %s33, 0
      %p159 = por %p157, %p158
      %p160 = scmp.ne.s32.totalorder %s148, %s149
      %p161 = scmp.eq.s32.totalorder %s34, 1
      %p162 = por %p160, %p161
      %p164 = scmp.ne.s32.totalorder %s149, %s163
      %p165 = scmp.eq.s32.totalorder %s34, 0
      %p166 = por %p164, %p165
      %s168 = sadd.s32 %s167, 1
      %p171 = scmp.eq.s32.totalorder %s28, 1
      %p172 = scmp.ne.s32.totalorder %s167, %s169
      %p173 = scmp.eq.s32.totalorder %s28, 0
      %p174 = por %p172, %p173
      %p175 = scmp.ne.s32.totalorder %s167, %s169
      %p176 = scmp.eq.s32.totalorder %s33, 1
      %p177 = por %p175, %p176
      %p178 = scmp.ne.s32.totalorder %s169, %s170
      %p179 = scmp.eq.s32.totalorder %s33, 0
      %p180 = por %p178, %p179
      %p181 = scmp.ne.s32.totalorder %s169, %s170
      %p182 = scmp.eq.s32.totalorder %s34, 1
      %p183 = por %p181, %p182
      %p185 = scmp.ne.s32.totalorder %s170, %s184
      %p186 = scmp.eq.s32.totalorder %s34, 0
      %p187 = por %p185, %p186
      %s189 = sadd.s32 %s188, 1
      %p192 = scmp.eq.s32.totalorder %s28, 1
      %p193 = scmp.ne.s32.totalorder %s188, %s190
      %p194 = scmp.eq.s32.totalorder %s28, 0
      %p195 = por %p193, %p194
      %p196 = scmp.ne.s32.totalorder %s188, %s190
      %p197 = scmp.eq.s32.totalorder %s33, 1
      %p198 = por %p196, %p197
      %p199 = scmp.ne.s32.totalorder %s190, %s191
      %p200 = scmp.eq.s32.totalorder %s33, 0
      %p201 = por %p199, %p200
      %p202 = scmp.ne.s32.totalorder %s190, %s191
      %p203 = scmp.eq.s32.totalorder %s34, 1
      %p204 = por %p202, %p203
      %p206 = scmp.ne.s32.totalorder %s191, %s205
      %p207 = scmp.eq.s32.totalorder %s34, 0
      %p208 = por %p206, %p207
      %s210 = sadd.s32 %s209, 1
      %p213 = scmp.eq.s32.totalorder %s28, 1
      %p214 = scmp.ne.s32.totalorder %s209, %s211
      %p215 = scmp.eq.s32.totalorder %s28, 0
      %p216 = por %p214, %p215
      %p217 = scmp.ne.s32.totalorder %s209, %s211
      %p218 = scmp.eq.s32.totalorder %s33, 1
      %p219 = por %p217, %p218
      %p220 = scmp.ne.s32.totalorder %s211, %s212
      %p221 = scmp.eq.s32.totalorder %s33, 0
      %p222 = por %p220, %p221
      %p223 = scmp.ne.s32.totalorder %s211, %s212
      %p224 = scmp.eq.s32.totalorder %s34, 1
      %p225 = por %p223, %p224
      %p227 = scmp.ne.s32.totalorder %s212, %s226
      %p228 = scmp.eq.s32.totalorder %s34, 0
      %p229 = por %p227, %p228
      %s231 = sadd.s32 %s230, 1
      %p234 = scmp.eq.s32.totalorder %s28, 1
      %p235 = scmp.ne.s32.totalorder %s230, %s232
      %p236 = scmp.eq.s32.totalorder %s28, 0
      %p237 = por %p235, %p236
      %p238 = scmp.ne.s32.totalorder %s230, %s232
      %p239 = scmp.eq.s32.totalorder %s33, 1
      %p240 = por %p238, %p239
      %p241 = scmp.ne.s32.totalorder %s232, %s233
      %p242 = scmp.eq.s32.totalorder %s33, 0
      %p243 = por %p241, %p242
      %p244 = scmp.ne.s32.totalorder %s232, %s233
      %p245 = scmp.eq.s32.totalorder %s34, 1
      %p246 = por %p244, %p245
      %p248 = scmp.ne.s32.totalorder %s233, %s247
      %p249 = scmp.eq.s32.totalorder %s34, 0
      %p250 = por %p248, %p249
      %s252 = sadd.s32 %s251, 1
      %p255 = scmp.eq.s32.totalorder %s28, 1
      %p256 = scmp.ne.s32.totalorder %s251, %s253
      %p257 = scmp.eq.s32.totalorder %s28, 0
      %p258 = por %p256, %p257
      %p259 = scmp.ne.s32.totalorder %s251, %s253
      %p260 = scmp.eq.s32.totalorder %s33, 1
      %p261 = por %p259, %p260
      %p262 = scmp.ne.s32.totalorder %s253, %s254
      %p263 = scmp.eq.s32.totalorder %s33, 0
      %p264 = por %p262, %p263
      %p265 = scmp.ne.s32.totalorder %s253, %s254
      %p266 = scmp.eq.s32.totalorder %s34, 1
      %p267 = por %p265, %p266
      %p269 = scmp.ne.s32.totalorder %s254, %s268
      %p270 = scmp.eq.s32.totalorder %s34, 0
      %p271 = por %p269, %p270
      %s273 = sadd.s32 %s272, 1
      %p276 = scmp.eq.s32.totalorder %s28, 1
      %p277 = scmp.ne.s32.totalorder %s272, %s274
      %p278 = scmp.eq.s32.totalorder %s28, 0
      %p279 = por %p277, %p278
      %p280 = scmp.ne.s32.totalorder %s272, %s274
      %p281 = scmp.eq.s32.totalorder %s33, 1
      %p282 = por %p280, %p281
      %p283 = scmp.ne.s32.totalorder %s274, %s275
      %p284 = scmp.eq.s32.totalorder %s33, 0
      %p285 = por %p283, %p284
      %p286 = scmp.ne.s32.totalorder %s274, %s275
      %p287 = scmp.eq.s32.totalorder %s34, 1
      %p288 = por %p286, %p287
      %p290 = scmp.ne.s32.totalorder %s275, %s289
      %p291 = scmp.eq.s32.totalorder %s34, 0
      %p292 = por %p290, %p291
      %s294 = sadd.s32 %s293, 1
      %p297 = scmp.eq.s32.totalorder %s28, 1
      %p298 = scmp.ne.s32.totalorder %s293, %s295
      %p299 = scmp.eq.s32.totalorder %s28, 0
      %p300 = por %p298, %p299
      %p301 = scmp.ne.s32.totalorder %s293, %s295
      %p302 = scmp.eq.s32.totalorder %s33, 1
      %p303 = por %p301, %p302
      %p304 = scmp.ne.s32.totalorder %s295, %s296
      %p305 = scmp.eq.s32.totalorder %s33, 0
      %p306 = por %p304, %p305
      %p307 = scmp.ne.s32.totalorder %s295, %s296
      %p308 = scmp.eq.s32.totalorder %s34, 1
      %p309 = por %p307, %p308
      %p311 = scmp.ne.s32.totalorder %s296, %s310
      %p312 = scmp.eq.s32.totalorder %s34, 0
      %p313 = por %p311, %p312
      %s314 = ssub.s32 %s28, %s35
      %p315 = scmp.eq.s32.totalorder %s314, 0
      %s317 = sadd.s32 %s316, 1
      %s318 = scalar_select %p315, %s316, %s317
      %p321 = pneg %p315
      %p322 = scmp.eq.s32.totalorder %s28, 1
      %p323 = por %p321, %p322
      %p324 = scmp.ne.s32.totalorder %s316, %s319
      %p325 = scmp.eq.s32.totalorder %s28, 0
      %p326 = por %p324, %p325
      %p327 = scmp.ne.s32.totalorder %s316, %s319
      %p328 = scmp.eq.s32.totalorder %s33, 1
      %p329 = por %p327, %p328
      %p330 = scmp.ne.s32.totalorder %s319, %s320
      %p331 = scmp.eq.s32.totalorder %s33, 0
      %p332 = por %p330, %p331
      %p333 = scmp.ne.s32.totalorder %s319, %s320
      %p334 = scmp.eq.s32.totalorder %s34, 1
      %p335 = por %p333, %p334
      %p337 = scmp.ne.s32.totalorder %s320, %s336
      %p338 = scmp.eq.s32.totalorder %s34, 0
      %p339 = por %p337, %p338
      %p340 = scmp.le.s32.totalorder 1, %s28
      %p341 = scmp.lt.s32.totalorder %s28, 3
      %p342 = pnand %p340, %p341
      %p343 = pneg %p342
      // Predicated region
      $region9: #{tpu_custom_call.1} parent=5 // pred_check
        _
      $region10: #{tpu_custom_call.1} parent=5 // pred_check_branch
        %345 = sbr.rel (%p342) target = $region12
      $region11: #{tpu_custom_call.1} parent=5 // pred_region
        %s346 = ssub.s32 %s28, 1
        // Predicated region
        $region13: #{tpu_custom_call.1} parent=11 // pred_check
          %p347 = pneg %p75
        $region14: #{tpu_custom_call.1} parent=11 // pred_check_branch
          %349 = sbr.rel (%p347) target = $region16
        $region15: #{tpu_custom_call.1} parent=11 // pred_region
          %s351 = ssub.s32 1024, 1024
          %352 = vsyncadd [#allocation8], %s351
          %s353 = sshll.u32 [#allocation7], 4
          %s354 = int_to_ptr.vmem [resolvable:$true] %s353
          %359 = dma.hbm_to_vmem [thread:$0]  %s1, 1024, %s354, [#allocation8], 64, 64, 4
        $region16: #{tpu_custom_call.1} parent=11 // pred_fallthru
          _
        // Predicated region
        $region17: #{tpu_custom_call.1} parent=11 // pred_check
          %p360 = pneg %p96
        $region18: #{tpu_custom_call.1} parent=11 // pred_check_branch
          %362 = sbr.rel (%p360) target = $region20
        $region19: #{tpu_custom_call.1} parent=11 // pred_region
          _
        $region20: #{tpu_custom_call.1} parent=11 // pred_fallthru
          _
        // Predicated region
        $region21: #{tpu_custom_call.1} parent=11 // pred_check
          %p363 = pneg %p117
        $region22: #{tpu_custom_call.1} parent=11 // pred_check_branch
          %365 = sbr.rel (%p363) target = $region24
        $region23: #{tpu_custom_call.1} parent=11 // pred_region
          %s367 = ssub.s32 12288, 12288
          %368 = vsyncadd [#allocation8], %s367
          %s369 = sshll.u32 [#allocation9], 4
          %s370 = int_to_ptr.vmem [resolvable:$true] %s369
          %375 = dma.hbm_to_vmem [thread:$0]  %s3, 12288, %s370, [#allocation8], 64, 64, 4
        $region24: #{tpu_custom_call.1} parent=11 // pred_fallthru
          _
        // Predicated region
        $region25: #{tpu_custom_call.1} parent=11 // pred_check
          %p376 = pneg %p138
        $region26: #{tpu_custom_call.1} parent=11 // pred_check_branch
          %378 = sbr.rel (%p376) target = $region28
        $region27: #{tpu_custom_call.1} parent=11 // pred_region
          _
        $region28: #{tpu_custom_call.1} parent=11 // pred_fallthru
          _
        // Predicated region
        $region29: #{tpu_custom_call.1} parent=11 // pred_check
          %p379 = pneg %p159
        $region30: #{tpu_custom_call.1} parent=11 // pred_check_branch
          %381 = sbr.rel (%p379) target = $region32
        $region31: #{tpu_custom_call.1} parent=11 // pred_region
          %s383 = ssub.s32 4096, 4096
          %384 = vsyncadd [#allocation11], %s383
          %s385 = sshll.u32 [#allocation10], 4
          %s386 = int_to_ptr.vmem [resolvable:$true] %s385
          %391 = dma.hbm_to_vmem [thread:$0]  %s5, 4096, %s386, [#allocation11], 64, 64, 4
        $region32: #{tpu_custom_call.1} parent=11 // pred_fallthru
          _
        // Predicated region
        $region33: #{tpu_custom_call.1} parent=11 // pred_check
          %p392 = pneg %p180
        $region34: #{tpu_custom_call.1} parent=11 // pred_check_branch
          %394 = sbr.rel (%p392) target = $region36
        $region35: #{tpu_custom_call.1} parent=11 // pred_region
          _
        $region36: #{tpu_custom_call.1} parent=11 // pred_fallthru
          _
        // Predicated region
        $region37: #{tpu_custom_call.1} parent=11 // pred_check
          %p395 = pneg %p201
        $region38: #{tpu_custom_call.1} parent=11 // pred_check_branch
          %397 = sbr.rel (%p395) target = $region40
        $region39: #{tpu_custom_call.1} parent=11 // pred_region
          %s399 = ssub.s32 2048, 2048
          %400 = vsyncadd [#allocation11], %s399
          %s401 = sshll.u32 [#allocation12], 4
          %s402 = int_to_ptr.vmem [resolvable:$true] %s401
          %407 = dma.hbm_to_vmem [thread:$0]  %s7, 2048, %s402, [#allocation11], 64, 64, 4
        $region40: #{tpu_custom_call.1} parent=11 // pred_fallthru
          _
        // Predicated region
        $region41: #{tpu_custom_call.1} parent=11 // pred_check
          %p408 = pneg %p222
        $region42: #{tpu_custom_call.1} parent=11 // pred_check_branch
          %410 = sbr.rel (%p408) target = $region44
        $region43: #{tpu_custom_call.1} parent=11 // pred_region
          _
        $region44: #{tpu_custom_call.1} parent=11 // pred_fallthru
          _
        // Predicated region
        $region45: #{tpu_custom_call.1} parent=11 // pred_check
          %p411 = pneg %p243
        $region46: #{tpu_custom_call.1} parent=11 // pred_check_branch
          %413 = sbr.rel (%p411) target = $region48
        $region47: #{tpu_custom_call.1} parent=11 // pred_region
          %s415 = ssub.s32 1024, 1024
          %416 = vsyncadd [#allocation14], %s415
          %s417 = sshll.u32 [#allocation13], 4
          %s418 = int_to_ptr.vmem [resolvable:$true] %s417
          %423 = dma.hbm_to_vmem [thread:$0]  %s9, 1024, %s418, [#allocation14], 64, 64, 4
        $region48: #{tpu_custom_call.1} parent=11 // pred_fallthru
          _
        // Predicated region
        $region49: #{tpu_custom_call.1} parent=11 // pred_check
          %p424 = pneg %p264
        $region50: #{tpu_custom_call.1} parent=11 // pred_check_branch
          %426 = sbr.rel (%p424) target = $region52
        $region51: #{tpu_custom_call.1} parent=11 // pred_region
          _
        $region52: #{tpu_custom_call.1} parent=11 // pred_fallthru
          _
        // Predicated region
        $region53: #{tpu_custom_call.1} parent=11 // pred_check
          %p427 = pneg %p285
        $region54: #{tpu_custom_call.1} parent=11 // pred_check_branch
          %429 = sbr.rel (%p427) target = $region56
        $region55: #{tpu_custom_call.1} parent=11 // pred_region
          %s431 = ssub.s32 1024, 1024
          %432 = vsyncadd [#allocation14], %s431
          %s433 = sshll.u32 [#allocation15], 4
          %s434 = int_to_ptr.vmem [resolvable:$true] %s433
          %439 = dma.hbm_to_vmem [thread:$0]  %s11, 1024, %s434, [#allocation14], 64, 64, 4
        $region56: #{tpu_custom_call.1} parent=11 // pred_fallthru
          _
        // Predicated region
        $region57: #{tpu_custom_call.1} parent=11 // pred_check
          %p440 = pneg %p306
        $region58: #{tpu_custom_call.1} parent=11 // pred_check_branch
          %442 = sbr.rel (%p440) target = $region60
        $region59: #{tpu_custom_call.1} parent=11 // pred_region
          _
        $region60: #{tpu_custom_call.1} parent=11 // pred_fallthru
          _
      $region12: #{tpu_custom_call.1} parent=5 // pred_fallthru
        _
      %p443 = scmp.lt.s32.totalorder %s28, 2
      // Predicated region
      $region61: #{tpu_custom_call.1} parent=5 // pred_check
        %p444 = pneg %p443
      $region62: #{tpu_custom_call.1} parent=5 // pred_check_branch
        %446 = sbr.rel (%p444) target = $region64
      $region63: #{tpu_custom_call.1} parent=5 // pred_region
        // Predicated region
        $region65: #{tpu_custom_call.1} parent=63 // pred_check
          %p447 = pneg %p48
        $region66: #{tpu_custom_call.1} parent=63 // pred_check_branch
          %449 = sbr.rel (%p447) target = $region68
        $region67: #{tpu_custom_call.1} parent=63 // pred_region
          %s450 = sand.u32 %s38, 1
          %s451 = scalar_lea.sflag [#allocation5], %s450
          %s452 = sand.u32 %s38, 1
          %s453 = smul.addr %s452, 16
          %s454 = scalar_lea.vmem [#allocation4], %s453
          %s455 = smul.u32 4, %s28
          %s457 = ssub.s32 256, 256
          %458 = vsyncadd %s451, %s457
          %s459 = smul.addr %s455, 64
          %s460 = scalar_lea.hbm %s0, %s459
          %s461 = sshll.u32 %s454, 4
          %s462 = int_to_ptr.vmem [resolvable:$true] %s461
          %467 = dma.hbm_to_vmem [thread:$0]  %s460, 256, %s462, %s451, 64, 64, 4
        $region68: #{tpu_custom_call.1} parent=63 // pred_fallthru
          _
      $region64: #{tpu_custom_call.1} parent=5 // pred_fallthru
        _
      %p468 = scmp.le.s32.totalorder 1, %s28
      %p469 = scmp.lt.s32.totalorder %s28, 3
      %p470 = pnand %p468, %p469
      %p471 = pneg %p470
      // Predicated region
      $region69: #{tpu_custom_call.1} parent=5 // pred_check
        _
      $region70: #{tpu_custom_call.1} parent=5 // pred_check_branch
        %473 = sbr.rel (%p470) target = $region72
      $region71: #{tpu_custom_call.1} parent=5 // pred_region
        %s474 = ssub.s32 %s28, 1
        %s475 = sand.u32 %s41, 1
        %s476 = scalar_lea.sflag [#allocation5], %s475
        %s477 = sand.u32 %s41, 1
        %s478 = smul.addr %s477, 16
        %s479 = scalar_lea.vmem [#allocation4], %s478
        // Predicated region
        $region73: #{tpu_custom_call.1} parent=71 // pred_check
          %p480 = pneg %p54
        $region74: #{tpu_custom_call.1} parent=71 // pred_check_branch
          %482 = sbr.rel (%p480) target = $region76
        $region75: #{tpu_custom_call.1} parent=71 // pred_region
          %483 = dma.done %s476, 256
        $region76: #{tpu_custom_call.1} parent=71 // pred_fallthru
          _
        // Predicated region
        $region77: #{tpu_custom_call.1} parent=71 // pred_check
          %p484 = pneg %p75
        $region78: #{tpu_custom_call.1} parent=71 // pred_check_branch
          %486 = sbr.rel (%p484) target = $region80
        $region79: #{tpu_custom_call.1} parent=71 // pred_region
          %487 = dma.done [#allocation8], 1024
        $region80: #{tpu_custom_call.1} parent=71 // pred_fallthru
          _
        // Predicated region
        $region81: #{tpu_custom_call.1} parent=71 // pred_check
          %p488 = pneg %p117
        $region82: #{tpu_custom_call.1} parent=71 // pred_check_branch
          %490 = sbr.rel (%p488) target = $region84
        $region83: #{tpu_custom_call.1} parent=71 // pred_region
          %491 = dma.done [#allocation8], 12288
        $region84: #{tpu_custom_call.1} parent=71 // pred_fallthru
          _
        // Predicated region
        $region85: #{tpu_custom_call.1} parent=71 // pred_check
          %p492 = pneg %p159
        $region86: #{tpu_custom_call.1} parent=71 // pred_check_branch
          %494 = sbr.rel (%p492) target = $region88
        $region87: #{tpu_custom_call.1} parent=71 // pred_region
          %495 = dma.done [#allocation11], 4096
        $region88: #{tpu_custom_call.1} parent=71 // pred_fallthru
          _
        // Predicated region
        $region89: #{tpu_custom_call.1} parent=71 // pred_check
          %p496 = pneg %p201
        $region90: #{tpu_custom_call.1} parent=71 // pred_check_branch
          %498 = sbr.rel (%p496) target = $region92
        $region91: #{tpu_custom_call.1} parent=71 // pred_region
          %499 = dma.done [#allocation11], 2048
        $region92: #{tpu_custom_call.1} parent=71 // pred_fallthru
          _
        // Predicated region
        $region93: #{tpu_custom_call.1} parent=71 // pred_check
          %p500 = pneg %p243
        $region94: #{tpu_custom_call.1} parent=71 // pred_check_branch
          %502 = sbr.rel (%p500) target = $region96
        $region95: #{tpu_custom_call.1} parent=71 // pred_region
          %503 = dma.done [#allocation14], 1024
        $region96: #{tpu_custom_call.1} parent=71 // pred_fallthru
          _
        // Predicated region
        $region97: #{tpu_custom_call.1} parent=71 // pred_check
          %p504 = pneg %p285
        $region98: #{tpu_custom_call.1} parent=71 // pred_check_branch
          %506 = sbr.rel (%p504) target = $region100
        $region99: #{tpu_custom_call.1} parent=71 // pred_region
          %507 = dma.done [#allocation14], 1024
        $region100: #{tpu_custom_call.1} parent=71 // pred_fallthru
          _
        %s508 = sand.u32 %s41, 1
        %s509 = scalar_lea.sflag [#allocation5], %s508
        %s510 = sand.u32 %s41, 1
        %s511 = smul.addr %s510, 16
        %s512 = scalar_lea.vmem [#allocation4], %s511
        %p513 = pneg %p54
        %p514 = pneg %p51
        %p515 = pneg %p75
        %p516 = pneg %p72
        %p517 = pneg %p96
        %p518 = pneg %p93
        %p519 = pneg %p117
        %p520 = pneg %p114
        %p521 = pneg %p138
        %p522 = pneg %p135
        %p523 = pneg %p159
        %p524 = pneg %p156
        %p525 = pneg %p180
        %p526 = pneg %p177
        %p527 = pneg %p201
        %p528 = pneg %p198
        %p529 = pneg %p222
        %p530 = pneg %p219
        %p531 = pneg %p243
        %p532 = pneg %p240
        %p533 = pneg %p264
        %p534 = pneg %p261
        %p535 = pneg %p285
        %p536 = pneg %p282
        %p537 = pneg %p306
        %p538 = pneg %p303
        %p539 = pneg %p332
        %p540 = pneg %p329
        %s541 = sand.u32 %s319, 1
        %s542 = scalar_lea.sflag [#allocation6], %s541
        %s543 = sand.u32 %s319, 1
        %s544 = smul.addr %s543, 32
        %s545 = scalar_lea.vmem [#allocation16], %s544
        %s546 = smul.u32 4, %s33
        %s547 = smul.u32 4, %s33
        %549 = vst [vmem:[#allocation2] sm:$0xf] 0
        %550 = vst [vmem:[#allocation2 + $0x8] sm:$0xf0] 0
        %s551 = scalar_lea.vmem [#allocation2], 16
        %552 = vst [vmem:[%s551] sm:$0xf] 0
        %553 = vst [vmem:[%s551 + $0x8] sm:$0xf0] 0
        %v554 = vld [vmem:[%s479] sm:$0xf]
        %v555 = vld [vmem:[%s479 + $0x4] sm:$0xf]
        %v556 = vld [vmem:[%s479 + $0x8] sm:$0xf]
        %v557 = vld [vmem:[%s479 + $0xc] sm:$0xf]
        %v558 = vld [vmem:[#allocation7] sm:$0xf]
        %v559 = vld [vmem:[#allocation7 + $0x4] sm:$0xf]
        %v560 = vld [vmem:[#allocation7 + $0x8] sm:$0xf]
        %v561 = vld [vmem:[#allocation7 + $0xc] sm:$0xf]
        %v562 = vld [vmem:[#allocation7 + $0x10] sm:$0xf]
        %v563 = vld [vmem:[#allocation7 + $0x14] sm:$0xf]
        %v564 = vld [vmem:[#allocation7 + $0x18] sm:$0xf]
        %v565 = vld [vmem:[#allocation7 + $0x1c] sm:$0xf]
        %v566 = vld [vmem:[#allocation7 + $0x20] sm:$0xf]
        %v567 = vld [vmem:[#allocation7 + $0x24] sm:$0xf]
        %v568 = vld [vmem:[#allocation7 + $0x28] sm:$0xf]
        %v569 = vld [vmem:[#allocation7 + $0x2c] sm:$0xf]
        %v570 = vld [vmem:[#allocation7 + $0x30] sm:$0xf]
        %v571 = vld [vmem:[#allocation7 + $0x34] sm:$0xf]
        %v572 = vld [vmem:[#allocation7 + $0x38] sm:$0xf]
        %v573 = vld [vmem:[#allocation7 + $0x3c] sm:$0xf]
        %v574 = vld [vmem:[%s2] sm:$0x1]
        %v576 = vlaneseq
        %v577 = vshrl.u32 %v576, 7
        %v578 = vsub.s32 0, %v577
        %v579 = vrot.slane %v574, %v578
        %v585 = vunpack.c.l.b16 %v554
        %v586 = vunpack.c.l.b16 %v555
        %v587 = vunpack.c.l.b16 %v556
        %v588 = vunpack.c.l.b16 %v557
        %v589 = vpack.c.b16 %v586, %v585
        %v590 = vpack.c.b16 %v588, %v587
        %v609 = vunpack.c.l.b16 %v558
        %v610 = vunpack.c.l.b16 %v559
        %v611 = vunpack.c.l.b16 %v560
        %v612 = vunpack.c.l.b16 %v561
        %v613 = vunpack.c.l.b16 %v562
        %v614 = vunpack.c.l.b16 %v563
        %v615 = vunpack.c.l.b16 %v564
        %v616 = vunpack.c.l.b16 %v565
        %v617 = vunpack.c.l.b16 %v566
        %v618 = vunpack.c.l.b16 %v567
        %v619 = vunpack.c.l.b16 %v568
        %v620 = vunpack.c.l.b16 %v569
        %v621 = vunpack.c.l.b16 %v570
        %v622 = vunpack.c.l.b16 %v571
        %v623 = vunpack.c.l.b16 %v572
        %v624 = vunpack.c.l.b16 %v573
        %v625 = vpack.c.b16 %v610, %v609
        %v626 = vpack.c.b16 %v612, %v611
        %v627 = vpack.c.b16 %v614, %v613
        %v628 = vpack.c.b16 %v616, %v615
        %v629 = vpack.c.b16 %v618, %v617
        %v630 = vpack.c.b16 %v620, %v619
        %v631 = vpack.c.b16 %v622, %v621
        %v632 = vpack.c.b16 %v624, %v623
        %641 = vmatprep.subr.bf16.mxu0 0
        %642 = vmatpush1.bf16.msra.mxu0 %v625
        %643 = vmatprep.subr.bf16.mxu0 0
        %644 = vmatpush1.bf16.msra.mxu0 %v626
        %645 = vmatprep.subr.bf16.mxu0 0
        %646 = vmatpush1.bf16.msra.mxu0 %v627
        %647 = vmatprep.subr.bf16.mxu0 0
        %648 = vmatpush1.bf16.msra.mxu0 %v628
        %649 = vmatprep.subr.bf16.mxu0 0
        %650 = vmatpush1.bf16.msra.mxu0 %v629
        %651 = vmatprep.subr.bf16.mxu0 0
        %652 = vmatpush1.bf16.msra.mxu0 %v630
        %653 = vmatprep.subr.bf16.mxu0 0
        %654 = vmatpush1.bf16.msra.mxu0 %v631
        %655 = vmatprep.subr.bf16.mxu0 0
        %656 = vmatpush1.bf16.msra.mxu0 %v632
        %657 = vmatprep.subr.bf16.mxu0 0
        %658 = vmatpush1.bf16.msra.mxu0 0
        %659 = vmatprep.subr.bf16.mxu0 0
        %660 = vmatpush1.bf16.msra.mxu0 0
        %661 = vmatprep.subr.bf16.mxu0 0
        %662 = vmatpush1.bf16.msra.mxu0 0
        %663 = vmatprep.subr.bf16.mxu0 0
        %664 = vmatpush1.bf16.msra.mxu0 0
        %665 = vmatprep.subr.bf16.mxu0 0
        %666 = vmatpush1.bf16.msra.mxu0 0
        %667 = vmatprep.subr.bf16.mxu0 0
        %668 = vmatpush1.bf16.msra.mxu0 0
        %669 = vmatprep.subr.bf16.mxu0 0
        %670 = vmatpush1.bf16.msra.mxu0 0
        %671 = vmatprep.subr.bf16.mxu0 0
        %672 = vmatpush1.bf16.msra.mxu0 0
        %673 = vmatprep.mubr.bf16.mxu0 0
        %674 = vmatmul.mubr.bf16.gmra.mrb[0].mxu0 %v589
        %v675 = vpop.f32.mrb[0].mxu0
        %v676 = vadd.f32 %v579, %v675
        %v677 = vpop.f32.mrb[0].mxu0
        %v678 = vpop.f32.mrb[0].mxu0
        %v679 = vadd.f32 %v579, %v678
        %v680 = vpop.f32.mrb[0].mxu0
        %681 = vmatprep.mubr.bf16.mxu0 0
        %682 = vmatmul.mubr.bf16.gmra.mrb[0].mxu0 %v590
        %v683 = vpop.f32.mrb[0].mxu0
        %v684 = vadd.f32 %v579, %v683
        %v685 = vpop.f32.mrb[0].mxu0
        %v686 = vpop.f32.mrb[0].mxu0
        %v687 = vadd.f32 %v579, %v686
        %v688 = vpop.f32.mrb[0].mxu0
        %689 = vdwg.mxu0
        %v690 = vmax.f32 %v676, 0.0
        %v691 = vmax.f32 %v679, 0.0
        %v692 = vmax.f32 %v684, 0.0
        %v693 = vmax.f32 %v687, 0.0
        %v694 = vmax.f32 %v690, 0.0
        %v695 = vmax.f32 %v691, 0.0
        %v696 = vmax.f32 %v692, 0.0
        %v697 = vmax.f32 %v693, 0.0
        %v698 = vpack.c.bf16 %v695, %v694
        %v699 = vpack.c.bf16 %v697, %v696
        %700 = vst [vmem:[#allocation3 + $0x8] sm:$0xff] %v698
        %701 = vst [vmem:[#allocation3 + $0x20] sm:$0xff] %v699
        %v703 = vrot.slane %v698, 4
        %705 = vst [vmem:[#allocation2] sm:$0xf0] %v703
        %706 = vst [vmem:[#allocation2 + $0x8] sm:$0xf] %v703
        %v707 = vld [vmem:[#allocation2] sm:$0xfc]
        %v708 = vld [vmem:[#allocation2 + $0x8] sm:$0x7]
        %vm709 = vsmask.f32 5376
        %v711 = vshrl.u32 %v707, 16
        %v713 = vrot.slane %v711, 2
        %v714 = vshll.u32 %v707, 16
        %v716 = vrot.slane %v714, 3
        %v717 = vor.u32 %v713, %v716
        %v719 = vshrl.u32 %v708, 16
        %v721 = vrot.slane %v719, 2
        %v722 = vshll.u32 %v708, 16
        %v724 = vrot.slane %v722, 3
        %v725 = vor.u32 %v721, %v724
        %v726 = vsel %vm709, %v717, %v725
        %728 = vst [vmem:[#allocation3] sm:$0xff] %v726
        %v729 = vld [vmem:[#allocation2] sm:$0xe0]
        %v730 = vld [vmem:[#allocation2 + $0x8] sm:$0x3f]
        %vm731 = vsmask.f32 2304
        %v733 = vshrl.u32 %v729, 16
        %v735 = vrot.slane %v733, 5
        %v736 = vshll.u32 %v729, 16
        %v738 = vrot.slane %v736, 6
        %v739 = vor.u32 %v735, %v738
        %v741 = vshrl.u32 %v730, 16
        %v743 = vrot.slane %v741, 5
        %v744 = vshll.u32 %v730, 16
        %v746 = vrot.slane %v744, 6
        %v747 = vor.u32 %v743, %v746
        %v748 = vsel %vm731, %v739, %v747
        %750 = vst [vmem:[#allocation3 + $0x10] sm:$0xff] %v748
        %v752 = vrot.slane %v699, 4
        %754 = vst [vmem:[%s551] sm:$0xf0] %v752
        %755 = vst [vmem:[%s551 + $0x8] sm:$0xf] %v752
        %v756 = vld [vmem:[%s551] sm:$0xfc]
        %v757 = vld [vmem:[%s551 + $0x8] sm:$0x7]
        %v759 = vshrl.u32 %v756, 16
        %v761 = vrot.slane %v759, 2
        %v762 = vshll.u32 %v756, 16
        %v764 = vrot.slane %v762, 3
        %v765 = vor.u32 %v761, %v764
        %v767 = vshrl.u32 %v757, 16
        %v769 = vrot.slane %v767, 2
        %v770 = vshll.u32 %v757, 16
        %v772 = vrot.slane %v770, 3
        %v773 = vor.u32 %v769, %v772
        %v774 = vsel %vm709, %v765, %v773
        %776 = vst [vmem:[#allocation3 + $0x18] sm:$0xff] %v774
        %v777 = vld [vmem:[%s551] sm:$0xe0]
        %v778 = vld [vmem:[%s551 + $0x8] sm:$0x3f]
        %v780 = vshrl.u32 %v777, 16
        %v782 = vrot.slane %v780, 5
        %v783 = vshll.u32 %v777, 16
        %v785 = vrot.slane %v783, 6
        %v786 = vor.u32 %v782, %v785
        %v788 = vshrl.u32 %v778, 16
        %v790 = vrot.slane %v788, 5
        %v791 = vshll.u32 %v778, 16
        %v793 = vrot.slane %v791, 6
        %v794 = vor.u32 %v790, %v793
        %v795 = vsel %vm731, %v786, %v794
        %797 = vst [vmem:[#allocation3 + $0x28] sm:$0xff] %v795
        %v798 = vld [vmem:[#allocation3] sm:$0xff]
        %v799 = vld [vmem:[#allocation3 + $0x8] sm:$0xff]
        %v800 = vld [vmem:[#allocation3 + $0x10] sm:$0xff]
        %v801 = vld [vmem:[#allocation3 + $0x18] sm:$0xff]
        %v802 = vld [vmem:[#allocation3 + $0x20] sm:$0xff]
        %v803 = vld [vmem:[#allocation3 + $0x28] sm:$0xff]
        %v804 = vld [vmem:[#allocation9] sm:$0xf]
        %v805 = vld [vmem:[#allocation9 + $0x4] sm:$0xf]
        %v806 = vld [vmem:[#allocation9 + $0x8] sm:$0xf]
        %v807 = vld [vmem:[#allocation9 + $0xc] sm:$0xf]
        %v808 = vld [vmem:[#allocation9 + $0x10] sm:$0xf]
        %v809 = vld [vmem:[#allocation9 + $0x14] sm:$0xf]
        %v810 = vld [vmem:[#allocation9 + $0x18] sm:$0xf]
        %v811 = vld [vmem:[#allocation9 + $0x1c] sm:$0xf]
        %v812 = vld [vmem:[#allocation9 + $0x20] sm:$0xf]
        %v813 = vld [vmem:[#allocation9 + $0x24] sm:$0xf]
        %v814 = vld [vmem:[#allocation9 + $0x28] sm:$0xf]
        %v815 = vld [vmem:[#allocation9 + $0x2c] sm:$0xf]
        %v816 = vld [vmem:[#allocation9 + $0x30] sm:$0xf]
        %v817 = vld [vmem:[#allocation9 + $0x34] sm:$0xf]
        %v818 = vld [vmem:[#allocation9 + $0x38] sm:$0xf]
        %v819 = vld [vmem:[#allocation9 + $0x3c] sm:$0xf]
        %v820 = vld [vmem:[#allocation9 + $0x40] sm:$0xf]
        %v821 = vld [vmem:[#allocation9 + $0x44] sm:$0xf]
        %v822 = vld [vmem:[#allocation9 + $0x48] sm:$0xf]
        %v823 = vld [vmem:[#allocation9 + $0x4c] sm:$0xf]
        %v824 = vld [vmem:[#allocation9 + $0x50] sm:$0xf]
        %v825 = vld [vmem:[#allocation9 + $0x54] sm:$0xf]
        %v826 = vld [vmem:[#allocation9 + $0x58] sm:$0xf]
        %v827 = vld [vmem:[#allocation9 + $0x5c] sm:$0xf]
        %v828 = vld [vmem:[#allocation9 + $0x60] sm:$0xf]
        %v829 = vld [vmem:[#allocation9 + $0x64] sm:$0xf]
        %v830 = vld [vmem:[#allocation9 + $0x68] sm:$0xf]
        %v831 = vld [vmem:[#allocation9 + $0x6c] sm:$0xf]
        %v832 = vld [vmem:[#allocation9 + $0x70] sm:$0xf]
        %v833 = vld [vmem:[#allocation9 + $0x74] sm:$0xf]
        %v834 = vld [vmem:[#allocation9 + $0x78] sm:$0xf]
        %v835 = vld [vmem:[#allocation9 + $0x7c] sm:$0xf]
        %v836 = vld [vmem:[#allocation9 + $0x80] sm:$0xf]
        %v837 = vld [vmem:[#allocation9 + $0x84] sm:$0xf]
        %v838 = vld [vmem:[#allocation9 + $0x88] sm:$0xf]
        %v839 = vld [vmem:[#allocation9 + $0x8c] sm:$0xf]
        %v840 = vld [vmem:[#allocation9 + $0x90] sm:$0xf]
        %v841 = vld [vmem:[#allocation9 + $0x94] sm:$0xf]
        %v842 = vld [vmem:[#allocation9 + $0x98] sm:$0xf]
        %v843 = vld [vmem:[#allocation9 + $0x9c] sm:$0xf]
        %v844 = vld [vmem:[#allocation9 + $0xa0] sm:$0xf]
        %v845 = vld [vmem:[#allocation9 + $0xa4] sm:$0xf]
        %v846 = vld [vmem:[#allocation9 + $0xa8] sm:$0xf]
        %v847 = vld [vmem:[#allocation9 + $0xac] sm:$0xf]
        %v848 = vld [vmem:[#allocation9 + $0xb0] sm:$0xf]
        %v849 = vld [vmem:[#allocation9 + $0xb4] sm:$0xf]
        %v850 = vld [vmem:[#allocation9 + $0xb8] sm:$0xf]
        %v851 = vld [vmem:[#allocation9 + $0xbc] sm:$0xf]
        %v852 = vld [vmem:[%s4] sm:$0x1]
        %v854 = vlaneseq
        %v855 = vshrl.u32 %v854, 7
        %v856 = vsub.s32 0, %v855
        %v857 = vrot.slane %v852, %v856
        %v907 = vunpack.c.l.b16 %v804
        %v908 = vunpack.c.l.b16 %v805
        %v909 = vunpack.c.l.b16 %v806
        %v910 = vunpack.c.l.b16 %v807
        %v911 = vunpack.c.l.b16 %v808
        %v912 = vunpack.c.l.b16 %v809
        %v913 = vunpack.c.l.b16 %v810
        %v914 = vunpack.c.l.b16 %v811
        %v915 = vunpack.c.l.b16 %v812
        %v916 = vunpack.c.l.b16 %v813
        %v917 = vunpack.c.l.b16 %v814
        %v918 = vunpack.c.l.b16 %v815
        %v919 = vunpack.c.l.b16 %v816
        %v920 = vunpack.c.l.b16 %v817
        %v921 = vunpack.c.l.b16 %v818
        %v922 = vunpack.c.l.b16 %v819
        %v923 = vunpack.c.l.b16 %v820
        %v924 = vunpack.c.l.b16 %v821
        %v925 = vunpack.c.l.b16 %v822
        %v926 = vunpack.c.l.b16 %v823
        %v927 = vunpack.c.l.b16 %v824
        %v928 = vunpack.c.l.b16 %v825
        %v929 = vunpack.c.l.b16 %v826
        %v930 = vunpack.c.l.b16 %v827
        %v931 = vunpack.c.l.b16 %v828
        %v932 = vunpack.c.l.b16 %v829
        %v933 = vunpack.c.l.b16 %v830
        %v934 = vunpack.c.l.b16 %v831
        %v935 = vunpack.c.l.b16 %v832
        %v936 = vunpack.c.l.b16 %v833
        %v937 = vunpack.c.l.b16 %v834
        %v938 = vunpack.c.l.b16 %v835
        %v939 = vunpack.c.l.b16 %v836
        %v940 = vunpack.c.l.b16 %v837
        %v941 = vunpack.c.l.b16 %v838
        %v942 = vunpack.c.l.b16 %v839
        %v943 = vunpack.c.l.b16 %v840
        %v944 = vunpack.c.l.b16 %v841
        %v945 = vunpack.c.l.b16 %v842
        %v946 = vunpack.c.l.b16 %v843
        %v947 = vunpack.c.l.b16 %v844
        %v948 = vunpack.c.l.b16 %v845
        %v949 = vunpack.c.l.b16 %v846
        %v950 = vunpack.c.l.b16 %v847
        %v951 = vunpack.c.l.b16 %v848
        %v952 = vunpack.c.l.b16 %v849
        %v953 = vunpack.c.l.b16 %v850
        %v954 = vunpack.c.l.b16 %v851
        %v955 = vpack.c.b16 %v908, %v907
        %v956 = vpack.c.b16 %v910, %v909
        %v957 = vpack.c.b16 %v912, %v911
        %v958 = vpack.c.b16 %v914, %v913
        %v959 = vpack.c.b16 %v916, %v915
        %v960 = vpack.c.b16 %v918, %v917
        %v961 = vpack.c.b16 %v920, %v919
        %v962 = vpack.c.b16 %v922, %v921
        %v963 = vpack.c.b16 %v924, %v923
        %v964 = vpack.c.b16 %v926, %v925
        %v965 = vpack.c.b16 %v928, %v927
        %v966 = vpack.c.b16 %v930, %v929
        %v967 = vpack.c.b16 %v932, %v931
        %v968 = vpack.c.b16 %v934, %v933
        %v969 = vpack.c.b16 %v936, %v935
        %v970 = vpack.c.b16 %v938, %v937
        %v971 = vpack.c.b16 %v940, %v939
        %v972 = vpack.c.b16 %v942, %v941
        %v973 = vpack.c.b16 %v944, %v943
        %v974 = vpack.c.b16 %v946, %v945
        %v975 = vpack.c.b16 %v948, %v947
        %v976 = vpack.c.b16 %v950, %v949
        %v977 = vpack.c.b16 %v952, %v951
        %v978 = vpack.c.b16 %v954, %v953
        %1003 = vmatprep.subr.bf16.mxu0 0
        %1004 = vmatpush1.bf16.msra.mxu0 %v955
        %1005 = vmatprep.subr.bf16.mxu0 0
        %1006 = vmatpush1.bf16.msra.mxu0 %v956
        %1007 = vmatprep.subr.bf16.mxu0 0
        %1008 = vmatpush1.bf16.msra.mxu0 %v957
        %1009 = vmatprep.subr.bf16.mxu0 0
        %1010 = vmatpush1.bf16.msra.mxu0 %v958
        %1011 = vmatprep.subr.bf16.mxu0 0
        %1012 = vmatpush1.bf16.msra.mxu0 %v959
        %1013 = vmatprep.subr.bf16.mxu0 0
        %1014 = vmatpush1.bf16.msra.mxu0 %v960
        %1015 = vmatprep.subr.bf16.mxu0 0
        %1016 = vmatpush1.bf16.msra.mxu0 %v961
        %1017 = vmatprep.subr.bf16.mxu0 0
        %1018 = vmatpush1.bf16.msra.mxu0 %v962
        %1019 = vmatprep.subr.bf16.mxu0 0
        %1020 = vmatpush1.bf16.msra.mxu0 %v963
        %1021 = vmatprep.subr.bf16.mxu0 0
        %1022 = vmatpush1.bf16.msra.mxu0 %v964
        %1023 = vmatprep.subr.bf16.mxu0 0
        %1024 = vmatpush1.bf16.msra.mxu0 %v965
        %1025 = vmatprep.subr.bf16.mxu0 0
        %1026 = vmatpush1.bf16.msra.mxu0 %v966
        %1027 = vmatprep.subr.bf16.mxu0 0
        %1028 = vmatpush1.bf16.msra.mxu0 %v967
        %1029 = vmatprep.subr.bf16.mxu0 0
        %1030 = vmatpush1.bf16.msra.mxu0 %v968
        %1031 = vmatprep.subr.bf16.mxu0 0
        %1032 = vmatpush1.bf16.msra.mxu0 %v969
        %1033 = vmatprep.subr.bf16.mxu0 0
        %1034 = vmatpush1.bf16.msra.mxu0 %v970
        %1035 = vmatprep.mubr.bf16.mxu0 %v799
        %1036 = vmatmul.mubr.bf16.gmra.mrb[0].mxu0 %v798
        %v1037 = vpop.f32.mrb[0].mxu0
        %v1038 = vadd.f32 %v857, %v1037
        %v1039 = vpop.f32.mrb[0].mxu0
        %v1040 = vpop.f32.mrb[0].mxu0
        %v1041 = vadd.f32 %v857, %v1040
        %v1042 = vpop.f32.mrb[0].mxu0
        %1043 = vmatprep.mubr.bf16.mxu0 %v802
        %1044 = vmatmul.mubr.bf16.gmra.mrb[0].mxu0 %v801
        %v1045 = vpop.f32.mrb[0].mxu0
        %v1046 = vadd.f32 %v857, %v1045
        %v1047 = vpop.f32.mrb[0].mxu0
        %v1048 = vpop.f32.mrb[0].mxu0
        %v1049 = vadd.f32 %v857, %v1048
        %v1050 = vpop.f32.mrb[0].mxu0
        %1051 = vdwg.mxu0
        %1052 = vmatprep.subr.bf16.mxu0 0
        %1053 = vmatpush1.bf16.msra.mxu0 %v971
        %1054 = vmatprep.subr.bf16.mxu0 0
        %1055 = vmatpush1.bf16.msra.mxu0 %v972
        %1056 = vmatprep.subr.bf16.mxu0 0
        %1057 = vmatpush1.bf16.msra.mxu0 %v973
        %1058 = vmatprep.subr.bf16.mxu0 0
        %1059 = vmatpush1.bf16.msra.mxu0 %v974
        %1060 = vmatprep.subr.bf16.mxu0 0
        %1061 = vmatpush1.bf16.msra.mxu0 %v975
        %1062 = vmatprep.subr.bf16.mxu0 0
        %1063 = vmatpush1.bf16.msra.mxu0 %v976
        %1064 = vmatprep.subr.bf16.mxu0 0
        %1065 = vmatpush1.bf16.msra.mxu0 %v977
        %1066 = vmatprep.subr.bf16.mxu0 0
        %1067 = vmatpush1.bf16.msra.mxu0 %v978
        %1068 = vmatprep.subr.bf16.mxu0 0
        %1069 = vmatpush1.bf16.msra.mxu0 0
        %1070 = vmatprep.subr.bf16.mxu0 0
        %1071 = vmatpush1.bf16.msra.mxu0 0
        %1072 = vmatprep.subr.bf16.mxu0 0
        %1073 = vmatpush1.bf16.msra.mxu0 0
        %1074 = vmatprep.subr.bf16.mxu0 0
        %1075 = vmatpush1.bf16.msra.mxu0 0
        %1076 = vmatprep.subr.bf16.mxu0 0
        %1077 = vmatpush1.bf16.msra.mxu0 0
        %1078 = vmatprep.subr.bf16.mxu0 0
        %1079 = vmatpush1.bf16.msra.mxu0 0
        %1080 = vmatprep.subr.bf16.mxu0 0
        %1081 = vmatpush1.bf16.msra.mxu0 0
        %1082 = vmatprep.subr.bf16.mxu0 0
        %1083 = vmatpush1.bf16.msra.mxu0 0
        %1084 = vmatprep.mubr.bf16.mxu0 0
        %1085 = vmatmul.mubr.bf16.gmra.mrb[0].mxu0 %v800
        %v1086 = vpop.f32.mrb[0].mxu0
        %v1087 = vadd.f32 %v1038, %v1086
        %v1088 = vpop.f32.mrb[0].mxu0
        %v1089 = vpop.f32.mrb[0].mxu0
        %v1090 = vadd.f32 %v1041, %v1089
        %v1091 = vpop.f32.mrb[0].mxu0
        %1092 = vmatprep.mubr.bf16.mxu0 0
        %1093 = vmatmul.mubr.bf16.gmra.mrb[0].mxu0 %v803
        %v1094 = vpop.f32.mrb[0].mxu0
        %v1095 = vadd.f32 %v1046, %v1094
        %v1096 = vpop.f32.mrb[0].mxu0
        %v1097 = vpop.f32.mrb[0].mxu0
        %v1098 = vadd.f32 %v1049, %v1097
        %v1099 = vpop.f32.mrb[0].mxu0
        %1100 = vdwg.mxu0
        %v1101 = vmax.f32 %v1087, 0.0
        %v1102 = vmax.f32 %v1090, 0.0
        %v1103 = vmax.f32 %v1095, 0.0
        %v1104 = vmax.f32 %v1098, 0.0
        %v1105 = vpack.c.bf16 %v1102, %v1101
        %v1106 = vpack.c.bf16 %v1104, %v1103
        %v1107 = vld [vmem:[#allocation10] sm:$0xf]
        %v1108 = vld [vmem:[#allocation10 + $0x4] sm:$0xf]
        %v1109 = vld [vmem:[#allocation10 + $0x8] sm:$0xf]
        %v1110 = vld [vmem:[#allocation10 + $0xc] sm:$0xf]
        %v1111 = vld [vmem:[#allocation10 + $0x10] sm:$0xf]
        %v1112 = vld [vmem:[#allocation10 + $0x14] sm:$0xf]
        %v1113 = vld [vmem:[#allocation10 + $0x18] sm:$0xf]
        %v1114 = vld [vmem:[#allocation10 + $0x1c] sm:$0xf]
        %v1115 = vld [vmem:[#allocation10 + $0x20] sm:$0xf]
        %v1116 = vld [vmem:[#allocation10 + $0x24] sm:$0xf]
        %v1117 = vld [vmem:[#allocation10 + $0x28] sm:$0xf]
        %v1118 = vld [vmem:[#allocation10 + $0x2c] sm:$0xf]
        %v1119 = vld [vmem:[#allocation10 + $0x30] sm:$0xf]
        %v1120 = vld [vmem:[#allocation10 + $0x34] sm:$0xf]
        %v1121 = vld [vmem:[#allocation10 + $0x38] sm:$0xf]
        %v1122 = vld [vmem:[#allocation10 + $0x3c] sm:$0xf]
        %v1139 = vunpack.c.l.b16 %v1107
        %v1140 = vunpack.c.l.b16 %v1108
        %v1141 = vunpack.c.l.b16 %v1109
        %v1142 = vunpack.c.l.b16 %v1110
        %v1143 = vunpack.c.l.b16 %v1111
        %v1144 = vunpack.c.l.b16 %v1112
        %v1145 = vunpack.c.l.b16 %v1113
        %v1146 = vunpack.c.l.b16 %v1114
        %v1147 = vunpack.c.l.b16 %v1115
        %v1148 = vunpack.c.l.b16 %v1116
        %v1149 = vunpack.c.l.b16 %v1117
        %v1150 = vunpack.c.l.b16 %v1118
        %v1151 = vunpack.c.l.b16 %v1119
        %v1152 = vunpack.c.l.b16 %v1120
        %v1153 = vunpack.c.l.b16 %v1121
        %v1154 = vunpack.c.l.b16 %v1122
        %v1155 = vpack.c.b16 %v1140, %v1139
        %v1156 = vpack.c.b16 %v1142, %v1141
        %v1157 = vpack.c.b16 %v1144, %v1143
        %v1158 = vpack.c.b16 %v1146, %v1145
        %v1159 = vpack.c.b16 %v1148, %v1147
        %v1160 = vpack.c.b16 %v1150, %v1149
        %v1161 = vpack.c.b16 %v1152, %v1151
        %v1162 = vpack.c.b16 %v1154, %v1153
        %1171 = vmatprep.subr.bf16.mxu0 0
        %1172 = vmatpush1.bf16.msra.mxu0 %v1155
        %1173 = vmatprep.subr.bf16.mxu0 0
        %1174 = vmatpush1.bf16.msra.mxu0 %v1156
        %1175 = vmatprep.subr.bf16.mxu0 0
        %1176 = vmatpush1.bf16.msra.mxu0 %v1157
        %1177 = vmatprep.subr.bf16.mxu0 0
        %1178 = vmatpush1.bf16.msra.mxu0 %v1158
        %1179 = vmatprep.subr.bf16.mxu0 0
        %1180 = vmatpush1.bf16.msra.mxu0 %v1159
        %1181 = vmatprep.subr.bf16.mxu0 0
        %1182 = vmatpush1.bf16.msra.mxu0 %v1160
        %1183 = vmatprep.subr.bf16.mxu0 0
        %1184 = vmatpush1.bf16.msra.mxu0 %v1161
        %1185 = vmatprep.subr.bf16.mxu0 0
        %1186 = vmatpush1.bf16.msra.mxu0 %v1162
        %1187 = vmatprep.subr.bf16.mxu0 0
        %1188 = vmatpush1.bf16.msra.mxu0 0
        %1189 = vmatprep.subr.bf16.mxu0 0
        %1190 = vmatpush1.bf16.msra.mxu0 0
        %1191 = vmatprep.subr.bf16.mxu0 0
        %1192 = vmatpush1.bf16.msra.mxu0 0
        %1193 = vmatprep.subr.bf16.mxu0 0
        %1194 = vmatpush1.bf16.msra.mxu0 0
        %1195 = vmatprep.subr.bf16.mxu0 0
        %1196 = vmatpush1.bf16.msra.mxu0 0
        %1197 = vmatprep.subr.bf16.mxu0 0
        %1198 = vmatpush1.bf16.msra.mxu0 0
        %1199 = vmatprep.subr.bf16.mxu0 0
        %1200 = vmatpush1.bf16.msra.mxu0 0
        %1201 = vmatprep.subr.bf16.mxu0 0
        %1202 = vmatpush1.bf16.msra.mxu0 0
        %1203 = vmatprep.mubr.bf16.mxu0 0
        %1204 = vmatmul.mubr.bf16.gmra.mrb[0].mxu0 %v1105
        %v1205 = vpop.f32.mrb[0].mxu0
        %v1206 = vadd.f32 0.0, %v1205
        %v1207 = vpop.f32.mrb[0].mxu0
        %v1208 = vpop.f32.mrb[0].mxu0
        %v1209 = vadd.f32 0.0, %v1208
        %v1210 = vpop.f32.mrb[0].mxu0
        %1211 = vmatprep.mubr.bf16.mxu0 0
        %1212 = vmatmul.mubr.bf16.gmra.mrb[0].mxu0 %v1106
        %v1213 = vpop.f32.mrb[0].mxu0
        %v1214 = vadd.f32 0.0, %v1213
        %v1215 = vpop.f32.mrb[0].mxu0
        %v1216 = vpop.f32.mrb[0].mxu0
        %v1217 = vadd.f32 0.0, %v1216
        %v1218 = vpop.f32.mrb[0].mxu0
        %1219 = vdwg.mxu0
        %v1220 = vadd.f32 %v690, %v1206
        %v1221 = vadd.f32 %v691, %v1209
        %v1222 = vadd.f32 %v692, %v1214
        %v1223 = vadd.f32 %v693, %v1217
        %v1224 = vld [vmem:[%s6] sm:$0x1]
        %v1226 = vlaneseq
        %v1227 = vshrl.u32 %v1226, 7
        %v1228 = vsub.s32 0, %v1227
        %v1229 = vrot.slane %v1224, %v1228
        %v1231 = vadd.f32 %v1220, %v1229
        %v1232 = vadd.f32 %v1221, %v1229
        %v1233 = vadd.f32 %v1222, %v1229
        %v1234 = vadd.f32 %v1223, %v1229
        %v1235 = vmax.f32 %v1231, 0.0
        %v1236 = vmax.f32 %v1232, 0.0
        %v1237 = vmax.f32 %v1233, 0.0
        %v1238 = vmax.f32 %v1234, 0.0
        %v1239 = vpack.c.bf16 %v1236, %v1235
        %v1240 = vpack.c.bf16 %v1238, %v1237
        %1241 = vst [vmem:[#allocation3 + $0x8] sm:$0xff] %v1239
        %1242 = vst [vmem:[#allocation3 + $0x20] sm:$0xff] %v1240
        %v1244 = vrot.slane %v1239, 4
        %1246 = vst [vmem:[#allocation2] sm:$0xf0] %v1244
        %1247 = vst [vmem:[#allocation2 + $0x8] sm:$0xf] %v1244
        %v1248 = vld [vmem:[#allocation2] sm:$0xf8]
        %v1249 = vld [vmem:[#allocation2 + $0x8] sm:$0xf]
        %vm1250 = vsmask.f32 4352
        %v1252 = vshrl.u32 %v1248, 16
        %v1254 = vrot.slane %v1252, 3
        %v1255 = vshll.u32 %v1248, 16
        %v1257 = vrot.slane %v1255, 4
        %v1258 = vor.u32 %v1254, %v1257
        %v1260 = vshrl.u32 %v1249, 16
        %v1262 = vrot.slane %v1260, 3
        %v1263 = vshll.u32 %v1249, 16
        %v1265 = vrot.slane %v1263, 4
        %v1266 = vor.u32 %v1262, %v1265
        %v1267 = vsel %vm1250, %v1258, %v1266
        %1269 = vst [vmem:[#allocation3] sm:$0xff] %v1267
        %v1270 = vld [vmem:[#allocation2] sm:$0xf0]
        %v1271 = vld [vmem:[#allocation2 + $0x8] sm:$0x1f]
        %vm1272 = vsmask.f32 3328
        %v1274 = vshrl.u32 %v1270, 16
        %v1276 = vrot.slane %v1274, 4
        %v1277 = vshll.u32 %v1270, 16
        %v1279 = vrot.slane %v1277, 5
        %v1280 = vor.u32 %v1276, %v1279
        %v1282 = vshrl.u32 %v1271, 16
        %v1284 = vrot.slane %v1282, 4
        %v1285 = vshll.u32 %v1271, 16
        %v1287 = vrot.slane %v1285, 5
        %v1288 = vor.u32 %v1284, %v1287
        %v1289 = vsel %vm1272, %v1280, %v1288
        %1291 = vst [vmem:[#allocation3 + $0x10] sm:$0xff] %v1289
        %v1293 = vrot.slane %v1240, 4
        %1295 = vst [vmem:[%s551] sm:$0xf0] %v1293
        %1296 = vst [vmem:[%s551 + $0x8] sm:$0xf] %v1293
        %v1297 = vld [vmem:[%s551] sm:$0xf8]
        %v1298 = vld [vmem:[%s551 + $0x8] sm:$0xf]
        %v1300 = vshrl.u32 %v1297, 16
        %v1302 = vrot.slane %v1300, 3
        %v1303 = vshll.u32 %v1297, 16
        %v1305 = vrot.slane %v1303, 4
        %v1306 = vor.u32 %v1302, %v1305
        %v1308 = vshrl.u32 %v1298, 16
        %v1310 = vrot.slane %v1308, 3
        %v1311 = vshll.u32 %v1298, 16
        %v1313 = vrot.slane %v1311, 4
        %v1314 = vor.u32 %v1310, %v1313
        %v1315 = vsel %vm1250, %v1306, %v1314
        %1317 = vst [vmem:[#allocation3 + $0x18] sm:$0xff] %v1315
        %v1318 = vld [vmem:[%s551] sm:$0xf0]
        %v1319 = vld [vmem:[%s551 + $0x8] sm:$0x1f]
        %v1321 = vshrl.u32 %v1318, 16
        %v1323 = vrot.slane %v1321, 4
        %v1324 = vshll.u32 %v1318, 16
        %v1326 = vrot.slane %v1324, 5
        %v1327 = vor.u32 %v1323, %v1326
        %v1329 = vshrl.u32 %v1319, 16
        %v1331 = vrot.slane %v1329, 4
        %v1332 = vshll.u32 %v1319, 16
        %v1334 = vrot.slane %v1332, 5
        %v1335 = vor.u32 %v1331, %v1334
        %v1336 = vsel %vm1272, %v1327, %v1335
        %1338 = vst [vmem:[#allocation3 + $0x28] sm:$0xff] %v1336
        %v1339 = vld [vmem:[#allocation3] sm:$0xff]
        %v1340 = vld [vmem:[#allocation3 + $0x8] sm:$0xff]
        %v1341 = vld [vmem:[#allocation3 + $0x10] sm:$0xff]
        %v1342 = vld [vmem:[#allocation3 + $0x18] sm:$0xff]
        %v1343 = vld [vmem:[#allocation3 + $0x20] sm:$0xff]
        %v1344 = vld [vmem:[#allocation3 + $0x28] sm:$0xff]
        %s1345 = scalar_lea.vmem [#allocation9], 192
        %v1346 = vld [vmem:[%s1345] sm:$0xf]
        %v1347 = vld [vmem:[%s1345 + $0x4] sm:$0xf]
        %v1348 = vld [vmem:[%s1345 + $0x8] sm:$0xf]
        %v1349 = vld [vmem:[%s1345 + $0xc] sm:$0xf]
        %v1350 = vld [vmem:[%s1345 + $0x10] sm:$0xf]
        %v1351 = vld [vmem:[%s1345 + $0x14] sm:$0xf]
        %v1352 = vld [vmem:[%s1345 + $0x18] sm:$0xf]
        %v1353 = vld [vmem:[%s1345 + $0x1c] sm:$0xf]
        %v1354 = vld [vmem:[%s1345 + $0x20] sm:$0xf]
        %v1355 = vld [vmem:[%s1345 + $0x24] sm:$0xf]
        %v1356 = vld [vmem:[%s1345 + $0x28] sm:$0xf]
        %v1357 = vld [vmem:[%s1345 + $0x2c] sm:$0xf]
        %v1358 = vld [vmem:[%s1345 + $0x30] sm:$0xf]
        %v1359 = vld [vmem:[%s1345 + $0x34] sm:$0xf]
        %v1360 = vld [vmem:[%s1345 + $0x38] sm:$0xf]
        %v1361 = vld [vmem:[%s1345 + $0x3c] sm:$0xf]
        %v1362 = vld [vmem:[%s1345 + $0x40] sm:$0xf]
        %v1363 = vld [vmem:[%s1345 + $0x44] sm:$0xf]
        %v1364 = vld [vmem:[%s1345 + $0x48] sm:$0xf]
        %v1365 = vld [vmem:[%s1345 + $0x4c] sm:$0xf]
        %v1366 = vld [vmem:[%s1345 + $0x50] sm:$0xf]
        %v1367 = vld [vmem:[%s1345 + $0x54] sm:$0xf]
        %v1368 = vld [vmem:[%s1345 + $0x58] sm:$0xf]
        %v1369 = vld [vmem:[%s1345 + $0x5c] sm:$0xf]
        %v1370 = vld [vmem:[%s1345 + $0x60] sm:$0xf]
        %v1371 = vld [vmem:[%s1345 + $0x64] sm:$0xf]
        %v1372 = vld [vmem:[%s1345 + $0x68] sm:$0xf]
        %v1373 = vld [vmem:[%s1345 + $0x6c] sm:$0xf]
        %v1374 = vld [vmem:[%s1345 + $0x70] sm:$0xf]
        %v1375 = vld [vmem:[%s1345 + $0x74] sm:$0xf]
        %v1376 = vld [vmem:[%s1345 + $0x78] sm:$0xf]
        %v1377 = vld [vmem:[%s1345 + $0x7c] sm:$0xf]
        %v1378 = vld [vmem:[%s1345 + $0x80] sm:$0xf]
        %v1379 = vld [vmem:[%s1345 + $0x84] sm:$0xf]
        %v1380 = vld [vmem:[%s1345 + $0x88] sm:$0xf]
        %v1381 = vld [vmem:[%s1345 + $0x8c] sm:$0xf]
        %v1382 = vld [vmem:[%s1345 + $0x90] sm:$0xf]
        %v1383 = vld [vmem:[%s1345 + $0x94] sm:$0xf]
        %v1384 = vld [vmem:[%s1345 + $0x98] sm:$0xf]
        %v1385 = vld [vmem:[%s1345 + $0x9c] sm:$0xf]
        %v1386 = vld [vmem:[%s1345 + $0xa0] sm:$0xf]
        %v1387 = vld [vmem:[%s1345 + $0xa4] sm:$0xf]
        %v1388 = vld [vmem:[%s1345 + $0xa8] sm:$0xf]
        %v1389 = vld [vmem:[%s1345 + $0xac] sm:$0xf]
        %v1390 = vld [vmem:[%s1345 + $0xb0] sm:$0xf]
        %v1391 = vld [vmem:[%s1345 + $0xb4] sm:$0xf]
        %v1392 = vld [vmem:[%s1345 + $0xb8] sm:$0xf]
        %v1393 = vld [vmem:[%s1345 + $0xbc] sm:$0xf]
        %s1394 = scalar_lea.vmem %s4, 1
        %v1395 = vld [vmem:[%s1394] sm:$0x1]
        %v1397 = vlaneseq
        %v1398 = vshrl.u32 %v1397, 7
        %v1399 = vsub.s32 0, %v1398
        %v1400 = vrot.slane %v1395, %v1399
        %v1450 = vunpack.c.l.b16 %v1346
        %v1451 = vunpack.c.l.b16 %v1347
        %v1452 = vunpack.c.l.b16 %v1348
        %v1453 = vunpack.c.l.b16 %v1349
        %v1454 = vunpack.c.l.b16 %v1350
        %v1455 = vunpack.c.l.b16 %v1351
        %v1456 = vunpack.c.l.b16 %v1352
        %v1457 = vunpack.c.l.b16 %v1353
        %v1458 = vunpack.c.l.b16 %v1354
        %v1459 = vunpack.c.l.b16 %v1355
        %v1460 = vunpack.c.l.b16 %v1356
        %v1461 = vunpack.c.l.b16 %v1357
        %v1462 = vunpack.c.l.b16 %v1358
        %v1463 = vunpack.c.l.b16 %v1359
        %v1464 = vunpack.c.l.b16 %v1360
        %v1465 = vunpack.c.l.b16 %v1361
        %v1466 = vunpack.c.l.b16 %v1362
        %v1467 = vunpack.c.l.b16 %v1363
        %v1468 = vunpack.c.l.b16 %v1364
        %v1469 = vunpack.c.l.b16 %v1365
        %v1470 = vunpack.c.l.b16 %v1366
        %v1471 = vunpack.c.l.b16 %v1367
        %v1472 = vunpack.c.l.b16 %v1368
        %v1473 = vunpack.c.l.b16 %v1369
        %v1474 = vunpack.c.l.b16 %v1370
        %v1475 = vunpack.c.l.b16 %v1371
        %v1476 = vunpack.c.l.b16 %v1372
        %v1477 = vunpack.c.l.b16 %v1373
        %v1478 = vunpack.c.l.b16 %v1374
        %v1479 = vunpack.c.l.b16 %v1375
        %v1480 = vunpack.c.l.b16 %v1376
        %v1481 = vunpack.c.l.b16 %v1377
        %v1482 = vunpack.c.l.b16 %v1378
        %v1483 = vunpack.c.l.b16 %v1379
        %v1484 = vunpack.c.l.b16 %v1380
        %v1485 = vunpack.c.l.b16 %v1381
        %v1486 = vunpack.c.l.b16 %v1382
        %v1487 = vunpack.c.l.b16 %v1383
        %v1488 = vunpack.c.l.b16 %v1384
        %v1489 = vunpack.c.l.b16 %v1385
        %v1490 = vunpack.c.l.b16 %v1386
        %v1491 = vunpack.c.l.b16 %v1387
        %v1492 = vunpack.c.l.b16 %v1388
        %v1493 = vunpack.c.l.b16 %v1389
        %v1494 = vunpack.c.l.b16 %v1390
        %v1495 = vunpack.c.l.b16 %v1391
        %v1496 = vunpack.c.l.b16 %v1392
        %v1497 = vunpack.c.l.b16 %v1393
        %v1498 = vpack.c.b16 %v1451, %v1450
        %v1499 = vpack.c.b16 %v1453, %v1452
        %v1500 = vpack.c.b16 %v1455, %v1454
        %v1501 = vpack.c.b16 %v1457, %v1456
        %v1502 = vpack.c.b16 %v1459, %v1458
        %v1503 = vpack.c.b16 %v1461, %v1460
        %v1504 = vpack.c.b16 %v1463, %v1462
        %v1505 = vpack.c.b16 %v1465, %v1464
        %v1506 = vpack.c.b16 %v1467, %v1466
        %v1507 = vpack.c.b16 %v1469, %v1468
        %v1508 = vpack.c.b16 %v1471, %v1470
        %v1509 = vpack.c.b16 %v1473, %v1472
        %v1510 = vpack.c.b16 %v1475, %v1474
        %v1511 = vpack.c.b16 %v1477, %v1476
        %v1512 = vpack.c.b16 %v1479, %v1478
        %v1513 = vpack.c.b16 %v1481, %v1480
        %v1514 = vpack.c.b16 %v1483, %v1482
        %v1515 = vpack.c.b16 %v1485, %v1484
        %v1516 = vpack.c.b16 %v1487, %v1486
        %v1517 = vpack.c.b16 %v1489, %v1488
        %v1518 = vpack.c.b16 %v1491, %v1490
        %v1519 = vpack.c.b16 %v1493, %v1492
        %v1520 = vpack.c.b16 %v1495, %v1494
        %v1521 = vpack.c.b16 %v1497, %v1496
        %1546 = vmatprep.subr.bf16.mxu0 0
        %1547 = vmatpush1.bf16.msra.mxu0 %v1498
        %1548 = vmatprep.subr.bf16.mxu0 0
        %1549 = vmatpush1.bf16.msra.mxu0 %v1499
        %1550 = vmatprep.subr.bf16.mxu0 0
        %1551 = vmatpush1.bf16.msra.mxu0 %v1500
        %1552 = vmatprep.subr.bf16.mxu0 0
        %1553 = vmatpush1.bf16.msra.mxu0 %v1501
        %1554 = vmatprep.subr.bf16.mxu0 0
        %1555 = vmatpush1.bf16.msra.mxu0 %v1502
        %1556 = vmatprep.subr.bf16.mxu0 0
        %1557 = vmatpush1.bf16.msra.mxu0 %v1503
        %1558 = vmatprep.subr.bf16.mxu0 0
        %1559 = vmatpush1.bf16.msra.mxu0 %v1504
        %1560 = vmatprep.subr.bf16.mxu0 0
        %1561 = vmatpush1.bf16.msra.mxu0 %v1505
        %1562 = vmatprep.subr.bf16.mxu0 0
        %1563 = vmatpush1.bf16.msra.mxu0 %v1506
        %1564 = vmatprep.subr.bf16.mxu0 0
        %1565 = vmatpush1.bf16.msra.mxu0 %v1507
        %1566 = vmatprep.subr.bf16.mxu0 0
        %1567 = vmatpush1.bf16.msra.mxu0 %v1508
        %1568 = vmatprep.subr.bf16.mxu0 0
        %1569 = vmatpush1.bf16.msra.mxu0 %v1509
        %1570 = vmatprep.subr.bf16.mxu0 0
        %1571 = vmatpush1.bf16.msra.mxu0 %v1510
        %1572 = vmatprep.subr.bf16.mxu0 0
        %1573 = vmatpush1.bf16.msra.mxu0 %v1511
        %1574 = vmatprep.subr.bf16.mxu0 0
        %1575 = vmatpush1.bf16.msra.mxu0 %v1512
        %1576 = vmatprep.subr.bf16.mxu0 0
        %1577 = vmatpush1.bf16.msra.mxu0 %v1513
        %1578 = vmatprep.mubr.bf16.mxu0 %v1340
        %1579 = vmatmul.mubr.bf16.gmra.mrb[0].mxu0 %v1339
        %v1580 = vpop.f32.mrb[0].mxu0
        %v1581 = vadd.f32 %v1400, %v1580
        %v1582 = vpop.f32.mrb[0].mxu0
        %v1583 = vpop.f32.mrb[0].mxu0
        %v1584 = vadd.f32 %v1400, %v1583
        %v1585 = vpop.f32.mrb[0].mxu0
        %1586 = vmatprep.mubr.bf16.mxu0 %v1343
        %1587 = vmatmul.mubr.bf16.gmra.mrb[0].mxu0 %v1342
        %v1588 = vpop.f32.mrb[0].mxu0
        %v1589 = vadd.f32 %v1400, %v1588
        %v1590 = vpop.f32.mrb[0].mxu0
        %v1591 = vpop.f32.mrb[0].mxu0
        %v1592 = vadd.f32 %v1400, %v1591
        %v1593 = vpop.f32.mrb[0].mxu0
        %1594 = vdwg.mxu0
        %1595 = vmatprep.subr.bf16.mxu0 0
        %1596 = vmatpush1.bf16.msra.mxu0 %v1514
        %1597 = vmatprep.subr.bf16.mxu0 0
        %1598 = vmatpush1.bf16.msra.mxu0 %v1515
        %1599 = vmatprep.subr.bf16.mxu0 0
        %1600 = vmatpush1.bf16.msra.mxu0 %v1516
        %1601 = vmatprep.subr.bf16.mxu0 0
        %1602 = vmatpush1.bf16.msra.mxu0 %v1517
        %1603 = vmatprep.subr.bf16.mxu0 0
        %1604 = vmatpush1.bf16.msra.mxu0 %v1518
        %1605 = vmatprep.subr.bf16.mxu0 0
        %1606 = vmatpush1.bf16.msra.mxu0 %v1519
        %1607 = vmatprep.subr.bf16.mxu0 0
        %1608 = vmatpush1.bf16.msra.mxu0 %v1520
        %1609 = vmatprep.subr.bf16.mxu0 0
        %1610 = vmatpush1.bf16.msra.mxu0 %v1521
        %1611 = vmatprep.subr.bf16.mxu0 0
        %1612 = vmatpush1.bf16.msra.mxu0 0
        %1613 = vmatprep.subr.bf16.mxu0 0
        %1614 = vmatpush1.bf16.msra.mxu0 0
        %1615 = vmatprep.subr.bf16.mxu0 0
        %1616 = vmatpush1.bf16.msra.mxu0 0
        %1617 = vmatprep.subr.bf16.mxu0 0
        %1618 = vmatpush1.bf16.msra.mxu0 0
        %1619 = vmatprep.subr.bf16.mxu0 0
        %1620 = vmatpush1.bf16.msra.mxu0 0
        %1621 = vmatprep.subr.bf16.mxu0 0
        %1622 = vmatpush1.bf16.msra.mxu0 0
        %1623 = vmatprep.subr.bf16.mxu0 0
        %1624 = vmatpush1.bf16.msra.mxu0 0
        %1625 = vmatprep.subr.bf16.mxu0 0
        %1626 = vmatpush1.bf16.msra.mxu0 0
        %1627 = vmatprep.mubr.bf16.mxu0 0
        %1628 = vmatmul.mubr.bf16.gmra.mrb[0].mxu0 %v1341
        %v1629 = vpop.f32.mrb[0].mxu0
        %v1630 = vadd.f32 %v1581, %v1629
        %v1631 = vpop.f32.mrb[0].mxu0
        %v1632 = vpop.f32.mrb[0].mxu0
        %v1633 = vadd.f32 %v1584, %v1632
        %v1634 = vpop.f32.mrb[0].mxu0
        %1635 = vmatprep.mubr.bf16.mxu0 0
        %1636 = vmatmul.mubr.bf16.gmra.mrb[0].mxu0 %v1344
        %v1637 = vpop.f32.mrb[0].mxu0
        %v1638 = vadd.f32 %v1589, %v1637
        %v1639 = vpop.f32.mrb[0].mxu0
        %v1640 = vpop.f32.mrb[0].mxu0
        %v1641 = vadd.f32 %v1592, %v1640
        %v1642 = vpop.f32.mrb[0].mxu0
        %1643 = vdwg.mxu0
        %v1644 = vmax.f32 %v1630, 0.0
        %v1645 = vmax.f32 %v1633, 0.0
        %v1646 = vmax.f32 %v1638, 0.0
        %v1647 = vmax.f32 %v1641, 0.0
        %v1648 = vpack.c.bf16 %v1645, %v1644
        %v1649 = vpack.c.bf16 %v1647, %v1646
        %s1650 = scalar_lea.vmem [#allocation10], 64
        %v1651 = vld [vmem:[%s1650] sm:$0xf]
        %v1652 = vld [vmem:[%s1650 + $0x4] sm:$0xf]
        %v1653 = vld [vmem:[%s1650 + $0x8] sm:$0xf]
        %v1654 = vld [vmem:[%s1650 + $0xc] sm:$0xf]
        %v1655 = vld [vmem:[%s1650 + $0x10] sm:$0xf]
        %v1656 = vld [vmem:[%s1650 + $0x14] sm:$0xf]
        %v1657 = vld [vmem:[%s1650 + $0x18] sm:$0xf]
        %v1658 = vld [vmem:[%s1650 + $0x1c] sm:$0xf]
        %v1659 = vld [vmem:[%s1650 + $0x20] sm:$0xf]
        %v1660 = vld [vmem:[%s1650 + $0x24] sm:$0xf]
        %v1661 = vld [vmem:[%s1650 + $0x28] sm:$0xf]
        %v1662 = vld [vmem:[%s1650 + $0x2c] sm:$0xf]
        %v1663 = vld [vmem:[%s1650 + $0x30] sm:$0xf]
        %v1664 = vld [vmem:[%s1650 + $0x34] sm:$0xf]
        %v1665 = vld [vmem:[%s1650 + $0x38] sm:$0xf]
        %v1666 = vld [vmem:[%s1650 + $0x3c] sm:$0xf]
        %v1683 = vunpack.c.l.b16 %v1651
        %v1684 = vunpack.c.l.b16 %v1652
        %v1685 = vunpack.c.l.b16 %v1653
        %v1686 = vunpack.c.l.b16 %v1654
        %v1687 = vunpack.c.l.b16 %v1655
        %v1688 = vunpack.c.l.b16 %v1656
        %v1689 = vunpack.c.l.b16 %v1657
        %v1690 = vunpack.c.l.b16 %v1658
        %v1691 = vunpack.c.l.b16 %v1659
        %v1692 = vunpack.c.l.b16 %v1660
        %v1693 = vunpack.c.l.b16 %v1661
        %v1694 = vunpack.c.l.b16 %v1662
        %v1695 = vunpack.c.l.b16 %v1663
        %v1696 = vunpack.c.l.b16 %v1664
        %v1697 = vunpack.c.l.b16 %v1665
        %v1698 = vunpack.c.l.b16 %v1666
        %v1699 = vpack.c.b16 %v1684, %v1683
        %v1700 = vpack.c.b16 %v1686, %v1685
        %v1701 = vpack.c.b16 %v1688, %v1687
        %v1702 = vpack.c.b16 %v1690, %v1689
        %v1703 = vpack.c.b16 %v1692, %v1691
        %v1704 = vpack.c.b16 %v1694, %v1693
        %v1705 = vpack.c.b16 %v1696, %v1695
        %v1706 = vpack.c.b16 %v1698, %v1697
        %1715 = vmatprep.subr.bf16.mxu0 0
        %1716 = vmatpush1.bf16.msra.mxu0 %v1699
        %1717 = vmatprep.subr.bf16.mxu0 0
        %1718 = vmatpush1.bf16.msra.mxu0 %v1700
        %1719 = vmatprep.subr.bf16.mxu0 0
        %1720 = vmatpush1.bf16.msra.mxu0 %v1701
        %1721 = vmatprep.subr.bf16.mxu0 0
        %1722 = vmatpush1.bf16.msra.mxu0 %v1702
        %1723 = vmatprep.subr.bf16.mxu0 0
        %1724 = vmatpush1.bf16.msra.mxu0 %v1703
        %1725 = vmatprep.subr.bf16.mxu0 0
        %1726 = vmatpush1.bf16.msra.mxu0 %v1704
        %1727 = vmatprep.subr.bf16.mxu0 0
        %1728 = vmatpush1.bf16.msra.mxu0 %v1705
        %1729 = vmatprep.subr.bf16.mxu0 0
        %1730 = vmatpush1.bf16.msra.mxu0 %v1706
        %1731 = vmatprep.subr.bf16.mxu0 0
        %1732 = vmatpush1.bf16.msra.mxu0 0
        %1733 = vmatprep.subr.bf16.mxu0 0
        %1734 = vmatpush1.bf16.msra.mxu0 0
        %1735 = vmatprep.subr.bf16.mxu0 0
        %1736 = vmatpush1.bf16.msra.mxu0 0
        %1737 = vmatprep.subr.bf16.mxu0 0
        %1738 = vmatpush1.bf16.msra.mxu0 0
        %1739 = vmatprep.subr.bf16.mxu0 0
        %1740 = vmatpush1.bf16.msra.mxu0 0
        %1741 = vmatprep.subr.bf16.mxu0 0
        %1742 = vmatpush1.bf16.msra.mxu0 0
        %1743 = vmatprep.subr.bf16.mxu0 0
        %1744 = vmatpush1.bf16.msra.mxu0 0
        %1745 = vmatprep.subr.bf16.mxu0 0
        %1746 = vmatpush1.bf16.msra.mxu0 0
        %1747 = vmatprep.mubr.bf16.mxu0 0
        %1748 = vmatmul.mubr.bf16.gmra.mrb[0].mxu0 %v1648
        %v1749 = vpop.f32.mrb[0].mxu0
        %v1750 = vadd.f32 0.0, %v1749
        %v1751 = vpop.f32.mrb[0].mxu0
        %v1752 = vpop.f32.mrb[0].mxu0
        %v1753 = vadd.f32 0.0, %v1752
        %v1754 = vpop.f32.mrb[0].mxu0
        %1755 = vmatprep.mubr.bf16.mxu0 0
        %1756 = vmatmul.mubr.bf16.gmra.mrb[0].mxu0 %v1649
        %v1757 = vpop.f32.mrb[0].mxu0
        %v1758 = vadd.f32 0.0, %v1757
        %v1759 = vpop.f32.mrb[0].mxu0
        %v1760 = vpop.f32.mrb[0].mxu0
        %v1761 = vadd.f32 0.0, %v1760
        %v1762 = vpop.f32.mrb[0].mxu0
        %1763 = vdwg.mxu0
        %v1764 = vadd.f32 %v1231, %v1750
        %v1765 = vadd.f32 %v1232, %v1753
        %v1766 = vadd.f32 %v1233, %v1758
        %v1767 = vadd.f32 %v1234, %v1761
        %s1768 = scalar_lea.vmem %s6, 1
        %v1769 = vld [vmem:[%s1768] sm:$0x1]
        %v1771 = vlaneseq
        %v1772 = vshrl.u32 %v1771, 7
        %v1773 = vsub.s32 0, %v1772
        %v1774 = vrot.slane %v1769, %v1773
        %v1776 = vadd.f32 %v1764, %v1774
        %v1777 = vadd.f32 %v1765, %v1774
        %v1778 = vadd.f32 %v1766, %v1774
        %v1779 = vadd.f32 %v1767, %v1774
        %v1780 = vld [vmem:[#allocation12] sm:$0xf]
        %v1781 = vld [vmem:[#allocation12 + $0x4] sm:$0xf]
        %v1782 = vld [vmem:[#allocation12 + $0x8] sm:$0xf]
        %v1783 = vld [vmem:[#allocation12 + $0xc] sm:$0xf]
        %v1784 = vld [vmem:[#allocation12 + $0x10] sm:$0xf]
        %v1785 = vld [vmem:[#allocation12 + $0x14] sm:$0xf]
        %v1786 = vld [vmem:[#allocation12 + $0x18] sm:$0xf]
        %v1787 = vld [vmem:[#allocation12 + $0x1c] sm:$0xf]
        %v1788 = vld [vmem:[#allocation12 + $0x20] sm:$0xf]
        %v1789 = vld [vmem:[#allocation12 + $0x24] sm:$0xf]
        %v1790 = vld [vmem:[#allocation12 + $0x28] sm:$0xf]
        %v1791 = vld [vmem:[#allocation12 + $0x2c] sm:$0xf]
        %v1792 = vld [vmem:[#allocation12 + $0x30] sm:$0xf]
        %v1793 = vld [vmem:[#allocation12 + $0x34] sm:$0xf]
        %v1794 = vld [vmem:[#allocation12 + $0x38] sm:$0xf]
        %v1795 = vld [vmem:[#allocation12 + $0x3c] sm:$0xf]
        %v1796 = vpack.c.bf16 %v1777, %v1776
        %v1797 = vpack.c.bf16 %v1779, %v1778
        %v1798 = vld [vmem:[%s8] sm:$0x1]
        %v1800 = vlaneseq
        %v1801 = vshrl.u32 %v1800, 7
        %v1802 = vsub.s32 0, %v1801
        %v1803 = vrot.slane %v1798, %v1802
        %v1821 = vunpack.c.l.b16 %v1780
        %v1822 = vunpack.c.l.b16 %v1781
        %v1823 = vunpack.c.l.b16 %v1782
        %v1824 = vunpack.c.l.b16 %v1783
        %v1825 = vunpack.c.l.b16 %v1784
        %v1826 = vunpack.c.l.b16 %v1785
        %v1827 = vunpack.c.l.b16 %v1786
        %v1828 = vunpack.c.l.b16 %v1787
        %v1829 = vunpack.c.l.b16 %v1788
        %v1830 = vunpack.c.l.b16 %v1789
        %v1831 = vunpack.c.l.b16 %v1790
        %v1832 = vunpack.c.l.b16 %v1791
        %v1833 = vunpack.c.l.b16 %v1792
        %v1834 = vunpack.c.l.b16 %v1793
        %v1835 = vunpack.c.l.b16 %v1794
        %v1836 = vunpack.c.l.b16 %v1795
        %v1837 = vpack.c.b16 %v1822, %v1821
        %v1838 = vpack.c.b16 %v1824, %v1823
        %v1839 = vpack.c.b16 %v1826, %v1825
        %v1840 = vpack.c.b16 %v1828, %v1827
        %v1841 = vpack.c.b16 %v1830, %v1829
        %v1842 = vpack.c.b16 %v1832, %v1831
        %v1843 = vpack.c.b16 %v1834, %v1833
        %v1844 = vpack.c.b16 %v1836, %v1835
        %1853 = vmatprep.subr.bf16.mxu0 0
        %1854 = vmatpush1.bf16.msra.mxu0 %v1837
        %1855 = vmatprep.subr.bf16.mxu0 0
        %1856 = vmatpush1.bf16.msra.mxu0 %v1838
        %1857 = vmatprep.subr.bf16.mxu0 0
        %1858 = vmatpush1.bf16.msra.mxu0 %v1839
        %1859 = vmatprep.subr.bf16.mxu0 0
        %1860 = vmatpush1.bf16.msra.mxu0 %v1840
        %1861 = vmatprep.subr.bf16.mxu0 0
        %1862 = vmatpush1.bf16.msra.mxu0 %v1841
        %1863 = vmatprep.subr.bf16.mxu0 0
        %1864 = vmatpush1.bf16.msra.mxu0 %v1842
        %1865 = vmatprep.subr.bf16.mxu0 0
        %1866 = vmatpush1.bf16.msra.mxu0 %v1843
        %1867 = vmatprep.subr.bf16.mxu0 0
        %1868 = vmatpush1.bf16.msra.mxu0 %v1844
        %1869 = vmatprep.subr.bf16.mxu0 0
        %1870 = vmatpush1.bf16.msra.mxu0 0
        %1871 = vmatprep.subr.bf16.mxu0 0
        %1872 = vmatpush1.bf16.msra.mxu0 0
        %1873 = vmatprep.subr.bf16.mxu0 0
        %1874 = vmatpush1.bf16.msra.mxu0 0
        %1875 = vmatprep.subr.bf16.mxu0 0
        %1876 = vmatpush1.bf16.msra.mxu0 0
        %1877 = vmatprep.subr.bf16.mxu0 0
        %1878 = vmatpush1.bf16.msra.mxu0 0
        %1879 = vmatprep.subr.bf16.mxu0 0
        %1880 = vmatpush1.bf16.msra.mxu0 0
        %1881 = vmatprep.subr.bf16.mxu0 0
        %1882 = vmatpush1.bf16.msra.mxu0 0
        %1883 = vmatprep.subr.bf16.mxu0 0
        %1884 = vmatpush1.bf16.msra.mxu0 0
        %1885 = vmatprep.mubr.bf16.mxu0 0
        %1886 = vmatmul.mubr.bf16.gmra.mrb[0].mxu0 %v1796
        %v1887 = vpop.f32.mrb[0].mxu0
        %v1888 = vadd.f32 %v1803, %v1887
        %v1889 = vpop.f32.mrb[0].mxu0
        %v1890 = vpop.f32.mrb[0].mxu0
        %v1891 = vadd.f32 %v1803, %v1890
        %v1892 = vpop.f32.mrb[0].mxu0
        %1893 = vmatprep.mubr.bf16.mxu0 0
        %1894 = vmatmul.mubr.bf16.gmra.mrb[0].mxu0 %v1797
        %v1895 = vpop.f32.mrb[0].mxu0
        %v1896 = vadd.f32 %v1803, %v1895
        %v1897 = vpop.f32.mrb[0].mxu0
        %v1898 = vpop.f32.mrb[0].mxu0
        %v1899 = vadd.f32 %v1803, %v1898
        %v1900 = vpop.f32.mrb[0].mxu0
        %1901 = vdwg.mxu0
        %v1902 = vmax.f32 %v1888, 0.0
        %v1903 = vmax.f32 %v1891, 0.0
        %v1904 = vmax.f32 %v1896, 0.0
        %v1905 = vmax.f32 %v1899, 0.0
        %v1906 = vpack.c.bf16 %v1903, %v1902
        %v1907 = vpack.c.bf16 %v1905, %v1904
        %1908 = vst [vmem:[#allocation3 + $0x8] sm:$0xff] %v1906
        %1909 = vst [vmem:[#allocation3 + $0x20] sm:$0xff] %v1907
        %v1911 = vrot.slane %v1906, 4
        %1913 = vst [vmem:[#allocation2] sm:$0xf0] %v1911
        %1914 = vst [vmem:[#allocation2 + $0x8] sm:$0xf] %v1911
        %v1915 = vld [vmem:[#allocation2] sm:$0xfc]
        %v1916 = vld [vmem:[#allocation2 + $0x8] sm:$0x7]
        %v1918 = vshrl.u32 %v1915, 16
        %v1920 = vrot.slane %v1918, 2
        %v1921 = vshll.u32 %v1915, 16
        %v1923 = vrot.slane %v1921, 3
        %v1924 = vor.u32 %v1920, %v1923
        %v1926 = vshrl.u32 %v1916, 16
        %v1928 = vrot.slane %v1926, 2
        %v1929 = vshll.u32 %v1916, 16
        %v1931 = vrot.slane %v1929, 3
        %v1932 = vor.u32 %v1928, %v1931
        %v1933 = vsel %vm709, %v1924, %v1932
        %1935 = vst [vmem:[#allocation3] sm:$0xff] %v1933
        %v1936 = vld [vmem:[#allocation2] sm:$0xe0]
        %v1937 = vld [vmem:[#allocation2 + $0x8] sm:$0x3f]
        %v1939 = vshrl.u32 %v1936, 16
        %v1941 = vrot.slane %v1939, 5
        %v1942 = vshll.u32 %v1936, 16
        %v1944 = vrot.slane %v1942, 6
        %v1945 = vor.u32 %v1941, %v1944
        %v1947 = vshrl.u32 %v1937, 16
        %v1949 = vrot.slane %v1947, 5
        %v1950 = vshll.u32 %v1937, 16
        %v1952 = vrot.slane %v1950, 6
        %v1953 = vor.u32 %v1949, %v1952
        %v1954 = vsel %vm731, %v1945, %v1953
        %1956 = vst [vmem:[#allocation3 + $0x10] sm:$0xff] %v1954
        %v1958 = vrot.slane %v1907, 4
        %1960 = vst [vmem:[%s551] sm:$0xf0] %v1958
        %1961 = vst [vmem:[%s551 + $0x8] sm:$0xf] %v1958
        %v1962 = vld [vmem:[%s551] sm:$0xfc]
        %v1963 = vld [vmem:[%s551 + $0x8] sm:$0x7]
        %v1965 = vshrl.u32 %v1962, 16
        %v1967 = vrot.slane %v1965, 2
        %v1968 = vshll.u32 %v1962, 16
        %v1970 = vrot.slane %v1968, 3
        %v1971 = vor.u32 %v1967, %v1970
        %v1973 = vshrl.u32 %v1963, 16
        %v1975 = vrot.slane %v1973, 2
        %v1976 = vshll.u32 %v1963, 16
        %v1978 = vrot.slane %v1976, 3
        %v1979 = vor.u32 %v1975, %v1978
        %v1980 = vsel %vm709, %v1971, %v1979
        %1982 = vst [vmem:[#allocation3 + $0x18] sm:$0xff] %v1980
        %v1983 = vld [vmem:[%s551] sm:$0xe0]
        %v1984 = vld [vmem:[%s551 + $0x8] sm:$0x3f]
        %v1986 = vshrl.u32 %v1983, 16
        %v1988 = vrot.slane %v1986, 5
        %v1989 = vshll.u32 %v1983, 16
        %v1991 = vrot.slane %v1989, 6
        %v1992 = vor.u32 %v1988, %v1991
        %v1994 = vshrl.u32 %v1984, 16
        %v1996 = vrot.slane %v1994, 5
        %v1997 = vshll.u32 %v1984, 16
        %v1999 = vrot.slane %v1997, 6
        %v2000 = vor.u32 %v1996, %v1999
        %v2001 = vsel %vm731, %v1992, %v2000
        %2003 = vst [vmem:[#allocation3 + $0x28] sm:$0xff] %v2001
        %v2004 = vld [vmem:[#allocation3] sm:$0xff]
        %v2005 = vld [vmem:[#allocation3 + $0x8] sm:$0xff]
        %v2006 = vld [vmem:[#allocation3 + $0x10] sm:$0xff]
        %v2007 = vld [vmem:[#allocation3 + $0x18] sm:$0xff]
        %v2008 = vld [vmem:[#allocation3 + $0x20] sm:$0xff]
        %v2009 = vld [vmem:[#allocation3 + $0x28] sm:$0xff]
        %s2010 = scalar_lea.vmem [#allocation9], 384
        %v2011 = vld [vmem:[%s2010] sm:$0xf]
        %v2012 = vld [vmem:[%s2010 + $0x4] sm:$0xf]
        %v2013 = vld [vmem:[%s2010 + $0x8] sm:$0xf]
        %v2014 = vld [vmem:[%s2010 + $0xc] sm:$0xf]
        %v2015 = vld [vmem:[%s2010 + $0x10] sm:$0xf]
        %v2016 = vld [vmem:[%s2010 + $0x14] sm:$0xf]
        %v2017 = vld [vmem:[%s2010 + $0x18] sm:$0xf]
        %v2018 = vld [vmem:[%s2010 + $0x1c] sm:$0xf]
        %v2019 = vld [vmem:[%s2010 + $0x20] sm:$0xf]
        %v2020 = vld [vmem:[%s2010 + $0x24] sm:$0xf]
        %v2021 = vld [vmem:[%s2010 + $0x28] sm:$0xf]
        %v2022 = vld [vmem:[%s2010 + $0x2c] sm:$0xf]
        %v2023 = vld [vmem:[%s2010 + $0x30] sm:$0xf]
        %v2024 = vld [vmem:[%s2010 + $0x34] sm:$0xf]
        %v2025 = vld [vmem:[%s2010 + $0x38] sm:$0xf]
        %v2026 = vld [vmem:[%s2010 + $0x3c] sm:$0xf]
        %v2027 = vld [vmem:[%s2010 + $0x40] sm:$0xf]
        %v2028 = vld [vmem:[%s2010 + $0x44] sm:$0xf]
        %v2029 = vld [vmem:[%s2010 + $0x48] sm:$0xf]
        %v2030 = vld [vmem:[%s2010 + $0x4c] sm:$0xf]
        %v2031 = vld [vmem:[%s2010 + $0x50] sm:$0xf]
        %v2032 = vld [vmem:[%s2010 + $0x54] sm:$0xf]
        %v2033 = vld [vmem:[%s2010 + $0x58] sm:$0xf]
        %v2034 = vld [vmem:[%s2010 + $0x5c] sm:$0xf]
        %v2035 = vld [vmem:[%s2010 + $0x60] sm:$0xf]
        %v2036 = vld [vmem:[%s2010 + $0x64] sm:$0xf]
        %v2037 = vld [vmem:[%s2010 + $0x68] sm:$0xf]
        %v2038 = vld [vmem:[%s2010 + $0x6c] sm:$0xf]
        %v2039 = vld [vmem:[%s2010 + $0x70] sm:$0xf]
        %v2040 = vld [vmem:[%s2010 + $0x74] sm:$0xf]
        %v2041 = vld [vmem:[%s2010 + $0x78] sm:$0xf]
        %v2042 = vld [vmem:[%s2010 + $0x7c] sm:$0xf]
        %v2043 = vld [vmem:[%s2010 + $0x80] sm:$0xf]
        %v2044 = vld [vmem:[%s2010 + $0x84] sm:$0xf]
        %v2045 = vld [vmem:[%s2010 + $0x88] sm:$0xf]
        %v2046 = vld [vmem:[%s2010 + $0x8c] sm:$0xf]
        %v2047 = vld [vmem:[%s2010 + $0x90] sm:$0xf]
        %v2048 = vld [vmem:[%s2010 + $0x94] sm:$0xf]
        %v2049 = vld [vmem:[%s2010 + $0x98] sm:$0xf]
        %v2050 = vld [vmem:[%s2010 + $0x9c] sm:$0xf]
        %v2051 = vld [vmem:[%s2010 + $0xa0] sm:$0xf]
        %v2052 = vld [vmem:[%s2010 + $0xa4] sm:$0xf]
        %v2053 = vld [vmem:[%s2010 + $0xa8] sm:$0xf]
        %v2054 = vld [vmem:[%s2010 + $0xac] sm:$0xf]
        %v2055 = vld [vmem:[%s2010 + $0xb0] sm:$0xf]
        %v2056 = vld [vmem:[%s2010 + $0xb4] sm:$0xf]
        %v2057 = vld [vmem:[%s2010 + $0xb8] sm:$0xf]
        %v2058 = vld [vmem:[%s2010 + $0xbc] sm:$0xf]
        %s2059 = scalar_lea.vmem %s4, 2
        %v2060 = vld [vmem:[%s2059] sm:$0x1]
        %v2062 = vlaneseq
        %v2063 = vshrl.u32 %v2062, 7
        %v2064 = vsub.s32 0, %v2063
        %v2065 = vrot.slane %v2060, %v2064
        %v2115 = vunpack.c.l.b16 %v2011
        %v2116 = vunpack.c.l.b16 %v2012
        %v2117 = vunpack.c.l.b16 %v2013
        %v2118 = vunpack.c.l.b16 %v2014
        %v2119 = vunpack.c.l.b16 %v2015
        %v2120 = vunpack.c.l.b16 %v2016
        %v2121 = vunpack.c.l.b16 %v2017
        %v2122 = vunpack.c.l.b16 %v2018
        %v2123 = vunpack.c.l.b16 %v2019
        %v2124 = vunpack.c.l.b16 %v2020
        %v2125 = vunpack.c.l.b16 %v2021
        %v2126 = vunpack.c.l.b16 %v2022
        %v2127 = vunpack.c.l.b16 %v2023
        %v2128 = vunpack.c.l.b16 %v2024
        %v2129 = vunpack.c.l.b16 %v2025
        %v2130 = vunpack.c.l.b16 %v2026
        %v2131 = vunpack.c.l.b16 %v2027
        %v2132 = vunpack.c.l.b16 %v2028
        %v2133 = vunpack.c.l.b16 %v2029
        %v2134 = vunpack.c.l.b16 %v2030
        %v2135 = vunpack.c.l.b16 %v2031
        %v2136 = vunpack.c.l.b16 %v2032
        %v2137 = vunpack.c.l.b16 %v2033
        %v2138 = vunpack.c.l.b16 %v2034
        %v2139 = vunpack.c.l.b16 %v2035
        %v2140 = vunpack.c.l.b16 %v2036
        %v2141 = vunpack.c.l.b16 %v2037
        %v2142 = vunpack.c.l.b16 %v2038
        %v2143 = vunpack.c.l.b16 %v2039
        %v2144 = vunpack.c.l.b16 %v2040
        %v2145 = vunpack.c.l.b16 %v2041
        %v2146 = vunpack.c.l.b16 %v2042
        %v2147 = vunpack.c.l.b16 %v2043
        %v2148 = vunpack.c.l.b16 %v2044
        %v2149 = vunpack.c.l.b16 %v2045
        %v2150 = vunpack.c.l.b16 %v2046
        %v2151 = vunpack.c.l.b16 %v2047
        %v2152 = vunpack.c.l.b16 %v2048
        %v2153 = vunpack.c.l.b16 %v2049
        %v2154 = vunpack.c.l.b16 %v2050
        %v2155 = vunpack.c.l.b16 %v2051
        %v2156 = vunpack.c.l.b16 %v2052
        %v2157 = vunpack.c.l.b16 %v2053
        %v2158 = vunpack.c.l.b16 %v2054
        %v2159 = vunpack.c.l.b16 %v2055
        %v2160 = vunpack.c.l.b16 %v2056
        %v2161 = vunpack.c.l.b16 %v2057
        %v2162 = vunpack.c.l.b16 %v2058
        %v2163 = vpack.c.b16 %v2116, %v2115
        %v2164 = vpack.c.b16 %v2118, %v2117
        %v2165 = vpack.c.b16 %v2120, %v2119
        %v2166 = vpack.c.b16 %v2122, %v2121
        %v2167 = vpack.c.b16 %v2124, %v2123
        %v2168 = vpack.c.b16 %v2126, %v2125
        %v2169 = vpack.c.b16 %v2128, %v2127
        %v2170 = vpack.c.b16 %v2130, %v2129
        %v2171 = vpack.c.b16 %v2132, %v2131
        %v2172 = vpack.c.b16 %v2134, %v2133
        %v2173 = vpack.c.b16 %v2136, %v2135
        %v2174 = vpack.c.b16 %v2138, %v2137
        %v2175 = vpack.c.b16 %v2140, %v2139
        %v2176 = vpack.c.b16 %v2142, %v2141
        %v2177 = vpack.c.b16 %v2144, %v2143
        %v2178 = vpack.c.b16 %v2146, %v2145
        %v2179 = vpack.c.b16 %v2148, %v2147
        %v2180 = vpack.c.b16 %v2150, %v2149
        %v2181 = vpack.c.b16 %v2152, %v2151
        %v2182 = vpack.c.b16 %v2154, %v2153
        %v2183 = vpack.c.b16 %v2156, %v2155
        %v2184 = vpack.c.b16 %v2158, %v2157
        %v2185 = vpack.c.b16 %v2160, %v2159
        %v2186 = vpack.c.b16 %v2162, %v2161
        %2211 = vmatprep.subr.bf16.mxu0 0
        %2212 = vmatpush1.bf16.msra.mxu0 %v2163
        %2213 = vmatprep.subr.bf16.mxu0 0
        %2214 = vmatpush1.bf16.msra.mxu0 %v2164
        %2215 = vmatprep.subr.bf16.mxu0 0
        %2216 = vmatpush1.bf16.msra.mxu0 %v2165
        %2217 = vmatprep.subr.bf16.mxu0 0
        %2218 = vmatpush1.bf16.msra.mxu0 %v2166
        %2219 = vmatprep.subr.bf16.mxu0 0
        %2220 = vmatpush1.bf16.msra.mxu0 %v2167
        %2221 = vmatprep.subr.bf16.mxu0 0
        %2222 = vmatpush1.bf16.msra.mxu0 %v2168
        %2223 = vmatprep.subr.bf16.mxu0 0
        %2224 = vmatpush1.bf16.msra.mxu0 %v2169
        %2225 = vmatprep.subr.bf16.mxu0 0
        %2226 = vmatpush1.bf16.msra.mxu0 %v2170
        %2227 = vmatprep.subr.bf16.mxu0 0
        %2228 = vmatpush1.bf16.msra.mxu0 %v2171
        %2229 = vmatprep.subr.bf16.mxu0 0
        %2230 = vmatpush1.bf16.msra.mxu0 %v2172
        %2231 = vmatprep.subr.bf16.mxu0 0
        %2232 = vmatpush1.bf16.msra.mxu0 %v2173
        %2233 = vmatprep.subr.bf16.mxu0 0
        %2234 = vmatpush1.bf16.msra.mxu0 %v2174
        %2235 = vmatprep.subr.bf16.mxu0 0
        %2236 = vmatpush1.bf16.msra.mxu0 %v2175
        %2237 = vmatprep.subr.bf16.mxu0 0
        %2238 = vmatpush1.bf16.msra.mxu0 %v2176
        %2239 = vmatprep.subr.bf16.mxu0 0
        %2240 = vmatpush1.bf16.msra.mxu0 %v2177
        %2241 = vmatprep.subr.bf16.mxu0 0
        %2242 = vmatpush1.bf16.msra.mxu0 %v2178
        %2243 = vmatprep.mubr.bf16.mxu0 %v2005
        %2244 = vmatmul.mubr.bf16.gmra.mrb[0].mxu0 %v2004
        %v2245 = vpop.f32.mrb[0].mxu0
        %v2246 = vadd.f32 %v2065, %v2245
        %v2247 = vpop.f32.mrb[0].mxu0
        %v2248 = vpop.f32.mrb[0].mxu0
        %v2249 = vadd.f32 %v2065, %v2248
        %v2250 = vpop.f32.mrb[0].mxu0
        %2251 = vmatprep.mubr.bf16.mxu0 %v2008
        %2252 = vmatmul.mubr.bf16.gmra.mrb[0].mxu0 %v2007
        %v2253 = vpop.f32.mrb[0].mxu0
        %v2254 = vadd.f32 %v2065, %v2253
        %v2255 = vpop.f32.mrb[0].mxu0
        %v2256 = vpop.f32.mrb[0].mxu0
        %v2257 = vadd.f32 %v2065, %v2256
        %v2258 = vpop.f32.mrb[0].mxu0
        %2259 = vdwg.mxu0
        %2260 = vmatprep.subr.bf16.mxu0 0
        %2261 = vmatpush1.bf16.msra.mxu0 %v2179
        %2262 = vmatprep.subr.bf16.mxu0 0
        %2263 = vmatpush1.bf16.msra.mxu0 %v2180
        %2264 = vmatprep.subr.bf16.mxu0 0
        %2265 = vmatpush1.bf16.msra.mxu0 %v2181
        %2266 = vmatprep.subr.bf16.mxu0 0
        %2267 = vmatpush1.bf16.msra.mxu0 %v2182
        %2268 = vmatprep.subr.bf16.mxu0 0
        %2269 = vmatpush1.bf16.msra.mxu0 %v2183
        %2270 = vmatprep.subr.bf16.mxu0 0
        %2271 = vmatpush1.bf16.msra.mxu0 %v2184
        %2272 = vmatprep.subr.bf16.mxu0 0
        %2273 = vmatpush1.bf16.msra.mxu0 %v2185
        %2274 = vmatprep.subr.bf16.mxu0 0
        %2275 = vmatpush1.bf16.msra.mxu0 %v2186
        %2276 = vmatprep.subr.bf16.mxu0 0
        %2277 = vmatpush1.bf16.msra.mxu0 0
        %2278 = vmatprep.subr.bf16.mxu0 0
        %2279 = vmatpush1.bf16.msra.mxu0 0
        %2280 = vmatprep.subr.bf16.mxu0 0
        %2281 = vmatpush1.bf16.msra.mxu0 0
        %2282 = vmatprep.subr.bf16.mxu0 0
        %2283 = vmatpush1.bf16.msra.mxu0 0
        %2284 = vmatprep.subr.bf16.mxu0 0
        %2285 = vmatpush1.bf16.msra.mxu0 0
        %2286 = vmatprep.subr.bf16.mxu0 0
        %2287 = vmatpush1.bf16.msra.mxu0 0
        %2288 = vmatprep.subr.bf16.mxu0 0
        %2289 = vmatpush1.bf16.msra.mxu0 0
        %2290 = vmatprep.subr.bf16.mxu0 0
        %2291 = vmatpush1.bf16.msra.mxu0 0
        %2292 = vmatprep.mubr.bf16.mxu0 0
        %2293 = vmatmul.mubr.bf16.gmra.mrb[0].mxu0 %v2006
        %v2294 = vpop.f32.mrb[0].mxu0
        %v2295 = vadd.f32 %v2246, %v2294
        %v2296 = vpop.f32.mrb[0].mxu0
        %v2297 = vpop.f32.mrb[0].mxu0
        %v2298 = vadd.f32 %v2249, %v2297
        %v2299 = vpop.f32.mrb[0].mxu0
        %2300 = vmatprep.mubr.bf16.mxu0 0
        %2301 = vmatmul.mubr.bf16.gmra.mrb[0].mxu0 %v2009
        %v2302 = vpop.f32.mrb[0].mxu0
        %v2303 = vadd.f32 %v2254, %v2302
        %v2304 = vpop.f32.mrb[0].mxu0
        %v2305 = vpop.f32.mrb[0].mxu0
        %v2306 = vadd.f32 %v2257, %v2305
        %v2307 = vpop.f32.mrb[0].mxu0
        %2308 = vdwg.mxu0
        %v2309 = vmax.f32 %v2295, 0.0
        %v2310 = vmax.f32 %v2298, 0.0
        %v2311 = vmax.f32 %v2303, 0.0
        %v2312 = vmax.f32 %v2306, 0.0
        %v2313 = vpack.c.bf16 %v2310, %v2309
        %v2314 = vpack.c.bf16 %v2312, %v2311
        %s2315 = scalar_lea.vmem [#allocation10], 128
        %v2316 = vld [vmem:[%s2315] sm:$0xf]
        %v2317 = vld [vmem:[%s2315 + $0x4] sm:$0xf]
        %v2318 = vld [vmem:[%s2315 + $0x8] sm:$0xf]
        %v2319 = vld [vmem:[%s2315 + $0xc] sm:$0xf]
        %v2320 = vld [vmem:[%s2315 + $0x10] sm:$0xf]
        %v2321 = vld [vmem:[%s2315 + $0x14] sm:$0xf]
        %v2322 = vld [vmem:[%s2315 + $0x18] sm:$0xf]
        %v2323 = vld [vmem:[%s2315 + $0x1c] sm:$0xf]
        %v2324 = vld [vmem:[%s2315 + $0x20] sm:$0xf]
        %v2325 = vld [vmem:[%s2315 + $0x24] sm:$0xf]
        %v2326 = vld [vmem:[%s2315 + $0x28] sm:$0xf]
        %v2327 = vld [vmem:[%s2315 + $0x2c] sm:$0xf]
        %v2328 = vld [vmem:[%s2315 + $0x30] sm:$0xf]
        %v2329 = vld [vmem:[%s2315 + $0x34] sm:$0xf]
        %v2330 = vld [vmem:[%s2315 + $0x38] sm:$0xf]
        %v2331 = vld [vmem:[%s2315 + $0x3c] sm:$0xf]
        %v2348 = vunpack.c.l.b16 %v2316
        %v2349 = vunpack.c.l.b16 %v2317
        %v2350 = vunpack.c.l.b16 %v2318
        %v2351 = vunpack.c.l.b16 %v2319
        %v2352 = vunpack.c.l.b16 %v2320
        %v2353 = vunpack.c.l.b16 %v2321
        %v2354 = vunpack.c.l.b16 %v2322
        %v2355 = vunpack.c.l.b16 %v2323
        %v2356 = vunpack.c.l.b16 %v2324
        %v2357 = vunpack.c.l.b16 %v2325
        %v2358 = vunpack.c.l.b16 %v2326
        %v2359 = vunpack.c.l.b16 %v2327
        %v2360 = vunpack.c.l.b16 %v2328
        %v2361 = vunpack.c.l.b16 %v2329
        %v2362 = vunpack.c.l.b16 %v2330
        %v2363 = vunpack.c.l.b16 %v2331
        %v2364 = vpack.c.b16 %v2349, %v2348
        %v2365 = vpack.c.b16 %v2351, %v2350
        %v2366 = vpack.c.b16 %v2353, %v2352
        %v2367 = vpack.c.b16 %v2355, %v2354
        %v2368 = vpack.c.b16 %v2357, %v2356
        %v2369 = vpack.c.b16 %v2359, %v2358
        %v2370 = vpack.c.b16 %v2361, %v2360
        %v2371 = vpack.c.b16 %v2363, %v2362
        %2380 = vmatprep.subr.bf16.mxu0 0
        %2381 = vmatpush1.bf16.msra.mxu0 %v2364
        %2382 = vmatprep.subr.bf16.mxu0 0
        %2383 = vmatpush1.bf16.msra.mxu0 %v2365
        %2384 = vmatprep.subr.bf16.mxu0 0
        %2385 = vmatpush1.bf16.msra.mxu0 %v2366
        %2386 = vmatprep.subr.bf16.mxu0 0
        %2387 = vmatpush1.bf16.msra.mxu0 %v2367
        %2388 = vmatprep.subr.bf16.mxu0 0
        %2389 = vmatpush1.bf16.msra.mxu0 %v2368
        %2390 = vmatprep.subr.bf16.mxu0 0
        %2391 = vmatpush1.bf16.msra.mxu0 %v2369
        %2392 = vmatprep.subr.bf16.mxu0 0
        %2393 = vmatpush1.bf16.msra.mxu0 %v2370
        %2394 = vmatprep.subr.bf16.mxu0 0
        %2395 = vmatpush1.bf16.msra.mxu0 %v2371
        %2396 = vmatprep.subr.bf16.mxu0 0
        %2397 = vmatpush1.bf16.msra.mxu0 0
        %2398 = vmatprep.subr.bf16.mxu0 0
        %2399 = vmatpush1.bf16.msra.mxu0 0
        %2400 = vmatprep.subr.bf16.mxu0 0
        %2401 = vmatpush1.bf16.msra.mxu0 0
        %2402 = vmatprep.subr.bf16.mxu0 0
        %2403 = vmatpush1.bf16.msra.mxu0 0
        %2404 = vmatprep.subr.bf16.mxu0 0
        %2405 = vmatpush1.bf16.msra.mxu0 0
        %2406 = vmatprep.subr.bf16.mxu0 0
        %2407 = vmatpush1.bf16.msra.mxu0 0
        %2408 = vmatprep.subr.bf16.mxu0 0
        %2409 = vmatpush1.bf16.msra.mxu0 0
        %2410 = vmatprep.subr.bf16.mxu0 0
        %2411 = vmatpush1.bf16.msra.mxu0 0
        %2412 = vmatprep.mubr.bf16.mxu0 0
        %2413 = vmatmul.mubr.bf16.gmra.mrb[0].mxu0 %v2313
        %v2414 = vpop.f32.mrb[0].mxu0
        %v2415 = vadd.f32 0.0, %v2414
        %v2416 = vpop.f32.mrb[0].mxu0
        %v2417 = vpop.f32.mrb[0].mxu0
        %v2418 = vadd.f32 0.0, %v2417
        %v2419 = vpop.f32.mrb[0].mxu0
        %2420 = vmatprep.mubr.bf16.mxu0 0
        %2421 = vmatmul.mubr.bf16.gmra.mrb[0].mxu0 %v2314
        %v2422 = vpop.f32.mrb[0].mxu0
        %v2423 = vadd.f32 0.0, %v2422
        %v2424 = vpop.f32.mrb[0].mxu0
        %v2425 = vpop.f32.mrb[0].mxu0
        %v2426 = vadd.f32 0.0, %v2425
        %v2427 = vpop.f32.mrb[0].mxu0
        %2428 = vdwg.mxu0
        %v2429 = vadd.f32 %v1888, %v2415
        %v2430 = vadd.f32 %v1891, %v2418
        %v2431 = vadd.f32 %v1896, %v2423
        %v2432 = vadd.f32 %v1899, %v2426
        %s2433 = scalar_lea.vmem %s6, 2
        %v2434 = vld [vmem:[%s2433] sm:$0x1]
        %v2436 = vlaneseq
        %v2437 = vshrl.u32 %v2436, 7
        %v2438 = vsub.s32 0, %v2437
        %v2439 = vrot.slane %v2434, %v2438
        %v2441 = vadd.f32 %v2429, %v2439
        %v2442 = vadd.f32 %v2430, %v2439
        %v2443 = vadd.f32 %v2431, %v2439
        %v2444 = vadd.f32 %v2432, %v2439
        %v2445 = vmax.f32 %v2441, 0.0
        %v2446 = vmax.f32 %v2442, 0.0
        %v2447 = vmax.f32 %v2443, 0.0
        %v2448 = vmax.f32 %v2444, 0.0
        %v2449 = vpack.c.bf16 %v2446, %v2445
        %v2450 = vpack.c.bf16 %v2448, %v2447
        %2451 = vst [vmem:[#allocation3 + $0x8] sm:$0xff] %v2449
        %2452 = vst [vmem:[#allocation3 + $0x20] sm:$0xff] %v2450
        %v2454 = vrot.slane %v2449, 4
        %2456 = vst [vmem:[#allocation2] sm:$0xf0] %v2454
        %2457 = vst [vmem:[#allocation2 + $0x8] sm:$0xf] %v2454
        %v2458 = vld [vmem:[#allocation2] sm:$0xf8]
        %v2459 = vld [vmem:[#allocation2 + $0x8] sm:$0xf]
        %v2461 = vshrl.u32 %v2458, 16
        %v2463 = vrot.slane %v2461, 3
        %v2464 = vshll.u32 %v2458, 16
        %v2466 = vrot.slane %v2464, 4
        %v2467 = vor.u32 %v2463, %v2466
        %v2469 = vshrl.u32 %v2459, 16
        %v2471 = vrot.slane %v2469, 3
        %v2472 = vshll.u32 %v2459, 16
        %v2474 = vrot.slane %v2472, 4
        %v2475 = vor.u32 %v2471, %v2474
        %v2476 = vsel %vm1250, %v2467, %v2475
        %2478 = vst [vmem:[#allocation3] sm:$0xff] %v2476
        %v2479 = vld [vmem:[#allocation2] sm:$0xf0]
        %v2480 = vld [vmem:[#allocation2 + $0x8] sm:$0x1f]
        %v2482 = vshrl.u32 %v2479, 16
        %v2484 = vrot.slane %v2482, 4
        %v2485 = vshll.u32 %v2479, 16
        %v2487 = vrot.slane %v2485, 5
        %v2488 = vor.u32 %v2484, %v2487
        %v2490 = vshrl.u32 %v2480, 16
        %v2492 = vrot.slane %v2490, 4
        %v2493 = vshll.u32 %v2480, 16
        %v2495 = vrot.slane %v2493, 5
        %v2496 = vor.u32 %v2492, %v2495
        %v2497 = vsel %vm1272, %v2488, %v2496
        %2499 = vst [vmem:[#allocation3 + $0x10] sm:$0xff] %v2497
        %v2501 = vrot.slane %v2450, 4
        %2503 = vst [vmem:[%s551] sm:$0xf0] %v2501
        %2504 = vst [vmem:[%s551 + $0x8] sm:$0xf] %v2501
        %v2505 = vld [vmem:[%s551] sm:$0xf8]
        %v2506 = vld [vmem:[%s551 + $0x8] sm:$0xf]
        %v2508 = vshrl.u32 %v2505, 16
        %v2510 = vrot.slane %v2508, 3
        %v2511 = vshll.u32 %v2505, 16
        %v2513 = vrot.slane %v2511, 4
        %v2514 = vor.u32 %v2510, %v2513
        %v2516 = vshrl.u32 %v2506, 16
        %v2518 = vrot.slane %v2516, 3
        %v2519 = vshll.u32 %v2506, 16
        %v2521 = vrot.slane %v2519, 4
        %v2522 = vor.u32 %v2518, %v2521
        %v2523 = vsel %vm1250, %v2514, %v2522
        %2525 = vst [vmem:[#allocation3 + $0x18] sm:$0xff] %v2523
        %v2526 = vld [vmem:[%s551] sm:$0xf0]
        %v2527 = vld [vmem:[%s551 + $0x8] sm:$0x1f]
        %v2529 = vshrl.u32 %v2526, 16
        %v2531 = vrot.slane %v2529, 4
        %v2532 = vshll.u32 %v2526, 16
        %v2534 = vrot.slane %v2532, 5
        %v2535 = vor.u32 %v2531, %v2534
        %v2537 = vshrl.u32 %v2527, 16
        %v2539 = vrot.slane %v2537, 4
        %v2540 = vshll.u32 %v2527, 16
        %v2542 = vrot.slane %v2540, 5
        %v2543 = vor.u32 %v2539, %v2542
        %v2544 = vsel %vm1272, %v2535, %v2543
        %2546 = vst [vmem:[#allocation3 + $0x28] sm:$0xff] %v2544
        %v2547 = vld [vmem:[#allocation3] sm:$0xff]
        %v2548 = vld [vmem:[#allocation3 + $0x8] sm:$0xff]
        %v2549 = vld [vmem:[#allocation3 + $0x10] sm:$0xff]
        %v2550 = vld [vmem:[#allocation3 + $0x18] sm:$0xff]
        %v2551 = vld [vmem:[#allocation3 + $0x20] sm:$0xff]
        %v2552 = vld [vmem:[#allocation3 + $0x28] sm:$0xff]
        %s2553 = scalar_lea.vmem [#allocation9], 576
        %v2554 = vld [vmem:[%s2553] sm:$0xf]
        %v2555 = vld [vmem:[%s2553 + $0x4] sm:$0xf]
        %v2556 = vld [vmem:[%s2553 + $0x8] sm:$0xf]
        %v2557 = vld [vmem:[%s2553 + $0xc] sm:$0xf]
        %v2558 = vld [vmem:[%s2553 + $0x10] sm:$0xf]
        %v2559 = vld [vmem:[%s2553 + $0x14] sm:$0xf]
        %v2560 = vld [vmem:[%s2553 + $0x18] sm:$0xf]
        %v2561 = vld [vmem:[%s2553 + $0x1c] sm:$0xf]
        %v2562 = vld [vmem:[%s2553 + $0x20] sm:$0xf]
        %v2563 = vld [vmem:[%s2553 + $0x24] sm:$0xf]
        %v2564 = vld [vmem:[%s2553 + $0x28] sm:$0xf]
        %v2565 = vld [vmem:[%s2553 + $0x2c] sm:$0xf]
        %v2566 = vld [vmem:[%s2553 + $0x30] sm:$0xf]
        %v2567 = vld [vmem:[%s2553 + $0x34] sm:$0xf]
        %v2568 = vld [vmem:[%s2553 + $0x38] sm:$0xf]
        %v2569 = vld [vmem:[%s2553 + $0x3c] sm:$0xf]
        %v2570 = vld [vmem:[%s2553 + $0x40] sm:$0xf]
        %v2571 = vld [vmem:[%s2553 + $0x44] sm:$0xf]
        %v2572 = vld [vmem:[%s2553 + $0x48] sm:$0xf]
        %v2573 = vld [vmem:[%s2553 + $0x4c] sm:$0xf]
        %v2574 = vld [vmem:[%s2553 + $0x50] sm:$0xf]
        %v2575 = vld [vmem:[%s2553 + $0x54] sm:$0xf]
        %v2576 = vld [vmem:[%s2553 + $0x58] sm:$0xf]
        %v2577 = vld [vmem:[%s2553 + $0x5c] sm:$0xf]
        %v2578 = vld [vmem:[%s2553 + $0x60] sm:$0xf]
        %v2579 = vld [vmem:[%s2553 + $0x64] sm:$0xf]
        %v2580 = vld [vmem:[%s2553 + $0x68] sm:$0xf]
        %v2581 = vld [vmem:[%s2553 + $0x6c] sm:$0xf]
        %v2582 = vld [vmem:[%s2553 + $0x70] sm:$0xf]
        %v2583 = vld [vmem:[%s2553 + $0x74] sm:$0xf]
        %v2584 = vld [vmem:[%s2553 + $0x78] sm:$0xf]
        %v2585 = vld [vmem:[%s2553 + $0x7c] sm:$0xf]
        %v2586 = vld [vmem:[%s2553 + $0x80] sm:$0xf]
        %v2587 = vld [vmem:[%s2553 + $0x84] sm:$0xf]
        %v2588 = vld [vmem:[%s2553 + $0x88] sm:$0xf]
        %v2589 = vld [vmem:[%s2553 + $0x8c] sm:$0xf]
        %v2590 = vld [vmem:[%s2553 + $0x90] sm:$0xf]
        %v2591 = vld [vmem:[%s2553 + $0x94] sm:$0xf]
        %v2592 = vld [vmem:[%s2553 + $0x98] sm:$0xf]
        %v2593 = vld [vmem:[%s2553 + $0x9c] sm:$0xf]
        %v2594 = vld [vmem:[%s2553 + $0xa0] sm:$0xf]
        %v2595 = vld [vmem:[%s2553 + $0xa4] sm:$0xf]
        %v2596 = vld [vmem:[%s2553 + $0xa8] sm:$0xf]
        %v2597 = vld [vmem:[%s2553 + $0xac] sm:$0xf]
        %v2598 = vld [vmem:[%s2553 + $0xb0] sm:$0xf]
        %v2599 = vld [vmem:[%s2553 + $0xb4] sm:$0xf]
        %v2600 = vld [vmem:[%s2553 + $0xb8] sm:$0xf]
        %v2601 = vld [vmem:[%s2553 + $0xbc] sm:$0xf]
        %s2602 = scalar_lea.vmem %s4, 3
        %v2603 = vld [vmem:[%s2602] sm:$0x1]
        %v2605 = vlaneseq
        %v2606 = vshrl.u32 %v2605, 7
        %v2607 = vsub.s32 0, %v2606
        %v2608 = vrot.slane %v2603, %v2607
        %v2658 = vunpack.c.l.b16 %v2554
        %v2659 = vunpack.c.l.b16 %v2555
        %v2660 = vunpack.c.l.b16 %v2556
        %v2661 = vunpack.c.l.b16 %v2557
        %v2662 = vunpack.c.l.b16 %v2558
        %v2663 = vunpack.c.l.b16 %v2559
        %v2664 = vunpack.c.l.b16 %v2560
        %v2665 = vunpack.c.l.b16 %v2561
        %v2666 = vunpack.c.l.b16 %v2562
        %v2667 = vunpack.c.l.b16 %v2563
        %v2668 = vunpack.c.l.b16 %v2564
        %v2669 = vunpack.c.l.b16 %v2565
        %v2670 = vunpack.c.l.b16 %v2566
        %v2671 = vunpack.c.l.b16 %v2567
        %v2672 = vunpack.c.l.b16 %v2568
        %v2673 = vunpack.c.l.b16 %v2569
        %v2674 = vunpack.c.l.b16 %v2570
        %v2675 = vunpack.c.l.b16 %v2571
        %v2676 = vunpack.c.l.b16 %v2572
        %v2677 = vunpack.c.l.b16 %v2573
        %v2678 = vunpack.c.l.b16 %v2574
        %v2679 = vunpack.c.l.b16 %v2575
        %v2680 = vunpack.c.l.b16 %v2576
        %v2681 = vunpack.c.l.b16 %v2577
        %v2682 = vunpack.c.l.b16 %v2578
        %v2683 = vunpack.c.l.b16 %v2579
        %v2684 = vunpack.c.l.b16 %v2580
        %v2685 = vunpack.c.l.b16 %v2581
        %v2686 = vunpack.c.l.b16 %v2582
        %v2687 = vunpack.c.l.b16 %v2583
        %v2688 = vunpack.c.l.b16 %v2584
        %v2689 = vunpack.c.l.b16 %v2585
        %v2690 = vunpack.c.l.b16 %v2586
        %v2691 = vunpack.c.l.b16 %v2587
        %v2692 = vunpack.c.l.b16 %v2588
        %v2693 = vunpack.c.l.b16 %v2589
        %v2694 = vunpack.c.l.b16 %v2590
        %v2695 = vunpack.c.l.b16 %v2591
        %v2696 = vunpack.c.l.b16 %v2592
        %v2697 = vunpack.c.l.b16 %v2593
        %v2698 = vunpack.c.l.b16 %v2594
        %v2699 = vunpack.c.l.b16 %v2595
        %v2700 = vunpack.c.l.b16 %v2596
        %v2701 = vunpack.c.l.b16 %v2597
        %v2702 = vunpack.c.l.b16 %v2598
        %v2703 = vunpack.c.l.b16 %v2599
        %v2704 = vunpack.c.l.b16 %v2600
        %v2705 = vunpack.c.l.b16 %v2601
        %v2706 = vpack.c.b16 %v2659, %v2658
        %v2707 = vpack.c.b16 %v2661, %v2660
        %v2708 = vpack.c.b16 %v2663, %v2662
        %v2709 = vpack.c.b16 %v2665, %v2664
        %v2710 = vpack.c.b16 %v2667, %v2666
        %v2711 = vpack.c.b16 %v2669, %v2668
        %v2712 = vpack.c.b16 %v2671, %v2670
        %v2713 = vpack.c.b16 %v2673, %v2672
        %v2714 = vpack.c.b16 %v2675, %v2674
        %v2715 = vpack.c.b16 %v2677, %v2676
        %v2716 = vpack.c.b16 %v2679, %v2678
        %v2717 = vpack.c.b16 %v2681, %v2680
        %v2718 = vpack.c.b16 %v2683, %v2682
        %v2719 = vpack.c.b16 %v2685, %v2684
        %v2720 = vpack.c.b16 %v2687, %v2686
        %v2721 = vpack.c.b16 %v2689, %v2688
        %v2722 = vpack.c.b16 %v2691, %v2690
        %v2723 = vpack.c.b16 %v2693, %v2692
        %v2724 = vpack.c.b16 %v2695, %v2694
        %v2725 = vpack.c.b16 %v2697, %v2696
        %v2726 = vpack.c.b16 %v2699, %v2698
        %v2727 = vpack.c.b16 %v2701, %v2700
        %v2728 = vpack.c.b16 %v2703, %v2702
        %v2729 = vpack.c.b16 %v2705, %v2704
        %2754 = vmatprep.subr.bf16.mxu0 0
        %2755 = vmatpush1.bf16.msra.mxu0 %v2706
        %2756 = vmatprep.subr.bf16.mxu0 0
        %2757 = vmatpush1.bf16.msra.mxu0 %v2707
        %2758 = vmatprep.subr.bf16.mxu0 0
        %2759 = vmatpush1.bf16.msra.mxu0 %v2708
        %2760 = vmatprep.subr.bf16.mxu0 0
        %2761 = vmatpush1.bf16.msra.mxu0 %v2709
        %2762 = vmatprep.subr.bf16.mxu0 0
        %2763 = vmatpush1.bf16.msra.mxu0 %v2710
        %2764 = vmatprep.subr.bf16.mxu0 0
        %2765 = vmatpush1.bf16.msra.mxu0 %v2711
        %2766 = vmatprep.subr.bf16.mxu0 0
        %2767 = vmatpush1.bf16.msra.mxu0 %v2712
        %2768 = vmatprep.subr.bf16.mxu0 0
        %2769 = vmatpush1.bf16.msra.mxu0 %v2713
        %2770 = vmatprep.subr.bf16.mxu0 0
        %2771 = vmatpush1.bf16.msra.mxu0 %v2714
        %2772 = vmatprep.subr.bf16.mxu0 0
        %2773 = vmatpush1.bf16.msra.mxu0 %v2715
        %2774 = vmatprep.subr.bf16.mxu0 0
        %2775 = vmatpush1.bf16.msra.mxu0 %v2716
        %2776 = vmatprep.subr.bf16.mxu0 0
        %2777 = vmatpush1.bf16.msra.mxu0 %v2717
        %2778 = vmatprep.subr.bf16.mxu0 0
        %2779 = vmatpush1.bf16.msra.mxu0 %v2718
        %2780 = vmatprep.subr.bf16.mxu0 0
        %2781 = vmatpush1.bf16.msra.mxu0 %v2719
        %2782 = vmatprep.subr.bf16.mxu0 0
        %2783 = vmatpush1.bf16.msra.mxu0 %v2720
        %2784 = vmatprep.subr.bf16.mxu0 0
        %2785 = vmatpush1.bf16.msra.mxu0 %v2721
        %2786 = vmatprep.mubr.bf16.mxu0 %v2548
        %2787 = vmatmul.mubr.bf16.gmra.mrb[0].mxu0 %v2547
        %v2788 = vpop.f32.mrb[0].mxu0
        %v2789 = vadd.f32 %v2608, %v2788
        %v2790 = vpop.f32.mrb[0].mxu0
        %v2791 = vpop.f32.mrb[0].mxu0
        %v2792 = vadd.f32 %v2608, %v2791
        %v2793 = vpop.f32.mrb[0].mxu0
        %2794 = vmatprep.mubr.bf16.mxu0 %v2551
        %2795 = vmatmul.mubr.bf16.gmra.mrb[0].mxu0 %v2550
        %v2796 = vpop.f32.mrb[0].mxu0
        %v2797 = vadd.f32 %v2608, %v2796
        %v2798 = vpop.f32.mrb[0].mxu0
        %v2799 = vpop.f32.mrb[0].mxu0
        %v2800 = vadd.f32 %v2608, %v2799
        %v2801 = vpop.f32.mrb[0].mxu0
        %2802 = vdwg.mxu0
        %2803 = vmatprep.subr.bf16.mxu0 0
        %2804 = vmatpush1.bf16.msra.mxu0 %v2722
        %2805 = vmatprep.subr.bf16.mxu0 0
        %2806 = vmatpush1.bf16.msra.mxu0 %v2723
        %2807 = vmatprep.subr.bf16.mxu0 0
        %2808 = vmatpush1.bf16.msra.mxu0 %v2724
        %2809 = vmatprep.subr.bf16.mxu0 0
        %2810 = vmatpush1.bf16.msra.mxu0 %v2725
        %2811 = vmatprep.subr.bf16.mxu0 0
        %2812 = vmatpush1.bf16.msra.mxu0 %v2726
        %2813 = vmatprep.subr.bf16.mxu0 0
        %2814 = vmatpush1.bf16.msra.mxu0 %v2727
        %2815 = vmatprep.subr.bf16.mxu0 0
        %2816 = vmatpush1.bf16.msra.mxu0 %v2728
        %2817 = vmatprep.subr.bf16.mxu0 0
        %2818 = vmatpush1.bf16.msra.mxu0 %v2729
        %2819 = vmatprep.subr.bf16.mxu0 0
        %2820 = vmatpush1.bf16.msra.mxu0 0
        %2821 = vmatprep.subr.bf16.mxu0 0
        %2822 = vmatpush1.bf16.msra.mxu0 0
        %2823 = vmatprep.subr.bf16.mxu0 0
        %2824 = vmatpush1.bf16.msra.mxu0 0
        %2825 = vmatprep.subr.bf16.mxu0 0
        %2826 = vmatpush1.bf16.msra.mxu0 0
        %2827 = vmatprep.subr.bf16.mxu0 0
        %2828 = vmatpush1.bf16.msra.mxu0 0
        %2829 = vmatprep.subr.bf16.mxu0 0
        %2830 = vmatpush1.bf16.msra.mxu0 0
        %2831 = vmatprep.subr.bf16.mxu0 0
        %2832 = vmatpush1.bf16.msra.mxu0 0
        %2833 = vmatprep.subr.bf16.mxu0 0
        %2834 = vmatpush1.bf16.msra.mxu0 0
        %2835 = vmatprep.mubr.bf16.mxu0 0
        %2836 = vmatmul.mubr.bf16.gmra.mrb[0].mxu0 %v2549
        %v2837 = vpop.f32.mrb[0].mxu0
        %v2838 = vadd.f32 %v2789, %v2837
        %v2839 = vpop.f32.mrb[0].mxu0
        %v2840 = vpop.f32.mrb[0].mxu0
        %v2841 = vadd.f32 %v2792, %v2840
        %v2842 = vpop.f32.mrb[0].mxu0
        %2843 = vmatprep.mubr.bf16.mxu0 0
        %2844 = vmatmul.mubr.bf16.gmra.mrb[0].mxu0 %v2552
        %v2845 = vpop.f32.mrb[0].mxu0
        %v2846 = vadd.f32 %v2797, %v2845
        %v2847 = vpop.f32.mrb[0].mxu0
        %v2848 = vpop.f32.mrb[0].mxu0
        %v2849 = vadd.f32 %v2800, %v2848
        %v2850 = vpop.f32.mrb[0].mxu0
        %2851 = vdwg.mxu0
        %v2852 = vmax.f32 %v2838, 0.0
        %v2853 = vmax.f32 %v2841, 0.0
        %v2854 = vmax.f32 %v2846, 0.0
        %v2855 = vmax.f32 %v2849, 0.0
        %v2856 = vpack.c.bf16 %v2853, %v2852
        %v2857 = vpack.c.bf16 %v2855, %v2854
        %s2858 = scalar_lea.vmem [#allocation10], 192
        %v2859 = vld [vmem:[%s2858] sm:$0xf]
        %v2860 = vld [vmem:[%s2858 + $0x4] sm:$0xf]
        %v2861 = vld [vmem:[%s2858 + $0x8] sm:$0xf]
        %v2862 = vld [vmem:[%s2858 + $0xc] sm:$0xf]
        %v2863 = vld [vmem:[%s2858 + $0x10] sm:$0xf]
        %v2864 = vld [vmem:[%s2858 + $0x14] sm:$0xf]
        %v2865 = vld [vmem:[%s2858 + $0x18] sm:$0xf]
        %v2866 = vld [vmem:[%s2858 + $0x1c] sm:$0xf]
        %v2867 = vld [vmem:[%s2858 + $0x20] sm:$0xf]
        %v2868 = vld [vmem:[%s2858 + $0x24] sm:$0xf]
        %v2869 = vld [vmem:[%s2858 + $0x28] sm:$0xf]
        %v2870 = vld [vmem:[%s2858 + $0x2c] sm:$0xf]
        %v2871 = vld [vmem:[%s2858 + $0x30] sm:$0xf]
        %v2872 = vld [vmem:[%s2858 + $0x34] sm:$0xf]
        %v2873 = vld [vmem:[%s2858 + $0x38] sm:$0xf]
        %v2874 = vld [vmem:[%s2858 + $0x3c] sm:$0xf]
        %v2891 = vunpack.c.l.b16 %v2859
        %v2892 = vunpack.c.l.b16 %v2860
        %v2893 = vunpack.c.l.b16 %v2861
        %v2894 = vunpack.c.l.b16 %v2862
        %v2895 = vunpack.c.l.b16 %v2863
        %v2896 = vunpack.c.l.b16 %v2864
        %v2897 = vunpack.c.l.b16 %v2865
        %v2898 = vunpack.c.l.b16 %v2866
        %v2899 = vunpack.c.l.b16 %v2867
        %v2900 = vunpack.c.l.b16 %v2868
        %v2901 = vunpack.c.l.b16 %v2869
        %v2902 = vunpack.c.l.b16 %v2870
        %v2903 = vunpack.c.l.b16 %v2871
        %v2904 = vunpack.c.l.b16 %v2872
        %v2905 = vunpack.c.l.b16 %v2873
        %v2906 = vunpack.c.l.b16 %v2874
        %v2907 = vpack.c.b16 %v2892, %v2891
        %v2908 = vpack.c.b16 %v2894, %v2893
        %v2909 = vpack.c.b16 %v2896, %v2895
        %v2910 = vpack.c.b16 %v2898, %v2897
        %v2911 = vpack.c.b16 %v2900, %v2899
        %v2912 = vpack.c.b16 %v2902, %v2901
        %v2913 = vpack.c.b16 %v2904, %v2903
        %v2914 = vpack.c.b16 %v2906, %v2905
        %2923 = vmatprep.subr.bf16.mxu0 0
        %2924 = vmatpush1.bf16.msra.mxu0 %v2907
        %2925 = vmatprep.subr.bf16.mxu0 0
        %2926 = vmatpush1.bf16.msra.mxu0 %v2908
        %2927 = vmatprep.subr.bf16.mxu0 0
        %2928 = vmatpush1.bf16.msra.mxu0 %v2909
        %2929 = vmatprep.subr.bf16.mxu0 0
        %2930 = vmatpush1.bf16.msra.mxu0 %v2910
        %2931 = vmatprep.subr.bf16.mxu0 0
        %2932 = vmatpush1.bf16.msra.mxu0 %v2911
        %2933 = vmatprep.subr.bf16.mxu0 0
        %2934 = vmatpush1.bf16.msra.mxu0 %v2912
        %2935 = vmatprep.subr.bf16.mxu0 0
        %2936 = vmatpush1.bf16.msra.mxu0 %v2913
        %2937 = vmatprep.subr.bf16.mxu0 0
        %2938 = vmatpush1.bf16.msra.mxu0 %v2914
        %2939 = vmatprep.subr.bf16.mxu0 0
        %2940 = vmatpush1.bf16.msra.mxu0 0
        %2941 = vmatprep.subr.bf16.mxu0 0
        %2942 = vmatpush1.bf16.msra.mxu0 0
        %2943 = vmatprep.subr.bf16.mxu0 0
        %2944 = vmatpush1.bf16.msra.mxu0 0
        %2945 = vmatprep.subr.bf16.mxu0 0
        %2946 = vmatpush1.bf16.msra.mxu0 0
        %2947 = vmatprep.subr.bf16.mxu0 0
        %2948 = vmatpush1.bf16.msra.mxu0 0
        %2949 = vmatprep.subr.bf16.mxu0 0
        %2950 = vmatpush1.bf16.msra.mxu0 0
        %2951 = vmatprep.subr.bf16.mxu0 0
        %2952 = vmatpush1.bf16.msra.mxu0 0
        %2953 = vmatprep.subr.bf16.mxu0 0
        %2954 = vmatpush1.bf16.msra.mxu0 0
        %2955 = vmatprep.mubr.bf16.mxu0 0
        %2956 = vmatmul.mubr.bf16.gmra.mrb[0].mxu0 %v2856
        %v2957 = vpop.f32.mrb[0].mxu0
        %v2958 = vadd.f32 0.0, %v2957
        %v2959 = vpop.f32.mrb[0].mxu0
        %v2960 = vpop.f32.mrb[0].mxu0
        %v2961 = vadd.f32 0.0, %v2960
        %v2962 = vpop.f32.mrb[0].mxu0
        %2963 = vmatprep.mubr.bf16.mxu0 0
        %2964 = vmatmul.mubr.bf16.gmra.mrb[0].mxu0 %v2857
        %v2965 = vpop.f32.mrb[0].mxu0
        %v2966 = vadd.f32 0.0, %v2965
        %v2967 = vpop.f32.mrb[0].mxu0
        %v2968 = vpop.f32.mrb[0].mxu0
        %v2969 = vadd.f32 0.0, %v2968
        %v2970 = vpop.f32.mrb[0].mxu0
        %2971 = vdwg.mxu0
        %v2972 = vadd.f32 %v2441, %v2958
        %v2973 = vadd.f32 %v2442, %v2961
        %v2974 = vadd.f32 %v2443, %v2966
        %v2975 = vadd.f32 %v2444, %v2969
        %s2976 = scalar_lea.vmem %s6, 3
        %v2977 = vld [vmem:[%s2976] sm:$0x1]
        %v2979 = vlaneseq
        %v2980 = vshrl.u32 %v2979, 7
        %v2981 = vsub.s32 0, %v2980
        %v2982 = vrot.slane %v2977, %v2981
        %v2984 = vadd.f32 %v2972, %v2982
        %v2985 = vadd.f32 %v2973, %v2982
        %v2986 = vadd.f32 %v2974, %v2982
        %v2987 = vadd.f32 %v2975, %v2982
        %s2988 = scalar_lea.vmem [#allocation12], 64
        %v2989 = vld [vmem:[%s2988] sm:$0xf]
        %v2990 = vld [vmem:[%s2988 + $0x4] sm:$0xf]
        %v2991 = vld [vmem:[%s2988 + $0x8] sm:$0xf]
        %v2992 = vld [vmem:[%s2988 + $0xc] sm:$0xf]
        %v2993 = vld [vmem:[%s2988 + $0x10] sm:$0xf]
        %v2994 = vld [vmem:[%s2988 + $0x14] sm:$0xf]
        %v2995 = vld [vmem:[%s2988 + $0x18] sm:$0xf]
        %v2996 = vld [vmem:[%s2988 + $0x1c] sm:$0xf]
        %v2997 = vld [vmem:[%s2988 + $0x20] sm:$0xf]
        %v2998 = vld [vmem:[%s2988 + $0x24] sm:$0xf]
        %v2999 = vld [vmem:[%s2988 + $0x28] sm:$0xf]
        %v3000 = vld [vmem:[%s2988 + $0x2c] sm:$0xf]
        %v3001 = vld [vmem:[%s2988 + $0x30] sm:$0xf]
        %v3002 = vld [vmem:[%s2988 + $0x34] sm:$0xf]
        %v3003 = vld [vmem:[%s2988 + $0x38] sm:$0xf]
        %v3004 = vld [vmem:[%s2988 + $0x3c] sm:$0xf]
        %v3005 = vpack.c.bf16 %v2985, %v2984
        %v3006 = vpack.c.bf16 %v2987, %v2986
        %s3007 = scalar_lea.vmem %s8, 1
        %v3008 = vld [vmem:[%s3007] sm:$0x1]
        %v3010 = vlaneseq
        %v3011 = vshrl.u32 %v3010, 7
        %v3012 = vsub.s32 0, %v3011
        %v3013 = vrot.slane %v3008, %v3012
        %v3031 = vunpack.c.l.b16 %v2989
        %v3032 = vunpack.c.l.b16 %v2990
        %v3033 = vunpack.c.l.b16 %v2991
        %v3034 = vunpack.c.l.b16 %v2992
        %v3035 = vunpack.c.l.b16 %v2993
        %v3036 = vunpack.c.l.b16 %v2994
        %v3037 = vunpack.c.l.b16 %v2995
        %v3038 = vunpack.c.l.b16 %v2996
        %v3039 = vunpack.c.l.b16 %v2997
        %v3040 = vunpack.c.l.b16 %v2998
        %v3041 = vunpack.c.l.b16 %v2999
        %v3042 = vunpack.c.l.b16 %v3000
        %v3043 = vunpack.c.l.b16 %v3001
        %v3044 = vunpack.c.l.b16 %v3002
        %v3045 = vunpack.c.l.b16 %v3003
        %v3046 = vunpack.c.l.b16 %v3004
        %v3047 = vpack.c.b16 %v3032, %v3031
        %v3048 = vpack.c.b16 %v3034, %v3033
        %v3049 = vpack.c.b16 %v3036, %v3035
        %v3050 = vpack.c.b16 %v3038, %v3037
        %v3051 = vpack.c.b16 %v3040, %v3039
        %v3052 = vpack.c.b16 %v3042, %v3041
        %v3053 = vpack.c.b16 %v3044, %v3043
        %v3054 = vpack.c.b16 %v3046, %v3045
        %3063 = vmatprep.subr.bf16.mxu0 0
        %3064 = vmatpush1.bf16.msra.mxu0 %v3047
        %3065 = vmatprep.subr.bf16.mxu0 0
        %3066 = vmatpush1.bf16.msra.mxu0 %v3048
        %3067 = vmatprep.subr.bf16.mxu0 0
        %3068 = vmatpush1.bf16.msra.mxu0 %v3049
        %3069 = vmatprep.subr.bf16.mxu0 0
        %3070 = vmatpush1.bf16.msra.mxu0 %v3050
        %3071 = vmatprep.subr.bf16.mxu0 0
        %3072 = vmatpush1.bf16.msra.mxu0 %v3051
        %3073 = vmatprep.subr.bf16.mxu0 0
        %3074 = vmatpush1.bf16.msra.mxu0 %v3052
        %3075 = vmatprep.subr.bf16.mxu0 0
        %3076 = vmatpush1.bf16.msra.mxu0 %v3053
        %3077 = vmatprep.subr.bf16.mxu0 0
        %3078 = vmatpush1.bf16.msra.mxu0 %v3054
        %3079 = vmatprep.subr.bf16.mxu0 0
        %3080 = vmatpush1.bf16.msra.mxu0 0
        %3081 = vmatprep.subr.bf16.mxu0 0
        %3082 = vmatpush1.bf16.msra.mxu0 0
        %3083 = vmatprep.subr.bf16.mxu0 0
        %3084 = vmatpush1.bf16.msra.mxu0 0
        %3085 = vmatprep.subr.bf16.mxu0 0
        %3086 = vmatpush1.bf16.msra.mxu0 0
        %3087 = vmatprep.subr.bf16.mxu0 0
        %3088 = vmatpush1.bf16.msra.mxu0 0
        %3089 = vmatprep.subr.bf16.mxu0 0
        %3090 = vmatpush1.bf16.msra.mxu0 0
        %3091 = vmatprep.subr.bf16.mxu0 0
        %3092 = vmatpush1.bf16.msra.mxu0 0
        %3093 = vmatprep.subr.bf16.mxu0 0
        %3094 = vmatpush1.bf16.msra.mxu0 0
        %3095 = vmatprep.mubr.bf16.mxu0 0
        %3096 = vmatmul.mubr.bf16.gmra.mrb[0].mxu0 %v3005
        %v3097 = vpop.f32.mrb[0].mxu0
        %v3098 = vadd.f32 %v3013, %v3097
        %v3099 = vpop.f32.mrb[0].mxu0
        %v3100 = vpop.f32.mrb[0].mxu0
        %v3101 = vadd.f32 %v3013, %v3100
        %v3102 = vpop.f32.mrb[0].mxu0
        %3103 = vmatprep.mubr.bf16.mxu0 0
        %3104 = vmatmul.mubr.bf16.gmra.mrb[0].mxu0 %v3006
        %v3105 = vpop.f32.mrb[0].mxu0
        %v3106 = vadd.f32 %v3013, %v3105
        %v3107 = vpop.f32.mrb[0].mxu0
        %v3108 = vpop.f32.mrb[0].mxu0
        %v3109 = vadd.f32 %v3013, %v3108
        %v3110 = vpop.f32.mrb[0].mxu0
        %3111 = vdwg.mxu0
        %v3112 = vld [vmem:[#allocation13] sm:$0xf]
        %v3113 = vld [vmem:[#allocation13 + $0x4] sm:$0xf]
        %v3114 = vld [vmem:[#allocation13 + $0x8] sm:$0xf]
        %v3115 = vld [vmem:[#allocation13 + $0xc] sm:$0xf]
        %v3116 = vld [vmem:[#allocation13 + $0x10] sm:$0xf]
        %v3117 = vld [vmem:[#allocation13 + $0x14] sm:$0xf]
        %v3118 = vld [vmem:[#allocation13 + $0x18] sm:$0xf]
        %v3119 = vld [vmem:[#allocation13 + $0x1c] sm:$0xf]
        %v3120 = vld [vmem:[#allocation13 + $0x20] sm:$0xf]
        %v3121 = vld [vmem:[#allocation13 + $0x24] sm:$0xf]
        %v3122 = vld [vmem:[#allocation13 + $0x28] sm:$0xf]
        %v3123 = vld [vmem:[#allocation13 + $0x2c] sm:$0xf]
        %v3124 = vld [vmem:[#allocation13 + $0x30] sm:$0xf]
        %v3125 = vld [vmem:[#allocation13 + $0x34] sm:$0xf]
        %v3126 = vld [vmem:[#allocation13 + $0x38] sm:$0xf]
        %v3127 = vld [vmem:[#allocation13 + $0x3c] sm:$0xf]
        %v3128 = vpack.c.bf16 %v3101, %v3098
        %v3129 = vpack.c.bf16 %v3109, %v3106
        %v3130 = vld [vmem:[%s10] sm:$0x1]
        %v3132 = vlaneseq
        %v3133 = vshrl.u32 %v3132, 7
        %v3134 = vsub.s32 0, %v3133
        %v3135 = vrot.slane %v3130, %v3134
        %v3153 = vunpack.c.l.b16 %v3112
        %v3154 = vunpack.c.l.b16 %v3113
        %v3155 = vunpack.c.l.b16 %v3114
        %v3156 = vunpack.c.l.b16 %v3115
        %v3157 = vunpack.c.l.b16 %v3116
        %v3158 = vunpack.c.l.b16 %v3117
        %v3159 = vunpack.c.l.b16 %v3118
        %v3160 = vunpack.c.l.b16 %v3119
        %v3161 = vunpack.c.l.b16 %v3120
        %v3162 = vunpack.c.l.b16 %v3121
        %v3163 = vunpack.c.l.b16 %v3122
        %v3164 = vunpack.c.l.b16 %v3123
        %v3165 = vunpack.c.l.b16 %v3124
        %v3166 = vunpack.c.l.b16 %v3125
        %v3167 = vunpack.c.l.b16 %v3126
        %v3168 = vunpack.c.l.b16 %v3127
        %v3169 = vpack.c.b16 %v3154, %v3153
        %v3170 = vpack.c.b16 %v3156, %v3155
        %v3171 = vpack.c.b16 %v3158, %v3157
        %v3172 = vpack.c.b16 %v3160, %v3159
        %v3173 = vpack.c.b16 %v3162, %v3161
        %v3174 = vpack.c.b16 %v3164, %v3163
        %v3175 = vpack.c.b16 %v3166, %v3165
        %v3176 = vpack.c.b16 %v3168, %v3167
        %3185 = vmatprep.subr.bf16.mxu0 0
        %3186 = vmatpush1.bf16.msra.mxu0 %v3169
        %3187 = vmatprep.subr.bf16.mxu0 0
        %3188 = vmatpush1.bf16.msra.mxu0 %v3170
        %3189 = vmatprep.subr.bf16.mxu0 0
        %3190 = vmatpush1.bf16.msra.mxu0 %v3171
        %3191 = vmatprep.subr.bf16.mxu0 0
        %3192 = vmatpush1.bf16.msra.mxu0 %v3172
        %3193 = vmatprep.subr.bf16.mxu0 0
        %3194 = vmatpush1.bf16.msra.mxu0 %v3173
        %3195 = vmatprep.subr.bf16.mxu0 0
        %3196 = vmatpush1.bf16.msra.mxu0 %v3174
        %3197 = vmatprep.subr.bf16.mxu0 0
        %3198 = vmatpush1.bf16.msra.mxu0 %v3175
        %3199 = vmatprep.subr.bf16.mxu0 0
        %3200 = vmatpush1.bf16.msra.mxu0 %v3176
        %3201 = vmatprep.subr.bf16.mxu0 0
        %3202 = vmatpush1.bf16.msra.mxu0 0
        %3203 = vmatprep.subr.bf16.mxu0 0
        %3204 = vmatpush1.bf16.msra.mxu0 0
        %3205 = vmatprep.subr.bf16.mxu0 0
        %3206 = vmatpush1.bf16.msra.mxu0 0
        %3207 = vmatprep.subr.bf16.mxu0 0
        %3208 = vmatpush1.bf16.msra.mxu0 0
        %3209 = vmatprep.subr.bf16.mxu0 0
        %3210 = vmatpush1.bf16.msra.mxu0 0
        %3211 = vmatprep.subr.bf16.mxu0 0
        %3212 = vmatpush1.bf16.msra.mxu0 0
        %3213 = vmatprep.subr.bf16.mxu0 0
        %3214 = vmatpush1.bf16.msra.mxu0 0
        %3215 = vmatprep.subr.bf16.mxu0 0
        %3216 = vmatpush1.bf16.msra.mxu0 0
        %3217 = vmatprep.mubr.bf16.mxu0 0
        %3218 = vmatmul.mubr.bf16.gmra.mrb[0].mxu0 %v3128
        %v3219 = vpop.f32.mrb[0].mxu0
        %v3220 = vadd.f32 %v3135, %v3219
        %v3221 = vpop.f32.mrb[0].mxu0
        %v3222 = vpop.f32.mrb[0].mxu0
        %v3223 = vadd.f32 %v3135, %v3222
        %v3224 = vpop.f32.mrb[0].mxu0
        %3225 = vmatprep.mubr.bf16.mxu0 0
        %3226 = vmatmul.mubr.bf16.gmra.mrb[0].mxu0 %v3129
        %v3227 = vpop.f32.mrb[0].mxu0
        %v3228 = vadd.f32 %v3135, %v3227
        %v3229 = vpop.f32.mrb[0].mxu0
        %v3230 = vpop.f32.mrb[0].mxu0
        %v3231 = vadd.f32 %v3135, %v3230
        %v3232 = vpop.f32.mrb[0].mxu0
        %3233 = vdwg.mxu0
        %v3234 = vmax.f32 %v3220, 0.0
        %v3235 = vmax.f32 %v3223, 0.0
        %v3236 = vmax.f32 %v3228, 0.0
        %v3237 = vmax.f32 %v3231, 0.0
        %v3238 = vld [vmem:[#allocation15] sm:$0xf]
        %v3239 = vld [vmem:[#allocation15 + $0x4] sm:$0xf]
        %v3240 = vld [vmem:[#allocation15 + $0x8] sm:$0xf]
        %v3241 = vld [vmem:[#allocation15 + $0xc] sm:$0xf]
        %v3242 = vld [vmem:[#allocation15 + $0x10] sm:$0xf]
        %v3243 = vld [vmem:[#allocation15 + $0x14] sm:$0xf]
        %v3244 = vld [vmem:[#allocation15 + $0x18] sm:$0xf]
        %v3245 = vld [vmem:[#allocation15 + $0x1c] sm:$0xf]
        %v3246 = vld [vmem:[#allocation15 + $0x20] sm:$0xf]
        %v3247 = vld [vmem:[#allocation15 + $0x24] sm:$0xf]
        %v3248 = vld [vmem:[#allocation15 + $0x28] sm:$0xf]
        %v3249 = vld [vmem:[#allocation15 + $0x2c] sm:$0xf]
        %v3250 = vld [vmem:[#allocation15 + $0x30] sm:$0xf]
        %v3251 = vld [vmem:[#allocation15 + $0x34] sm:$0xf]
        %v3252 = vld [vmem:[#allocation15 + $0x38] sm:$0xf]
        %v3253 = vld [vmem:[#allocation15 + $0x3c] sm:$0xf]
        %v3254 = vpack.c.bf16 %v3235, %v3234
        %v3255 = vpack.c.bf16 %v3237, %v3236
        %v3256 = vld [vmem:[%s12] sm:$0x1]
        %v3258 = vlaneseq
        %v3259 = vshrl.u32 %v3258, 7
        %v3260 = vsub.s32 0, %v3259
        %v3261 = vrot.slane %v3256, %v3260
        %v3279 = vunpack.c.l.b16 %v3238
        %v3280 = vunpack.c.l.b16 %v3239
        %v3281 = vunpack.c.l.b16 %v3240
        %v3282 = vunpack.c.l.b16 %v3241
        %v3283 = vunpack.c.l.b16 %v3242
        %v3284 = vunpack.c.l.b16 %v3243
        %v3285 = vunpack.c.l.b16 %v3244
        %v3286 = vunpack.c.l.b16 %v3245
        %v3287 = vunpack.c.l.b16 %v3246
        %v3288 = vunpack.c.l.b16 %v3247
        %v3289 = vunpack.c.l.b16 %v3248
        %v3290 = vunpack.c.l.b16 %v3249
        %v3291 = vunpack.c.l.b16 %v3250
        %v3292 = vunpack.c.l.b16 %v3251
        %v3293 = vunpack.c.l.b16 %v3252
        %v3294 = vunpack.c.l.b16 %v3253
        %v3295 = vpack.c.b16 %v3280, %v3279
        %v3296 = vpack.c.b16 %v3282, %v3281
        %v3297 = vpack.c.b16 %v3284, %v3283
        %v3298 = vpack.c.b16 %v3286, %v3285
        %v3299 = vpack.c.b16 %v3288, %v3287
        %v3300 = vpack.c.b16 %v3290, %v3289
        %v3301 = vpack.c.b16 %v3292, %v3291
        %v3302 = vpack.c.b16 %v3294, %v3293
        %3311 = vmatprep.subr.bf16.mxu0 0
        %3312 = vmatpush1.bf16.msra.mxu0 %v3295
        %3313 = vmatprep.subr.bf16.mxu0 0
        %3314 = vmatpush1.bf16.msra.mxu0 %v3296
        %3315 = vmatprep.subr.bf16.mxu0 0
        %3316 = vmatpush1.bf16.msra.mxu0 %v3297
        %3317 = vmatprep.subr.bf16.mxu0 0
        %3318 = vmatpush1.bf16.msra.mxu0 %v3298
        %3319 = vmatprep.subr.bf16.mxu0 0
        %3320 = vmatpush1.bf16.msra.mxu0 %v3299
        %3321 = vmatprep.subr.bf16.mxu0 0
        %3322 = vmatpush1.bf16.msra.mxu0 %v3300
        %3323 = vmatprep.subr.bf16.mxu0 0
        %3324 = vmatpush1.bf16.msra.mxu0 %v3301
        %3325 = vmatprep.subr.bf16.mxu0 0
        %3326 = vmatpush1.bf16.msra.mxu0 %v3302
        %3327 = vmatprep.subr.bf16.mxu0 0
        %3328 = vmatpush1.bf16.msra.mxu0 0
        %3329 = vmatprep.subr.bf16.mxu0 0
        %3330 = vmatpush1.bf16.msra.mxu0 0
        %3331 = vmatprep.subr.bf16.mxu0 0
        %3332 = vmatpush1.bf16.msra.mxu0 0
        %3333 = vmatprep.subr.bf16.mxu0 0
        %3334 = vmatpush1.bf16.msra.mxu0 0
        %3335 = vmatprep.subr.bf16.mxu0 0
        %3336 = vmatpush1.bf16.msra.mxu0 0
        %3337 = vmatprep.subr.bf16.mxu0 0
        %3338 = vmatpush1.bf16.msra.mxu0 0
        %3339 = vmatprep.subr.bf16.mxu0 0
        %3340 = vmatpush1.bf16.msra.mxu0 0
        %3341 = vmatprep.subr.bf16.mxu0 0
        %3342 = vmatpush1.bf16.msra.mxu0 0
        %3343 = vmatprep.mubr.bf16.mxu0 0
        %3344 = vmatmul.mubr.bf16.gmra.mrb[0].mxu0 %v3254
        %v3345 = vpop.f32.mrb[0].mxu0
        %v3346 = vadd.f32 %v3261, %v3345
        %v3347 = vpop.f32.mrb[0].mxu0
        %v3348 = vpop.f32.mrb[0].mxu0
        %v3349 = vadd.f32 %v3261, %v3348
        %v3350 = vpop.f32.mrb[0].mxu0
        %3351 = vmatprep.mubr.bf16.mxu0 0
        %3352 = vmatmul.mubr.bf16.gmra.mrb[0].mxu0 %v3255
        %v3353 = vpop.f32.mrb[0].mxu0
        %v3354 = vadd.f32 %v3261, %v3353
        %v3355 = vpop.f32.mrb[0].mxu0
        %v3356 = vpop.f32.mrb[0].mxu0
        %v3357 = vadd.f32 %v3261, %v3356
        %v3358 = vpop.f32.mrb[0].mxu0
        %3359 = vdwg.mxu0
        %3360 = vst [vmem:[%s545] sm:$0xff] %v3346
        %3361 = vst [vmem:[%s545 + $0x8] sm:$0xff] %v3349
        %3362 = vst [vmem:[%s545 + $0x10] sm:$0xff] %v3354
        %3363 = vst [vmem:[%s545 + $0x18] sm:$0xff] %v3357
        %s3364 = sand.u32 %s319, 1
        %s3365 = scalar_lea.sflag [#allocation6], %s3364
        %s3366 = sand.u32 %s319, 1
        %s3367 = smul.addr %s3366, 32
        %s3368 = scalar_lea.vmem [#allocation16], %s3367
        // Predicated region
        $region101: #{tpu_custom_call.1} parent=71 // pred_check
          %p3369 = pneg %p329
        $region102: #{tpu_custom_call.1} parent=71 // pred_check_branch
          %3371 = sbr.rel (%p3369) target = $region104
        $region103: #{tpu_custom_call.1} parent=71 // pred_region
          %s3372 = smul.u32 4, %s33
          %s3374 = ssub.s32 512, 512
          %3375 = vsyncadd %s3365, %s3374
          %s3376 = smul.addr %s3372, 128
          %s3377 = scalar_lea.hbm %s13, %s3376
          %s3378 = sshll.u32 %s3368, 4
          %s3379 = int_to_ptr.vmem [resolvable:$true] %s3378
          %3384 = dma.vmem_to_hbm [thread:$0]  %s3379, 512, %s3377, %s3365, 128, 128, 8
        $region104: #{tpu_custom_call.1} parent=71 // pred_fallthru
          _
      $region72: #{tpu_custom_call.1} parent=5 // pred_fallthru
        _
      %p3385 = scmp.le.s32.totalorder 2, %s28
      // Predicated region
      $region105: #{tpu_custom_call.1} parent=5 // pred_check
        %p3386 = pneg %p3385
      $region106: #{tpu_custom_call.1} parent=5 // pred_check_branch
        %3388 = sbr.rel (%p3386) target = $region108
      $region107: #{tpu_custom_call.1} parent=5 // pred_region
        %s3389 = ssub.s32 %s28, 2
        // Predicated region
        $region109: #{tpu_custom_call.1} parent=107 // pred_check
          %p3390 = pneg %p335
        $region110: #{tpu_custom_call.1} parent=107 // pred_check_branch
          %3392 = sbr.rel (%p3390) target = $region112
        $region111: #{tpu_custom_call.1} parent=107 // pred_region
          %s3393 = sand.u32 %s320, 1
          %s3394 = scalar_lea.sflag [#allocation6], %s3393
          %s3395 = sand.u32 %s320, 1
          %s3396 = smul.addr %s3395, 32
          %s3397 = scalar_lea.vmem [#allocation16], %s3396
          %3398 = dma.done %s3394, 512
        $region112: #{tpu_custom_call.1} parent=107 // pred_fallthru
          _
      $region108: #{tpu_custom_call.1} parent=5 // pred_fallthru
        _
    $region6: #{tpu_custom_call.1} parent=1 // loop_footer
      %s32 = sadd.s32 1, %s28
    $region7: #{tpu_custom_call.1} parent=1 // loop_footer_branch
      %27 = sbr.rel target = $region3
    $region8: #{tpu_custom_call.1} parent=1 // loop_exit
      _
    %3399 = vsyncpa [#allocation5], 1
    %s3400 = scalar_lea.sflag [#allocation5], 1
    %3401 = vsyncpa %s3400, 1
    %3402 = vsyncpa [#allocation8], 1
    %3403 = vsyncpa [#allocation11], 1
    %3404 = vsyncpa [#allocation14], 1
    %3405 = vsyncpa [#allocation6], 1
    %s3406 = scalar_lea.sflag [#allocation6], 1
    %3407 = vsyncpa %s3406, 1

</llo_original>
